<compile_context>
chip_gen: v6e
topology: v6e:2x2x1
jax: 0.10.0
libtpu: 0.0.40
codegen_flags: <defaults>
</compile_context>

<pallas_src>
import functools

import jax
import jax.numpy as jnp
from jax.experimental import pallas as pl
from jax.experimental.pallas import tpu as pltpu

_BN_EPS = 1e-5
_POOL_ROW_BUDGET = 4 << 20


def _round_up(x, m):
    return (x + m - 1) // m * m


def _cdiv(a, b):
    return (a + b - 1) // b


def _detect_vmem_limit():
    # Per-chip scoped-VMEM limit: ~half of physical, capped at 96 MiB, floor 32 MiB.
    try:
        phys = int(pltpu.get_tpu_info().vmem_capacity_bytes)
        return max(32 * 1024 * 1024, min(phys // 2, 96 * 1024 * 1024))
    except Exception:
        return 32 * 1024 * 1024


def _detect_prologue_dtype():
    # v5e's VPU has no bf16 -> keep the BN+ReLU prologue in f32 there; bf16 elsewhere.
    try:
        kind = jax.devices()[0].device_kind.lower()
        if "v5e" in kind or "lite" in kind:
            return jnp.float32
    except Exception:
        pass
    return jnp.bfloat16


_VMEM_LIMIT = _detect_vmem_limit()
_PRO_DTYPE = _detect_prologue_dtype()


# ----------------------------- fused GEMM kernel -----------------------------
# C = relu(scale_out * (relu(scale_in * A + bias_in) @ B) + bias_out)
# (prologue / epilogue are optional; MXU in bf16, f32 accumulation)

def _gemm_kernel(has_pro, has_epi, *refs):
    a_ref, b_ref = refs[0], refs[1]
    i = 2
    if has_pro:
        ps_ref, pb_ref = refs[i], refs[i + 1]
        i += 2
    if has_epi:
        es_ref, eb_ref = refs[i], refs[i + 1]
        i += 2
    o_ref, acc_ref = refs[i], refs[i + 1]

    k = pl.program_id(2)

    @pl.when(k == 0)
    def _():
        acc_ref[...] = jnp.zeros_like(acc_ref)

    a = a_ref[...]
    if has_pro:  # fused pre-activation BN + ReLU on the A tile (per-K-column)
        a = jnp.maximum(a.astype(ps_ref.dtype) * ps_ref[...] + pb_ref[...], 0.0)
        a = a.astype(jnp.bfloat16)
    acc_ref[...] += jnp.dot(a, b_ref[...], preferred_element_type=jnp.float32)

    @pl.when(k == pl.num_programs(2) - 1)
    def _():
        r = acc_ref[...]
        if has_epi:  # fused post-conv BN + ReLU on the output tile (per-N-column)
            r = jnp.maximum(r * es_ref[...] + eb_ref[...], 0.0)
        o_ref[...] = r.astype(o_ref.dtype)


def _prep_vec(v, full, pad_to, dtype):
    v = v.reshape(1, full).astype(dtype)
    if pad_to != full:
        v = jnp.pad(v, ((0, 0), (0, pad_to - full)))
    return v


def fused_matmul(a, b, pro=None, epi=None, out_dtype=jnp.bfloat16):
    """a: (M, K), b: (K, N) -> (M, N). pro/epi = (scale, bias) per K / N column."""
    M, K = a.shape
    Kb, N = b.shape
    assert K == Kb

    # K tiling: collapse to a single reduction step whenever K is small.
    tk = K if K <= 640 else 512
    Kp = _round_up(K, tk)
    # N tiling: Cout is small here -> one full-dim block; tile at 128 otherwise.
    tn = N if N <= 128 else 128
    Np = _round_up(N, tn)
    # M tiling: large tiles to amortize per-step overhead (cap 1024 for small K/N).
    Mp8 = _round_up(M, 8)
    cap = 1024 if (Kp <= 640 and Np <= 128) else 512
    nblk = _cdiv(Mp8, cap)
    tm = _round_up(_cdiv(Mp8, nblk), 8)
    # Split a single-block GEMM in two along M so v7x's two TensorCores both get work;
    # each half keeps >=512 rows so the extra grid step is negligible on v5e/v6e.
    if nblk == 1 and Np == tn and tm >= 1024 and (tm // 2) % 8 == 0:
        tm //= 2
        nblk = 2
    Mp = tm * nblk

    a = a.astype(jnp.bfloat16)
    if (Mp, Kp) != (M, K):
        a = jnp.pad(a, ((0, Mp - M), (0, Kp - K)))
    b = b.astype(jnp.bfloat16)
    if (Kp, Np) != (K, N):
        b = jnp.pad(b, ((0, Kp - K), (0, Np - N)))

    in_specs = [pl.BlockSpec((tm, tk), lambda i, j, k: (i, k)),
                pl.BlockSpec((tk, tn), lambda i, j, k: (k, j))]
    args = [a, b]

    if pro is not None:
        args += [_prep_vec(pro[0], K, Kp, _PRO_DTYPE),
                 _prep_vec(pro[1], K, Kp, _PRO_DTYPE)]
        in_specs += [pl.BlockSpec((1, tk), lambda i, j, k: (0, k))] * 2
    if epi is not None:
        args += [_prep_vec(epi[0], N, Np, jnp.float32),
                 _prep_vec(epi[1], N, Np, jnp.float32)]
        in_specs += [pl.BlockSpec((1, tn), lambda i, j, k: (0, j))] * 2

    out = pl.pallas_call(
        functools.partial(_gemm_kernel, pro is not None, epi is not None),
        out_shape=jax.ShapeDtypeStruct((Mp, Np), out_dtype),
        grid_spec=pltpu.PrefetchScalarGridSpec(
            num_scalar_prefetch=0,
            grid=(Mp // tm, Np // tn, Kp // tk),
            in_specs=in_specs,
            out_specs=pl.BlockSpec((tm, tn), lambda i, j, k: (i, j)),
            scratch_shapes=[pltpu.VMEM((tm, tn), jnp.float32)]),
        compiler_params=pltpu.CompilerParams(
            dimension_semantics=("parallel", "parallel", "arbitrary"),
            vmem_limit_bytes=_VMEM_LIMIT),
    )(*args)
    if (Mp, Np) != (M, N):
        out = out[:M, :N]
    return out


# ------------------ 3x3x3 conv (input already BN+ReLU'd), no HBM im2col ------------------
# Per grid step (n, d, kd): load one zero-padded flattened plane ((H+2)*(W+2)+2, C) of
# depth plane d+kd, build the 9 (kh,kw) taps as contiguous static slices of it, concat
# into (H*(W+2), 9C), and accumulate one MXU dot into the f32 scratch.  kd is the grid
# reduction axis (depth block size 1 => element-granular offsets d+kd).

def _conv3x3_kernel(Wq, H, a_ref, b_ref, o_ref, acc_ref):
    kd = pl.program_id(2)

    @pl.when(kd == 0)
    def _():
        acc_ref[...] = jnp.zeros_like(acc_ref)

    a = a_ref[0, 0]                      # ((H+2)*(W+2)+2, C) bf16, already activated
    M = H * Wq
    slabs = []
    for kh in range(3):
        for kw in range(3):
            s = kh * Wq + kw             # static offset
            slabs.append(a[s:s + M, :])
    am = jnp.concatenate(slabs, axis=-1)  # (M, 9*C)
    acc_ref[...] += jnp.dot(am, b_ref[0], preferred_element_type=jnp.float32)

    @pl.when(kd == pl.num_programs(2) - 1)
    def _():
        o_ref[0, 0] = acc_ref[...].astype(o_ref.dtype)


def conv3x3(x, w_flat):
    """conv3d(x, k=3, s=1, p=1) on an already-activated input.

    x: (N, D, H, W, C) bf16.
    w_flat: (3, 9*C, Cout) bf16, laid out as (kd, (kh, kw, Cin), Cout).
    """
    N, D, H, W, C = x.shape
    Cout = w_flat.shape[-1]
    Hq, Wq = H + 2, W + 2
    M = H * Wq                 # output rows on an (H, W+2) grid; last 2 cols are garbage
    R2 = Hq * Wq + 2           # +2 pad rows so every tap slice stays in bounds

    xp = jnp.pad(x, ((0, 0), (1, 1), (1, 1), (1, 1), (0, 0)))
    a = xp.reshape(N, D + 2, Hq * Wq, C)
    a = jnp.pad(a, ((0, 0), (0, 0), (0, 2), (0, 0)))

    out = pl.pallas_call(
        functools.partial(_conv3x3_kernel, Wq, H),
        out_shape=jax.ShapeDtypeStruct((N, D, M, Cout), jnp.bfloat16),
        grid_spec=pltpu.PrefetchScalarGridSpec(
            num_scalar_prefetch=0,
            grid=(N, D, 3),
            in_specs=[
                pl.BlockSpec((1, 1, R2, C), lambda n, d, kd: (n, d + kd, 0, 0)),
                pl.BlockSpec((1, 9 * C, Cout), lambda n, d, kd: (kd, 0, 0)),
            ],
            out_specs=pl.BlockSpec((1, 1, M, Cout), lambda n, d, kd: (n, d, 0, 0)),
            scratch_shapes=[pltpu.VMEM((M, Cout), jnp.float32)]),
        compiler_params=pltpu.CompilerParams(
            dimension_semantics=("parallel", "parallel", "arbitrary"),
            vmem_limit_bytes=_VMEM_LIMIT),
    )(a, w_flat)
    # drop the 2 garbage columns per row
    return out.reshape(N, D, H, Wq, Cout)[:, :, :, :W, :]


# ----------------------------- tiled window reductions (pooling) -----------------------------

def _pool_max_kernel(x_ref, o_ref):
    o_ref[...] = jnp.max(x_ref[...], axis=1)


def _pool_mean_kernel(inv_k, x_ref, o_ref):
    o_ref[...] = (jnp.sum(x_ref[...].astype(jnp.float32), axis=1) * inv_k).astype(o_ref.dtype)


def pallas_window_reduce(x, op, out_dtype=None):
    """x: (R, Kw, WC) -> (R, WC), reducing the window axis with max or mean."""
    R, Kw, WC = x.shape
    out_dtype = out_dtype or x.dtype
    row_bytes = max(int(Kw * WC * x.dtype.itemsize), 1)
    cap = max(8, (_POOL_ROW_BUDGET // row_bytes) // 8 * 8)
    tr = min(_round_up(R, 8), cap)
    Rp = _round_up(R, tr)
    if Rp != R:
        x = jnp.pad(x, ((0, Rp - R), (0, 0), (0, 0)))  # padded rows are sliced off below
    kern = _pool_max_kernel if op == "max" else functools.partial(
        _pool_mean_kernel, float(1.0 / Kw))
    out = pl.pallas_call(
        kern,
        out_shape=jax.ShapeDtypeStruct((Rp, WC), out_dtype),
        grid_spec=pltpu.PrefetchScalarGridSpec(
            num_scalar_prefetch=0,
            grid=(Rp // tr,),
            in_specs=[pl.BlockSpec((tr, Kw, WC), lambda i: (i, 0, 0))],
            out_specs=pl.BlockSpec((tr, WC), lambda i: (i, 0))),
        compiler_params=pltpu.CompilerParams(
            dimension_semantics=("parallel",),
            vmem_limit_bytes=_VMEM_LIMIT),
    )(x)
    return out[:R] if Rp != R else out


# ----------------------------- JAX glue: patch extraction -----------------------------

def _extract_patches_gemm(x, k, s, p):
    """(N, D, H, W, C) -> (N, Do, Ho, Wo, k^3, C) with (kd, kh, kw) tap ordering (im2col)."""
    N, D, H, W, C = x.shape
    if p > 0:
        x = jnp.pad(x, ((0, 0), (p, p), (p, p), (p, p), (0, 0)))
    Do = (D + 2 * p - k) // s + 1
    Ho = (H + 2 * p - k) // s + 1
    Wo = (W + 2 * p - k) // s + 1
    pieces = []
    for kd in range(k):
        for kh in range(k):
            for kw in range(k):
                pieces.append(x[:, kd:kd + (Do - 1) * s + 1:s,
                                kh:kh + (Ho - 1) * s + 1:s,
                                kw:kw + (Wo - 1) * s + 1:s, :])
    return jnp.stack(pieces, axis=-2), (Do, Ho, Wo)


def _extract_patches_pool(x, k, s, p, pad_value=0.0):
    """(N, D, H, W, C) -> (N, Do, Ho, k^3, Wo, C) — lane-dense (Wo*C) layout for reductions."""
    N, D, H, W, C = x.shape
    if p > 0:
        x = jnp.pad(x, ((0, 0), (p, p), (p, p), (p, p), (0, 0)),
                    constant_values=pad_value)
    Do = (D + 2 * p - k) // s + 1
    Ho = (H + 2 * p - k) // s + 1
    Wo = (W + 2 * p - k) // s + 1
    pieces = []
    for kd in range(k):
        for kh in range(k):
            for kw in range(k):
                pieces.append(x[:, kd:kd + (Do - 1) * s + 1:s,
                                kh:kh + (Ho - 1) * s + 1:s,
                                kw:kw + (Wo - 1) * s + 1:s, :])
    return jnp.stack(pieces, axis=3), (Do, Ho, Wo)


def maxpool3d(x, k, s, p):
    N, D, H, W, C = x.shape
    patches, (Do, Ho, Wo) = _extract_patches_pool(x, k, s, p, pad_value=-jnp.inf)
    red = pallas_window_reduce(patches.reshape(N * Do * Ho, k ** 3, Wo * C), "max")
    return red.reshape(N, Do, Ho, Wo, C)


def avgpool3d(x, k, s):
    N, D, H, W, C = x.shape
    patches, (Do, Ho, Wo) = _extract_patches_pool(x, k, s, 0)
    red = pallas_window_reduce(patches.reshape(N * Do * Ho, k ** 3, Wo * C), "mean")
    return red.reshape(N, Do, Ho, Wo, C)


def global_avgpool(x):
    N, D, H, W, C = x.shape
    return pallas_window_reduce(x.reshape(N, D * H * W, C), "mean",
                                out_dtype=jnp.float32)   # (N, C)


# ----------------------------- parameters (matches module __init__) -----------------------------

def _make_bn(c):
    # gamma=1, beta=0, running_mean=0, running_var=1 (module init), eval mode.
    scale = jnp.full((c,), 1.0 / ((1.0 + _BN_EPS) ** 0.5), jnp.float32)
    bias = jnp.zeros((c,), jnp.float32)
    return {"scale": scale, "bias": bias}


def init_densenet_params(key, growth_rate, block_config, num_init_features,
                         bn_size, in_channels):
    n_keys = 1 + 2 * sum(block_config) + max(len(block_config) - 1, 0)
    keys = iter(jax.random.split(key, n_keys))

    def kaiming(k, shape, fan_in):
        # nn.init.kaiming_normal_ default: fan_in, gain=sqrt(2)
        std = (2.0 / fan_in) ** 0.5
        return (std * jax.random.normal(k, shape, jnp.float32)).astype(jnp.bfloat16)

    params = {
        # conv0 weight already in GEMM layout: (k^3 * Cin, Cout)
        "conv0_w": kaiming(next(keys), (343 * in_channels, num_init_features),
                           343 * in_channels),
        "norm0": _make_bn(num_init_features),
        "blocks": [],
    }
    num_features = num_init_features
    for i, num_layers in enumerate(block_config):
        layers = []
        for j in range(num_layers):
            nin = num_features + j * growth_rate
            mid = bn_size * growth_rate
            layers.append({
                "norm1": _make_bn(nin),
                "conv1_w": kaiming(next(keys), (nin, mid), nin),               # 1x1x1
                "norm2": _make_bn(mid),
                "conv2_w": kaiming(next(keys), (3, 9 * mid, growth_rate), 27 * mid),  # 3x3x3
            })
        num_features += num_layers * growth_rate
        block = {"layers": layers}
        if i != len(block_config) - 1:
            block["transition"] = {
                "norm": _make_bn(num_features),
                "conv_w": kaiming(next(keys), (num_features, num_features // 2),
                                  num_features),
            }
            num_features //= 2
        params["blocks"].append(block)
    return params, num_features


# ----------------------------- forward (mode='encoder') -----------------------------

def densenet_forward(params, x_ncdhw):
    # NCDHW -> NDHWC channels-last, bf16 activations throughout.
    x = jnp.transpose(x_ncdhw, (0, 2, 3, 4, 1)).astype(jnp.bfloat16)
    N = x.shape[0]
    Cin = x.shape[-1]

    # conv0 (7x7x7, s=2, p=3) with norm0+relu0 fused as the GEMM epilogue.
    patches, (Do, Ho, Wo) = _extract_patches_gemm(x, 7, 2, 3)
    out2d = fused_matmul(patches.reshape(N * Do * Ho * Wo, 343 * Cin),
                         params["conv0_w"],
                         epi=(params["norm0"]["scale"], params["norm0"]["bias"]))
    x = out2d.reshape(N, Do, Ho, Wo, -1)

    # pool0: MaxPool3d(kernel=3, stride=2, padding=1)
    x = maxpool3d(x, 3, 2, 1)

    # dense blocks (+ transitions): O(L) feature buffer instead of per-layer concat.
    for block in params["blocks"]:
        layers = block["layers"]
        Nn, D, H, W, c0 = x.shape
        g = layers[0]["conv2_w"].shape[-1]
        c_final = c0 + len(layers) * g
        buf = jnp.zeros((Nn, D, H, W, c_final), jnp.bfloat16)
        buf = jax.lax.dynamic_update_slice_in_dim(buf, x, 0, axis=4)
        c_cur = c0
        for layer in layers:
            inp = buf[..., :c_cur]                              # static slice
            # norm1+relu1 fused as prologue, norm2+relu2 fused as epilogue of the
            # 1x1x1 bottleneck GEMM -> the 3x3x3 conv consumes the activated tensor.
            h2d = fused_matmul(inp.reshape(Nn * D * H * W, c_cur),
                               layer["conv1_w"],
                               pro=(layer["norm1"]["scale"], layer["norm1"]["bias"]),
                               epi=(layer["norm2"]["scale"], layer["norm2"]["bias"]))
            h = h2d.reshape(Nn, D, H, W, -1)
            new = conv3x3(h, layer["conv2_w"])
            buf = jax.lax.dynamic_update_slice_in_dim(buf, new, c_cur, axis=4)
            c_cur += g
        x = buf
        if "transition" in block:
            t = block["transition"]
            Nn, D, H, W, C = x.shape
            y2d = fused_matmul(x.reshape(Nn * D * H * W, C), t["conv_w"],
                               pro=(t["norm"]["scale"], t["norm"]["bias"]))
            x = y2d.reshape(Nn, D, H, W, -1)
            x = avgpool3d(x, 2, 2)

    # encoder head: adaptive_avg_pool3d(1) -> flatten -> squeeze(dim=1)
    out = global_avgpool(x)                                     # (N, num_features) f32
    if out.shape[1] == 1:
        out = out[:, 0]
    return out


if __name__ == "__main__":
    key = jax.random.PRNGKey(0)
    kp, kx = jax.random.split(key)

    # Small config consistent with the module:
    # DenseNet(growth_rate=8, block_config=(2, 2), num_init_features=8,
    #          mode='encoder', bn_size=2, in_channels=1)
    params, num_features = init_densenet_params(
        kp, growth_rate=8, block_config=(2, 2),
        num_init_features=8, bn_size=2, in_channels=1)

    # PyTorch-style NCDHW input: (batch=2, channels=1, 16, 16, 16)
    x = jax.random.normal(kx, (2, 1, 16, 16, 16), jnp.float32)

    fwd = jax.jit(densenet_forward)
    out = fwd(params, x)
    jax.block_until_ready(out)
    assert out.shape == (2, num_features), out.shape
    assert bool(jnp.all(jnp.isfinite(out)))
    print("KERNEL_OK")
</pallas_src>

<mosaic_0001>
module attributes {stable_mosaic.version = 11 : i64} {
  func.func @_gemm_kernel(%arg0: i32, %arg1: i32, %arg2: i32, %arg3: memref<512x343xbf16, #tpu.memory_space<vmem>>, %arg4: memref<343x8xbf16, #tpu.memory_space<vmem>>, %arg5: memref<1x8xf32, #tpu.memory_space<vmem>>, %arg6: memref<1x8xf32, #tpu.memory_space<vmem>>, %arg7: memref<512x8xbf16, #tpu.memory_space<vmem>>, %arg8: memref<512x8xf32, #tpu.memory_space<vmem>>) attributes {dimension_semantics = [#tpu.dimension_semantics<parallel>, #tpu.dimension_semantics<parallel>, #tpu.dimension_semantics<arbitrary>], iteration_bounds = array<i64: 2, 1, 1>, scalar_prefetch = 0 : i64, scratch_operands = 1 : i64, tpu.core_type = #tpu.core_type<tc>, window_params = [{transform_indices = @transform_0, window_bounds = array<i64: 512, 343>}, {transform_indices = @transform_1, window_bounds = array<i64: 343, 8>}, {transform_indices = @transform_2, window_bounds = array<i64: 1, 8>}, {transform_indices = @transform_3, window_bounds = array<i64: 1, 8>}, {transform_indices = @transform_4, window_bounds = array<i64: 512, 8>}]} {
    %c0_i32 = arith.constant 0 : i32
    %0 = arith.cmpi eq, %arg2, %c0_i32 : i32
    %1 = arith.extui %0 : i1 to i32
    %c0_i32_0 = arith.constant 0 : i32
    %2 = arith.cmpi ne, %1, %c0_i32_0 : i32
    scf.if %2 {
      %cst_10 = arith.constant 0.000000e+00 : f32
      %12 = vector.broadcast %cst_10 : f32 to vector<512x8xf32>
      %c0_11 = arith.constant 0 : index
      %c0_12 = arith.constant 0 : index
      %13 = vector.load %arg8[%c0_11, %c0_12] : memref<512x8xf32, #tpu.memory_space<vmem>>, vector<512x8xf32>
      tpu.vector_store %arg8[%c0_11, %c0_12], %12 {strides = array<i32>} : memref<512x8xf32, #tpu.memory_space<vmem>>, vector<512x8xf32>,
    } else {
    }
    %c0 = arith.constant 0 : index
    %c0_1 = arith.constant 0 : index
    %3 = vector.load %arg3[%c0, %c0_1] : memref<512x343xbf16, #tpu.memory_space<vmem>>, vector<512x343xbf16>
    %c0_2 = arith.constant 0 : index
    %c0_3 = arith.constant 0 : index
    %4 = vector.load %arg8[%c0_2, %c0_3] : memref<512x8xf32, #tpu.memory_space<vmem>>, vector<512x8xf32>
    %c0_4 = arith.constant 0 : index
    %c0_5 = arith.constant 0 : index
    %5 = vector.load %arg4[%c0_4, %c0_5] : memref<343x8xbf16, #tpu.memory_space<vmem>>, vector<343x8xbf16>
    %cst = arith.constant dense<0.000000e+00> : vector<512x8xf32>
    %6 = tpu.matmul %3, %5, %cst {dimension_numbers = #tpu.dot_dimension_numbers<[1], [0], [0], [1], [0, 0, 1, 1], [], []>} : vector<512x343xbf16>, vector<343x8xbf16>, vector<512x8xf32> -> vector<512x8xf32>
    %7 = arith.addf %4, %6 : vector<512x8xf32>
    %c0_6 = arith.constant 0 : index
    %c0_7 = arith.constant 0 : index
    %8 = vector.load %arg8[%c0_6, %c0_7] : memref<512x8xf32, #tpu.memory_space<vmem>>, vector<512x8xf32>
    tpu.vector_store %arg8[%c0_6, %c0_7], %7 {strides = array<i32>} : memref<512x8xf32, #tpu.memory_space<vmem>>, vector<512x8xf32>,
    %c0_i32_8 = arith.constant 0 : i32
    %9 = arith.cmpi eq, %arg2, %c0_i32_8 : i32
    %10 = arith.extui %9 : i1 to i32
    %c0_i32_9 = arith.constant 0 : i32
    %11 = arith.cmpi ne, %10, %c0_i32_9 : i32
    scf.if %11 {
      %c0_10 = arith.constant 0 : index
      %c0_11 = arith.constant 0 : index
      %12 = vector.load %arg8[%c0_10, %c0_11] : memref<512x8xf32, #tpu.memory_space<vmem>>, vector<512x8xf32>
      %c0_12 = arith.constant 0 : index
      %c0_13 = arith.constant 0 : index
      %13 = vector.load %arg5[%c0_12, %c0_13] : memref<1x8xf32, #tpu.memory_space<vmem>>, vector<1x8xf32>
      %14 = vector.broadcast %13 : vector<1x8xf32> to vector<512x8xf32>
      %15 = arith.mulf %12, %14 : vector<512x8xf32>
      %c0_14 = arith.constant 0 : index
      %c0_15 = arith.constant 0 : index
      %16 = vector.load %arg6[%c0_14, %c0_15] : memref<1x8xf32, #tpu.memory_space<vmem>>, vector<1x8xf32>
      %17 = vector.broadcast %16 : vector<1x8xf32> to vector<512x8xf32>
      %18 = arith.addf %15, %17 : vector<512x8xf32>
      %cst_16 = arith.constant 0.000000e+00 : f32
      %19 = vector.broadcast %cst_16 : f32 to vector<512x8xf32>
      %20 = arith.maximumf %18, %19 : vector<512x8xf32>
      %21 = arith.truncf %20 : vector<512x8xf32> to vector<512x8xbf16>
      %c0_17 = arith.constant 0 : index
      %c0_18 = arith.constant 0 : index
      %22 = vector.load %arg7[%c0_17, %c0_18] : memref<512x8xbf16, #tpu.memory_space<vmem>>, vector<512x8xbf16>
      tpu.vector_store %arg7[%c0_17, %c0_18], %21 {strides = array<i32>} : memref<512x8xbf16, #tpu.memory_space<vmem>>, vector<512x8xbf16>,
    } else {
    }
    return
  }
  func.func @transform_0(%arg0: i32, %arg1: i32, %arg2: i32) -> (i32, i32) {
    %c0_i32 = arith.constant 0 : i32
    return %arg0, %arg2 : i32, i32
  }
  func.func @transform_1(%arg0: i32, %arg1: i32, %arg2: i32) -> (i32, i32) {
    %c0_i32 = arith.constant 0 : i32
    return %arg2, %arg1 : i32, i32
  }
  func.func @transform_2(%arg0: i32, %arg1: i32, %arg2: i32) -> (i32, i32) {
    %c0_i32 = arith.constant 0 : i32
    %c0_i32_0 = arith.constant 0 : i32
    return %c0_i32, %arg1 : i32, i32
  }
  func.func @transform_3(%arg0: i32, %arg1: i32, %arg2: i32) -> (i32, i32) {
    %c0_i32 = arith.constant 0 : i32
    %c0_i32_0 = arith.constant 0 : i32
    return %c0_i32, %arg1 : i32, i32
  }
  func.func @transform_4(%arg0: i32, %arg1: i32, %arg2: i32) -> (i32, i32) {
    %c0_i32 = arith.constant 0 : i32
    return %arg0, %arg1 : i32, i32
  }
}

module attributes {stable_mosaic.version = 11 : i64} {
  func.func @_pool_max_kernel(%arg0: i32, %arg1: memref<32x27x32xbf16, #tpu.memory_space<vmem>>, %arg2: memref<32x32xbf16, #tpu.memory_space<vmem>>) attributes {dimension_semantics = [#tpu.dimension_semantics<parallel>], iteration_bounds = array<i64: 1>, scalar_prefetch = 0 : i64, scratch_operands = 0 : i64, tpu.core_type = #tpu.core_type<tc>, window_params = [{transform_indices = @transform_0, window_bounds = array<i64: 32, 27, 32>}, {transform_indices = @transform_1, window_bounds = array<i64: 32, 32>}]} {
    %c0 = arith.constant 0 : index
    %c0_0 = arith.constant 0 : index
    %c0_1 = arith.constant 0 : index
    %0 = vector.load %arg1[%c0, %c0_0, %c0_1] : memref<32x27x32xbf16, #tpu.memory_space<vmem>>, vector<32x27x32xbf16>
    %cst = arith.constant dense<0xFF80> : vector<32x32xbf16>
    %1 = vector.multi_reduction <maximumf>, %0, %cst [1] : vector<32x27x32xbf16> to vector<32x32xbf16>
    %c0_2 = arith.constant 0 : index
    %c0_3 = arith.constant 0 : index
    %2 = vector.load %arg2[%c0_2, %c0_3] : memref<32x32xbf16, #tpu.memory_space<vmem>>, vector<32x32xbf16>
    tpu.vector_store %arg2[%c0_2, %c0_3], %1 {strides = array<i32>} : memref<32x32xbf16, #tpu.memory_space<vmem>>, vector<32x32xbf16>,
    return
  }
  func.func @transform_0(%arg0: i32) -> (i32, i32, i32) {
    %c0_i32 = arith.constant 0 : i32
    %c0_i32_0 = arith.constant 0 : i32
    %c0_i32_1 = arith.constant 0 : i32
    return %arg0, %c0_i32, %c0_i32_0 : i32, i32, i32
  }
  func.func @transform_1(%arg0: i32) -> (i32, i32) {
    %c0_i32 = arith.constant 0 : i32
    %c0_i32_0 = arith.constant 0 : i32
    return %arg0, %c0_i32 : i32, i32
  }
}

module attributes {stable_mosaic.version = 11 : i64} {
  func.func @_gemm_kernel(%arg0: i32, %arg1: i32, %arg2: i32, %arg3: memref<128x8xbf16, #tpu.memory_space<vmem>>, %arg4: memref<8x16xbf16, #tpu.memory_space<vmem>>, %arg5: memref<1x8xbf16, #tpu.memory_space<vmem>>, %arg6: memref<1x8xbf16, #tpu.memory_space<vmem>>, %arg7: memref<1x16xf32, #tpu.memory_space<vmem>>, %arg8: memref<1x16xf32, #tpu.memory_space<vmem>>, %arg9: memref<128x16xbf16, #tpu.memory_space<vmem>>, %arg10: memref<128x16xf32, #tpu.memory_space<vmem>>) attributes {dimension_semantics = [#tpu.dimension_semantics<parallel>, #tpu.dimension_semantics<parallel>, #tpu.dimension_semantics<arbitrary>], iteration_bounds = array<i64: 1, 1, 1>, scalar_prefetch = 0 : i64, scratch_operands = 1 : i64, tpu.core_type = #tpu.core_type<tc>, window_params = [{transform_indices = @transform_0, window_bounds = array<i64: 128, 8>}, {transform_indices = @transform_1, window_bounds = array<i64: 8, 16>}, {transform_indices = @transform_2, window_bounds = array<i64: 1, 8>}, {transform_indices = @transform_3, window_bounds = array<i64: 1, 8>}, {transform_indices = @transform_4, window_bounds = array<i64: 1, 16>}, {transform_indices = @transform_5, window_bounds = array<i64: 1, 16>}, {transform_indices = @transform_6, window_bounds = array<i64: 128, 16>}]} {
    %c0_i32 = arith.constant 0 : i32
    %0 = arith.cmpi eq, %arg2, %c0_i32 : i32
    %1 = arith.extui %0 : i1 to i32
    %c0_i32_0 = arith.constant 0 : i32
    %2 = arith.cmpi ne, %1, %c0_i32_0 : i32
    scf.if %2 {
      %cst_15 = arith.constant 0.000000e+00 : f32
      %20 = vector.broadcast %cst_15 : f32 to vector<128x16xf32>
      %c0_16 = arith.constant 0 : index
      %c0_17 = arith.constant 0 : index
      %21 = vector.load %arg10[%c0_16, %c0_17] : memref<128x16xf32, #tpu.memory_space<vmem>>, vector<128x16xf32>
      tpu.vector_store %arg10[%c0_16, %c0_17], %20 {strides = array<i32>} : memref<128x16xf32, #tpu.memory_space<vmem>>, vector<128x16xf32>,
    } else {
    }
    %c0 = arith.constant 0 : index
    %c0_1 = arith.constant 0 : index
    %3 = vector.load %arg3[%c0, %c0_1] : memref<128x8xbf16, #tpu.memory_space<vmem>>, vector<128x8xbf16>
    %c0_2 = arith.constant 0 : index
    %c0_3 = arith.constant 0 : index
    %4 = vector.load %arg5[%c0_2, %c0_3] : memref<1x8xbf16, #tpu.memory_space<vmem>>, vector<1x8xbf16>
    %5 = vector.broadcast %4 : vector<1x8xbf16> to vector<128x8xbf16>
    %6 = arith.mulf %3, %5 : vector<128x8xbf16>
    %c0_4 = arith.constant 0 : index
    %c0_5 = arith.constant 0 : index
    %7 = vector.load %arg6[%c0_4, %c0_5] : memref<1x8xbf16, #tpu.memory_space<vmem>>, vector<1x8xbf16>
    %8 = vector.broadcast %7 : vector<1x8xbf16> to vector<128x8xbf16>
    %9 = arith.addf %6, %8 : vector<128x8xbf16>
    %cst = arith.constant 0.000000e+00 : bf16
    %10 = vector.broadcast %cst : bf16 to vector<128x8xbf16>
    %11 = arith.maximumf %9, %10 : vector<128x8xbf16>
    %c0_6 = arith.constant 0 : index
    %c0_7 = arith.constant 0 : index
    %12 = vector.load %arg10[%c0_6, %c0_7] : memref<128x16xf32, #tpu.memory_space<vmem>>, vector<128x16xf32>
    %c0_8 = arith.constant 0 : index
    %c0_9 = arith.constant 0 : index
    %13 = vector.load %arg4[%c0_8, %c0_9] : memref<8x16xbf16, #tpu.memory_space<vmem>>, vector<8x16xbf16>
    %cst_10 = arith.constant dense<0.000000e+00> : vector<128x16xf32>
    %14 = tpu.matmul %11, %13, %cst_10 {dimension_numbers = #tpu.dot_dimension_numbers<[1], [0], [0], [1], [0, 0, 1, 1], [], []>} : vector<128x8xbf16>, vector<8x16xbf16>, vector<128x16xf32> -> vector<128x16xf32>
    %15 = arith.addf %12, %14 : vector<128x16xf32>
    %c0_11 = arith.constant 0 : index
    %c0_12 = arith.constant 0 : index
    %16 = vector.load %arg10[%c0_11, %c0_12] : memref<128x16xf32, #tpu.memory_space<vmem>>, vector<128x16xf32>
    tpu.vector_store %arg10[%c0_11, %c0_12], %15 {strides = array<i32>} : memref<128x16xf32, #tpu.memory_space<vmem>>, vector<128x16xf32>,
    %c0_i32_13 = arith.constant 0 : i32
    %17 = arith.cmpi eq, %arg2, %c0_i32_13 : i32
    %18 = arith.extui %17 : i1 to i32
    %c0_i32_14 = arith.constant 0 : i32
    %19 = arith.cmpi ne, %18, %c0_i32_14 : i32
    scf.if %19 {
      %c0_15 = arith.constant 0 : index
      %c0_16 = arith.constant 0 : index
      %20 = vector.load %arg10[%c0_15, %c0_16] : memref<128x16xf32, #tpu.memory_space<vmem>>, vector<128x16xf32>
      %c0_17 = arith.constant 0 : index
      %c0_18 = arith.constant 0 : index
      %21 = vector.load %arg7[%c0_17, %c0_18] : memref<1x16xf32, #tpu.memory_space<vmem>>, vector<1x16xf32>
      %22 = vector.broadcast %21 : vector<1x16xf32> to vector<128x16xf32>
      %23 = arith.mulf %20, %22 : vector<128x16xf32>
      %c0_19 = arith.constant 0 : index
      %c0_20 = arith.constant 0 : index
      %24 = vector.load %arg8[%c0_19, %c0_20] : memref<1x16xf32, #tpu.memory_space<vmem>>, vector<1x16xf32>
      %25 = vector.broadcast %24 : vector<1x16xf32> to vector<128x16xf32>
      %26 = arith.addf %23, %25 : vector<128x16xf32>
      %cst_21 = arith.constant 0.000000e+00 : f32
      %27 = vector.broadcast %cst_21 : f32 to vector<128x16xf32>
      %28 = arith.maximumf %26, %27 : vector<128x16xf32>
      %29 = arith.truncf %28 : vector<128x16xf32> to vector<128x16xbf16>
      %c0_22 = arith.constant 0 : index
      %c0_23 = arith.constant 0 : index
      %30 = vector.load %arg9[%c0_22, %c0_23] : memref<128x16xbf16, #tpu.memory_space<vmem>>, vector<128x16xbf16>
      tpu.vector_store %arg9[%c0_22, %c0_23], %29 {strides = array<i32>} : memref<128x16xbf16, #tpu.memory_space<vmem>>, vector<128x16xbf16>,
    } else {
    }
    return
  }
  func.func @transform_0(%arg0: i32, %arg1: i32, %arg2: i32) -> (i32, i32) {
    %c0_i32 = arith.constant 0 : i32
    return %arg0, %arg2 : i32, i32
  }
  func.func @transform_1(%arg0: i32, %arg1: i32, %arg2: i32) -> (i32, i32) {
    %c0_i32 = arith.constant 0 : i32
    return %arg2, %arg1 : i32, i32
  }
  func.func @transform_2(%arg0: i32, %arg1: i32, %arg2: i32) -> (i32, i32) {
    %c0_i32 = arith.constant 0 : i32
    %c0_i32_0 = arith.constant 0 : i32
    return %c0_i32, %arg2 : i32, i32
  }
  func.func @transform_3(%arg0: i32, %arg1: i32, %arg2: i32) -> (i32, i32) {
    %c0_i32 = arith.constant 0 : i32
    %c0_i32_0 = arith.constant 0 : i32
    return %c0_i32, %arg2 : i32, i32
  }
  func.func @transform_4(%arg0: i32, %arg1: i32, %arg2: i32) -> (i32, i32) {
    %c0_i32 = arith.constant 0 : i32
    %c0_i32_0 = arith.constant 0 : i32
    return %c0_i32, %arg1 : i32, i32
  }
  func.func @transform_5(%arg0: i32, %arg1: i32, %arg2: i32) -> (i32, i32) {
    %c0_i32 = arith.constant 0 : i32
    %c0_i32_0 = arith.constant 0 : i32
    return %c0_i32, %arg1 : i32, i32
  }
  func.func @transform_6(%arg0: i32, %arg1: i32, %arg2: i32) -> (i32, i32) {
    %c0_i32 = arith.constant 0 : i32
    return %arg0, %arg1 : i32, i32
  }
}

module attributes {stable_mosaic.version = 11 : i64} {
  func.func @_conv3x3_kernel(%arg0: i32, %arg1: i32, %arg2: i32, %arg3: memref<1x1x38x16xbf16, #tpu.memory_space<vmem>>, %arg4: memref<1x144x8xbf16, #tpu.memory_space<vmem>>, %arg5: memref<1x1x24x8xbf16, #tpu.memory_space<vmem>>, %arg6: memref<24x8xf32, #tpu.memory_space<vmem>>) attributes {dimension_semantics = [#tpu.dimension_semantics<parallel>, #tpu.dimension_semantics<parallel>, #tpu.dimension_semantics<arbitrary>], iteration_bounds = array<i64: 2, 4, 3>, scalar_prefetch = 0 : i64, scratch_operands = 1 : i64, tpu.core_type = #tpu.core_type<tc>, window_params = [{transform_indices = @transform_0, window_bounds = array<i64: 1, 1, 38, 16>}, {transform_indices = @transform_1, window_bounds = array<i64: 1, 144, 8>}, {transform_indices = @transform_2, window_bounds = array<i64: 1, 1, 24, 8>}]} {
    %c0_i32 = arith.constant 0 : i32
    %0 = arith.cmpi eq, %arg2, %c0_i32 : i32
    %1 = arith.extui %0 : i1 to i32
    %c0_i32_0 = arith.constant 0 : i32
    %2 = arith.cmpi ne, %1, %c0_i32_0 : i32
    scf.if %2 {
      %cst_12 = arith.constant 0.000000e+00 : f32
      %24 = vector.broadcast %cst_12 : f32 to vector<24x8xf32>
      %c0_13 = arith.constant 0 : index
      %c0_14 = arith.constant 0 : index
      %25 = vector.load %arg6[%c0_13, %c0_14] : memref<24x8xf32, #tpu.memory_space<vmem>>, vector<24x8xf32>
      tpu.vector_store %arg6[%c0_13, %c0_14], %24 {strides = array<i32>} : memref<24x8xf32, #tpu.memory_space<vmem>>, vector<24x8xf32>,
    } else {
    }
    %c0 = arith.constant 0 : index
    %c0_1 = arith.constant 0 : index
    %c0_2 = arith.constant 0 : index
    %c0_3 = arith.constant 0 : index
    %3 = vector.load %arg3[%c0, %c0_1, %c0_2, %c0_3] : memref<1x1x38x16xbf16, #tpu.memory_space<vmem>>, vector<1x1x38x16xbf16>
    %4 = vector.shape_cast %3 : vector<1x1x38x16xbf16> to vector<38x16xbf16>
    %5 = vector.extract_strided_slice %4 {offsets = [0, 0], sizes = [24, 16], strides = [1, 1]} : vector<38x16xbf16> to vector<24x16xbf16>
    %6 = vector.extract_strided_slice %4 {offsets = [1, 0], sizes = [24, 16], strides = [1, 1]} : vector<38x16xbf16> to vector<24x16xbf16>
    %7 = vector.extract_strided_slice %4 {offsets = [2, 0], sizes = [24, 16], strides = [1, 1]} : vector<38x16xbf16> to vector<24x16xbf16>
    %8 = vector.extract_strided_slice %4 {offsets = [6, 0], sizes = [24, 16], strides = [1, 1]} : vector<38x16xbf16> to vector<24x16xbf16>
    %9 = vector.extract_strided_slice %4 {offsets = [7, 0], sizes = [24, 16], strides = [1, 1]} : vector<38x16xbf16> to vector<24x16xbf16>
    %10 = vector.extract_strided_slice %4 {offsets = [8, 0], sizes = [24, 16], strides = [1, 1]} : vector<38x16xbf16> to vector<24x16xbf16>
    %11 = vector.extract_strided_slice %4 {offsets = [12, 0], sizes = [24, 16], strides = [1, 1]} : vector<38x16xbf16> to vector<24x16xbf16>
    %12 = vector.extract_strided_slice %4 {offsets = [13, 0], sizes = [24, 16], strides = [1, 1]} : vector<38x16xbf16> to vector<24x16xbf16>
    %13 = vector.extract_strided_slice %4 {offsets = [14, 0], sizes = [24, 16], strides = [1, 1]} : vector<38x16xbf16> to vector<24x16xbf16>
    %14 = tpu.concatenate %5, %6, %7, %8, %9, %10, %11, %12, %13 in 1 : vector<24x16xbf16>, vector<24x16xbf16>, vector<24x16xbf16>, vector<24x16xbf16>, vector<24x16xbf16>, vector<24x16xbf16>, vector<24x16xbf16>, vector<24x16xbf16>, vector<24x16xbf16> -> vector<24x144xbf16>
    %c0_4 = arith.constant 0 : index
    %c0_5 = arith.constant 0 : index
    %15 = vector.load %arg6[%c0_4, %c0_5] : memref<24x8xf32, #tpu.memory_space<vmem>>, vector<24x8xf32>
    %c0_6 = arith.constant 0 : index
    %c0_7 = arith.constant 0 : index
    %c0_8 = arith.constant 0 : index
    %16 = vector.load %arg4[%c0_6, %c0_7, %c0_8] : memref<1x144x8xbf16, #tpu.memory_space<vmem>>, vector<1x144x8xbf16>
    %17 = vector.shape_cast %16 : vector<1x144x8xbf16> to vector<144x8xbf16>
    %cst = arith.constant dense<0.000000e+00> : vector<24x8xf32>
    %18 = tpu.matmul %14, %17, %cst {dimension_numbers = #tpu.dot_dimension_numbers<[1], [0], [0], [1], [0, 0, 1, 1], [], []>} : vector<24x144xbf16>, vector<144x8xbf16>, vector<24x8xf32> -> vector<24x8xf32>
    %19 = arith.addf %15, %18 : vector<24x8xf32>
    %c0_9 = arith.constant 0 : index
    %c0_10 = arith.constant 0 : index
    %20 = vector.load %arg6[%c0_9, %c0_10] : memref<24x8xf32, #tpu.memory_space<vmem>>, vector<24x8xf32>
    tpu.vector_store %arg6[%c0_9, %c0_10], %19 {strides = array<i32>} : memref<24x8xf32, #tpu.memory_space<vmem>>, vector<24x8xf32>,
    %c2_i32 = arith.constant 2 : i32
    %21 = arith.cmpi eq, %arg2, %c2_i32 : i32
    %22 = arith.extui %21 : i1 to i32
    %c0_i32_11 = arith.constant 0 : i32
    %23 = arith.cmpi ne, %22, %c0_i32_11 : i32
    scf.if %23 {
      %c0_12 = arith.constant 0 : index
      %c0_13 = arith.constant 0 : index
      %24 = vector.load %arg6[%c0_12, %c0_13] : memref<24x8xf32, #tpu.memory_space<vmem>>, vector<24x8xf32>
      %25 = arith.truncf %24 : vector<24x8xf32> to vector<24x8xbf16>
      %c0_14 = arith.constant 0 : index
      %c0_15 = arith.constant 0 : index
      %c0_16 = arith.constant 0 : index
      %c0_17 = arith.constant 0 : index
      %26 = vector.load %arg5[%c0_14, %c0_15, %c0_16, %c0_17] : memref<1x1x24x8xbf16, #tpu.memory_space<vmem>>, vector<1x1x24x8xbf16>
      %27 = vector.shape_cast %26 : vector<1x1x24x8xbf16> to vector<24x8xbf16>
      %28 = vector.shape_cast %25 : vector<24x8xbf16> to vector<1x1x24x8xbf16>
      tpu.vector_store %arg5[%c0_14, %c0_15, %c0_16, %c0_17], %28 {strides = array<i32>} : memref<1x1x24x8xbf16, #tpu.memory_space<vmem>>, vector<1x1x24x8xbf16>,
    } else {
    }
    return
  }
  func.func @transform_0(%arg0: i32, %arg1: i32, %arg2: i32) -> (i32, i32, i32, i32) {
    %0 = arith.addi %arg1, %arg2 : i32
    %c0_i32 = arith.constant 0 : i32
    %c0_i32_0 = arith.constant 0 : i32
    %c0_i32_1 = arith.constant 0 : i32
    return %arg0, %0, %c0_i32, %c0_i32_0 : i32, i32, i32, i32
  }
  func.func @transform_1(%arg0: i32, %arg1: i32, %arg2: i32) -> (i32, i32, i32) {
    %c0_i32 = arith.constant 0 : i32
    %c0_i32_0 = arith.constant 0 : i32
    %c0_i32_1 = arith.constant 0 : i32
    return %arg2, %c0_i32, %c0_i32_0 : i32, i32, i32
  }
  func.func @transform_2(%arg0: i32, %arg1: i32, %arg2: i32) -> (i32, i32, i32, i32) {
    %c0_i32 = arith.constant 0 : i32
    %c0_i32_0 = arith.constant 0 : i32
    %c0_i32_1 = arith.constant 0 : i32
    return %arg0, %arg1, %c0_i32, %c0_i32_0 : i32, i32, i32, i32
  }
}

module attributes {stable_mosaic.version = 11 : i64} {
  func.func @_gemm_kernel(%arg0: i32, %arg1: i32, %arg2: i32, %arg3: memref<128x16xbf16, #tpu.memory_space<vmem>>, %arg4: memref<16x16xbf16, #tpu.memory_space<vmem>>, %arg5: memref<1x16xbf16, #tpu.memory_space<vmem>>, %arg6: memref<1x16xbf16, #tpu.memory_space<vmem>>, %arg7: memref<1x16xf32, #tpu.memory_space<vmem>>, %arg8: memref<1x16xf32, #tpu.memory_space<vmem>>, %arg9: memref<128x16xbf16, #tpu.memory_space<vmem>>, %arg10: memref<128x16xf32, #tpu.memory_space<vmem>>) attributes {dimension_semantics = [#tpu.dimension_semantics<parallel>, #tpu.dimension_semantics<parallel>, #tpu.dimension_semantics<arbitrary>], iteration_bounds = array<i64: 1, 1, 1>, scalar_prefetch = 0 : i64, scratch_operands = 1 : i64, tpu.core_type = #tpu.core_type<tc>, window_params = [{transform_indices = @transform_0, window_bounds = array<i64: 128, 16>}, {transform_indices = @transform_1, window_bounds = array<i64: 16, 16>}, {transform_indices = @transform_2, window_bounds = array<i64: 1, 16>}, {transform_indices = @transform_3, window_bounds = array<i64: 1, 16>}, {transform_indices = @transform_4, window_bounds = array<i64: 1, 16>}, {transform_indices = @transform_5, window_bounds = array<i64: 1, 16>}, {transform_indices = @transform_6, window_bounds = array<i64: 128, 16>}]} {
    %c0_i32 = arith.constant 0 : i32
    %0 = arith.cmpi eq, %arg2, %c0_i32 : i32
    %1 = arith.extui %0 : i1 to i32
    %c0_i32_0 = arith.constant 0 : i32
    %2 = arith.cmpi ne, %1, %c0_i32_0 : i32
    scf.if %2 {
      %cst_15 = arith.constant 0.000000e+00 : f32
      %20 = vector.broadcast %cst_15 : f32 to vector<128x16xf32>
      %c0_16 = arith.constant 0 : index
      %c0_17 = arith.constant 0 : index
      %21 = vector.load %arg10[%c0_16, %c0_17] : memref<128x16xf32, #tpu.memory_space<vmem>>, vector<128x16xf32>
      tpu.vector_store %arg10[%c0_16, %c0_17], %20 {strides = array<i32>} : memref<128x16xf32, #tpu.memory_space<vmem>>, vector<128x16xf32>,
    } else {
    }
    %c0 = arith.constant 0 : index
    %c0_1 = arith.constant 0 : index
    %3 = vector.load %arg3[%c0, %c0_1] : memref<128x16xbf16, #tpu.memory_space<vmem>>, vector<128x16xbf16>
    %c0_2 = arith.constant 0 : index
    %c0_3 = arith.constant 0 : index
    %4 = vector.load %arg5[%c0_2, %c0_3] : memref<1x16xbf16, #tpu.memory_space<vmem>>, vector<1x16xbf16>
    %5 = vector.broadcast %4 : vector<1x16xbf16> to vector<128x16xbf16>
    %6 = arith.mulf %3, %5 : vector<128x16xbf16>
    %c0_4 = arith.constant 0 : index
    %c0_5 = arith.constant 0 : index
    %7 = vector.load %arg6[%c0_4, %c0_5] : memref<1x16xbf16, #tpu.memory_space<vmem>>, vector<1x16xbf16>
    %8 = vector.broadcast %7 : vector<1x16xbf16> to vector<128x16xbf16>
    %9 = arith.addf %6, %8 : vector<128x16xbf16>
    %cst = arith.constant 0.000000e+00 : bf16
    %10 = vector.broadcast %cst : bf16 to vector<128x16xbf16>
    %11 = arith.maximumf %9, %10 : vector<128x16xbf16>
    %c0_6 = arith.constant 0 : index
    %c0_7 = arith.constant 0 : index
    %12 = vector.load %arg10[%c0_6, %c0_7] : memref<128x16xf32, #tpu.memory_space<vmem>>, vector<128x16xf32>
    %c0_8 = arith.constant 0 : index
    %c0_9 = arith.constant 0 : index
    %13 = vector.load %arg4[%c0_8, %c0_9] : memref<16x16xbf16, #tpu.memory_space<vmem>>, vector<16x16xbf16>
    %cst_10 = arith.constant dense<0.000000e+00> : vector<128x16xf32>
    %14 = tpu.matmul %11, %13, %cst_10 {dimension_numbers = #tpu.dot_dimension_numbers<[1], [0], [0], [1], [0, 0, 1, 1], [], []>} : vector<128x16xbf16>, vector<16x16xbf16>, vector<128x16xf32> -> vector<128x16xf32>
    %15 = arith.addf %12, %14 : vector<128x16xf32>
    %c0_11 = arith.constant 0 : index
    %c0_12 = arith.constant 0 : index
    %16 = vector.load %arg10[%c0_11, %c0_12] : memref<128x16xf32, #tpu.memory_space<vmem>>, vector<128x16xf32>
    tpu.vector_store %arg10[%c0_11, %c0_12], %15 {strides = array<i32>} : memref<128x16xf32, #tpu.memory_space<vmem>>, vector<128x16xf32>,
    %c0_i32_13 = arith.constant 0 : i32
    %17 = arith.cmpi eq, %arg2, %c0_i32_13 : i32
    %18 = arith.extui %17 : i1 to i32
    %c0_i32_14 = arith.constant 0 : i32
    %19 = arith.cmpi ne, %18, %c0_i32_14 : i32
    scf.if %19 {
      %c0_15 = arith.constant 0 : index
      %c0_16 = arith.constant 0 : index
      %20 = vector.load %arg10[%c0_15, %c0_16] : memref<128x16xf32, #tpu.memory_space<vmem>>, vector<128x16xf32>
      %c0_17 = arith.constant 0 : index
      %c0_18 = arith.constant 0 : index
      %21 = vector.load %arg7[%c0_17, %c0_18] : memref<1x16xf32, #tpu.memory_space<vmem>>, vector<1x16xf32>
      %22 = vector.broadcast %21 : vector<1x16xf32> to vector<128x16xf32>
      %23 = arith.mulf %20, %22 : vector<128x16xf32>
      %c0_19 = arith.constant 0 : index
      %c0_20 = arith.constant 0 : index
      %24 = vector.load %arg8[%c0_19, %c0_20] : memref<1x16xf32, #tpu.memory_space<vmem>>, vector<1x16xf32>
      %25 = vector.broadcast %24 : vector<1x16xf32> to vector<128x16xf32>
      %26 = arith.addf %23, %25 : vector<128x16xf32>
      %cst_21 = arith.constant 0.000000e+00 : f32
      %27 = vector.broadcast %cst_21 : f32 to vector<128x16xf32>
      %28 = arith.maximumf %26, %27 : vector<128x16xf32>
      %29 = arith.truncf %28 : vector<128x16xf32> to vector<128x16xbf16>
      %c0_22 = arith.constant 0 : index
      %c0_23 = arith.constant 0 : index
      %30 = vector.load %arg9[%c0_22, %c0_23] : memref<128x16xbf16, #tpu.memory_space<vmem>>, vector<128x16xbf16>
      tpu.vector_store %arg9[%c0_22, %c0_23], %29 {strides = array<i32>} : memref<128x16xbf16, #tpu.memory_space<vmem>>, vector<128x16xbf16>,
    } else {
    }
    return
  }
  func.func @transform_0(%arg0: i32, %arg1: i32, %arg2: i32) -> (i32, i32) {
    %c0_i32 = arith.constant 0 : i32
    return %arg0, %arg2 : i32, i32
  }
  func.func @transform_1(%arg0: i32, %arg1: i32, %arg2: i32) -> (i32, i32) {
    %c0_i32 = arith.constant 0 : i32
    return %arg2, %arg1 : i32, i32
  }
  func.func @transform_2(%arg0: i32, %arg1: i32, %arg2: i32) -> (i32, i32) {
    %c0_i32 = arith.constant 0 : i32
    %c0_i32_0 = arith.constant 0 : i32
    return %c0_i32, %arg2 : i32, i32
  }
  func.func @transform_3(%arg0: i32, %arg1: i32, %arg2: i32) -> (i32, i32) {
    %c0_i32 = arith.constant 0 : i32
    %c0_i32_0 = arith.constant 0 : i32
    return %c0_i32, %arg2 : i32, i32
  }
  func.func @transform_4(%arg0: i32, %arg1: i32, %arg2: i32) -> (i32, i32) {
    %c0_i32 = arith.constant 0 : i32
    %c0_i32_0 = arith.constant 0 : i32
    return %c0_i32, %arg1 : i32, i32
  }
  func.func @transform_5(%arg0: i32, %arg1: i32, %arg2: i32) -> (i32, i32) {
    %c0_i32 = arith.constant 0 : i32
    %c0_i32_0 = arith.constant 0 : i32
    return %c0_i32, %arg1 : i32, i32
  }
  func.func @transform_6(%arg0: i32, %arg1: i32, %arg2: i32) -> (i32, i32) {
    %c0_i32 = arith.constant 0 : i32
    return %arg0, %arg1 : i32, i32
  }
}

module attributes {stable_mosaic.version = 11 : i64} {
  func.func @_gemm_kernel(%arg0: i32, %arg1: i32, %arg2: i32, %arg3: memref<128x24xbf16, #tpu.memory_space<vmem>>, %arg4: memref<24x12xbf16, #tpu.memory_space<vmem>>, %arg5: memref<1x24xbf16, #tpu.memory_space<vmem>>, %arg6: memref<1x24xbf16, #tpu.memory_space<vmem>>, %arg7: memref<128x12xbf16, #tpu.memory_space<vmem>>, %arg8: memref<128x12xf32, #tpu.memory_space<vmem>>) attributes {dimension_semantics = [#tpu.dimension_semantics<parallel>, #tpu.dimension_semantics<parallel>, #tpu.dimension_semantics<arbitrary>], iteration_bounds = array<i64: 1, 1, 1>, scalar_prefetch = 0 : i64, scratch_operands = 1 : i64, tpu.core_type = #tpu.core_type<tc>, window_params = [{transform_indices = @transform_0, window_bounds = array<i64: 128, 24>}, {transform_indices = @transform_1, window_bounds = array<i64: 24, 12>}, {transform_indices = @transform_2, window_bounds = array<i64: 1, 24>}, {transform_indices = @transform_3, window_bounds = array<i64: 1, 24>}, {transform_indices = @transform_4, window_bounds = array<i64: 128, 12>}]} {
    %c0_i32 = arith.constant 0 : i32
    %0 = arith.cmpi eq, %arg2, %c0_i32 : i32
    %1 = arith.extui %0 : i1 to i32
    %c0_i32_0 = arith.constant 0 : i32
    %2 = arith.cmpi ne, %1, %c0_i32_0 : i32
    scf.if %2 {
      %cst_15 = arith.constant 0.000000e+00 : f32
      %20 = vector.broadcast %cst_15 : f32 to vector<128x12xf32>
      %c0_16 = arith.constant 0 : index
      %c0_17 = arith.constant 0 : index
      %21 = vector.load %arg8[%c0_16, %c0_17] : memref<128x12xf32, #tpu.memory_space<vmem>>, vector<128x12xf32>
      tpu.vector_store %arg8[%c0_16, %c0_17], %20 {strides = array<i32>} : memref<128x12xf32, #tpu.memory_space<vmem>>, vector<128x12xf32>,
    } else {
    }
    %c0 = arith.constant 0 : index
    %c0_1 = arith.constant 0 : index
    %3 = vector.load %arg3[%c0, %c0_1] : memref<128x24xbf16, #tpu.memory_space<vmem>>, vector<128x24xbf16>
    %c0_2 = arith.constant 0 : index
    %c0_3 = arith.constant 0 : index
    %4 = vector.load %arg5[%c0_2, %c0_3] : memref<1x24xbf16, #tpu.memory_space<vmem>>, vector<1x24xbf16>
    %5 = vector.broadcast %4 : vector<1x24xbf16> to vector<128x24xbf16>
    %6 = arith.mulf %3, %5 : vector<128x24xbf16>
    %c0_4 = arith.constant 0 : index
    %c0_5 = arith.constant 0 : index
    %7 = vector.load %arg6[%c0_4, %c0_5] : memref<1x24xbf16, #tpu.memory_space<vmem>>, vector<1x24xbf16>
    %8 = vector.broadcast %7 : vector<1x24xbf16> to vector<128x24xbf16>
    %9 = arith.addf %6, %8 : vector<128x24xbf16>
    %cst = arith.constant 0.000000e+00 : bf16
    %10 = vector.broadcast %cst : bf16 to vector<128x24xbf16>
    %11 = arith.maximumf %9, %10 : vector<128x24xbf16>
    %c0_6 = arith.constant 0 : index
    %c0_7 = arith.constant 0 : index
    %12 = vector.load %arg8[%c0_6, %c0_7] : memref<128x12xf32, #tpu.memory_space<vmem>>, vector<128x12xf32>
    %c0_8 = arith.constant 0 : index
    %c0_9 = arith.constant 0 : index
    %13 = vector.load %arg4[%c0_8, %c0_9] : memref<24x12xbf16, #tpu.memory_space<vmem>>, vector<24x12xbf16>
    %cst_10 = arith.constant dense<0.000000e+00> : vector<128x12xf32>
    %14 = tpu.matmul %11, %13, %cst_10 {dimension_numbers = #tpu.dot_dimension_numbers<[1], [0], [0], [1], [0, 0, 1, 1], [], []>} : vector<128x24xbf16>, vector<24x12xbf16>, vector<128x12xf32> -> vector<128x12xf32>
    %15 = arith.addf %12, %14 : vector<128x12xf32>
    %c0_11 = arith.constant 0 : index
    %c0_12 = arith.constant 0 : index
    %16 = vector.load %arg8[%c0_11, %c0_12] : memref<128x12xf32, #tpu.memory_space<vmem>>, vector<128x12xf32>
    tpu.vector_store %arg8[%c0_11, %c0_12], %15 {strides = array<i32>} : memref<128x12xf32, #tpu.memory_space<vmem>>, vector<128x12xf32>,
    %c0_i32_13 = arith.constant 0 : i32
    %17 = arith.cmpi eq, %arg2, %c0_i32_13 : i32
    %18 = arith.extui %17 : i1 to i32
    %c0_i32_14 = arith.constant 0 : i32
    %19 = arith.cmpi ne, %18, %c0_i32_14 : i32
    scf.if %19 {
      %c0_15 = arith.constant 0 : index
      %c0_16 = arith.constant 0 : index
      %20 = vector.load %arg8[%c0_15, %c0_16] : memref<128x12xf32, #tpu.memory_space<vmem>>, vector<128x12xf32>
      %21 = arith.truncf %20 : vector<128x12xf32> to vector<128x12xbf16>
      %c0_17 = arith.constant 0 : index
      %c0_18 = arith.constant 0 : index
      %22 = vector.load %arg7[%c0_17, %c0_18] : memref<128x12xbf16, #tpu.memory_space<vmem>>, vector<128x12xbf16>
      tpu.vector_store %arg7[%c0_17, %c0_18], %21 {strides = array<i32>} : memref<128x12xbf16, #tpu.memory_space<vmem>>, vector<128x12xbf16>,
    } else {
    }
    return
  }
  func.func @transform_0(%arg0: i32, %arg1: i32, %arg2: i32) -> (i32, i32) {
    %c0_i32 = arith.constant 0 : i32
    return %arg0, %arg2 : i32, i32
  }
  func.func @transform_1(%arg0: i32, %arg1: i32, %arg2: i32) -> (i32, i32) {
    %c0_i32 = arith.constant 0 : i32
    return %arg2, %arg1 : i32, i32
  }
  func.func @transform_2(%arg0: i32, %arg1: i32, %arg2: i32) -> (i32, i32) {
    %c0_i32 = arith.constant 0 : i32
    %c0_i32_0 = arith.constant 0 : i32
    return %c0_i32, %arg2 : i32, i32
  }
  func.func @transform_3(%arg0: i32, %arg1: i32, %arg2: i32) -> (i32, i32) {
    %c0_i32 = arith.constant 0 : i32
    %c0_i32_0 = arith.constant 0 : i32
    return %c0_i32, %arg2 : i32, i32
  }
  func.func @transform_4(%arg0: i32, %arg1: i32, %arg2: i32) -> (i32, i32) {
    %c0_i32 = arith.constant 0 : i32
    return %arg0, %arg1 : i32, i32
  }
}

module attributes {stable_mosaic.version = 11 : i64} {
  func.func @_pool_mean_kernel(%arg0: i32, %arg1: memref<8x8x24xbf16, #tpu.memory_space<vmem>>, %arg2: memref<8x24xbf16, #tpu.memory_space<vmem>>) attributes {dimension_semantics = [#tpu.dimension_semantics<parallel>], iteration_bounds = array<i64: 1>, scalar_prefetch = 0 : i64, scratch_operands = 0 : i64, tpu.core_type = #tpu.core_type<tc>, window_params = [{transform_indices = @transform_0, window_bounds = array<i64: 8, 8, 24>}, {transform_indices = @transform_1, window_bounds = array<i64: 8, 24>}]} {
    %c0 = arith.constant 0 : index
    %c0_0 = arith.constant 0 : index
    %c0_1 = arith.constant 0 : index
    %0 = vector.load %arg1[%c0, %c0_0, %c0_1] : memref<8x8x24xbf16, #tpu.memory_space<vmem>>, vector<8x8x24xbf16>
    %1 = arith.extf %0 : vector<8x8x24xbf16> to vector<8x8x24xf32>
    %cst = arith.constant dense<0.000000e+00> : vector<8x24xf32>
    %2 = vector.multi_reduction <add>, %1, %cst [1] : vector<8x8x24xf32> to vector<8x24xf32>
    %cst_2 = arith.constant 1.250000e-01 : f32
    %3 = vector.broadcast %cst_2 : f32 to vector<8x24xf32>
    %4 = arith.mulf %2, %3 : vector<8x24xf32>
    %5 = arith.truncf %4 : vector<8x24xf32> to vector<8x24xbf16>
    %c0_3 = arith.constant 0 : index
    %c0_4 = arith.constant 0 : index
    %6 = vector.load %arg2[%c0_3, %c0_4] : memref<8x24xbf16, #tpu.memory_space<vmem>>, vector<8x24xbf16>
    tpu.vector_store %arg2[%c0_3, %c0_4], %5 {strides = array<i32>} : memref<8x24xbf16, #tpu.memory_space<vmem>>, vector<8x24xbf16>,
    return
  }
  func.func @transform_0(%arg0: i32) -> (i32, i32, i32) {
    %c0_i32 = arith.constant 0 : i32
    %c0_i32_0 = arith.constant 0 : i32
    %c0_i32_1 = arith.constant 0 : i32
    return %arg0, %c0_i32, %c0_i32_0 : i32, i32, i32
  }
  func.func @transform_1(%arg0: i32) -> (i32, i32) {
    %c0_i32 = arith.constant 0 : i32
    %c0_i32_0 = arith.constant 0 : i32
    return %arg0, %c0_i32 : i32, i32
  }
}

module attributes {stable_mosaic.version = 11 : i64} {
  func.func @_gemm_kernel(%arg0: i32, %arg1: i32, %arg2: i32, %arg3: memref<16x12xbf16, #tpu.memory_space<vmem>>, %arg4: memref<12x16xbf16, #tpu.memory_space<vmem>>, %arg5: memref<1x12xbf16, #tpu.memory_space<vmem>>, %arg6: memref<1x12xbf16, #tpu.memory_space<vmem>>, %arg7: memref<1x16xf32, #tpu.memory_space<vmem>>, %arg8: memref<1x16xf32, #tpu.memory_space<vmem>>, %arg9: memref<16x16xbf16, #tpu.memory_space<vmem>>, %arg10: memref<16x16xf32, #tpu.memory_space<vmem>>) attributes {dimension_semantics = [#tpu.dimension_semantics<parallel>, #tpu.dimension_semantics<parallel>, #tpu.dimension_semantics<arbitrary>], iteration_bounds = array<i64: 1, 1, 1>, scalar_prefetch = 0 : i64, scratch_operands = 1 : i64, tpu.core_type = #tpu.core_type<tc>, window_params = [{transform_indices = @transform_0, window_bounds = array<i64: 16, 12>}, {transform_indices = @transform_1, window_bounds = array<i64: 12, 16>}, {transform_indices = @transform_2, window_bounds = array<i64: 1, 12>}, {transform_indices = @transform_3, window_bounds = array<i64: 1, 12>}, {transform_indices = @transform_4, window_bounds = array<i64: 1, 16>}, {transform_indices = @transform_5, window_bounds = array<i64: 1, 16>}, {transform_indices = @transform_6, window_bounds = array<i64: 16, 16>}]} {
    %c0_i32 = arith.constant 0 : i32
    %0 = arith.cmpi eq, %arg2, %c0_i32 : i32
    %1 = arith.extui %0 : i1 to i32
    %c0_i32_0 = arith.constant 0 : i32
    %2 = arith.cmpi ne, %1, %c0_i32_0 : i32
    scf.if %2 {
      %cst_15 = arith.constant 0.000000e+00 : f32
      %20 = vector.broadcast %cst_15 : f32 to vector<16x16xf32>
      %c0_16 = arith.constant 0 : index
      %c0_17 = arith.constant 0 : index
      %21 = vector.load %arg10[%c0_16, %c0_17] : memref<16x16xf32, #tpu.memory_space<vmem>>, vector<16x16xf32>
      tpu.vector_store %arg10[%c0_16, %c0_17], %20 {strides = array<i32>} : memref<16x16xf32, #tpu.memory_space<vmem>>, vector<16x16xf32>,
    } else {
    }
    %c0 = arith.constant 0 : index
    %c0_1 = arith.constant 0 : index
    %3 = vector.load %arg3[%c0, %c0_1] : memref<16x12xbf16, #tpu.memory_space<vmem>>, vector<16x12xbf16>
    %c0_2 = arith.constant 0 : index
    %c0_3 = arith.constant 0 : index
    %4 = vector.load %arg5[%c0_2, %c0_3] : memref<1x12xbf16, #tpu.memory_space<vmem>>, vector<1x12xbf16>
    %5 = vector.broadcast %4 : vector<1x12xbf16> to vector<16x12xbf16>
    %6 = arith.mulf %3, %5 : vector<16x12xbf16>
    %c0_4 = arith.constant 0 : index
    %c0_5 = arith.constant 0 : index
    %7 = vector.load %arg6[%c0_4, %c0_5] : memref<1x12xbf16, #tpu.memory_space<vmem>>, vector<1x12xbf16>
    %8 = vector.broadcast %7 : vector<1x12xbf16> to vector<16x12xbf16>
    %9 = arith.addf %6, %8 : vector<16x12xbf16>
    %cst = arith.constant 0.000000e+00 : bf16
    %10 = vector.broadcast %cst : bf16 to vector<16x12xbf16>
    %11 = arith.maximumf %9, %10 : vector<16x12xbf16>
    %c0_6 = arith.constant 0 : index
    %c0_7 = arith.constant 0 : index
    %12 = vector.load %arg10[%c0_6, %c0_7] : memref<16x16xf32, #tpu.memory_space<vmem>>, vector<16x16xf32>
    %c0_8 = arith.constant 0 : index
    %c0_9 = arith.constant 0 : index
    %13 = vector.load %arg4[%c0_8, %c0_9] : memref<12x16xbf16, #tpu.memory_space<vmem>>, vector<12x16xbf16>
    %cst_10 = arith.constant dense<0.000000e+00> : vector<16x16xf32>
    %14 = tpu.matmul %11, %13, %cst_10 {dimension_numbers = #tpu.dot_dimension_numbers<[1], [0], [0], [1], [0, 0, 1, 1], [], []>} : vector<16x12xbf16>, vector<12x16xbf16>, vector<16x16xf32> -> vector<16x16xf32>
    %15 = arith.addf %12, %14 : vector<16x16xf32>
    %c0_11 = arith.constant 0 : index
    %c0_12 = arith.constant 0 : index
    %16 = vector.load %arg10[%c0_11, %c0_12] : memref<16x16xf32, #tpu.memory_space<vmem>>, vector<16x16xf32>
    tpu.vector_store %arg10[%c0_11, %c0_12], %15 {strides = array<i32>} : memref<16x16xf32, #tpu.memory_space<vmem>>, vector<16x16xf32>,
    %c0_i32_13 = arith.constant 0 : i32
    %17 = arith.cmpi eq, %arg2, %c0_i32_13 : i32
    %18 = arith.extui %17 : i1 to i32
    %c0_i32_14 = arith.constant 0 : i32
    %19 = arith.cmpi ne, %18, %c0_i32_14 : i32
    scf.if %19 {
      %c0_15 = arith.constant 0 : index
      %c0_16 = arith.constant 0 : index
      %20 = vector.load %arg10[%c0_15, %c0_16] : memref<16x16xf32, #tpu.memory_space<vmem>>, vector<16x16xf32>
      %c0_17 = arith.constant 0 : index
      %c0_18 = arith.constant 0 : index
      %21 = vector.load %arg7[%c0_17, %c0_18] : memref<1x16xf32, #tpu.memory_space<vmem>>, vector<1x16xf32>
      %22 = vector.broadcast %21 : vector<1x16xf32> to vector<16x16xf32>
      %23 = arith.mulf %20, %22 : vector<16x16xf32>
      %c0_19 = arith.constant 0 : index
      %c0_20 = arith.constant 0 : index
      %24 = vector.load %arg8[%c0_19, %c0_20] : memref<1x16xf32, #tpu.memory_space<vmem>>, vector<1x16xf32>
      %25 = vector.broadcast %24 : vector<1x16xf32> to vector<16x16xf32>
      %26 = arith.addf %23, %25 : vector<16x16xf32>
      %cst_21 = arith.constant 0.000000e+00 : f32
      %27 = vector.broadcast %cst_21 : f32 to vector<16x16xf32>
      %28 = arith.maximumf %26, %27 : vector<16x16xf32>
      %29 = arith.truncf %28 : vector<16x16xf32> to vector<16x16xbf16>
      %c0_22 = arith.constant 0 : index
      %c0_23 = arith.constant 0 : index
      %30 = vector.load %arg9[%c0_22, %c0_23] : memref<16x16xbf16, #tpu.memory_space<vmem>>, vector<16x16xbf16>
      tpu.vector_store %arg9[%c0_22, %c0_23], %29 {strides = array<i32>} : memref<16x16xbf16, #tpu.memory_space<vmem>>, vector<16x16xbf16>,
    } else {
    }
    return
  }
  func.func @transform_0(%arg0: i32, %arg1: i32, %arg2: i32) -> (i32, i32) {
    %c0_i32 = arith.constant 0 : i32
    return %arg0, %arg2 : i32, i32
  }
  func.func @transform_1(%arg0: i32, %arg1: i32, %arg2: i32) -> (i32, i32) {
    %c0_i32 = arith.constant 0 : i32
    return %arg2, %arg1 : i32, i32
  }
  func.func @transform_2(%arg0: i32, %arg1: i32, %arg2: i32) -> (i32, i32) {
    %c0_i32 = arith.constant 0 : i32
    %c0_i32_0 = arith.constant 0 : i32
    return %c0_i32, %arg2 : i32, i32
  }
  func.func @transform_3(%arg0: i32, %arg1: i32, %arg2: i32) -> (i32, i32) {
    %c0_i32 = arith.constant 0 : i32
    %c0_i32_0 = arith.constant 0 : i32
    return %c0_i32, %arg2 : i32, i32
  }
  func.func @transform_4(%arg0: i32, %arg1: i32, %arg2: i32) -> (i32, i32) {
    %c0_i32 = arith.constant 0 : i32
    %c0_i32_0 = arith.constant 0 : i32
    return %c0_i32, %arg1 : i32, i32
  }
  func.func @transform_5(%arg0: i32, %arg1: i32, %arg2: i32) -> (i32, i32) {
    %c0_i32 = arith.constant 0 : i32
    %c0_i32_0 = arith.constant 0 : i32
    return %c0_i32, %arg1 : i32, i32
  }
  func.func @transform_6(%arg0: i32, %arg1: i32, %arg2: i32) -> (i32, i32) {
    %c0_i32 = arith.constant 0 : i32
    return %arg0, %arg1 : i32, i32
  }
}

module attributes {stable_mosaic.version = 11 : i64} {
  func.func @_conv3x3_kernel(%arg0: i32, %arg1: i32, %arg2: i32, %arg3: memref<1x1x18x16xbf16, #tpu.memory_space<vmem>>, %arg4: memref<1x144x8xbf16, #tpu.memory_space<vmem>>, %arg5: memref<1x1x8x8xbf16, #tpu.memory_space<vmem>>, %arg6: memref<8x8xf32, #tpu.memory_space<vmem>>) attributes {dimension_semantics = [#tpu.dimension_semantics<parallel>, #tpu.dimension_semantics<parallel>, #tpu.dimension_semantics<arbitrary>], iteration_bounds = array<i64: 2, 2, 3>, scalar_prefetch = 0 : i64, scratch_operands = 1 : i64, tpu.core_type = #tpu.core_type<tc>, window_params = [{transform_indices = @transform_0, window_bounds = array<i64: 1, 1, 18, 16>}, {transform_indices = @transform_1, window_bounds = array<i64: 1, 144, 8>}, {transform_indices = @transform_2, window_bounds = array<i64: 1, 1, 8, 8>}]} {
    %c0_i32 = arith.constant 0 : i32
    %0 = arith.cmpi eq, %arg2, %c0_i32 : i32
    %1 = arith.extui %0 : i1 to i32
    %c0_i32_0 = arith.constant 0 : i32
    %2 = arith.cmpi ne, %1, %c0_i32_0 : i32
    scf.if %2 {
      %cst_12 = arith.constant 0.000000e+00 : f32
      %24 = vector.broadcast %cst_12 : f32 to vector<8x8xf32>
      %c0_13 = arith.constant 0 : index
      %c0_14 = arith.constant 0 : index
      %25 = vector.load %arg6[%c0_13, %c0_14] : memref<8x8xf32, #tpu.memory_space<vmem>>, vector<8x8xf32>
      tpu.vector_store %arg6[%c0_13, %c0_14], %24 {strides = array<i32>} : memref<8x8xf32, #tpu.memory_space<vmem>>, vector<8x8xf32>,
    } else {
    }
    %c0 = arith.constant 0 : index
    %c0_1 = arith.constant 0 : index
    %c0_2 = arith.constant 0 : index
    %c0_3 = arith.constant 0 : index
    %3 = vector.load %arg3[%c0, %c0_1, %c0_2, %c0_3] : memref<1x1x18x16xbf16, #tpu.memory_space<vmem>>, vector<1x1x18x16xbf16>
    %4 = vector.shape_cast %3 : vector<1x1x18x16xbf16> to vector<18x16xbf16>
    %5 = vector.extract_strided_slice %4 {offsets = [0, 0], sizes = [8, 16], strides = [1, 1]} : vector<18x16xbf16> to vector<8x16xbf16>
    %6 = vector.extract_strided_slice %4 {offsets = [1, 0], sizes = [8, 16], strides = [1, 1]} : vector<18x16xbf16> to vector<8x16xbf16>
    %7 = vector.extract_strided_slice %4 {offsets = [2, 0], sizes = [8, 16], strides = [1, 1]} : vector<18x16xbf16> to vector<8x16xbf16>
    %8 = vector.extract_strided_slice %4 {offsets = [4, 0], sizes = [8, 16], strides = [1, 1]} : vector<18x16xbf16> to vector<8x16xbf16>
    %9 = vector.extract_strided_slice %4 {offsets = [5, 0], sizes = [8, 16], strides = [1, 1]} : vector<18x16xbf16> to vector<8x16xbf16>
    %10 = vector.extract_strided_slice %4 {offsets = [6, 0], sizes = [8, 16], strides = [1, 1]} : vector<18x16xbf16> to vector<8x16xbf16>
    %11 = vector.extract_strided_slice %4 {offsets = [8, 0], sizes = [8, 16], strides = [1, 1]} : vector<18x16xbf16> to vector<8x16xbf16>
    %12 = vector.extract_strided_slice %4 {offsets = [9, 0], sizes = [8, 16], strides = [1, 1]} : vector<18x16xbf16> to vector<8x16xbf16>
    %13 = vector.extract_strided_slice %4 {offsets = [10, 0], sizes = [8, 16], strides = [1, 1]} : vector<18x16xbf16> to vector<8x16xbf16>
    %14 = tpu.concatenate %5, %6, %7, %8, %9, %10, %11, %12, %13 in 1 : vector<8x16xbf16>, vector<8x16xbf16>, vector<8x16xbf16>, vector<8x16xbf16>, vector<8x16xbf16>, vector<8x16xbf16>, vector<8x16xbf16>, vector<8x16xbf16>, vector<8x16xbf16> -> vector<8x144xbf16>
    %c0_4 = arith.constant 0 : index
    %c0_5 = arith.constant 0 : index
    %15 = vector.load %arg6[%c0_4, %c0_5] : memref<8x8xf32, #tpu.memory_space<vmem>>, vector<8x8xf32>
    %c0_6 = arith.constant 0 : index
    %c0_7 = arith.constant 0 : index
    %c0_8 = arith.constant 0 : index
    %16 = vector.load %arg4[%c0_6, %c0_7, %c0_8] : memref<1x144x8xbf16, #tpu.memory_space<vmem>>, vector<1x144x8xbf16>
    %17 = vector.shape_cast %16 : vector<1x144x8xbf16> to vector<144x8xbf16>
    %cst = arith.constant dense<0.000000e+00> : vector<8x8xf32>
    %18 = tpu.matmul %14, %17, %cst {dimension_numbers = #tpu.dot_dimension_numbers<[1], [0], [0], [1], [0, 0, 1, 1], [], []>} : vector<8x144xbf16>, vector<144x8xbf16>, vector<8x8xf32> -> vector<8x8xf32>
    %19 = arith.addf %15, %18 : vector<8x8xf32>
    %c0_9 = arith.constant 0 : index
    %c0_10 = arith.constant 0 : index
    %20 = vector.load %arg6[%c0_9, %c0_10] : memref<8x8xf32, #tpu.memory_space<vmem>>, vector<8x8xf32>
    tpu.vector_store %arg6[%c0_9, %c0_10], %19 {strides = array<i32>} : memref<8x8xf32, #tpu.memory_space<vmem>>, vector<8x8xf32>,
    %c2_i32 = arith.constant 2 : i32
    %21 = arith.cmpi eq, %arg2, %c2_i32 : i32
    %22 = arith.extui %21 : i1 to i32
    %c0_i32_11 = arith.constant 0 : i32
    %23 = arith.cmpi ne, %22, %c0_i32_11 : i32
    scf.if %23 {
      %c0_12 = arith.constant 0 : index
      %c0_13 = arith.constant 0 : index
      %24 = vector.load %arg6[%c0_12, %c0_13] : memref<8x8xf32, #tpu.memory_space<vmem>>, vector<8x8xf32>
      %25 = arith.truncf %24 : vector<8x8xf32> to vector<8x8xbf16>
      %c0_14 = arith.constant 0 : index
      %c0_15 = arith.constant 0 : index
      %c0_16 = arith.constant 0 : index
      %c0_17 = arith.constant 0 : index
      %26 = vector.load %arg5[%c0_14, %c0_15, %c0_16, %c0_17] : memref<1x1x8x8xbf16, #tpu.memory_space<vmem>>, vector<1x1x8x8xbf16>
      %27 = vector.shape_cast %26 : vector<1x1x8x8xbf16> to vector<8x8xbf16>
      %28 = vector.shape_cast %25 : vector<8x8xbf16> to vector<1x1x8x8xbf16>
      tpu.vector_store %arg5[%c0_14, %c0_15, %c0_16, %c0_17], %28 {strides = array<i32>} : memref<1x1x8x8xbf16, #tpu.memory_space<vmem>>, vector<1x1x8x8xbf16>,
    } else {
    }
    return
  }
  func.func @transform_0(%arg0: i32, %arg1: i32, %arg2: i32) -> (i32, i32, i32, i32) {
    %0 = arith.addi %arg1, %arg2 : i32
    %c0_i32 = arith.constant 0 : i32
    %c0_i32_0 = arith.constant 0 : i32
    %c0_i32_1 = arith.constant 0 : i32
    return %arg0, %0, %c0_i32, %c0_i32_0 : i32, i32, i32, i32
  }
  func.func @transform_1(%arg0: i32, %arg1: i32, %arg2: i32) -> (i32, i32, i32) {
    %c0_i32 = arith.constant 0 : i32
    %c0_i32_0 = arith.constant 0 : i32
    %c0_i32_1 = arith.constant 0 : i32
    return %arg2, %c0_i32, %c0_i32_0 : i32, i32, i32
  }
  func.func @transform_2(%arg0: i32, %arg1: i32, %arg2: i32) -> (i32, i32, i32, i32) {
    %c0_i32 = arith.constant 0 : i32
    %c0_i32_0 = arith.constant 0 : i32
    %c0_i32_1 = arith.constant 0 : i32
    return %arg0, %arg1, %c0_i32, %c0_i32_0 : i32, i32, i32, i32
  }
}

module attributes {stable_mosaic.version = 11 : i64} {
  func.func @_gemm_kernel(%arg0: i32, %arg1: i32, %arg2: i32, %arg3: memref<16x20xbf16, #tpu.memory_space<vmem>>, %arg4: memref<20x16xbf16, #tpu.memory_space<vmem>>, %arg5: memref<1x20xbf16, #tpu.memory_space<vmem>>, %arg6: memref<1x20xbf16, #tpu.memory_space<vmem>>, %arg7: memref<1x16xf32, #tpu.memory_space<vmem>>, %arg8: memref<1x16xf32, #tpu.memory_space<vmem>>, %arg9: memref<16x16xbf16, #tpu.memory_space<vmem>>, %arg10: memref<16x16xf32, #tpu.memory_space<vmem>>) attributes {dimension_semantics = [#tpu.dimension_semantics<parallel>, #tpu.dimension_semantics<parallel>, #tpu.dimension_semantics<arbitrary>], iteration_bounds = array<i64: 1, 1, 1>, scalar_prefetch = 0 : i64, scratch_operands = 1 : i64, tpu.core_type = #tpu.core_type<tc>, window_params = [{transform_indices = @transform_0, window_bounds = array<i64: 16, 20>}, {transform_indices = @transform_1, window_bounds = array<i64: 20, 16>}, {transform_indices = @transform_2, window_bounds = array<i64: 1, 20>}, {transform_indices = @transform_3, window_bounds = array<i64: 1, 20>}, {transform_indices = @transform_4, window_bounds = array<i64: 1, 16>}, {transform_indices = @transform_5, window_bounds = array<i64: 1, 16>}, {transform_indices = @transform_6, window_bounds = array<i64: 16, 16>}]} {
    %c0_i32 = arith.constant 0 : i32
    %0 = arith.cmpi eq, %arg2, %c0_i32 : i32
    %1 = arith.extui %0 : i1 to i32
    %c0_i32_0 = arith.constant 0 : i32
    %2 = arith.cmpi ne, %1, %c0_i32_0 : i32
    scf.if %2 {
      %cst_15 = arith.constant 0.000000e+00 : f32
      %20 = vector.broadcast %cst_15 : f32 to vector<16x16xf32>
      %c0_16 = arith.constant 0 : index
      %c0_17 = arith.constant 0 : index
      %21 = vector.load %arg10[%c0_16, %c0_17] : memref<16x16xf32, #tpu.memory_space<vmem>>, vector<16x16xf32>
      tpu.vector_store %arg10[%c0_16, %c0_17], %20 {strides = array<i32>} : memref<16x16xf32, #tpu.memory_space<vmem>>, vector<16x16xf32>,
    } else {
    }
    %c0 = arith.constant 0 : index
    %c0_1 = arith.constant 0 : index
    %3 = vector.load %arg3[%c0, %c0_1] : memref<16x20xbf16, #tpu.memory_space<vmem>>, vector<16x20xbf16>
    %c0_2 = arith.constant 0 : index
    %c0_3 = arith.constant 0 : index
    %4 = vector.load %arg5[%c0_2, %c0_3] : memref<1x20xbf16, #tpu.memory_space<vmem>>, vector<1x20xbf16>
    %5 = vector.broadcast %4 : vector<1x20xbf16> to vector<16x20xbf16>
    %6 = arith.mulf %3, %5 : vector<16x20xbf16>
    %c0_4 = arith.constant 0 : index
    %c0_5 = arith.constant 0 : index
    %7 = vector.load %arg6[%c0_4, %c0_5] : memref<1x20xbf16, #tpu.memory_space<vmem>>, vector<1x20xbf16>
    %8 = vector.broadcast %7 : vector<1x20xbf16> to vector<16x20xbf16>
    %9 = arith.addf %6, %8 : vector<16x20xbf16>
    %cst = arith.constant 0.000000e+00 : bf16
    %10 = vector.broadcast %cst : bf16 to vector<16x20xbf16>
    %11 = arith.maximumf %9, %10 : vector<16x20xbf16>
    %c0_6 = arith.constant 0 : index
    %c0_7 = arith.constant 0 : index
    %12 = vector.load %arg10[%c0_6, %c0_7] : memref<16x16xf32, #tpu.memory_space<vmem>>, vector<16x16xf32>
    %c0_8 = arith.constant 0 : index
    %c0_9 = arith.constant 0 : index
    %13 = vector.load %arg4[%c0_8, %c0_9] : memref<20x16xbf16, #tpu.memory_space<vmem>>, vector<20x16xbf16>
    %cst_10 = arith.constant dense<0.000000e+00> : vector<16x16xf32>
    %14 = tpu.matmul %11, %13, %cst_10 {dimension_numbers = #tpu.dot_dimension_numbers<[1], [0], [0], [1], [0, 0, 1, 1], [], []>} : vector<16x20xbf16>, vector<20x16xbf16>, vector<16x16xf32> -> vector<16x16xf32>
    %15 = arith.addf %12, %14 : vector<16x16xf32>
    %c0_11 = arith.constant 0 : index
    %c0_12 = arith.constant 0 : index
    %16 = vector.load %arg10[%c0_11, %c0_12] : memref<16x16xf32, #tpu.memory_space<vmem>>, vector<16x16xf32>
    tpu.vector_store %arg10[%c0_11, %c0_12], %15 {strides = array<i32>} : memref<16x16xf32, #tpu.memory_space<vmem>>, vector<16x16xf32>,
    %c0_i32_13 = arith.constant 0 : i32
    %17 = arith.cmpi eq, %arg2, %c0_i32_13 : i32
    %18 = arith.extui %17 : i1 to i32
    %c0_i32_14 = arith.constant 0 : i32
    %19 = arith.cmpi ne, %18, %c0_i32_14 : i32
    scf.if %19 {
      %c0_15 = arith.constant 0 : index
      %c0_16 = arith.constant 0 : index
      %20 = vector.load %arg10[%c0_15, %c0_16] : memref<16x16xf32, #tpu.memory_space<vmem>>, vector<16x16xf32>
      %c0_17 = arith.constant 0 : index
      %c0_18 = arith.constant 0 : index
      %21 = vector.load %arg7[%c0_17, %c0_18] : memref<1x16xf32, #tpu.memory_space<vmem>>, vector<1x16xf32>
      %22 = vector.broadcast %21 : vector<1x16xf32> to vector<16x16xf32>
      %23 = arith.mulf %20, %22 : vector<16x16xf32>
      %c0_19 = arith.constant 0 : index
      %c0_20 = arith.constant 0 : index
      %24 = vector.load %arg8[%c0_19, %c0_20] : memref<1x16xf32, #tpu.memory_space<vmem>>, vector<1x16xf32>
      %25 = vector.broadcast %24 : vector<1x16xf32> to vector<16x16xf32>
      %26 = arith.addf %23, %25 : vector<16x16xf32>
      %cst_21 = arith.constant 0.000000e+00 : f32
      %27 = vector.broadcast %cst_21 : f32 to vector<16x16xf32>
      %28 = arith.maximumf %26, %27 : vector<16x16xf32>
      %29 = arith.truncf %28 : vector<16x16xf32> to vector<16x16xbf16>
      %c0_22 = arith.constant 0 : index
      %c0_23 = arith.constant 0 : index
      %30 = vector.load %arg9[%c0_22, %c0_23] : memref<16x16xbf16, #tpu.memory_space<vmem>>, vector<16x16xbf16>
      tpu.vector_store %arg9[%c0_22, %c0_23], %29 {strides = array<i32>} : memref<16x16xbf16, #tpu.memory_space<vmem>>, vector<16x16xbf16>,
    } else {
    }
    return
  }
  func.func @transform_0(%arg0: i32, %arg1: i32, %arg2: i32) -> (i32, i32) {
    %c0_i32 = arith.constant 0 : i32
    return %arg0, %arg2 : i32, i32
  }
  func.func @transform_1(%arg0: i32, %arg1: i32, %arg2: i32) -> (i32, i32) {
    %c0_i32 = arith.constant 0 : i32
    return %arg2, %arg1 : i32, i32
  }
  func.func @transform_2(%arg0: i32, %arg1: i32, %arg2: i32) -> (i32, i32) {
    %c0_i32 = arith.constant 0 : i32
    %c0_i32_0 = arith.constant 0 : i32
    return %c0_i32, %arg2 : i32, i32
  }
  func.func @transform_3(%arg0: i32, %arg1: i32, %arg2: i32) -> (i32, i32) {
    %c0_i32 = arith.constant 0 : i32
    %c0_i32_0 = arith.constant 0 : i32
    return %c0_i32, %arg2 : i32, i32
  }
  func.func @transform_4(%arg0: i32, %arg1: i32, %arg2: i32) -> (i32, i32) {
    %c0_i32 = arith.constant 0 : i32
    %c0_i32_0 = arith.constant 0 : i32
    return %c0_i32, %arg1 : i32, i32
  }
  func.func @transform_5(%arg0: i32, %arg1: i32, %arg2: i32) -> (i32, i32) {
    %c0_i32 = arith.constant 0 : i32
    %c0_i32_0 = arith.constant 0 : i32
    return %c0_i32, %arg1 : i32, i32
  }
  func.func @transform_6(%arg0: i32, %arg1: i32, %arg2: i32) -> (i32, i32) {
    %c0_i32 = arith.constant 0 : i32
    return %arg0, %arg1 : i32, i32
  }
}

module attributes {stable_mosaic.version = 11 : i64} {
  func.func @_pool_mean_kernel(%arg0: i32, %arg1: memref<8x8x28xbf16, #tpu.memory_space<vmem>>, %arg2: memref<8x28xf32, #tpu.memory_space<vmem>>) attributes {dimension_semantics = [#tpu.dimension_semantics<parallel>], iteration_bounds = array<i64: 1>, scalar_prefetch = 0 : i64, scratch_operands = 0 : i64, tpu.core_type = #tpu.core_type<tc>, window_params = [{transform_indices = @transform_0, window_bounds = array<i64: 8, 8, 28>}, {transform_indices = @transform_1, window_bounds = array<i64: 8, 28>}]} {
    %c0 = arith.constant 0 : index
    %c0_0 = arith.constant 0 : index
    %c0_1 = arith.constant 0 : index
    %0 = vector.load %arg1[%c0, %c0_0, %c0_1] : memref<8x8x28xbf16, #tpu.memory_space<vmem>>, vector<8x8x28xbf16>
    %1 = arith.extf %0 : vector<8x8x28xbf16> to vector<8x8x28xf32>
    %cst = arith.constant dense<0.000000e+00> : vector<8x28xf32>
    %2 = vector.multi_reduction <add>, %1, %cst [1] : vector<8x8x28xf32> to vector<8x28xf32>
    %cst_2 = arith.constant 1.250000e-01 : f32
    %3 = vector.broadcast %cst_2 : f32 to vector<8x28xf32>
    %4 = arith.mulf %2, %3 : vector<8x28xf32>
    %c0_3 = arith.constant 0 : index
    %c0_4 = arith.constant 0 : index
    %5 = vector.load %arg2[%c0_3, %c0_4] : memref<8x28xf32, #tpu.memory_space<vmem>>, vector<8x28xf32>
    tpu.vector_store %arg2[%c0_3, %c0_4], %4 {strides = array<i32>} : memref<8x28xf32, #tpu.memory_space<vmem>>, vector<8x28xf32>,
    return
  }
  func.func @transform_0(%arg0: i32) -> (i32, i32, i32) {
    %c0_i32 = arith.constant 0 : i32
    %c0_i32_0 = arith.constant 0 : i32
    %c0_i32_1 = arith.constant 0 : i32
    return %arg0, %c0_i32, %c0_i32_0 : i32, i32, i32
  }
  func.func @transform_1(%arg0: i32) -> (i32, i32) {
    %c0_i32 = arith.constant 0 : i32
    %c0_i32_0 = arith.constant 0 : i32
    return %arg0, %c0_i32 : i32, i32
  }
}

</mosaic_0001>

<llo_original>
// kernel: densenet_forward.13
$region0: #{densenet_forward.13}
  #allocation0 [shape = 'u32[]', space=smem, size = 0x4, offset = 0x4, fixed_abs, tag = 'smem constant byte address 0x4 - core index']
  #allocation1 [shape = 'u32[144,128]{1,0:T(1,128)}', space=vmem, size = 0x12000, scoped, tag = 'internal scratch']
  #allocation2 [shape = 'f32[512,8]{1,0:T(8,128)}', space=vmem, size = 0x40000, scoped, tag = 'scratch operand']
  %s0 = inlined_call_operand.vmem [shape: bf16[1024,343], index: 0, kind: input, shape index: {}]
  %s1 = inlined_call_operand.vmem [shape: bf16[343,8], index: 1, kind: input, shape index: {}]
  %s2 = inlined_call_operand.vmem [shape: f32[1,8], index: 2, kind: input, shape index: {}]
  %s3 = inlined_call_operand.vmem [shape: f32[1,8], index: 3, kind: input, shape index: {}]
  %s4 = inlined_call_operand.vmem [shape: bf16[1024,8], index: 4, kind: output, shape index: {}]
  %s5 = sld [smem:[#allocation0]]
  $region57: #{densenet_forward.13} parent=0
    _
  %s7 = ssub.s32 1, %s5
  %s8 = scalar_select 0, %s7, %s5
  loop: start=0, step=1, limit=4
  $region2: #{densenet_forward.13} parent=0 // loop_pre_header
    _
  $region3: #{densenet_forward.13} parent=0 // loop_header
    %s10 = sphi 0, %s14
    %p11 = scmp.ge.s32.totalorder %s10, 4
    %s17 = sphi 0, %s36
    %s18 = sphi 0, %s32
    %s19 = sphi 0, %s28
    %s20 = sphi 0, %s17
    %s21 = sphi 0, %s18
    %s22 = sphi 0, %s19
    %s23 = sphi 0, %s20
    %s24 = sphi 0, %s21
    %s25 = sphi 0, %s22
    %s41 = sphi 0, %s43
    %s44 = sphi 0, %s41
    %s45 = sphi 0, %s44
    %s61 = sphi 0, %s45
    %s69 = sphi 0, %s71
    %s72 = sphi 0, %s69
    %s73 = sphi 0, %s72
    %s89 = sphi 0, %s73
    %s95 = sphi 0, %s97
    %s98 = sphi 0, %s95
    %s99 = sphi 0, %s98
    %s115 = sphi 0, %s99
    %s121 = sphi 0, %s123
    %s124 = sphi 0, %s121
    %s125 = sphi 0, %s124
    %s141 = sphi 0, %s125
    %s149 = sphi 0, %s151
    %s152 = sphi 0, %s149
    %s153 = sphi 0, %s152
    %s169 = sphi 0, %s153
  $region4: #{densenet_forward.13} parent=0 // loop_header_branch
    %13 = sbr.rel (%p11) target = $region8
  $region5: #{densenet_forward.13} parent=0 // loop_body
    %s15 = ssub.s32 %s10, 1
    %s16 = ssub.s32 %s10, 2
    %s26 = sadd.s32 1, %s19
    %p27 = scmp.ge.s32.totalorder %s26, 1
    %s28 = scalar_select %p27, 0, %s26
    %s29 = sadd.s32 1, %s18
    %s30 = scalar_select %p27, %s29, %s18
    %p31 = scmp.ge.s32.totalorder %s30, 1
    %s32 = scalar_select %p31, 0, %s30
    %s33 = sadd.s32 1, %s17
    %s34 = scalar_select %p31, %s33, %s17
    %p35 = scmp.ge.s32.totalorder %s34, 2
    %s36 = scalar_select %p35, 0, %s34
    %s37 = ssub.s32 %s17, %s36
    %s38 = ssub.s32 %s19, %s28
    %s39 = sor.u32 %s37, %s38
    %p40 = scmp.eq.s32.totalorder %s39, 0
    %s42 = sadd.s32 %s41, 1
    %s43 = scalar_select %p40, %s41, %s42
    %p46 = pneg %p40
    %p47 = scmp.eq.s32.totalorder %s10, 1
    %p48 = por %p46, %p47
    %p49 = scmp.ne.s32.totalorder %s41, %s44
    %p50 = scmp.eq.s32.totalorder %s10, 0
    %p51 = por %p49, %p50
    %p52 = scmp.ne.s32.totalorder %s41, %s44
    %p53 = scmp.eq.s32.totalorder %s15, 1
    %p54 = por %p52, %p53
    %p55 = scmp.ne.s32.totalorder %s44, %s45
    %p56 = scmp.eq.s32.totalorder %s15, 0
    %p57 = por %p55, %p56
    %p58 = scmp.ne.s32.totalorder %s44, %s45
    %p59 = scmp.eq.s32.totalorder %s16, 1
    %p60 = por %p58, %p59
    %p62 = scmp.ne.s32.totalorder %s45, %s61
    %p63 = scmp.eq.s32.totalorder %s16, 0
    %p64 = por %p62, %p63
    %s65 = ssub.s32 %s19, %s28
    %s66 = ssub.s32 %s18, %s32
    %s67 = sor.u32 %s65, %s66
    %p68 = scmp.eq.s32.totalorder %s67, 0
    %s70 = sadd.s32 %s69, 1
    %s71 = scalar_select %p68, %s69, %s70
    %p74 = pneg %p68
    %p75 = scmp.eq.s32.totalorder %s10, 1
    %p76 = por %p74, %p75
    %p77 = scmp.ne.s32.totalorder %s69, %s72
    %p78 = scmp.eq.s32.totalorder %s10, 0
    %p79 = por %p77, %p78
    %p80 = scmp.ne.s32.totalorder %s69, %s72
    %p81 = scmp.eq.s32.totalorder %s15, 1
    %p82 = por %p80, %p81
    %p83 = scmp.ne.s32.totalorder %s72, %s73
    %p84 = scmp.eq.s32.totalorder %s15, 0
    %p85 = por %p83, %p84
    %p86 = scmp.ne.s32.totalorder %s72, %s73
    %p87 = scmp.eq.s32.totalorder %s16, 1
    %p88 = por %p86, %p87
    %p90 = scmp.ne.s32.totalorder %s73, %s89
    %p91 = scmp.eq.s32.totalorder %s16, 0
    %p92 = por %p90, %p91
    %s93 = ssub.s32 %s18, %s32
    %p94 = scmp.eq.s32.totalorder %s93, 0
    %s96 = sadd.s32 %s95, 1
    %s97 = scalar_select %p94, %s95, %s96
    %p100 = pneg %p94
    %p101 = scmp.eq.s32.totalorder %s10, 1
    %p102 = por %p100, %p101
    %p103 = scmp.ne.s32.totalorder %s95, %s98
    %p104 = scmp.eq.s32.totalorder %s10, 0
    %p105 = por %p103, %p104
    %p106 = scmp.ne.s32.totalorder %s95, %s98
    %p107 = scmp.eq.s32.totalorder %s15, 1
    %p108 = por %p106, %p107
    %p109 = scmp.ne.s32.totalorder %s98, %s99
    %p110 = scmp.eq.s32.totalorder %s15, 0
    %p111 = por %p109, %p110
    %p112 = scmp.ne.s32.totalorder %s98, %s99
    %p113 = scmp.eq.s32.totalorder %s16, 1
    %p114 = por %p112, %p113
    %p116 = scmp.ne.s32.totalorder %s99, %s115
    %p117 = scmp.eq.s32.totalorder %s16, 0
    %p118 = por %p116, %p117
    %s119 = ssub.s32 %s18, %s32
    %p120 = scmp.eq.s32.totalorder %s119, 0
    %s122 = sadd.s32 %s121, 1
    %s123 = scalar_select %p120, %s121, %s122
    %p126 = pneg %p120
    %p127 = scmp.eq.s32.totalorder %s10, 1
    %p128 = por %p126, %p127
    %p129 = scmp.ne.s32.totalorder %s121, %s124
    %p130 = scmp.eq.s32.totalorder %s10, 0
    %p131 = por %p129, %p130
    %p132 = scmp.ne.s32.totalorder %s121, %s124
    %p133 = scmp.eq.s32.totalorder %s15, 1
    %p134 = por %p132, %p133
    %p135 = scmp.ne.s32.totalorder %s124, %s125
    %p136 = scmp.eq.s32.totalorder %s15, 0
    %p137 = por %p135, %p136
    %p138 = scmp.ne.s32.totalorder %s124, %s125
    %p139 = scmp.eq.s32.totalorder %s16, 1
    %p140 = por %p138, %p139
    %p142 = scmp.ne.s32.totalorder %s125, %s141
    %p143 = scmp.eq.s32.totalorder %s16, 0
    %p144 = por %p142, %p143
    %s145 = ssub.s32 %s17, %s36
    %s146 = ssub.s32 %s18, %s32
    %s147 = sor.u32 %s145, %s146
    %p148 = scmp.eq.s32.totalorder %s147, 0
    %s150 = sadd.s32 %s149, 1
    %s151 = scalar_select %p148, %s149, %s150
    %p154 = pneg %p148
    %p155 = scmp.eq.s32.totalorder %s10, 1
    %p156 = por %p154, %p155
    %p157 = scmp.ne.s32.totalorder %s149, %s152
    %p158 = scmp.eq.s32.totalorder %s10, 0
    %p159 = por %p157, %p158
    %p160 = scmp.ne.s32.totalorder %s149, %s152
    %p161 = scmp.eq.s32.totalorder %s15, 1
    %p162 = por %p160, %p161
    %p163 = scmp.ne.s32.totalorder %s152, %s153
    %p164 = scmp.eq.s32.totalorder %s15, 0
    %p165 = por %p163, %p164
    %p166 = scmp.ne.s32.totalorder %s152, %s153
    %p167 = scmp.eq.s32.totalorder %s16, 1
    %p168 = por %p166, %p167
    %p170 = scmp.ne.s32.totalorder %s153, %s169
    %p171 = scmp.eq.s32.totalorder %s16, 0
    %p172 = por %p170, %p171
    %p173 = scmp.le.s32.totalorder 1, %s10
    %p174 = scmp.lt.s32.totalorder %s10, 3
    %p175 = pnand %p173, %p174
    %p176 = pneg %p175
    // Predicated region
    $region9: #{densenet_forward.13} parent=5 // pred_check
      _
    $region10: #{densenet_forward.13} parent=5 // pred_check_branch
      %178 = sbr.rel (%p175) target = $region12
    $region11: #{densenet_forward.13} parent=5 // pred_region
      %s179 = ssub.s32 %s10, 1
      // Predicated region
      $region13: #{densenet_forward.13} parent=11 // pred_check
        %p180 = pneg %p85
      $region14: #{densenet_forward.13} parent=11 // pred_check_branch
        %182 = sbr.rel (%p180) target = $region16
      $region15: #{densenet_forward.13} parent=11 // pred_region
        %s183 = smul.u32 43, %s22
        %p184 = scmp.lt.s32.totalorder %s183, 42
        %s185 = scalar_select %p184, %s183, 42
        %p186 = scmp.lt.s32.totalorder %s21, 0
        %s187 = scalar_select %p186, %s21, 0
        %s188 = sadd.s32 %s187, %s185
        %s189 = smul.addr %s188, 4
        %s190 = scalar_lea.vmem %s1, %s189
        %s191 = smul.u32 43, %s22
      $region16: #{densenet_forward.13} parent=11 // pred_fallthru
        _
      // Predicated region
      $region17: #{densenet_forward.13} parent=11 // pred_check
        %p192 = pneg %p111
      $region18: #{densenet_forward.13} parent=11 // pred_check_branch
        %194 = sbr.rel (%p192) target = $region20
      $region19: #{densenet_forward.13} parent=11 // pred_region
        %p195 = scmp.lt.s32.totalorder %s21, 0
        %s196 = scalar_select %p195, %s21, 0
        %s197 = scalar_lea.vmem %s2, %s196
      $region20: #{densenet_forward.13} parent=11 // pred_fallthru
        _
      // Predicated region
      $region21: #{densenet_forward.13} parent=11 // pred_check
        %p198 = pneg %p137
      $region22: #{densenet_forward.13} parent=11 // pred_check_branch
        %200 = sbr.rel (%p198) target = $region24
      $region23: #{densenet_forward.13} parent=11 // pred_region
        %p201 = scmp.lt.s32.totalorder %s21, 0
        %s202 = scalar_select %p201, %s21, 0
        %s203 = scalar_lea.vmem %s3, %s202
      $region24: #{densenet_forward.13} parent=11 // pred_fallthru
        _
    $region12: #{densenet_forward.13} parent=5 // pred_fallthru
      _
    %p204 = scmp.lt.s32.totalorder %s10, 2
    // Predicated region
    $region25: #{densenet_forward.13} parent=5 // pred_check
      %p205 = pneg %p204
    $region26: #{densenet_forward.13} parent=5 // pred_check_branch
      %207 = sbr.rel (%p205) target = $region28
    $region27: #{densenet_forward.13} parent=5 // pred_region
      // Predicated region
      $region29: #{densenet_forward.13} parent=27 // pred_check
        %p208 = pneg %p51
      $region30: #{densenet_forward.13} parent=27 // pred_check_branch
        %210 = sbr.rel (%p208) target = $region32
      $region31: #{densenet_forward.13} parent=27 // pred_region
        %s211 = smul.u32 64, %s17
        %s212 = smul.u32 3, %s19
        %p213 = scmp.lt.s32.totalorder %s211, 127
        %s214 = scalar_select %p213, %s211, 127
        %p215 = scmp.lt.s32.totalorder %s212, 2
        %s216 = scalar_select %p215, %s212, 2
        %s217 = smul.addr %s214, 3
        %s218 = sadd.s32 %s216, %s217
        %s219 = smul.addr %s218, 4
        %s220 = scalar_lea.vmem %s0, %s219
        %s221 = smul.u32 64, %s17
        %s222 = smul.u32 3, %s19
      $region32: #{densenet_forward.13} parent=27 // pred_fallthru
        _
    $region28: #{densenet_forward.13} parent=5 // pred_fallthru
      _
    %p223 = scmp.le.s32.totalorder 1, %s10
    %p224 = scmp.lt.s32.totalorder %s10, 3
    %p225 = pnand %p223, %p224
    %p226 = pneg %p225
    // Predicated region
    $region33: #{densenet_forward.13} parent=5 // pred_check
      _
    $region34: #{densenet_forward.13} parent=5 // pred_check_branch
      %228 = sbr.rel (%p225) target = $region36
    $region35: #{densenet_forward.13} parent=5 // pred_region
      %s229 = ssub.s32 %s10, 1
      %s230 = smul.u32 64, %s20
      %s231 = smul.u32 3, %s22
      %p232 = scmp.lt.s32.totalorder %s230, 127
      %s233 = scalar_select %p232, %s230, 127
      %p234 = scmp.lt.s32.totalorder %s231, 2
      %s235 = scalar_select %p234, %s231, 2
      %s236 = smul.addr %s233, 3
      %s237 = sadd.s32 %s235, %s236
      %s238 = smul.addr %s237, 4
      %s239 = scalar_lea.vmem %s0, %s238
      %p240 = pneg %p57
      %p241 = pneg %p54
      %s242 = smul.u32 43, %s22
      %p243 = scmp.lt.s32.totalorder %s242, 42
      %s244 = scalar_select %p243, %s242, 42
      %p245 = scmp.lt.s32.totalorder %s21, 0
      %s246 = scalar_select %p245, %s21, 0
      %s247 = sadd.s32 %s246, %s244
      %s248 = smul.addr %s247, 4
      %s249 = scalar_lea.vmem %s1, %s248
      %p250 = pneg %p85
      %p251 = pneg %p82
      %p252 = scmp.lt.s32.totalorder %s21, 0
      %s253 = scalar_select %p252, %s21, 0
      %s254 = scalar_lea.vmem %s2, %s253
      %p255 = pneg %p111
      %p256 = pneg %p108
      %p257 = scmp.lt.s32.totalorder %s21, 0
      %s258 = scalar_select %p257, %s21, 0
      %s259 = scalar_lea.vmem %s3, %s258
      %p260 = pneg %p137
      %p261 = pneg %p134
      %p262 = pneg %p165
      %p263 = pneg %p162
      %s264 = smul.u32 64, %s20
      %p265 = scmp.lt.s32.totalorder %s264, 127
      %s266 = scalar_select %p265, %s264, 127
      %p267 = scmp.lt.s32.totalorder %s21, 0
      %s268 = scalar_select %p267, %s21, 0
      %s269 = sadd.s32 %s268, %s266
      %s270 = smul.addr %s269, 4
      %s271 = scalar_lea.vmem %s4, %s270
      %s272 = smul.u32 64, %s20
      %s273 = smul.u32 3, %s22
      %p274 = scmp.lt.s32.totalorder %s272, 127
      %s275 = scalar_select %p274, %s272, 127
      %p276 = scmp.lt.s32.totalorder %s273, 2
      %s277 = scalar_select %p276, %s273, 2
      %s278 = smul.addr %s275, 3
      %s279 = sadd.s32 %s277, %s278
      %s280 = smul.addr %s279, 4
      %s281 = scalar_lea.vmem %s0, %s280
      %s282 = smul.u32 64, %s20
      %s283 = smul.u32 3, %s22
      %s284 = smul.u32 43, %s22
      %p285 = scmp.lt.s32.totalorder %s284, 42
      %s286 = scalar_select %p285, %s284, 42
      %p287 = scmp.lt.s32.totalorder %s21, 0
      %s288 = scalar_select %p287, %s21, 0
      %s289 = sadd.s32 %s288, %s286
      %s290 = smul.addr %s289, 4
      %s291 = scalar_lea.vmem %s1, %s290
      %s292 = smul.u32 43, %s22
      %p293 = scmp.lt.s32.totalorder %s21, 0
      %s294 = scalar_select %p293, %s21, 0
      %s295 = scalar_lea.vmem %s2, %s294
      %p296 = scmp.lt.s32.totalorder %s21, 0
      %s297 = scalar_select %p296, %s21, 0
      %s298 = scalar_lea.vmem %s3, %s297
      %s299 = smul.u32 64, %s20
      %p300 = scmp.lt.s32.totalorder %s299, 127
      %s301 = scalar_select %p300, %s299, 127
      %p302 = scmp.lt.s32.totalorder %s21, 0
      %s303 = scalar_select %p302, %s21, 0
      %s304 = sadd.s32 %s303, %s301
      %s305 = smul.addr %s304, 4
      %s306 = scalar_lea.vmem %s4, %s305
      %s307 = smul.u32 64, %s20
      %p309 = scmp.eq.s32.totalorder %s22, 0
      // Predicated region
      $region37: #{densenet_forward.13} parent=35 // pred_check
        %p310 = pneg %p309
      $region38: #{densenet_forward.13} parent=35 // pred_check_branch
        %312 = sbr.rel (%p310) target = $region40
      $region39: #{densenet_forward.13} parent=35 // pred_region
        %vm313 = vcmask 64512
        %314 = vst.msk [vmem:[#allocation2] sm:$0xff] %vm313, 0.0
        %315 = vst.msk [vmem:[#allocation2 + $0x8] sm:$0xff] %vm313, 0.0
        %316 = vst.msk [vmem:[#allocation2 + $0x10] sm:$0xff] %vm313, 0.0
        %317 = vst.msk [vmem:[#allocation2 + $0x18] sm:$0xff] %vm313, 0.0
        %318 = vst.msk [vmem:[#allocation2 + $0x20] sm:$0xff] %vm313, 0.0
        %319 = vst.msk [vmem:[#allocation2 + $0x28] sm:$0xff] %vm313, 0.0
        %320 = vst.msk [vmem:[#allocation2 + $0x30] sm:$0xff] %vm313, 0.0
        %321 = vst.msk [vmem:[#allocation2 + $0x38] sm:$0xff] %vm313, 0.0
        %322 = vst.msk [vmem:[#allocation2 + $0x40] sm:$0xff] %vm313, 0.0
        %323 = vst.msk [vmem:[#allocation2 + $0x48] sm:$0xff] %vm313, 0.0
        %324 = vst.msk [vmem:[#allocation2 + $0x50] sm:$0xff] %vm313, 0.0
        %325 = vst.msk [vmem:[#allocation2 + $0x58] sm:$0xff] %vm313, 0.0
        %326 = vst.msk [vmem:[#allocation2 + $0x60] sm:$0xff] %vm313, 0.0
        %327 = vst.msk [vmem:[#allocation2 + $0x68] sm:$0xff] %vm313, 0.0
        %328 = vst.msk [vmem:[#allocation2 + $0x70] sm:$0xff] %vm313, 0.0
        %329 = vst.msk [vmem:[#allocation2 + $0x78] sm:$0xff] %vm313, 0.0
        %330 = vst.msk [vmem:[#allocation2 + $0x80] sm:$0xff] %vm313, 0.0
        %331 = vst.msk [vmem:[#allocation2 + $0x88] sm:$0xff] %vm313, 0.0
        %332 = vst.msk [vmem:[#allocation2 + $0x90] sm:$0xff] %vm313, 0.0
        %333 = vst.msk [vmem:[#allocation2 + $0x98] sm:$0xff] %vm313, 0.0
        %334 = vst.msk [vmem:[#allocation2 + $0xa0] sm:$0xff] %vm313, 0.0
        %335 = vst.msk [vmem:[#allocation2 + $0xa8] sm:$0xff] %vm313, 0.0
        %336 = vst.msk [vmem:[#allocation2 + $0xb0] sm:$0xff] %vm313, 0.0
        %337 = vst.msk [vmem:[#allocation2 + $0xb8] sm:$0xff] %vm313, 0.0
        %338 = vst.msk [vmem:[#allocation2 + $0xc0] sm:$0xff] %vm313, 0.0
        %339 = vst.msk [vmem:[#allocation2 + $0xc8] sm:$0xff] %vm313, 0.0
        %340 = vst.msk [vmem:[#allocation2 + $0xd0] sm:$0xff] %vm313, 0.0
        %341 = vst.msk [vmem:[#allocation2 + $0xd8] sm:$0xff] %vm313, 0.0
        %342 = vst.msk [vmem:[#allocation2 + $0xe0] sm:$0xff] %vm313, 0.0
        %343 = vst.msk [vmem:[#allocation2 + $0xe8] sm:$0xff] %vm313, 0.0
        %344 = vst.msk [vmem:[#allocation2 + $0xf0] sm:$0xff] %vm313, 0.0
        %345 = vst.msk [vmem:[#allocation2 + $0xf8] sm:$0xff] %vm313, 0.0
        %346 = vst.msk [vmem:[#allocation2 + $0x100] sm:$0xff] %vm313, 0.0
        %347 = vst.msk [vmem:[#allocation2 + $0x108] sm:$0xff] %vm313, 0.0
        %348 = vst.msk [vmem:[#allocation2 + $0x110] sm:$0xff] %vm313, 0.0
        %349 = vst.msk [vmem:[#allocation2 + $0x118] sm:$0xff] %vm313, 0.0
        %350 = vst.msk [vmem:[#allocation2 + $0x120] sm:$0xff] %vm313, 0.0
        %351 = vst.msk [vmem:[#allocation2 + $0x128] sm:$0xff] %vm313, 0.0
        %352 = vst.msk [vmem:[#allocation2 + $0x130] sm:$0xff] %vm313, 0.0
        %353 = vst.msk [vmem:[#allocation2 + $0x138] sm:$0xff] %vm313, 0.0
        %354 = vst.msk [vmem:[#allocation2 + $0x140] sm:$0xff] %vm313, 0.0
        %355 = vst.msk [vmem:[#allocation2 + $0x148] sm:$0xff] %vm313, 0.0
        %356 = vst.msk [vmem:[#allocation2 + $0x150] sm:$0xff] %vm313, 0.0
        %357 = vst.msk [vmem:[#allocation2 + $0x158] sm:$0xff] %vm313, 0.0
        %358 = vst.msk [vmem:[#allocation2 + $0x160] sm:$0xff] %vm313, 0.0
        %359 = vst.msk [vmem:[#allocation2 + $0x168] sm:$0xff] %vm313, 0.0
        %360 = vst.msk [vmem:[#allocation2 + $0x170] sm:$0xff] %vm313, 0.0
        %361 = vst.msk [vmem:[#allocation2 + $0x178] sm:$0xff] %vm313, 0.0
        %362 = vst.msk [vmem:[#allocation2 + $0x180] sm:$0xff] %vm313, 0.0
        %363 = vst.msk [vmem:[#allocation2 + $0x188] sm:$0xff] %vm313, 0.0
        %364 = vst.msk [vmem:[#allocation2 + $0x190] sm:$0xff] %vm313, 0.0
        %365 = vst.msk [vmem:[#allocation2 + $0x198] sm:$0xff] %vm313, 0.0
        %366 = vst.msk [vmem:[#allocation2 + $0x1a0] sm:$0xff] %vm313, 0.0
        %367 = vst.msk [vmem:[#allocation2 + $0x1a8] sm:$0xff] %vm313, 0.0
        %368 = vst.msk [vmem:[#allocation2 + $0x1b0] sm:$0xff] %vm313, 0.0
        %369 = vst.msk [vmem:[#allocation2 + $0x1b8] sm:$0xff] %vm313, 0.0
        %370 = vst.msk [vmem:[#allocation2 + $0x1c0] sm:$0xff] %vm313, 0.0
        %371 = vst.msk [vmem:[#allocation2 + $0x1c8] sm:$0xff] %vm313, 0.0
        %372 = vst.msk [vmem:[#allocation2 + $0x1d0] sm:$0xff] %vm313, 0.0
        %373 = vst.msk [vmem:[#allocation2 + $0x1d8] sm:$0xff] %vm313, 0.0
        %374 = vst.msk [vmem:[#allocation2 + $0x1e0] sm:$0xff] %vm313, 0.0
        %375 = vst.msk [vmem:[#allocation2 + $0x1e8] sm:$0xff] %vm313, 0.0
        %376 = vst.msk [vmem:[#allocation2 + $0x1f0] sm:$0xff] %vm313, 0.0
        %377 = vst.msk [vmem:[#allocation2 + $0x1f8] sm:$0xff] %vm313, 0.0
      $region40: #{densenet_forward.13} parent=35 // pred_fallthru
        _
      %v378 = vld [vmem:[%s281] sm:$0xff]
      %v379 = vld [vmem:[%s281 + $0x8] sm:$0xf]
      %v380 = vld [vmem:[%s281 + $0xc] sm:$0xff]
      %v381 = vld [vmem:[%s281 + $0x14] sm:$0xf]
      %v382 = vld [vmem:[%s281 + $0x18] sm:$0xff]
      %v383 = vld [vmem:[%s281 + $0x20] sm:$0xf]
      %v384 = vld [vmem:[%s281 + $0x24] sm:$0xff]
      %v385 = vld [vmem:[%s281 + $0x2c] sm:$0xf]
      %v386 = vld [vmem:[%s281 + $0x30] sm:$0xff]
      %v387 = vld [vmem:[%s281 + $0x38] sm:$0xf]
      %v388 = vld [vmem:[%s281 + $0x3c] sm:$0xff]
      %v389 = vld [vmem:[%s281 + $0x44] sm:$0xf]
      %v390 = vld [vmem:[%s281 + $0x48] sm:$0xff]
      %v391 = vld [vmem:[%s281 + $0x50] sm:$0xf]
      %v392 = vld [vmem:[%s281 + $0x54] sm:$0xff]
      %v393 = vld [vmem:[%s281 + $0x5c] sm:$0xf]
      %v394 = vld [vmem:[%s281 + $0x60] sm:$0xff]
      %v395 = vld [vmem:[%s281 + $0x68] sm:$0xf]
      %v396 = vld [vmem:[%s281 + $0x6c] sm:$0xff]
      %v397 = vld [vmem:[%s281 + $0x74] sm:$0xf]
      %v398 = vld [vmem:[%s281 + $0x78] sm:$0xff]
      %v399 = vld [vmem:[%s281 + $0x80] sm:$0xf]
      %v400 = vld [vmem:[%s281 + $0x84] sm:$0xff]
      %v401 = vld [vmem:[%s281 + $0x8c] sm:$0xf]
      %v402 = vld [vmem:[%s281 + $0x90] sm:$0xff]
      %v403 = vld [vmem:[%s281 + $0x98] sm:$0xf]
      %v404 = vld [vmem:[%s281 + $0x9c] sm:$0xff]
      %v405 = vld [vmem:[%s281 + $0xa4] sm:$0xf]
      %v406 = vld [vmem:[%s281 + $0xa8] sm:$0xff]
      %v407 = vld [vmem:[%s281 + $0xb0] sm:$0xf]
      %v408 = vld [vmem:[%s281 + $0xb4] sm:$0xff]
      %v409 = vld [vmem:[%s281 + $0xbc] sm:$0xf]
      %v410 = vld [vmem:[%s281 + $0xc0] sm:$0xff]
      %v411 = vld [vmem:[%s281 + $0xc8] sm:$0xf]
      %v412 = vld [vmem:[%s281 + $0xcc] sm:$0xff]
      %v413 = vld [vmem:[%s281 + $0xd4] sm:$0xf]
      %v414 = vld [vmem:[%s281 + $0xd8] sm:$0xff]
      %v415 = vld [vmem:[%s281 + $0xe0] sm:$0xf]
      %v416 = vld [vmem:[%s281 + $0xe4] sm:$0xff]
      %v417 = vld [vmem:[%s281 + $0xec] sm:$0xf]
      %v418 = vld [vmem:[%s281 + $0xf0] sm:$0xff]
      %v419 = vld [vmem:[%s281 + $0xf8] sm:$0xf]
      %v420 = vld [vmem:[%s281 + $0xfc] sm:$0xff]
      %v421 = vld [vmem:[%s281 + $0x104] sm:$0xf]
      %v422 = vld [vmem:[%s281 + $0x108] sm:$0xff]
      %v423 = vld [vmem:[%s281 + $0x110] sm:$0xf]
      %v424 = vld [vmem:[%s281 + $0x114] sm:$0xff]
      %v425 = vld [vmem:[%s281 + $0x11c] sm:$0xf]
      %v426 = vld [vmem:[%s281 + $0x120] sm:$0xff]
      %v427 = vld [vmem:[%s281 + $0x128] sm:$0xf]
      %v428 = vld [vmem:[%s281 + $0x12c] sm:$0xff]
      %v429 = vld [vmem:[%s281 + $0x134] sm:$0xf]
      %v430 = vld [vmem:[%s281 + $0x138] sm:$0xff]
      %v431 = vld [vmem:[%s281 + $0x140] sm:$0xf]
      %v432 = vld [vmem:[%s281 + $0x144] sm:$0xff]
      %v433 = vld [vmem:[%s281 + $0x14c] sm:$0xf]
      %v434 = vld [vmem:[%s281 + $0x150] sm:$0xff]
      %v435 = vld [vmem:[%s281 + $0x158] sm:$0xf]
      %v436 = vld [vmem:[%s281 + $0x15c] sm:$0xff]
      %v437 = vld [vmem:[%s281 + $0x164] sm:$0xf]
      %v438 = vld [vmem:[%s281 + $0x168] sm:$0xff]
      %v439 = vld [vmem:[%s281 + $0x170] sm:$0xf]
      %v440 = vld [vmem:[%s281 + $0x174] sm:$0xff]
      %v441 = vld [vmem:[%s281 + $0x17c] sm:$0xf]
      %v442 = vld [vmem:[%s281 + $0x180] sm:$0xff]
      %v443 = vld [vmem:[%s281 + $0x188] sm:$0xf]
      %v444 = vld [vmem:[%s281 + $0x18c] sm:$0xff]
      %v445 = vld [vmem:[%s281 + $0x194] sm:$0xf]
      %v446 = vld [vmem:[%s281 + $0x198] sm:$0xff]
      %v447 = vld [vmem:[%s281 + $0x1a0] sm:$0xf]
      %v448 = vld [vmem:[%s281 + $0x1a4] sm:$0xff]
      %v449 = vld [vmem:[%s281 + $0x1ac] sm:$0xf]
      %v450 = vld [vmem:[%s281 + $0x1b0] sm:$0xff]
      %v451 = vld [vmem:[%s281 + $0x1b8] sm:$0xf]
      %v452 = vld [vmem:[%s281 + $0x1bc] sm:$0xff]
      %v453 = vld [vmem:[%s281 + $0x1c4] sm:$0xf]
      %v454 = vld [vmem:[%s281 + $0x1c8] sm:$0xff]
      %v455 = vld [vmem:[%s281 + $0x1d0] sm:$0xf]
      %v456 = vld [vmem:[%s281 + $0x1d4] sm:$0xff]
      %v457 = vld [vmem:[%s281 + $0x1dc] sm:$0xf]
      %v458 = vld [vmem:[%s281 + $0x1e0] sm:$0xff]
      %v459 = vld [vmem:[%s281 + $0x1e8] sm:$0xf]
      %v460 = vld [vmem:[%s281 + $0x1ec] sm:$0xff]
      %v461 = vld [vmem:[%s281 + $0x1f4] sm:$0xf]
      %v462 = vld [vmem:[%s281 + $0x1f8] sm:$0xff]
      %v463 = vld [vmem:[%s281 + $0x200] sm:$0xf]
      %v464 = vld [vmem:[%s281 + $0x204] sm:$0xff]
      %v465 = vld [vmem:[%s281 + $0x20c] sm:$0xf]
      %v466 = vld [vmem:[%s281 + $0x210] sm:$0xff]
      %v467 = vld [vmem:[%s281 + $0x218] sm:$0xf]
      %v468 = vld [vmem:[%s281 + $0x21c] sm:$0xff]
      %v469 = vld [vmem:[%s281 + $0x224] sm:$0xf]
      %v470 = vld [vmem:[%s281 + $0x228] sm:$0xff]
      %v471 = vld [vmem:[%s281 + $0x230] sm:$0xf]
      %v472 = vld [vmem:[%s281 + $0x234] sm:$0xff]
      %v473 = vld [vmem:[%s281 + $0x23c] sm:$0xf]
      %v474 = vld [vmem:[%s281 + $0x240] sm:$0xff]
      %v475 = vld [vmem:[%s281 + $0x248] sm:$0xf]
      %v476 = vld [vmem:[%s281 + $0x24c] sm:$0xff]
      %v477 = vld [vmem:[%s281 + $0x254] sm:$0xf]
      %v478 = vld [vmem:[%s281 + $0x258] sm:$0xff]
      %v479 = vld [vmem:[%s281 + $0x260] sm:$0xf]
      %v480 = vld [vmem:[%s281 + $0x264] sm:$0xff]
      %v481 = vld [vmem:[%s281 + $0x26c] sm:$0xf]
      %v482 = vld [vmem:[%s281 + $0x270] sm:$0xff]
      %v483 = vld [vmem:[%s281 + $0x278] sm:$0xf]
      %v484 = vld [vmem:[%s281 + $0x27c] sm:$0xff]
      %v485 = vld [vmem:[%s281 + $0x284] sm:$0xf]
      %v486 = vld [vmem:[%s281 + $0x288] sm:$0xff]
      %v487 = vld [vmem:[%s281 + $0x290] sm:$0xf]
      %v488 = vld [vmem:[%s281 + $0x294] sm:$0xff]
      %v489 = vld [vmem:[%s281 + $0x29c] sm:$0xf]
      %v490 = vld [vmem:[%s281 + $0x2a0] sm:$0xff]
      %v491 = vld [vmem:[%s281 + $0x2a8] sm:$0xf]
      %v492 = vld [vmem:[%s281 + $0x2ac] sm:$0xff]
      %v493 = vld [vmem:[%s281 + $0x2b4] sm:$0xf]
      %v494 = vld [vmem:[%s281 + $0x2b8] sm:$0xff]
      %v495 = vld [vmem:[%s281 + $0x2c0] sm:$0xf]
      %v496 = vld [vmem:[%s281 + $0x2c4] sm:$0xff]
      %v497 = vld [vmem:[%s281 + $0x2cc] sm:$0xf]
      %v498 = vld [vmem:[%s281 + $0x2d0] sm:$0xff]
      %v499 = vld [vmem:[%s281 + $0x2d8] sm:$0xf]
      %v500 = vld [vmem:[%s281 + $0x2dc] sm:$0xff]
      %v501 = vld [vmem:[%s281 + $0x2e4] sm:$0xf]
      %v502 = vld [vmem:[%s281 + $0x2e8] sm:$0xff]
      %v503 = vld [vmem:[%s281 + $0x2f0] sm:$0xf]
      %v504 = vld [vmem:[%s281 + $0x2f4] sm:$0xff]
      %v505 = vld [vmem:[%s281 + $0x2fc] sm:$0xf]
      %v506 = vld [vmem:[#allocation2] sm:$0xff]
      %v507 = vld [vmem:[#allocation2 + $0x8] sm:$0xff]
      %v508 = vld [vmem:[#allocation2 + $0x10] sm:$0xff]
      %v509 = vld [vmem:[#allocation2 + $0x18] sm:$0xff]
      %v510 = vld [vmem:[#allocation2 + $0x20] sm:$0xff]
      %v511 = vld [vmem:[#allocation2 + $0x28] sm:$0xff]
      %v512 = vld [vmem:[#allocation2 + $0x30] sm:$0xff]
      %v513 = vld [vmem:[#allocation2 + $0x38] sm:$0xff]
      %v514 = vld [vmem:[#allocation2 + $0x40] sm:$0xff]
      %v515 = vld [vmem:[#allocation2 + $0x48] sm:$0xff]
      %v516 = vld [vmem:[#allocation2 + $0x50] sm:$0xff]
      %v517 = vld [vmem:[#allocation2 + $0x58] sm:$0xff]
      %v518 = vld [vmem:[#allocation2 + $0x60] sm:$0xff]
      %v519 = vld [vmem:[#allocation2 + $0x68] sm:$0xff]
      %v520 = vld [vmem:[#allocation2 + $0x70] sm:$0xff]
      %v521 = vld [vmem:[#allocation2 + $0x78] sm:$0xff]
      %v522 = vld [vmem:[#allocation2 + $0x80] sm:$0xff]
      %v523 = vld [vmem:[#allocation2 + $0x88] sm:$0xff]
      %v524 = vld [vmem:[#allocation2 + $0x90] sm:$0xff]
      %v525 = vld [vmem:[#allocation2 + $0x98] sm:$0xff]
      %v526 = vld [vmem:[#allocation2 + $0xa0] sm:$0xff]
      %v527 = vld [vmem:[#allocation2 + $0xa8] sm:$0xff]
      %v528 = vld [vmem:[#allocation2 + $0xb0] sm:$0xff]
      %v529 = vld [vmem:[#allocation2 + $0xb8] sm:$0xff]
      %v530 = vld [vmem:[#allocation2 + $0xc0] sm:$0xff]
      %v531 = vld [vmem:[#allocation2 + $0xc8] sm:$0xff]
      %v532 = vld [vmem:[#allocation2 + $0xd0] sm:$0xff]
      %v533 = vld [vmem:[#allocation2 + $0xd8] sm:$0xff]
      %v534 = vld [vmem:[#allocation2 + $0xe0] sm:$0xff]
      %v535 = vld [vmem:[#allocation2 + $0xe8] sm:$0xff]
      %v536 = vld [vmem:[#allocation2 + $0xf0] sm:$0xff]
      %v537 = vld [vmem:[#allocation2 + $0xf8] sm:$0xff]
      %v538 = vld [vmem:[#allocation2 + $0x100] sm:$0xff]
      %v539 = vld [vmem:[#allocation2 + $0x108] sm:$0xff]
      %v540 = vld [vmem:[#allocation2 + $0x110] sm:$0xff]
      %v541 = vld [vmem:[#allocation2 + $0x118] sm:$0xff]
      %v542 = vld [vmem:[#allocation2 + $0x120] sm:$0xff]
      %v543 = vld [vmem:[#allocation2 + $0x128] sm:$0xff]
      %v544 = vld [vmem:[#allocation2 + $0x130] sm:$0xff]
      %v545 = vld [vmem:[#allocation2 + $0x138] sm:$0xff]
      %v546 = vld [vmem:[#allocation2 + $0x140] sm:$0xff]
      %v547 = vld [vmem:[#allocation2 + $0x148] sm:$0xff]
      %v548 = vld [vmem:[#allocation2 + $0x150] sm:$0xff]
      %v549 = vld [vmem:[#allocation2 + $0x158] sm:$0xff]
      %v550 = vld [vmem:[#allocation2 + $0x160] sm:$0xff]
      %v551 = vld [vmem:[#allocation2 + $0x168] sm:$0xff]
      %v552 = vld [vmem:[#allocation2 + $0x170] sm:$0xff]
      %v553 = vld [vmem:[#allocation2 + $0x178] sm:$0xff]
      %v554 = vld [vmem:[#allocation2 + $0x180] sm:$0xff]
      %v555 = vld [vmem:[#allocation2 + $0x188] sm:$0xff]
      %v556 = vld [vmem:[#allocation2 + $0x190] sm:$0xff]
      %v557 = vld [vmem:[#allocation2 + $0x198] sm:$0xff]
      %v558 = vld [vmem:[#allocation2 + $0x1a0] sm:$0xff]
      %v559 = vld [vmem:[#allocation2 + $0x1a8] sm:$0xff]
      %v560 = vld [vmem:[#allocation2 + $0x1b0] sm:$0xff]
      %v561 = vld [vmem:[#allocation2 + $0x1b8] sm:$0xff]
      %v562 = vld [vmem:[#allocation2 + $0x1c0] sm:$0xff]
      %v563 = vld [vmem:[#allocation2 + $0x1c8] sm:$0xff]
      %v564 = vld [vmem:[#allocation2 + $0x1d0] sm:$0xff]
      %v565 = vld [vmem:[#allocation2 + $0x1d8] sm:$0xff]
      %v566 = vld [vmem:[#allocation2 + $0x1e0] sm:$0xff]
      %v567 = vld [vmem:[#allocation2 + $0x1e8] sm:$0xff]
      %v568 = vld [vmem:[#allocation2 + $0x1f0] sm:$0xff]
      %v569 = vld [vmem:[#allocation2 + $0x1f8] sm:$0xff]
      %v570 = vld [vmem:[%s291] sm:$0xf]
      %v571 = vld [vmem:[%s291 + $0x4] sm:$0xf]
      %v572 = vld [vmem:[%s291 + $0x8] sm:$0xf]
      %v573 = vld [vmem:[%s291 + $0xc] sm:$0xf]
      %v574 = vld [vmem:[%s291 + $0x10] sm:$0xf]
      %v575 = vld [vmem:[%s291 + $0x14] sm:$0xf]
      %v576 = vld [vmem:[%s291 + $0x18] sm:$0xf]
      %v577 = vld [vmem:[%s291 + $0x1c] sm:$0xf]
      %v578 = vld [vmem:[%s291 + $0x20] sm:$0xf]
      %v579 = vld [vmem:[%s291 + $0x24] sm:$0xf]
      %v580 = vld [vmem:[%s291 + $0x28] sm:$0xf]
      %v581 = vld [vmem:[%s291 + $0x2c] sm:$0xf]
      %v582 = vld [vmem:[%s291 + $0x30] sm:$0xf]
      %v583 = vld [vmem:[%s291 + $0x34] sm:$0xf]
      %v584 = vld [vmem:[%s291 + $0x38] sm:$0xf]
      %v585 = vld [vmem:[%s291 + $0x3c] sm:$0xf]
      %v586 = vld [vmem:[%s291 + $0x40] sm:$0xf]
      %v587 = vld [vmem:[%s291 + $0x44] sm:$0xf]
      %v588 = vld [vmem:[%s291 + $0x48] sm:$0xf]
      %v589 = vld [vmem:[%s291 + $0x4c] sm:$0xf]
      %v590 = vld [vmem:[%s291 + $0x50] sm:$0xf]
      %v591 = vld [vmem:[%s291 + $0x54] sm:$0xf]
      %v592 = vld [vmem:[%s291 + $0x58] sm:$0xf]
      %v593 = vld [vmem:[%s291 + $0x5c] sm:$0xf]
      %v594 = vld [vmem:[%s291 + $0x60] sm:$0xf]
      %v595 = vld [vmem:[%s291 + $0x64] sm:$0xf]
      %v596 = vld [vmem:[%s291 + $0x68] sm:$0xf]
      %v597 = vld [vmem:[%s291 + $0x6c] sm:$0xf]
      %v598 = vld [vmem:[%s291 + $0x70] sm:$0xf]
      %v599 = vld [vmem:[%s291 + $0x74] sm:$0xf]
      %v600 = vld [vmem:[%s291 + $0x78] sm:$0xf]
      %v601 = vld [vmem:[%s291 + $0x7c] sm:$0xf]
      %v602 = vld [vmem:[%s291 + $0x80] sm:$0xf]
      %v603 = vld [vmem:[%s291 + $0x84] sm:$0xf]
      %v604 = vld [vmem:[%s291 + $0x88] sm:$0xf]
      %v605 = vld [vmem:[%s291 + $0x8c] sm:$0xf]
      %v606 = vld [vmem:[%s291 + $0x90] sm:$0xf]
      %v607 = vld [vmem:[%s291 + $0x94] sm:$0xf]
      %v608 = vld [vmem:[%s291 + $0x98] sm:$0xf]
      %v609 = vld [vmem:[%s291 + $0x9c] sm:$0xf]
      %v610 = vld [vmem:[%s291 + $0xa0] sm:$0xf]
      %v611 = vld [vmem:[%s291 + $0xa4] sm:$0xf]
      %v612 = vld [vmem:[%s291 + $0xa8] sm:$0xf]
      %v741 = vunpack.c.l.b16 %v378
      %v742 = vunpack.c.h.b16 %v378
      %v743 = vunpack.c.l.b16 %v379
      %v744 = vunpack.c.l.b16 %v380
      %v745 = vunpack.c.h.b16 %v380
      %v746 = vunpack.c.l.b16 %v381
      %v747 = vunpack.c.l.b16 %v382
      %v748 = vunpack.c.h.b16 %v382
      %v749 = vunpack.c.l.b16 %v383
      %v750 = vunpack.c.l.b16 %v384
      %v751 = vunpack.c.h.b16 %v384
      %v752 = vunpack.c.l.b16 %v385
      %v753 = vunpack.c.l.b16 %v386
      %v754 = vunpack.c.h.b16 %v386
      %v755 = vunpack.c.l.b16 %v387
      %v756 = vunpack.c.l.b16 %v388
      %v757 = vunpack.c.h.b16 %v388
      %v758 = vunpack.c.l.b16 %v389
      %v759 = vunpack.c.l.b16 %v390
      %v760 = vunpack.c.h.b16 %v390
      %v761 = vunpack.c.l.b16 %v391
      %v762 = vunpack.c.l.b16 %v392
      %v763 = vunpack.c.h.b16 %v392
      %v764 = vunpack.c.l.b16 %v393
      %v765 = vunpack.c.l.b16 %v394
      %v766 = vunpack.c.h.b16 %v394
      %v767 = vunpack.c.l.b16 %v395
      %v768 = vunpack.c.l.b16 %v396
      %v769 = vunpack.c.h.b16 %v396
      %v770 = vunpack.c.l.b16 %v397
      %v771 = vunpack.c.l.b16 %v398
      %v772 = vunpack.c.h.b16 %v398
      %v773 = vunpack.c.l.b16 %v399
      %v774 = vunpack.c.l.b16 %v400
      %v775 = vunpack.c.h.b16 %v400
      %v776 = vunpack.c.l.b16 %v401
      %v777 = vunpack.c.l.b16 %v402
      %v778 = vunpack.c.h.b16 %v402
      %v779 = vunpack.c.l.b16 %v403
      %v780 = vunpack.c.l.b16 %v404
      %v781 = vunpack.c.h.b16 %v404
      %v782 = vunpack.c.l.b16 %v405
      %v783 = vunpack.c.l.b16 %v406
      %v784 = vunpack.c.h.b16 %v406
      %v785 = vunpack.c.l.b16 %v407
      %v786 = vunpack.c.l.b16 %v408
      %v787 = vunpack.c.h.b16 %v408
      %v788 = vunpack.c.l.b16 %v409
      %v789 = vunpack.c.l.b16 %v410
      %v790 = vunpack.c.h.b16 %v410
      %v791 = vunpack.c.l.b16 %v411
      %v792 = vunpack.c.l.b16 %v412
      %v793 = vunpack.c.h.b16 %v412
      %v794 = vunpack.c.l.b16 %v413
      %v795 = vunpack.c.l.b16 %v414
      %v796 = vunpack.c.h.b16 %v414
      %v797 = vunpack.c.l.b16 %v415
      %v798 = vunpack.c.l.b16 %v416
      %v799 = vunpack.c.h.b16 %v416
      %v800 = vunpack.c.l.b16 %v417
      %v801 = vunpack.c.l.b16 %v418
      %v802 = vunpack.c.h.b16 %v418
      %v803 = vunpack.c.l.b16 %v419
      %v804 = vunpack.c.l.b16 %v420
      %v805 = vunpack.c.h.b16 %v420
      %v806 = vunpack.c.l.b16 %v421
      %v807 = vunpack.c.l.b16 %v422
      %v808 = vunpack.c.h.b16 %v422
      %v809 = vunpack.c.l.b16 %v423
      %v810 = vunpack.c.l.b16 %v424
      %v811 = vunpack.c.h.b16 %v424
      %v812 = vunpack.c.l.b16 %v425
      %v813 = vunpack.c.l.b16 %v426
      %v814 = vunpack.c.h.b16 %v426
      %v815 = vunpack.c.l.b16 %v427
      %v816 = vunpack.c.l.b16 %v428
      %v817 = vunpack.c.h.b16 %v428
      %v818 = vunpack.c.l.b16 %v429
      %v819 = vunpack.c.l.b16 %v430
      %v820 = vunpack.c.h.b16 %v430
      %v821 = vunpack.c.l.b16 %v431
      %v822 = vunpack.c.l.b16 %v432
      %v823 = vunpack.c.h.b16 %v432
      %v824 = vunpack.c.l.b16 %v433
      %v825 = vunpack.c.l.b16 %v434
      %v826 = vunpack.c.h.b16 %v434
      %v827 = vunpack.c.l.b16 %v435
      %v828 = vunpack.c.l.b16 %v436
      %v829 = vunpack.c.h.b16 %v436
      %v830 = vunpack.c.l.b16 %v437
      %v831 = vunpack.c.l.b16 %v438
      %v832 = vunpack.c.h.b16 %v438
      %v833 = vunpack.c.l.b16 %v439
      %v834 = vunpack.c.l.b16 %v440
      %v835 = vunpack.c.h.b16 %v440
      %v836 = vunpack.c.l.b16 %v441
      %v837 = vunpack.c.l.b16 %v442
      %v838 = vunpack.c.h.b16 %v442
      %v839 = vunpack.c.l.b16 %v443
      %v840 = vunpack.c.l.b16 %v444
      %v841 = vunpack.c.h.b16 %v444
      %v842 = vunpack.c.l.b16 %v445
      %v843 = vunpack.c.l.b16 %v446
      %v844 = vunpack.c.h.b16 %v446
      %v845 = vunpack.c.l.b16 %v447
      %v846 = vunpack.c.l.b16 %v448
      %v847 = vunpack.c.h.b16 %v448
      %v848 = vunpack.c.l.b16 %v449
      %v849 = vunpack.c.l.b16 %v450
      %v850 = vunpack.c.h.b16 %v450
      %v851 = vunpack.c.l.b16 %v451
      %v852 = vunpack.c.l.b16 %v452
      %v853 = vunpack.c.h.b16 %v452
      %v854 = vunpack.c.l.b16 %v453
      %v855 = vunpack.c.l.b16 %v454
      %v856 = vunpack.c.h.b16 %v454
      %v857 = vunpack.c.l.b16 %v455
      %v858 = vunpack.c.l.b16 %v456
      %v859 = vunpack.c.h.b16 %v456
      %v860 = vunpack.c.l.b16 %v457
      %v861 = vunpack.c.l.b16 %v458
      %v862 = vunpack.c.h.b16 %v458
      %v863 = vunpack.c.l.b16 %v459
      %v864 = vunpack.c.l.b16 %v460
      %v865 = vunpack.c.h.b16 %v460
      %v866 = vunpack.c.l.b16 %v461
      %v867 = vunpack.c.l.b16 %v462
      %v868 = vunpack.c.h.b16 %v462
      %v869 = vunpack.c.l.b16 %v463
      %v870 = vunpack.c.l.b16 %v464
      %v871 = vunpack.c.h.b16 %v464
      %v872 = vunpack.c.l.b16 %v465
      %v873 = vunpack.c.l.b16 %v466
      %v874 = vunpack.c.h.b16 %v466
      %v875 = vunpack.c.l.b16 %v467
      %v876 = vunpack.c.l.b16 %v468
      %v877 = vunpack.c.h.b16 %v468
      %v878 = vunpack.c.l.b16 %v469
      %v879 = vunpack.c.l.b16 %v470
      %v880 = vunpack.c.h.b16 %v470
      %v881 = vunpack.c.l.b16 %v471
      %v882 = vunpack.c.l.b16 %v472
      %v883 = vunpack.c.h.b16 %v472
      %v884 = vunpack.c.l.b16 %v473
      %v885 = vunpack.c.l.b16 %v474
      %v886 = vunpack.c.h.b16 %v474
      %v887 = vunpack.c.l.b16 %v475
      %v888 = vunpack.c.l.b16 %v476
      %v889 = vunpack.c.h.b16 %v476
      %v890 = vunpack.c.l.b16 %v477
      %v891 = vunpack.c.l.b16 %v478
      %v892 = vunpack.c.h.b16 %v478
      %v893 = vunpack.c.l.b16 %v479
      %v894 = vunpack.c.l.b16 %v480
      %v895 = vunpack.c.h.b16 %v480
      %v896 = vunpack.c.l.b16 %v481
      %v897 = vunpack.c.l.b16 %v482
      %v898 = vunpack.c.h.b16 %v482
      %v899 = vunpack.c.l.b16 %v483
      %v900 = vunpack.c.l.b16 %v484
      %v901 = vunpack.c.h.b16 %v484
      %v902 = vunpack.c.l.b16 %v485
      %v903 = vunpack.c.l.b16 %v486
      %v904 = vunpack.c.h.b16 %v486
      %v905 = vunpack.c.l.b16 %v487
      %v906 = vunpack.c.l.b16 %v488
      %v907 = vunpack.c.h.b16 %v488
      %v908 = vunpack.c.l.b16 %v489
      %v909 = vunpack.c.l.b16 %v490
      %v910 = vunpack.c.h.b16 %v490
      %v911 = vunpack.c.l.b16 %v491
      %v912 = vunpack.c.l.b16 %v492
      %v913 = vunpack.c.h.b16 %v492
      %v914 = vunpack.c.l.b16 %v493
      %v915 = vunpack.c.l.b16 %v494
      %v916 = vunpack.c.h.b16 %v494
      %v917 = vunpack.c.l.b16 %v495
      %v918 = vunpack.c.l.b16 %v496
      %v919 = vunpack.c.h.b16 %v496
      %v920 = vunpack.c.l.b16 %v497
      %v921 = vunpack.c.l.b16 %v498
      %v922 = vunpack.c.h.b16 %v498
      %v923 = vunpack.c.l.b16 %v499
      %v924 = vunpack.c.l.b16 %v500
      %v925 = vunpack.c.h.b16 %v500
      %v926 = vunpack.c.l.b16 %v501
      %v927 = vunpack.c.l.b16 %v502
      %v928 = vunpack.c.h.b16 %v502
      %v929 = vunpack.c.l.b16 %v503
      %v930 = vunpack.c.l.b16 %v504
      %v931 = vunpack.c.h.b16 %v504
      %v932 = vunpack.c.l.b16 %v505
      %v933 = vpack.c.b16 %v744, %v741
      %v934 = vpack.c.b16 %v745, %v742
      %v935 = vpack.c.b16 %v746, %v743
      %v936 = vpack.c.b16 %v750, %v747
      %v937 = vpack.c.b16 %v751, %v748
      %v938 = vpack.c.b16 %v752, %v749
      %v939 = vpack.c.b16 %v756, %v753
      %v940 = vpack.c.b16 %v757, %v754
      %v941 = vpack.c.b16 %v758, %v755
      %v942 = vpack.c.b16 %v762, %v759
      %v943 = vpack.c.b16 %v763, %v760
      %v944 = vpack.c.b16 %v764, %v761
      %v945 = vpack.c.b16 %v768, %v765
      %v946 = vpack.c.b16 %v769, %v766
      %v947 = vpack.c.b16 %v770, %v767
      %v948 = vpack.c.b16 %v774, %v771
      %v949 = vpack.c.b16 %v775, %v772
      %v950 = vpack.c.b16 %v776, %v773
      %v951 = vpack.c.b16 %v780, %v777
      %v952 = vpack.c.b16 %v781, %v778
      %v953 = vpack.c.b16 %v782, %v779
      %v954 = vpack.c.b16 %v786, %v783
      %v955 = vpack.c.b16 %v787, %v784
      %v956 = vpack.c.b16 %v788, %v785
      %v957 = vpack.c.b16 %v792, %v789
      %v958 = vpack.c.b16 %v793, %v790
      %v959 = vpack.c.b16 %v794, %v791
      %v960 = vpack.c.b16 %v798, %v795
      %v961 = vpack.c.b16 %v799, %v796
      %v962 = vpack.c.b16 %v800, %v797
      %v963 = vpack.c.b16 %v804, %v801
      %v964 = vpack.c.b16 %v805, %v802
      %v965 = vpack.c.b16 %v806, %v803
      %v966 = vpack.c.b16 %v810, %v807
      %v967 = vpack.c.b16 %v811, %v808
      %v968 = vpack.c.b16 %v812, %v809
      %v969 = vpack.c.b16 %v816, %v813
      %v970 = vpack.c.b16 %v817, %v814
      %v971 = vpack.c.b16 %v818, %v815
      %v972 = vpack.c.b16 %v822, %v819
      %v973 = vpack.c.b16 %v823, %v820
      %v974 = vpack.c.b16 %v824, %v821
      %v975 = vpack.c.b16 %v828, %v825
      %v976 = vpack.c.b16 %v829, %v826
      %v977 = vpack.c.b16 %v830, %v827
      %v978 = vpack.c.b16 %v834, %v831
      %v979 = vpack.c.b16 %v835, %v832
      %v980 = vpack.c.b16 %v836, %v833
      %v981 = vpack.c.b16 %v840, %v837
      %v982 = vpack.c.b16 %v841, %v838
      %v983 = vpack.c.b16 %v842, %v839
      %v984 = vpack.c.b16 %v846, %v843
      %v985 = vpack.c.b16 %v847, %v844
      %v986 = vpack.c.b16 %v848, %v845
      %v987 = vpack.c.b16 %v852, %v849
      %v988 = vpack.c.b16 %v853, %v850
      %v989 = vpack.c.b16 %v854, %v851
      %v990 = vpack.c.b16 %v858, %v855
      %v991 = vpack.c.b16 %v859, %v856
      %v992 = vpack.c.b16 %v860, %v857
      %v993 = vpack.c.b16 %v864, %v861
      %v994 = vpack.c.b16 %v865, %v862
      %v995 = vpack.c.b16 %v866, %v863
      %v996 = vpack.c.b16 %v870, %v867
      %v997 = vpack.c.b16 %v871, %v868
      %v998 = vpack.c.b16 %v872, %v869
      %v999 = vpack.c.b16 %v876, %v873
      %v1000 = vpack.c.b16 %v877, %v874
      %v1001 = vpack.c.b16 %v878, %v875
      %v1002 = vpack.c.b16 %v882, %v879
      %v1003 = vpack.c.b16 %v883, %v880
      %v1004 = vpack.c.b16 %v884, %v881
      %v1005 = vpack.c.b16 %v888, %v885
      %v1006 = vpack.c.b16 %v889, %v886
      %v1007 = vpack.c.b16 %v890, %v887
      %v1008 = vpack.c.b16 %v894, %v891
      %v1009 = vpack.c.b16 %v895, %v892
      %v1010 = vpack.c.b16 %v896, %v893
      %v1011 = vpack.c.b16 %v900, %v897
      %v1012 = vpack.c.b16 %v901, %v898
      %v1013 = vpack.c.b16 %v902, %v899
      %v1014 = vpack.c.b16 %v906, %v903
      %v1015 = vpack.c.b16 %v907, %v904
      %v1016 = vpack.c.b16 %v908, %v905
      %v1017 = vpack.c.b16 %v912, %v909
      %v1018 = vpack.c.b16 %v913, %v910
      %v1019 = vpack.c.b16 %v914, %v911
      %v1020 = vpack.c.b16 %v918, %v915
      %v1021 = vpack.c.b16 %v919, %v916
      %v1022 = vpack.c.b16 %v920, %v917
      %v1023 = vpack.c.b16 %v924, %v921
      %v1024 = vpack.c.b16 %v925, %v922
      %v1025 = vpack.c.b16 %v926, %v923
      %v1026 = vpack.c.b16 %v930, %v927
      %v1027 = vpack.c.b16 %v931, %v928
      %v1028 = vpack.c.b16 %v932, %v929
      %v1136 = vunpack.c.l.b16 %v570
      %v1137 = vunpack.c.l.b16 %v571
      %v1138 = vunpack.c.l.b16 %v572
      %v1139 = vunpack.c.l.b16 %v573
      %v1140 = vunpack.c.l.b16 %v574
      %v1141 = vunpack.c.l.b16 %v575
      %v1142 = vunpack.c.l.b16 %v576
      %v1143 = vunpack.c.l.b16 %v577
      %v1144 = vunpack.c.l.b16 %v578
      %v1145 = vunpack.c.l.b16 %v579
      %v1146 = vunpack.c.l.b16 %v580
      %v1147 = vunpack.c.l.b16 %v581
      %v1148 = vunpack.c.l.b16 %v582
      %v1149 = vunpack.c.l.b16 %v583
      %v1150 = vunpack.c.l.b16 %v584
      %v1151 = vunpack.c.l.b16 %v585
      %v1152 = vunpack.c.l.b16 %v586
      %v1153 = vunpack.c.l.b16 %v587
      %v1154 = vunpack.c.l.b16 %v588
      %v1155 = vunpack.c.l.b16 %v589
      %v1156 = vunpack.c.l.b16 %v590
      %v1157 = vunpack.c.l.b16 %v591
      %v1158 = vunpack.c.l.b16 %v592
      %v1159 = vunpack.c.l.b16 %v593
      %v1160 = vunpack.c.l.b16 %v594
      %v1161 = vunpack.c.l.b16 %v595
      %v1162 = vunpack.c.l.b16 %v596
      %v1163 = vunpack.c.l.b16 %v597
      %v1164 = vunpack.c.l.b16 %v598
      %v1165 = vunpack.c.l.b16 %v599
      %v1166 = vunpack.c.l.b16 %v600
      %v1167 = vunpack.c.l.b16 %v601
      %v1168 = vunpack.c.l.b16 %v602
      %v1169 = vunpack.c.l.b16 %v603
      %v1170 = vunpack.c.l.b16 %v604
      %v1171 = vunpack.c.l.b16 %v605
      %v1172 = vunpack.c.l.b16 %v606
      %v1173 = vunpack.c.l.b16 %v607
      %v1174 = vunpack.c.l.b16 %v608
      %v1175 = vunpack.c.l.b16 %v609
      %v1176 = vunpack.c.l.b16 %v610
      %v1177 = vunpack.c.l.b16 %v611
      %v1178 = vunpack.c.l.b16 %v612
      %v1179 = vpack.c.b16 %v1137, %v1136
      %v1180 = vpack.c.b16 %v1139, %v1138
      %v1181 = vpack.c.b16 %v1141, %v1140
      %v1182 = vpack.c.b16 %v1143, %v1142
      %v1183 = vpack.c.b16 %v1145, %v1144
      %v1184 = vpack.c.b16 %v1147, %v1146
      %v1185 = vpack.c.b16 %v1149, %v1148
      %v1186 = vpack.c.b16 %v1151, %v1150
      %v1187 = vpack.c.b16 %v1153, %v1152
      %v1188 = vpack.c.b16 %v1155, %v1154
      %v1189 = vpack.c.b16 %v1157, %v1156
      %v1190 = vpack.c.b16 %v1159, %v1158
      %v1191 = vpack.c.b16 %v1161, %v1160
      %v1192 = vpack.c.b16 %v1163, %v1162
      %v1193 = vpack.c.b16 %v1165, %v1164
      %v1194 = vpack.c.b16 %v1167, %v1166
      %v1195 = vpack.c.b16 %v1169, %v1168
      %v1196 = vpack.c.b16 %v1171, %v1170
      %v1197 = vpack.c.b16 %v1173, %v1172
      %v1198 = vpack.c.b16 %v1175, %v1174
      %v1199 = vpack.c.b16 %v1177, %v1176
      %v1200 = vpack.c.b16 %v1178, %v1178
      %vm1222 = vcmask 711680
      %v1224 = vsel %vm1222, %v935, 0
      %v1227 = vsel %vm1222, %v938, 0
      %v1230 = vsel %vm1222, %v941, 0
      %v1233 = vsel %vm1222, %v944, 0
      %v1236 = vsel %vm1222, %v947, 0
      %v1239 = vsel %vm1222, %v950, 0
      %v1242 = vsel %vm1222, %v953, 0
      %v1245 = vsel %vm1222, %v956, 0
      %v1248 = vsel %vm1222, %v959, 0
      %v1251 = vsel %vm1222, %v962, 0
      %v1254 = vsel %vm1222, %v965, 0
      %v1257 = vsel %vm1222, %v968, 0
      %v1260 = vsel %vm1222, %v971, 0
      %v1263 = vsel %vm1222, %v974, 0
      %v1266 = vsel %vm1222, %v977, 0
      %v1269 = vsel %vm1222, %v980, 0
      %v1272 = vsel %vm1222, %v983, 0
      %v1275 = vsel %vm1222, %v986, 0
      %v1278 = vsel %vm1222, %v989, 0
      %v1281 = vsel %vm1222, %v992, 0
      %v1284 = vsel %vm1222, %v995, 0
      %v1287 = vsel %vm1222, %v998, 0
      %v1290 = vsel %vm1222, %v1001, 0
      %v1293 = vsel %vm1222, %v1004, 0
      %v1296 = vsel %vm1222, %v1007, 0
      %v1299 = vsel %vm1222, %v1010, 0
      %v1302 = vsel %vm1222, %v1013, 0
      %v1305 = vsel %vm1222, %v1016, 0
      %v1308 = vsel %vm1222, %v1019, 0
      %v1311 = vsel %vm1222, %v1022, 0
      %v1314 = vsel %vm1222, %v1025, 0
      %v1317 = vsel %vm1222, %v1028, 0
      %vm1319 = vcmask 1042432
      %vm1320 = vcmask 1043456
      %v1321 = vsel %vm1319, 4294967295, 65535
      %v1322 = vsel %vm1320, %v1321, 0
      %v1324 = vand.u32 %v1200, %v1322
      %1326 = vmatprep.subr.bf16.mxu0 0
      %1327 = vmatpush1.bf16.msra.mxu0 %v1186
      %1328 = vmatprep.subr.bf16.mxu0 0
      %1329 = vmatpush1.bf16.msra.mxu0 %v1185
      %1330 = vmatprep.subr.bf16.mxu0 0
      %1331 = vmatpush1.bf16.msra.mxu0 %v1184
      %1332 = vmatprep.subr.bf16.mxu0 0
      %1333 = vmatpush1.bf16.msra.mxu0 %v1183
      %1334 = vmatprep.subr.bf16.mxu0 0
      %1335 = vmatpush1.bf16.msra.mxu0 %v1182
      %1336 = vmatprep.subr.bf16.mxu0 0
      %1337 = vmatpush1.bf16.msra.mxu0 %v1181
      %1338 = vmatprep.subr.bf16.mxu0 0
      %1339 = vmatpush1.bf16.msra.mxu0 %v1180
      %1340 = vmatprep.subr.bf16.mxu0 0
      %1341 = vmatpush1.bf16.msra.mxu0 %v1179
      %1342 = vmatprep.subr.bf16.mxu0 0
      %1343 = vmatpush2.bf16.msra.mxu0 %v1194
      %1344 = vmatprep.subr.bf16.mxu0 0
      %1345 = vmatpush2.bf16.msra.mxu0 %v1193
      %1346 = vmatprep.subr.bf16.mxu0 0
      %1347 = vmatpush2.bf16.msra.mxu0 %v1192
      %1348 = vmatprep.subr.bf16.mxu0 0
      %1349 = vmatpush2.bf16.msra.mxu0 %v1191
      %1350 = vmatprep.subr.bf16.mxu0 0
      %1351 = vmatpush2.bf16.msra.mxu0 %v1190
      %1352 = vmatprep.subr.bf16.mxu0 0
      %1353 = vmatpush2.bf16.msra.mxu0 %v1189
      %1354 = vmatprep.subr.bf16.mxu0 0
      %1355 = vmatpush2.bf16.msra.mxu0 %v1188
      %1356 = vmatprep.subr.bf16.mxu0 0
      %1357 = vmatpush2.bf16.msra.mxu0 %v1187
      %1358 = vmatprep.mubr.bf16.mxu0 %v934
      %1359 = vmatmul.mubr.bf16.gmra.mxu0 %v933
      %v1360 = vpop.f32.mrf.mxu0
      %v1361 = vadd.f32 0.0, %v1360
      %v1362 = vpop.f32.mrf.mxu0
      %v1363 = vpop.f32.mrf.mxu0
      %v1364 = vadd.f32 0.0, %v1363
      %v1365 = vpop.f32.mrf.mxu0
      %1366 = vmatprep.mubr.bf16.mxu0 %v937
      %1367 = vmatmul.mubr.bf16.gmra.mxu0 %v936
      %v1368 = vpop.f32.mrf.mxu0
      %v1369 = vadd.f32 0.0, %v1368
      %v1370 = vpop.f32.mrf.mxu0
      %v1371 = vpop.f32.mrf.mxu0
      %v1372 = vadd.f32 0.0, %v1371
      %v1373 = vpop.f32.mrf.mxu0
      %1374 = vmatprep.mubr.bf16.mxu0 %v940
      %1375 = vmatmul.mubr.bf16.gmra.mxu0 %v939
      %v1376 = vpop.f32.mrf.mxu0
      %v1377 = vadd.f32 0.0, %v1376
      %v1378 = vpop.f32.mrf.mxu0
      %v1379 = vpop.f32.mrf.mxu0
      %v1380 = vadd.f32 0.0, %v1379
      %v1381 = vpop.f32.mrf.mxu0
      %1382 = vmatprep.mubr.bf16.mxu0 %v943
      %1383 = vmatmul.mubr.bf16.gmra.mxu0 %v942
      %v1384 = vpop.f32.mrf.mxu0
      %v1385 = vadd.f32 0.0, %v1384
      %v1386 = vpop.f32.mrf.mxu0
      %v1387 = vpop.f32.mrf.mxu0
      %v1388 = vadd.f32 0.0, %v1387
      %v1389 = vpop.f32.mrf.mxu0
      %1390 = vmatprep.mubr.bf16.mxu0 %v946
      %1391 = vmatmul.mubr.bf16.gmra.mxu0 %v945
      %v1392 = vpop.f32.mrf.mxu0
      %v1393 = vadd.f32 0.0, %v1392
      %v1394 = vpop.f32.mrf.mxu0
      %v1395 = vpop.f32.mrf.mxu0
      %v1396 = vadd.f32 0.0, %v1395
      %v1397 = vpop.f32.mrf.mxu0
      %1398 = vmatprep.mubr.bf16.mxu0 %v949
      %1399 = vmatmul.mubr.bf16.gmra.mxu0 %v948
      %v1400 = vpop.f32.mrf.mxu0
      %v1401 = vadd.f32 0.0, %v1400
      %v1402 = vpop.f32.mrf.mxu0
      %v1403 = vpop.f32.mrf.mxu0
      %v1404 = vadd.f32 0.0, %v1403
      %v1405 = vpop.f32.mrf.mxu0
      %1406 = vmatprep.mubr.bf16.mxu0 %v952
      %1407 = vmatmul.mubr.bf16.gmra.mxu0 %v951
      %v1408 = vpop.f32.mrf.mxu0
      %v1409 = vadd.f32 0.0, %v1408
      %v1410 = vpop.f32.mrf.mxu0
      %v1411 = vpop.f32.mrf.mxu0
      %v1412 = vadd.f32 0.0, %v1411
      %v1413 = vpop.f32.mrf.mxu0
      %1414 = vmatprep.mubr.bf16.mxu0 %v955
      %1415 = vmatmul.mubr.bf16.gmra.mxu0 %v954
      %v1416 = vpop.f32.mrf.mxu0
      %v1417 = vadd.f32 0.0, %v1416
      %v1418 = vpop.f32.mrf.mxu0
      %v1419 = vpop.f32.mrf.mxu0
      %v1420 = vadd.f32 0.0, %v1419
      %v1421 = vpop.f32.mrf.mxu0
      %1422 = vmatprep.mubr.bf16.mxu0 %v958
      %1423 = vmatmul.mubr.bf16.gmra.mxu0 %v957
      %v1424 = vpop.f32.mrf.mxu0
      %v1425 = vadd.f32 0.0, %v1424
      %v1426 = vpop.f32.mrf.mxu0
      %v1427 = vpop.f32.mrf.mxu0
      %v1428 = vadd.f32 0.0, %v1427
      %v1429 = vpop.f32.mrf.mxu0
      %1430 = vmatprep.mubr.bf16.mxu0 %v961
      %1431 = vmatmul.mubr.bf16.gmra.mxu0 %v960
      %v1432 = vpop.f32.mrf.mxu0
      %v1433 = vadd.f32 0.0, %v1432
      %v1434 = vpop.f32.mrf.mxu0
      %v1435 = vpop.f32.mrf.mxu0
      %v1436 = vadd.f32 0.0, %v1435
      %v1437 = vpop.f32.mrf.mxu0
      %1438 = vmatprep.mubr.bf16.mxu0 %v964
      %1439 = vmatmul.mubr.bf16.gmra.mxu0 %v963
      %v1440 = vpop.f32.mrf.mxu0
      %v1441 = vadd.f32 0.0, %v1440
      %v1442 = vpop.f32.mrf.mxu0
      %v1443 = vpop.f32.mrf.mxu0
      %v1444 = vadd.f32 0.0, %v1443
      %v1445 = vpop.f32.mrf.mxu0
      %1446 = vmatprep.mubr.bf16.mxu0 %v967
      %1447 = vmatmul.mubr.bf16.gmra.mxu0 %v966
      %v1448 = vpop.f32.mrf.mxu0
      %v1449 = vadd.f32 0.0, %v1448
      %v1450 = vpop.f32.mrf.mxu0
      %v1451 = vpop.f32.mrf.mxu0
      %v1452 = vadd.f32 0.0, %v1451
      %v1453 = vpop.f32.mrf.mxu0
      %1454 = vmatprep.mubr.bf16.mxu0 %v970
      %1455 = vmatmul.mubr.bf16.gmra.mxu0 %v969
      %v1456 = vpop.f32.mrf.mxu0
      %v1457 = vadd.f32 0.0, %v1456
      %v1458 = vpop.f32.mrf.mxu0
      %v1459 = vpop.f32.mrf.mxu0
      %v1460 = vadd.f32 0.0, %v1459
      %v1461 = vpop.f32.mrf.mxu0
      %1462 = vmatprep.mubr.bf16.mxu0 %v973
      %1463 = vmatmul.mubr.bf16.gmra.mxu0 %v972
      %v1464 = vpop.f32.mrf.mxu0
      %v1465 = vadd.f32 0.0, %v1464
      %v1466 = vpop.f32.mrf.mxu0
      %v1467 = vpop.f32.mrf.mxu0
      %v1468 = vadd.f32 0.0, %v1467
      %v1469 = vpop.f32.mrf.mxu0
      %1470 = vmatprep.mubr.bf16.mxu0 %v976
      %1471 = vmatmul.mubr.bf16.gmra.mxu0 %v975
      %v1472 = vpop.f32.mrf.mxu0
      %v1473 = vadd.f32 0.0, %v1472
      %v1474 = vpop.f32.mrf.mxu0
      %v1475 = vpop.f32.mrf.mxu0
      %v1476 = vadd.f32 0.0, %v1475
      %v1477 = vpop.f32.mrf.mxu0
      %1478 = vmatprep.mubr.bf16.mxu0 %v979
      %1479 = vmatmul.mubr.bf16.gmra.mxu0 %v978
      %v1480 = vpop.f32.mrf.mxu0
      %v1481 = vadd.f32 0.0, %v1480
      %v1482 = vpop.f32.mrf.mxu0
      %v1483 = vpop.f32.mrf.mxu0
      %v1484 = vadd.f32 0.0, %v1483
      %v1485 = vpop.f32.mrf.mxu0
      %1486 = vmatprep.mubr.bf16.mxu0 %v982
      %1487 = vmatmul.mubr.bf16.gmra.mxu0 %v981
      %v1488 = vpop.f32.mrf.mxu0
      %v1489 = vadd.f32 0.0, %v1488
      %v1490 = vpop.f32.mrf.mxu0
      %v1491 = vpop.f32.mrf.mxu0
      %v1492 = vadd.f32 0.0, %v1491
      %v1493 = vpop.f32.mrf.mxu0
      %1494 = vmatprep.mubr.bf16.mxu0 %v985
      %1495 = vmatmul.mubr.bf16.gmra.mxu0 %v984
      %v1496 = vpop.f32.mrf.mxu0
      %v1497 = vadd.f32 0.0, %v1496
      %v1498 = vpop.f32.mrf.mxu0
      %v1499 = vpop.f32.mrf.mxu0
      %v1500 = vadd.f32 0.0, %v1499
      %v1501 = vpop.f32.mrf.mxu0
      %1502 = vmatprep.mubr.bf16.mxu0 %v988
      %1503 = vmatmul.mubr.bf16.gmra.mxu0 %v987
      %v1504 = vpop.f32.mrf.mxu0
      %v1505 = vadd.f32 0.0, %v1504
      %v1506 = vpop.f32.mrf.mxu0
      %v1507 = vpop.f32.mrf.mxu0
      %v1508 = vadd.f32 0.0, %v1507
      %v1509 = vpop.f32.mrf.mxu0
      %1510 = vmatprep.mubr.bf16.mxu0 %v991
      %1511 = vmatmul.mubr.bf16.gmra.mxu0 %v990
      %v1512 = vpop.f32.mrf.mxu0
      %v1513 = vadd.f32 0.0, %v1512
      %v1514 = vpop.f32.mrf.mxu0
      %v1515 = vpop.f32.mrf.mxu0
      %v1516 = vadd.f32 0.0, %v1515
      %v1517 = vpop.f32.mrf.mxu0
      %1518 = vmatprep.mubr.bf16.mxu0 %v994
      %1519 = vmatmul.mubr.bf16.gmra.mxu0 %v993
      %v1520 = vpop.f32.mrf.mxu0
      %v1521 = vadd.f32 0.0, %v1520
      %v1522 = vpop.f32.mrf.mxu0
      %v1523 = vpop.f32.mrf.mxu0
      %v1524 = vadd.f32 0.0, %v1523
      %v1525 = vpop.f32.mrf.mxu0
      %1526 = vmatprep.mubr.bf16.mxu0 %v997
      %1527 = vmatmul.mubr.bf16.gmra.mxu0 %v996
      %v1528 = vpop.f32.mrf.mxu0
      %v1529 = vadd.f32 0.0, %v1528
      %v1530 = vpop.f32.mrf.mxu0
      %v1531 = vpop.f32.mrf.mxu0
      %v1532 = vadd.f32 0.0, %v1531
      %v1533 = vpop.f32.mrf.mxu0
      %1534 = vmatprep.mubr.bf16.mxu0 %v1000
      %1535 = vmatmul.mubr.bf16.gmra.mxu0 %v999
      %v1536 = vpop.f32.mrf.mxu0
      %v1537 = vadd.f32 0.0, %v1536
      %v1538 = vpop.f32.mrf.mxu0
      %v1539 = vpop.f32.mrf.mxu0
      %v1540 = vadd.f32 0.0, %v1539
      %v1541 = vpop.f32.mrf.mxu0
      %1542 = vmatprep.mubr.bf16.mxu0 %v1003
      %1543 = vmatmul.mubr.bf16.gmra.mxu0 %v1002
      %v1544 = vpop.f32.mrf.mxu0
      %v1545 = vadd.f32 0.0, %v1544
      %v1546 = vpop.f32.mrf.mxu0
      %v1547 = vpop.f32.mrf.mxu0
      %v1548 = vadd.f32 0.0, %v1547
      %v1549 = vpop.f32.mrf.mxu0
      %1550 = vmatprep.mubr.bf16.mxu0 %v1006
      %1551 = vmatmul.mubr.bf16.gmra.mxu0 %v1005
      %v1552 = vpop.f32.mrf.mxu0
      %v1553 = vadd.f32 0.0, %v1552
      %v1554 = vpop.f32.mrf.mxu0
      %v1555 = vpop.f32.mrf.mxu0
      %v1556 = vadd.f32 0.0, %v1555
      %v1557 = vpop.f32.mrf.mxu0
      %1558 = vmatprep.mubr.bf16.mxu0 %v1009
      %1559 = vmatmul.mubr.bf16.gmra.mxu0 %v1008
      %v1560 = vpop.f32.mrf.mxu0
      %v1561 = vadd.f32 0.0, %v1560
      %v1562 = vpop.f32.mrf.mxu0
      %v1563 = vpop.f32.mrf.mxu0
      %v1564 = vadd.f32 0.0, %v1563
      %v1565 = vpop.f32.mrf.mxu0
      %1566 = vmatprep.mubr.bf16.mxu0 %v1012
      %1567 = vmatmul.mubr.bf16.gmra.mxu0 %v1011
      %v1568 = vpop.f32.mrf.mxu0
      %v1569 = vadd.f32 0.0, %v1568
      %v1570 = vpop.f32.mrf.mxu0
      %v1571 = vpop.f32.mrf.mxu0
      %v1572 = vadd.f32 0.0, %v1571
      %v1573 = vpop.f32.mrf.mxu0
      %1574 = vmatprep.mubr.bf16.mxu0 %v1015
      %1575 = vmatmul.mubr.bf16.gmra.mxu0 %v1014
      %v1576 = vpop.f32.mrf.mxu0
      %v1577 = vadd.f32 0.0, %v1576
      %v1578 = vpop.f32.mrf.mxu0
      %v1579 = vpop.f32.mrf.mxu0
      %v1580 = vadd.f32 0.0, %v1579
      %v1581 = vpop.f32.mrf.mxu0
      %1582 = vmatprep.mubr.bf16.mxu0 %v1018
      %1583 = vmatmul.mubr.bf16.gmra.mxu0 %v1017
      %v1584 = vpop.f32.mrf.mxu0
      %v1585 = vadd.f32 0.0, %v1584
      %v1586 = vpop.f32.mrf.mxu0
      %v1587 = vpop.f32.mrf.mxu0
      %v1588 = vadd.f32 0.0, %v1587
      %v1589 = vpop.f32.mrf.mxu0
      %1590 = vmatprep.mubr.bf16.mxu0 %v1021
      %1591 = vmatmul.mubr.bf16.gmra.mxu0 %v1020
      %v1592 = vpop.f32.mrf.mxu0
      %v1593 = vadd.f32 0.0, %v1592
      %v1594 = vpop.f32.mrf.mxu0
      %v1595 = vpop.f32.mrf.mxu0
      %v1596 = vadd.f32 0.0, %v1595
      %v1597 = vpop.f32.mrf.mxu0
      %1598 = vmatprep.mubr.bf16.mxu0 %v1024
      %1599 = vmatmul.mubr.bf16.gmra.mxu0 %v1023
      %v1600 = vpop.f32.mrf.mxu0
      %v1601 = vadd.f32 0.0, %v1600
      %v1602 = vpop.f32.mrf.mxu0
      %v1603 = vpop.f32.mrf.mxu0
      %v1604 = vadd.f32 0.0, %v1603
      %v1605 = vpop.f32.mrf.mxu0
      %1606 = vmatprep.mubr.bf16.mxu0 %v1027
      %1607 = vmatmul.mubr.bf16.gmra.mxu0 %v1026
      %v1608 = vpop.f32.mrf.mxu0
      %v1609 = vadd.f32 0.0, %v1608
      %v1610 = vpop.f32.mrf.mxu0
      %v1611 = vpop.f32.mrf.mxu0
      %v1612 = vadd.f32 0.0, %v1611
      %v1613 = vpop.f32.mrf.mxu0
      %1614 = vdwg.mxu0
      %1615 = vmatprep.subr.bf16.mxu0 0
      %1616 = vmatpush1.bf16.msra.mxu0 0
      %1617 = vmatprep.subr.bf16.mxu0 0
      %1618 = vmatpush1.bf16.msra.mxu0 0
      %1619 = vmatprep.subr.bf16.mxu0 0
      %1620 = vmatpush1.bf16.msra.mxu0 %v1324
      %1621 = vmatprep.subr.bf16.mxu0 0
      %1622 = vmatpush1.bf16.msra.mxu0 %v1199
      %1623 = vmatprep.subr.bf16.mxu0 0
      %1624 = vmatpush1.bf16.msra.mxu0 %v1198
      %1625 = vmatprep.subr.bf16.mxu0 0
      %1626 = vmatpush1.bf16.msra.mxu0 %v1197
      %1627 = vmatprep.subr.bf16.mxu0 0
      %1628 = vmatpush1.bf16.msra.mxu0 %v1196
      %1629 = vmatprep.subr.bf16.mxu0 0
      %1630 = vmatpush1.bf16.msra.mxu0 %v1195
      %1631 = vmatprep.subr.bf16.mxu0 0
      %1632 = vmatpush2.bf16.msra.mxu0 0
      %1633 = vmatprep.subr.bf16.mxu0 0
      %1634 = vmatpush2.bf16.msra.mxu0 0
      %1635 = vmatprep.subr.bf16.mxu0 0
      %1636 = vmatpush2.bf16.msra.mxu0 0
      %1637 = vmatprep.subr.bf16.mxu0 0
      %1638 = vmatpush2.bf16.msra.mxu0 0
      %1639 = vmatprep.subr.bf16.mxu0 0
      %1640 = vmatpush2.bf16.msra.mxu0 0
      %1641 = vmatprep.subr.bf16.mxu0 0
      %1642 = vmatpush2.bf16.msra.mxu0 0
      %1643 = vmatprep.subr.bf16.mxu0 0
      %1644 = vmatpush2.bf16.msra.mxu0 0
      %1645 = vmatprep.subr.bf16.mxu0 0
      %1646 = vmatpush2.bf16.msra.mxu0 0
      %1647 = vmatprep.mubr.bf16.mxu0 0
      %1648 = vmatmul.mubr.bf16.gmra.mxu0 %v1224
      %v1649 = vpop.f32.mrf.mxu0
      %v1650 = vadd.f32 %v1361, %v1649
      %v1651 = vpop.f32.mrf.mxu0
      %v1652 = vpop.f32.mrf.mxu0
      %v1653 = vadd.f32 %v1364, %v1652
      %v1654 = vpop.f32.mrf.mxu0
      %1655 = vmatprep.mubr.bf16.mxu0 0
      %1656 = vmatmul.mubr.bf16.gmra.mxu0 %v1227
      %v1657 = vpop.f32.mrf.mxu0
      %v1658 = vadd.f32 %v1369, %v1657
      %v1659 = vpop.f32.mrf.mxu0
      %v1660 = vpop.f32.mrf.mxu0
      %v1661 = vadd.f32 %v1372, %v1660
      %v1662 = vpop.f32.mrf.mxu0
      %1663 = vmatprep.mubr.bf16.mxu0 0
      %1664 = vmatmul.mubr.bf16.gmra.mxu0 %v1230
      %v1665 = vpop.f32.mrf.mxu0
      %v1666 = vadd.f32 %v1377, %v1665
      %v1667 = vpop.f32.mrf.mxu0
      %v1668 = vpop.f32.mrf.mxu0
      %v1669 = vadd.f32 %v1380, %v1668
      %v1670 = vpop.f32.mrf.mxu0
      %1671 = vmatprep.mubr.bf16.mxu0 0
      %1672 = vmatmul.mubr.bf16.gmra.mxu0 %v1233
      %v1673 = vpop.f32.mrf.mxu0
      %v1674 = vadd.f32 %v1385, %v1673
      %v1675 = vpop.f32.mrf.mxu0
      %v1676 = vpop.f32.mrf.mxu0
      %v1677 = vadd.f32 %v1388, %v1676
      %v1678 = vpop.f32.mrf.mxu0
      %1679 = vmatprep.mubr.bf16.mxu0 0
      %1680 = vmatmul.mubr.bf16.gmra.mxu0 %v1236
      %v1681 = vpop.f32.mrf.mxu0
      %v1682 = vadd.f32 %v1393, %v1681
      %v1683 = vpop.f32.mrf.mxu0
      %v1684 = vpop.f32.mrf.mxu0
      %v1685 = vadd.f32 %v1396, %v1684
      %v1686 = vpop.f32.mrf.mxu0
      %1687 = vmatprep.mubr.bf16.mxu0 0
      %1688 = vmatmul.mubr.bf16.gmra.mxu0 %v1239
      %v1689 = vpop.f32.mrf.mxu0
      %v1690 = vadd.f32 %v1401, %v1689
      %v1691 = vpop.f32.mrf.mxu0
      %v1692 = vpop.f32.mrf.mxu0
      %v1693 = vadd.f32 %v1404, %v1692
      %v1694 = vpop.f32.mrf.mxu0
      %1695 = vmatprep.mubr.bf16.mxu0 0
      %1696 = vmatmul.mubr.bf16.gmra.mxu0 %v1242
      %v1697 = vpop.f32.mrf.mxu0
      %v1698 = vadd.f32 %v1409, %v1697
      %v1699 = vpop.f32.mrf.mxu0
      %v1700 = vpop.f32.mrf.mxu0
      %v1701 = vadd.f32 %v1412, %v1700
      %v1702 = vpop.f32.mrf.mxu0
      %1703 = vmatprep.mubr.bf16.mxu0 0
      %1704 = vmatmul.mubr.bf16.gmra.mxu0 %v1245
      %v1705 = vpop.f32.mrf.mxu0
      %v1706 = vadd.f32 %v1417, %v1705
      %v1707 = vpop.f32.mrf.mxu0
      %v1708 = vpop.f32.mrf.mxu0
      %v1709 = vadd.f32 %v1420, %v1708
      %v1710 = vpop.f32.mrf.mxu0
      %1711 = vmatprep.mubr.bf16.mxu0 0
      %1712 = vmatmul.mubr.bf16.gmra.mxu0 %v1248
      %v1713 = vpop.f32.mrf.mxu0
      %v1714 = vadd.f32 %v1425, %v1713
      %v1715 = vpop.f32.mrf.mxu0
      %v1716 = vpop.f32.mrf.mxu0
      %v1717 = vadd.f32 %v1428, %v1716
      %v1718 = vpop.f32.mrf.mxu0
      %1719 = vmatprep.mubr.bf16.mxu0 0
      %1720 = vmatmul.mubr.bf16.gmra.mxu0 %v1251
      %v1721 = vpop.f32.mrf.mxu0
      %v1722 = vadd.f32 %v1433, %v1721
      %v1723 = vpop.f32.mrf.mxu0
      %v1724 = vpop.f32.mrf.mxu0
      %v1725 = vadd.f32 %v1436, %v1724
      %v1726 = vpop.f32.mrf.mxu0
      %1727 = vmatprep.mubr.bf16.mxu0 0
      %1728 = vmatmul.mubr.bf16.gmra.mxu0 %v1254
      %v1729 = vpop.f32.mrf.mxu0
      %v1730 = vadd.f32 %v1441, %v1729
      %v1731 = vpop.f32.mrf.mxu0
      %v1732 = vpop.f32.mrf.mxu0
      %v1733 = vadd.f32 %v1444, %v1732
      %v1734 = vpop.f32.mrf.mxu0
      %1735 = vmatprep.mubr.bf16.mxu0 0
      %1736 = vmatmul.mubr.bf16.gmra.mxu0 %v1257
      %v1737 = vpop.f32.mrf.mxu0
      %v1738 = vadd.f32 %v1449, %v1737
      %v1739 = vpop.f32.mrf.mxu0
      %v1740 = vpop.f32.mrf.mxu0
      %v1741 = vadd.f32 %v1452, %v1740
      %v1742 = vpop.f32.mrf.mxu0
      %1743 = vmatprep.mubr.bf16.mxu0 0
      %1744 = vmatmul.mubr.bf16.gmra.mxu0 %v1260
      %v1745 = vpop.f32.mrf.mxu0
      %v1746 = vadd.f32 %v1457, %v1745
      %v1747 = vpop.f32.mrf.mxu0
      %v1748 = vpop.f32.mrf.mxu0
      %v1749 = vadd.f32 %v1460, %v1748
      %v1750 = vpop.f32.mrf.mxu0
      %1751 = vmatprep.mubr.bf16.mxu0 0
      %1752 = vmatmul.mubr.bf16.gmra.mxu0 %v1263
      %v1753 = vpop.f32.mrf.mxu0
      %v1754 = vadd.f32 %v1465, %v1753
      %v1755 = vpop.f32.mrf.mxu0
      %v1756 = vpop.f32.mrf.mxu0
      %v1757 = vadd.f32 %v1468, %v1756
      %v1758 = vpop.f32.mrf.mxu0
      %1759 = vmatprep.mubr.bf16.mxu0 0
      %1760 = vmatmul.mubr.bf16.gmra.mxu0 %v1266
      %v1761 = vpop.f32.mrf.mxu0
      %v1762 = vadd.f32 %v1473, %v1761
      %v1763 = vpop.f32.mrf.mxu0
      %v1764 = vpop.f32.mrf.mxu0
      %v1765 = vadd.f32 %v1476, %v1764
      %v1766 = vpop.f32.mrf.mxu0
      %1767 = vmatprep.mubr.bf16.mxu0 0
      %1768 = vmatmul.mubr.bf16.gmra.mxu0 %v1269
      %v1769 = vpop.f32.mrf.mxu0
      %v1770 = vadd.f32 %v1481, %v1769
      %v1771 = vpop.f32.mrf.mxu0
      %v1772 = vpop.f32.mrf.mxu0
      %v1773 = vadd.f32 %v1484, %v1772
      %v1774 = vpop.f32.mrf.mxu0
      %1775 = vmatprep.mubr.bf16.mxu0 0
      %1776 = vmatmul.mubr.bf16.gmra.mxu0 %v1272
      %v1777 = vpop.f32.mrf.mxu0
      %v1778 = vadd.f32 %v1489, %v1777
      %v1779 = vpop.f32.mrf.mxu0
      %v1780 = vpop.f32.mrf.mxu0
      %v1781 = vadd.f32 %v1492, %v1780
      %v1782 = vpop.f32.mrf.mxu0
      %1783 = vmatprep.mubr.bf16.mxu0 0
      %1784 = vmatmul.mubr.bf16.gmra.mxu0 %v1275
      %v1785 = vpop.f32.mrf.mxu0
      %v1786 = vadd.f32 %v1497, %v1785
      %v1787 = vpop.f32.mrf.mxu0
      %v1788 = vpop.f32.mrf.mxu0
      %v1789 = vadd.f32 %v1500, %v1788
      %v1790 = vpop.f32.mrf.mxu0
      %1791 = vmatprep.mubr.bf16.mxu0 0
      %1792 = vmatmul.mubr.bf16.gmra.mxu0 %v1278
      %v1793 = vpop.f32.mrf.mxu0
      %v1794 = vadd.f32 %v1505, %v1793
      %v1795 = vpop.f32.mrf.mxu0
      %v1796 = vpop.f32.mrf.mxu0
      %v1797 = vadd.f32 %v1508, %v1796
      %v1798 = vpop.f32.mrf.mxu0
      %1799 = vmatprep.mubr.bf16.mxu0 0
      %1800 = vmatmul.mubr.bf16.gmra.mxu0 %v1281
      %v1801 = vpop.f32.mrf.mxu0
      %v1802 = vadd.f32 %v1513, %v1801
      %v1803 = vpop.f32.mrf.mxu0
      %v1804 = vpop.f32.mrf.mxu0
      %v1805 = vadd.f32 %v1516, %v1804
      %v1806 = vpop.f32.mrf.mxu0
      %1807 = vmatprep.mubr.bf16.mxu0 0
      %1808 = vmatmul.mubr.bf16.gmra.mxu0 %v1284
      %v1809 = vpop.f32.mrf.mxu0
      %v1810 = vadd.f32 %v1521, %v1809
      %v1811 = vpop.f32.mrf.mxu0
      %v1812 = vpop.f32.mrf.mxu0
      %v1813 = vadd.f32 %v1524, %v1812
      %v1814 = vpop.f32.mrf.mxu0
      %1815 = vmatprep.mubr.bf16.mxu0 0
      %1816 = vmatmul.mubr.bf16.gmra.mxu0 %v1287
      %v1817 = vpop.f32.mrf.mxu0
      %v1818 = vadd.f32 %v1529, %v1817
      %v1819 = vpop.f32.mrf.mxu0
      %v1820 = vpop.f32.mrf.mxu0
      %v1821 = vadd.f32 %v1532, %v1820
      %v1822 = vpop.f32.mrf.mxu0
      %1823 = vmatprep.mubr.bf16.mxu0 0
      %1824 = vmatmul.mubr.bf16.gmra.mxu0 %v1290
      %v1825 = vpop.f32.mrf.mxu0
      %v1826 = vadd.f32 %v1537, %v1825
      %v1827 = vpop.f32.mrf.mxu0
      %v1828 = vpop.f32.mrf.mxu0
      %v1829 = vadd.f32 %v1540, %v1828
      %v1830 = vpop.f32.mrf.mxu0
      %1831 = vmatprep.mubr.bf16.mxu0 0
      %1832 = vmatmul.mubr.bf16.gmra.mxu0 %v1293
      %v1833 = vpop.f32.mrf.mxu0
      %v1834 = vadd.f32 %v1545, %v1833
      %v1835 = vpop.f32.mrf.mxu0
      %v1836 = vpop.f32.mrf.mxu0
      %v1837 = vadd.f32 %v1548, %v1836
      %v1838 = vpop.f32.mrf.mxu0
      %1839 = vmatprep.mubr.bf16.mxu0 0
      %1840 = vmatmul.mubr.bf16.gmra.mxu0 %v1296
      %v1841 = vpop.f32.mrf.mxu0
      %v1842 = vadd.f32 %v1553, %v1841
      %v1843 = vpop.f32.mrf.mxu0
      %v1844 = vpop.f32.mrf.mxu0
      %v1845 = vadd.f32 %v1556, %v1844
      %v1846 = vpop.f32.mrf.mxu0
      %1847 = vmatprep.mubr.bf16.mxu0 0
      %1848 = vmatmul.mubr.bf16.gmra.mxu0 %v1299
      %v1849 = vpop.f32.mrf.mxu0
      %v1850 = vadd.f32 %v1561, %v1849
      %v1851 = vpop.f32.mrf.mxu0
      %v1852 = vpop.f32.mrf.mxu0
      %v1853 = vadd.f32 %v1564, %v1852
      %v1854 = vpop.f32.mrf.mxu0
      %1855 = vmatprep.mubr.bf16.mxu0 0
      %1856 = vmatmul.mubr.bf16.gmra.mxu0 %v1302
      %v1857 = vpop.f32.mrf.mxu0
      %v1858 = vadd.f32 %v1569, %v1857
      %v1859 = vpop.f32.mrf.mxu0
      %v1860 = vpop.f32.mrf.mxu0
      %v1861 = vadd.f32 %v1572, %v1860
      %v1862 = vpop.f32.mrf.mxu0
      %1863 = vmatprep.mubr.bf16.mxu0 0
      %1864 = vmatmul.mubr.bf16.gmra.mxu0 %v1305
      %v1865 = vpop.f32.mrf.mxu0
      %v1866 = vadd.f32 %v1577, %v1865
      %v1867 = vpop.f32.mrf.mxu0
      %v1868 = vpop.f32.mrf.mxu0
      %v1869 = vadd.f32 %v1580, %v1868
      %v1870 = vpop.f32.mrf.mxu0
      %1871 = vmatprep.mubr.bf16.mxu0 0
      %1872 = vmatmul.mubr.bf16.gmra.mxu0 %v1308
      %v1873 = vpop.f32.mrf.mxu0
      %v1874 = vadd.f32 %v1585, %v1873
      %v1875 = vpop.f32.mrf.mxu0
      %v1876 = vpop.f32.mrf.mxu0
      %v1877 = vadd.f32 %v1588, %v1876
      %v1878 = vpop.f32.mrf.mxu0
      %1879 = vmatprep.mubr.bf16.mxu0 0
      %1880 = vmatmul.mubr.bf16.gmra.mxu0 %v1311
      %v1881 = vpop.f32.mrf.mxu0
      %v1882 = vadd.f32 %v1593, %v1881
      %v1883 = vpop.f32.mrf.mxu0
      %v1884 = vpop.f32.mrf.mxu0
      %v1885 = vadd.f32 %v1596, %v1884
      %v1886 = vpop.f32.mrf.mxu0
      %1887 = vmatprep.mubr.bf16.mxu0 0
      %1888 = vmatmul.mubr.bf16.gmra.mxu0 %v1314
      %v1889 = vpop.f32.mrf.mxu0
      %v1890 = vadd.f32 %v1601, %v1889
      %v1891 = vpop.f32.mrf.mxu0
      %v1892 = vpop.f32.mrf.mxu0
      %v1893 = vadd.f32 %v1604, %v1892
      %v1894 = vpop.f32.mrf.mxu0
      %1895 = vmatprep.mubr.bf16.mxu0 0
      %1896 = vmatmul.mubr.bf16.gmra.mxu0 %v1317
      %v1897 = vpop.f32.mrf.mxu0
      %v1898 = vadd.f32 %v1609, %v1897
      %v1899 = vpop.f32.mrf.mxu0
      %v1900 = vpop.f32.mrf.mxu0
      %v1901 = vadd.f32 %v1612, %v1900
      %v1902 = vpop.f32.mrf.mxu0
      %1903 = vdwg.mxu0
      %v1904 = vadd.f32 %v506, %v1650
      %v1905 = vadd.f32 %v507, %v1653
      %v1906 = vadd.f32 %v508, %v1658
      %v1907 = vadd.f32 %v509, %v1661
      %v1908 = vadd.f32 %v510, %v1666
      %v1909 = vadd.f32 %v511, %v1669
      %v1910 = vadd.f32 %v512, %v1674
      %v1911 = vadd.f32 %v513, %v1677
      %v1912 = vadd.f32 %v514, %v1682
      %v1913 = vadd.f32 %v515, %v1685
      %v1914 = vadd.f32 %v516, %v1690
      %v1915 = vadd.f32 %v517, %v1693
      %v1916 = vadd.f32 %v518, %v1698
      %v1917 = vadd.f32 %v519, %v1701
      %v1918 = vadd.f32 %v520, %v1706
      %v1919 = vadd.f32 %v521, %v1709
      %v1920 = vadd.f32 %v522, %v1714
      %v1921 = vadd.f32 %v523, %v1717
      %v1922 = vadd.f32 %v524, %v1722
      %v1923 = vadd.f32 %v525, %v1725
      %v1924 = vadd.f32 %v526, %v1730
      %v1925 = vadd.f32 %v527, %v1733
      %v1926 = vadd.f32 %v528, %v1738
      %v1927 = vadd.f32 %v529, %v1741
      %v1928 = vadd.f32 %v530, %v1746
      %v1929 = vadd.f32 %v531, %v1749
      %v1930 = vadd.f32 %v532, %v1754
      %v1931 = vadd.f32 %v533, %v1757
      %v1932 = vadd.f32 %v534, %v1762
      %v1933 = vadd.f32 %v535, %v1765
      %v1934 = vadd.f32 %v536, %v1770
      %v1935 = vadd.f32 %v537, %v1773
      %v1936 = vadd.f32 %v538, %v1778
      %v1937 = vadd.f32 %v539, %v1781
      %v1938 = vadd.f32 %v540, %v1786
      %v1939 = vadd.f32 %v541, %v1789
      %v1940 = vadd.f32 %v542, %v1794
      %v1941 = vadd.f32 %v543, %v1797
      %v1942 = vadd.f32 %v544, %v1802
      %v1943 = vadd.f32 %v545, %v1805
      %v1944 = vadd.f32 %v546, %v1810
      %v1945 = vadd.f32 %v547, %v1813
      %v1946 = vadd.f32 %v548, %v1818
      %v1947 = vadd.f32 %v549, %v1821
      %v1948 = vadd.f32 %v550, %v1826
      %v1949 = vadd.f32 %v551, %v1829
      %v1950 = vadd.f32 %v552, %v1834
      %v1951 = vadd.f32 %v553, %v1837
      %v1952 = vadd.f32 %v554, %v1842
      %v1953 = vadd.f32 %v555, %v1845
      %v1954 = vadd.f32 %v556, %v1850
      %v1955 = vadd.f32 %v557, %v1853
      %v1956 = vadd.f32 %v558, %v1858
      %v1957 = vadd.f32 %v559, %v1861
      %v1958 = vadd.f32 %v560, %v1866
      %v1959 = vadd.f32 %v561, %v1869
      %v1960 = vadd.f32 %v562, %v1874
      %v1961 = vadd.f32 %v563, %v1877
      %v1962 = vadd.f32 %v564, %v1882
      %v1963 = vadd.f32 %v565, %v1885
      %v1964 = vadd.f32 %v566, %v1890
      %v1965 = vadd.f32 %v567, %v1893
      %v1966 = vadd.f32 %v568, %v1898
      %v1967 = vadd.f32 %v569, %v1901
      %vm1968 = vcmask 64512
      %1969 = vst.msk [vmem:[#allocation2] sm:$0xff] %vm1968, %v1904
      %1970 = vst.msk [vmem:[#allocation2 + $0x8] sm:$0xff] %vm1968, %v1905
      %1971 = vst.msk [vmem:[#allocation2 + $0x10] sm:$0xff] %vm1968, %v1906
      %1972 = vst.msk [vmem:[#allocation2 + $0x18] sm:$0xff] %vm1968, %v1907
      %1973 = vst.msk [vmem:[#allocation2 + $0x20] sm:$0xff] %vm1968, %v1908
      %1974 = vst.msk [vmem:[#allocation2 + $0x28] sm:$0xff] %vm1968, %v1909
      %1975 = vst.msk [vmem:[#allocation2 + $0x30] sm:$0xff] %vm1968, %v1910
      %1976 = vst.msk [vmem:[#allocation2 + $0x38] sm:$0xff] %vm1968, %v1911
      %1977 = vst.msk [vmem:[#allocation2 + $0x40] sm:$0xff] %vm1968, %v1912
      %1978 = vst.msk [vmem:[#allocation2 + $0x48] sm:$0xff] %vm1968, %v1913
      %1979 = vst.msk [vmem:[#allocation2 + $0x50] sm:$0xff] %vm1968, %v1914
      %1980 = vst.msk [vmem:[#allocation2 + $0x58] sm:$0xff] %vm1968, %v1915
      %1981 = vst.msk [vmem:[#allocation2 + $0x60] sm:$0xff] %vm1968, %v1916
      %1982 = vst.msk [vmem:[#allocation2 + $0x68] sm:$0xff] %vm1968, %v1917
      %1983 = vst.msk [vmem:[#allocation2 + $0x70] sm:$0xff] %vm1968, %v1918
      %1984 = vst.msk [vmem:[#allocation2 + $0x78] sm:$0xff] %vm1968, %v1919
      %1985 = vst.msk [vmem:[#allocation2 + $0x80] sm:$0xff] %vm1968, %v1920
      %1986 = vst.msk [vmem:[#allocation2 + $0x88] sm:$0xff] %vm1968, %v1921
      %1987 = vst.msk [vmem:[#allocation2 + $0x90] sm:$0xff] %vm1968, %v1922
      %1988 = vst.msk [vmem:[#allocation2 + $0x98] sm:$0xff] %vm1968, %v1923
      %1989 = vst.msk [vmem:[#allocation2 + $0xa0] sm:$0xff] %vm1968, %v1924
      %1990 = vst.msk [vmem:[#allocation2 + $0xa8] sm:$0xff] %vm1968, %v1925
      %1991 = vst.msk [vmem:[#allocation2 + $0xb0] sm:$0xff] %vm1968, %v1926
      %1992 = vst.msk [vmem:[#allocation2 + $0xb8] sm:$0xff] %vm1968, %v1927
      %1993 = vst.msk [vmem:[#allocation2 + $0xc0] sm:$0xff] %vm1968, %v1928
      %1994 = vst.msk [vmem:[#allocation2 + $0xc8] sm:$0xff] %vm1968, %v1929
      %1995 = vst.msk [vmem:[#allocation2 + $0xd0] sm:$0xff] %vm1968, %v1930
      %1996 = vst.msk [vmem:[#allocation2 + $0xd8] sm:$0xff] %vm1968, %v1931
      %1997 = vst.msk [vmem:[#allocation2 + $0xe0] sm:$0xff] %vm1968, %v1932
      %1998 = vst.msk [vmem:[#allocation2 + $0xe8] sm:$0xff] %vm1968, %v1933
      %1999 = vst.msk [vmem:[#allocation2 + $0xf0] sm:$0xff] %vm1968, %v1934
      %2000 = vst.msk [vmem:[#allocation2 + $0xf8] sm:$0xff] %vm1968, %v1935
      %2001 = vst.msk [vmem:[#allocation2 + $0x100] sm:$0xff] %vm1968, %v1936
      %2002 = vst.msk [vmem:[#allocation2 + $0x108] sm:$0xff] %vm1968, %v1937
      %2003 = vst.msk [vmem:[#allocation2 + $0x110] sm:$0xff] %vm1968, %v1938
      %2004 = vst.msk [vmem:[#allocation2 + $0x118] sm:$0xff] %vm1968, %v1939
      %2005 = vst.msk [vmem:[#allocation2 + $0x120] sm:$0xff] %vm1968, %v1940
      %2006 = vst.msk [vmem:[#allocation2 + $0x128] sm:$0xff] %vm1968, %v1941
      %2007 = vst.msk [vmem:[#allocation2 + $0x130] sm:$0xff] %vm1968, %v1942
      %2008 = vst.msk [vmem:[#allocation2 + $0x138] sm:$0xff] %vm1968, %v1943
      %2009 = vst.msk [vmem:[#allocation2 + $0x140] sm:$0xff] %vm1968, %v1944
      %2010 = vst.msk [vmem:[#allocation2 + $0x148] sm:$0xff] %vm1968, %v1945
      %2011 = vst.msk [vmem:[#allocation2 + $0x150] sm:$0xff] %vm1968, %v1946
      %2012 = vst.msk [vmem:[#allocation2 + $0x158] sm:$0xff] %vm1968, %v1947
      %2013 = vst.msk [vmem:[#allocation2 + $0x160] sm:$0xff] %vm1968, %v1948
      %2014 = vst.msk [vmem:[#allocation2 + $0x168] sm:$0xff] %vm1968, %v1949
      %2015 = vst.msk [vmem:[#allocation2 + $0x170] sm:$0xff] %vm1968, %v1950
      %2016 = vst.msk [vmem:[#allocation2 + $0x178] sm:$0xff] %vm1968, %v1951
      %2017 = vst.msk [vmem:[#allocation2 + $0x180] sm:$0xff] %vm1968, %v1952
      %2018 = vst.msk [vmem:[#allocation2 + $0x188] sm:$0xff] %vm1968, %v1953
      %2019 = vst.msk [vmem:[#allocation2 + $0x190] sm:$0xff] %vm1968, %v1954
      %2020 = vst.msk [vmem:[#allocation2 + $0x198] sm:$0xff] %vm1968, %v1955
      %2021 = vst.msk [vmem:[#allocation2 + $0x1a0] sm:$0xff] %vm1968, %v1956
      %2022 = vst.msk [vmem:[#allocation2 + $0x1a8] sm:$0xff] %vm1968, %v1957
      %2023 = vst.msk [vmem:[#allocation2 + $0x1b0] sm:$0xff] %vm1968, %v1958
      %2024 = vst.msk [vmem:[#allocation2 + $0x1b8] sm:$0xff] %vm1968, %v1959
      %2025 = vst.msk [vmem:[#allocation2 + $0x1c0] sm:$0xff] %vm1968, %v1960
      %2026 = vst.msk [vmem:[#allocation2 + $0x1c8] sm:$0xff] %vm1968, %v1961
      %2027 = vst.msk [vmem:[#allocation2 + $0x1d0] sm:$0xff] %vm1968, %v1962
      %2028 = vst.msk [vmem:[#allocation2 + $0x1d8] sm:$0xff] %vm1968, %v1963
      %2029 = vst.msk [vmem:[#allocation2 + $0x1e0] sm:$0xff] %vm1968, %v1964
      %2030 = vst.msk [vmem:[#allocation2 + $0x1e8] sm:$0xff] %vm1968, %v1965
      %2031 = vst.msk [vmem:[#allocation2 + $0x1f0] sm:$0xff] %vm1968, %v1966
      %2032 = vst.msk [vmem:[#allocation2 + $0x1f8] sm:$0xff] %vm1968, %v1967
      // Predicated region
      $region41: #{densenet_forward.13} parent=35 // pred_check
        %p2033 = pneg %p309
      $region42: #{densenet_forward.13} parent=35 // pred_check_branch
        %2035 = sbr.rel (%p2033) target = $region44
      $region43: #{densenet_forward.13} parent=35 // pred_region
        %v2036 = vld [vmem:[#allocation2] sm:$0xff]
        %v2037 = vld [vmem:[#allocation2 + $0x8] sm:$0xff]
        %v2038 = vld [vmem:[#allocation2 + $0x10] sm:$0xff]
        %v2039 = vld [vmem:[#allocation2 + $0x18] sm:$0xff]
        %v2040 = vld [vmem:[#allocation2 + $0x20] sm:$0xff]
        %v2041 = vld [vmem:[#allocation2 + $0x28] sm:$0xff]
        %v2042 = vld [vmem:[#allocation2 + $0x30] sm:$0xff]
        %v2043 = vld [vmem:[#allocation2 + $0x38] sm:$0xff]
        %v2044 = vld [vmem:[#allocation2 + $0x40] sm:$0xff]
        %v2045 = vld [vmem:[#allocation2 + $0x48] sm:$0xff]
        %v2046 = vld [vmem:[#allocation2 + $0x50] sm:$0xff]
        %v2047 = vld [vmem:[#allocation2 + $0x58] sm:$0xff]
        %v2048 = vld [vmem:[#allocation2 + $0x60] sm:$0xff]
        %v2049 = vld [vmem:[#allocation2 + $0x68] sm:$0xff]
        %v2050 = vld [vmem:[#allocation2 + $0x70] sm:$0xff]
        %v2051 = vld [vmem:[#allocation2 + $0x78] sm:$0xff]
        %v2052 = vld [vmem:[#allocation2 + $0x80] sm:$0xff]
        %v2053 = vld [vmem:[#allocation2 + $0x88] sm:$0xff]
        %v2054 = vld [vmem:[#allocation2 + $0x90] sm:$0xff]
        %v2055 = vld [vmem:[#allocation2 + $0x98] sm:$0xff]
        %v2056 = vld [vmem:[#allocation2 + $0xa0] sm:$0xff]
        %v2057 = vld [vmem:[#allocation2 + $0xa8] sm:$0xff]
        %v2058 = vld [vmem:[#allocation2 + $0xb0] sm:$0xff]
        %v2059 = vld [vmem:[#allocation2 + $0xb8] sm:$0xff]
        %v2060 = vld [vmem:[#allocation2 + $0xc0] sm:$0xff]
        %v2061 = vld [vmem:[#allocation2 + $0xc8] sm:$0xff]
        %v2062 = vld [vmem:[#allocation2 + $0xd0] sm:$0xff]
        %v2063 = vld [vmem:[#allocation2 + $0xd8] sm:$0xff]
        %v2064 = vld [vmem:[#allocation2 + $0xe0] sm:$0xff]
        %v2065 = vld [vmem:[#allocation2 + $0xe8] sm:$0xff]
        %v2066 = vld [vmem:[#allocation2 + $0xf0] sm:$0xff]
        %v2067 = vld [vmem:[#allocation2 + $0xf8] sm:$0xff]
        %v2068 = vld [vmem:[#allocation2 + $0x100] sm:$0xff]
        %v2069 = vld [vmem:[#allocation2 + $0x108] sm:$0xff]
        %v2070 = vld [vmem:[#allocation2 + $0x110] sm:$0xff]
        %v2071 = vld [vmem:[#allocation2 + $0x118] sm:$0xff]
        %v2072 = vld [vmem:[#allocation2 + $0x120] sm:$0xff]
        %v2073 = vld [vmem:[#allocation2 + $0x128] sm:$0xff]
        %v2074 = vld [vmem:[#allocation2 + $0x130] sm:$0xff]
        %v2075 = vld [vmem:[#allocation2 + $0x138] sm:$0xff]
        %v2076 = vld [vmem:[#allocation2 + $0x140] sm:$0xff]
        %v2077 = vld [vmem:[#allocation2 + $0x148] sm:$0xff]
        %v2078 = vld [vmem:[#allocation2 + $0x150] sm:$0xff]
        %v2079 = vld [vmem:[#allocation2 + $0x158] sm:$0xff]
        %v2080 = vld [vmem:[#allocation2 + $0x160] sm:$0xff]
        %v2081 = vld [vmem:[#allocation2 + $0x168] sm:$0xff]
        %v2082 = vld [vmem:[#allocation2 + $0x170] sm:$0xff]
        %v2083 = vld [vmem:[#allocation2 + $0x178] sm:$0xff]
        %v2084 = vld [vmem:[#allocation2 + $0x180] sm:$0xff]
        %v2085 = vld [vmem:[#allocation2 + $0x188] sm:$0xff]
        %v2086 = vld [vmem:[#allocation2 + $0x190] sm:$0xff]
        %v2087 = vld [vmem:[#allocation2 + $0x198] sm:$0xff]
        %v2088 = vld [vmem:[#allocation2 + $0x1a0] sm:$0xff]
        %v2089 = vld [vmem:[#allocation2 + $0x1a8] sm:$0xff]
        %v2090 = vld [vmem:[#allocation2 + $0x1b0] sm:$0xff]
        %v2091 = vld [vmem:[#allocation2 + $0x1b8] sm:$0xff]
        %v2092 = vld [vmem:[#allocation2 + $0x1c0] sm:$0xff]
        %v2093 = vld [vmem:[#allocation2 + $0x1c8] sm:$0xff]
        %v2094 = vld [vmem:[#allocation2 + $0x1d0] sm:$0xff]
        %v2095 = vld [vmem:[#allocation2 + $0x1d8] sm:$0xff]
        %v2096 = vld [vmem:[#allocation2 + $0x1e0] sm:$0xff]
        %v2097 = vld [vmem:[#allocation2 + $0x1e8] sm:$0xff]
        %v2098 = vld [vmem:[#allocation2 + $0x1f0] sm:$0xff]
        %v2099 = vld [vmem:[#allocation2 + $0x1f8] sm:$0xff]
        %v2100 = vld [vmem:[%s295] sm:$0x1]
        %v2102 = vlaneseq
        %v2103 = vshrl.u32 %v2102, 7
        %v2104 = vsub.s32 0, %v2103
        %v2105 = vrot.slane %v2100, %v2104
        %v2107 = vmul.f32 %v2036, %v2105
        %v2108 = vmul.f32 %v2037, %v2105
        %v2109 = vmul.f32 %v2038, %v2105
        %v2110 = vmul.f32 %v2039, %v2105
        %v2111 = vmul.f32 %v2040, %v2105
        %v2112 = vmul.f32 %v2041, %v2105
        %v2113 = vmul.f32 %v2042, %v2105
        %v2114 = vmul.f32 %v2043, %v2105
        %v2115 = vmul.f32 %v2044, %v2105
        %v2116 = vmul.f32 %v2045, %v2105
        %v2117 = vmul.f32 %v2046, %v2105
        %v2118 = vmul.f32 %v2047, %v2105
        %v2119 = vmul.f32 %v2048, %v2105
        %v2120 = vmul.f32 %v2049, %v2105
        %v2121 = vmul.f32 %v2050, %v2105
        %v2122 = vmul.f32 %v2051, %v2105
        %v2123 = vmul.f32 %v2052, %v2105
        %v2124 = vmul.f32 %v2053, %v2105
        %v2125 = vmul.f32 %v2054, %v2105
        %v2126 = vmul.f32 %v2055, %v2105
        %v2127 = vmul.f32 %v2056, %v2105
        %v2128 = vmul.f32 %v2057, %v2105
        %v2129 = vmul.f32 %v2058, %v2105
        %v2130 = vmul.f32 %v2059, %v2105
        %v2131 = vmul.f32 %v2060, %v2105
        %v2132 = vmul.f32 %v2061, %v2105
        %v2133 = vmul.f32 %v2062, %v2105
        %v2134 = vmul.f32 %v2063, %v2105
        %v2135 = vmul.f32 %v2064, %v2105
        %v2136 = vmul.f32 %v2065, %v2105
        %v2137 = vmul.f32 %v2066, %v2105
        %v2138 = vmul.f32 %v2067, %v2105
        %v2139 = vmul.f32 %v2068, %v2105
        %v2140 = vmul.f32 %v2069, %v2105
        %v2141 = vmul.f32 %v2070, %v2105
        %v2142 = vmul.f32 %v2071, %v2105
        %v2143 = vmul.f32 %v2072, %v2105
        %v2144 = vmul.f32 %v2073, %v2105
        %v2145 = vmul.f32 %v2074, %v2105
        %v2146 = vmul.f32 %v2075, %v2105
        %v2147 = vmul.f32 %v2076, %v2105
        %v2148 = vmul.f32 %v2077, %v2105
        %v2149 = vmul.f32 %v2078, %v2105
        %v2150 = vmul.f32 %v2079, %v2105
        %v2151 = vmul.f32 %v2080, %v2105
        %v2152 = vmul.f32 %v2081, %v2105
        %v2153 = vmul.f32 %v2082, %v2105
        %v2154 = vmul.f32 %v2083, %v2105
        %v2155 = vmul.f32 %v2084, %v2105
        %v2156 = vmul.f32 %v2085, %v2105
        %v2157 = vmul.f32 %v2086, %v2105
        %v2158 = vmul.f32 %v2087, %v2105
        %v2159 = vmul.f32 %v2088, %v2105
        %v2160 = vmul.f32 %v2089, %v2105
        %v2161 = vmul.f32 %v2090, %v2105
        %v2162 = vmul.f32 %v2091, %v2105
        %v2163 = vmul.f32 %v2092, %v2105
        %v2164 = vmul.f32 %v2093, %v2105
        %v2165 = vmul.f32 %v2094, %v2105
        %v2166 = vmul.f32 %v2095, %v2105
        %v2167 = vmul.f32 %v2096, %v2105
        %v2168 = vmul.f32 %v2097, %v2105
        %v2169 = vmul.f32 %v2098, %v2105
        %v2170 = vmul.f32 %v2099, %v2105
        %v2171 = vld [vmem:[%s298] sm:$0x1]
        %v2173 = vlaneseq
        %v2174 = vshrl.u32 %v2173, 7
        %v2175 = vsub.s32 0, %v2174
        %v2176 = vrot.slane %v2171, %v2175
        %v2178 = vadd.f32 %v2107, %v2176
        %v2179 = vadd.f32 %v2108, %v2176
        %v2180 = vadd.f32 %v2109, %v2176
        %v2181 = vadd.f32 %v2110, %v2176
        %v2182 = vadd.f32 %v2111, %v2176
        %v2183 = vadd.f32 %v2112, %v2176
        %v2184 = vadd.f32 %v2113, %v2176
        %v2185 = vadd.f32 %v2114, %v2176
        %v2186 = vadd.f32 %v2115, %v2176
        %v2187 = vadd.f32 %v2116, %v2176
        %v2188 = vadd.f32 %v2117, %v2176
        %v2189 = vadd.f32 %v2118, %v2176
        %v2190 = vadd.f32 %v2119, %v2176
        %v2191 = vadd.f32 %v2120, %v2176
        %v2192 = vadd.f32 %v2121, %v2176
        %v2193 = vadd.f32 %v2122, %v2176
        %v2194 = vadd.f32 %v2123, %v2176
        %v2195 = vadd.f32 %v2124, %v2176
        %v2196 = vadd.f32 %v2125, %v2176
        %v2197 = vadd.f32 %v2126, %v2176
        %v2198 = vadd.f32 %v2127, %v2176
        %v2199 = vadd.f32 %v2128, %v2176
        %v2200 = vadd.f32 %v2129, %v2176
        %v2201 = vadd.f32 %v2130, %v2176
        %v2202 = vadd.f32 %v2131, %v2176
        %v2203 = vadd.f32 %v2132, %v2176
        %v2204 = vadd.f32 %v2133, %v2176
        %v2205 = vadd.f32 %v2134, %v2176
        %v2206 = vadd.f32 %v2135, %v2176
        %v2207 = vadd.f32 %v2136, %v2176
        %v2208 = vadd.f32 %v2137, %v2176
        %v2209 = vadd.f32 %v2138, %v2176
        %v2210 = vadd.f32 %v2139, %v2176
        %v2211 = vadd.f32 %v2140, %v2176
        %v2212 = vadd.f32 %v2141, %v2176
        %v2213 = vadd.f32 %v2142, %v2176
        %v2214 = vadd.f32 %v2143, %v2176
        %v2215 = vadd.f32 %v2144, %v2176
        %v2216 = vadd.f32 %v2145, %v2176
        %v2217 = vadd.f32 %v2146, %v2176
        %v2218 = vadd.f32 %v2147, %v2176
        %v2219 = vadd.f32 %v2148, %v2176
        %v2220 = vadd.f32 %v2149, %v2176
        %v2221 = vadd.f32 %v2150, %v2176
        %v2222 = vadd.f32 %v2151, %v2176
        %v2223 = vadd.f32 %v2152, %v2176
        %v2224 = vadd.f32 %v2153, %v2176
        %v2225 = vadd.f32 %v2154, %v2176
        %v2226 = vadd.f32 %v2155, %v2176
        %v2227 = vadd.f32 %v2156, %v2176
        %v2228 = vadd.f32 %v2157, %v2176
        %v2229 = vadd.f32 %v2158, %v2176
        %v2230 = vadd.f32 %v2159, %v2176
        %v2231 = vadd.f32 %v2160, %v2176
        %v2232 = vadd.f32 %v2161, %v2176
        %v2233 = vadd.f32 %v2162, %v2176
        %v2234 = vadd.f32 %v2163, %v2176
        %v2235 = vadd.f32 %v2164, %v2176
        %v2236 = vadd.f32 %v2165, %v2176
        %v2237 = vadd.f32 %v2166, %v2176
        %v2238 = vadd.f32 %v2167, %v2176
        %v2239 = vadd.f32 %v2168, %v2176
        %v2240 = vadd.f32 %v2169, %v2176
        %v2241 = vadd.f32 %v2170, %v2176
        %v2242 = vmax.f32 %v2178, 0.0
        %v2243 = vmax.f32 %v2179, 0.0
        %v2244 = vmax.f32 %v2180, 0.0
        %v2245 = vmax.f32 %v2181, 0.0
        %v2246 = vmax.f32 %v2182, 0.0
        %v2247 = vmax.f32 %v2183, 0.0
        %v2248 = vmax.f32 %v2184, 0.0
        %v2249 = vmax.f32 %v2185, 0.0
        %v2250 = vmax.f32 %v2186, 0.0
        %v2251 = vmax.f32 %v2187, 0.0
        %v2252 = vmax.f32 %v2188, 0.0
        %v2253 = vmax.f32 %v2189, 0.0
        %v2254 = vmax.f32 %v2190, 0.0
        %v2255 = vmax.f32 %v2191, 0.0
        %v2256 = vmax.f32 %v2192, 0.0
        %v2257 = vmax.f32 %v2193, 0.0
        %v2258 = vmax.f32 %v2194, 0.0
        %v2259 = vmax.f32 %v2195, 0.0
        %v2260 = vmax.f32 %v2196, 0.0
        %v2261 = vmax.f32 %v2197, 0.0
        %v2262 = vmax.f32 %v2198, 0.0
        %v2263 = vmax.f32 %v2199, 0.0
        %v2264 = vmax.f32 %v2200, 0.0
        %v2265 = vmax.f32 %v2201, 0.0
        %v2266 = vmax.f32 %v2202, 0.0
        %v2267 = vmax.f32 %v2203, 0.0
        %v2268 = vmax.f32 %v2204, 0.0
        %v2269 = vmax.f32 %v2205, 0.0
        %v2270 = vmax.f32 %v2206, 0.0
        %v2271 = vmax.f32 %v2207, 0.0
        %v2272 = vmax.f32 %v2208, 0.0
        %v2273 = vmax.f32 %v2209, 0.0
        %v2274 = vmax.f32 %v2210, 0.0
        %v2275 = vmax.f32 %v2211, 0.0
        %v2276 = vmax.f32 %v2212, 0.0
        %v2277 = vmax.f32 %v2213, 0.0
        %v2278 = vmax.f32 %v2214, 0.0
        %v2279 = vmax.f32 %v2215, 0.0
        %v2280 = vmax.f32 %v2216, 0.0
        %v2281 = vmax.f32 %v2217, 0.0
        %v2282 = vmax.f32 %v2218, 0.0
        %v2283 = vmax.f32 %v2219, 0.0
        %v2284 = vmax.f32 %v2220, 0.0
        %v2285 = vmax.f32 %v2221, 0.0
        %v2286 = vmax.f32 %v2222, 0.0
        %v2287 = vmax.f32 %v2223, 0.0
        %v2288 = vmax.f32 %v2224, 0.0
        %v2289 = vmax.f32 %v2225, 0.0
        %v2290 = vmax.f32 %v2226, 0.0
        %v2291 = vmax.f32 %v2227, 0.0
        %v2292 = vmax.f32 %v2228, 0.0
        %v2293 = vmax.f32 %v2229, 0.0
        %v2294 = vmax.f32 %v2230, 0.0
        %v2295 = vmax.f32 %v2231, 0.0
        %v2296 = vmax.f32 %v2232, 0.0
        %v2297 = vmax.f32 %v2233, 0.0
        %v2298 = vmax.f32 %v2234, 0.0
        %v2299 = vmax.f32 %v2235, 0.0
        %v2300 = vmax.f32 %v2236, 0.0
        %v2301 = vmax.f32 %v2237, 0.0
        %v2302 = vmax.f32 %v2238, 0.0
        %v2303 = vmax.f32 %v2239, 0.0
        %v2304 = vmax.f32 %v2240, 0.0
        %v2305 = vmax.f32 %v2241, 0.0
        %v2306 = vpack.c.bf16 %v2243, %v2242
        %v2307 = vpack.c.bf16 %v2245, %v2244
        %v2308 = vpack.c.bf16 %v2247, %v2246
        %v2309 = vpack.c.bf16 %v2249, %v2248
        %v2310 = vpack.c.bf16 %v2251, %v2250
        %v2311 = vpack.c.bf16 %v2253, %v2252
        %v2312 = vpack.c.bf16 %v2255, %v2254
        %v2313 = vpack.c.bf16 %v2257, %v2256
        %v2314 = vpack.c.bf16 %v2259, %v2258
        %v2315 = vpack.c.bf16 %v2261, %v2260
        %v2316 = vpack.c.bf16 %v2263, %v2262
        %v2317 = vpack.c.bf16 %v2265, %v2264
        %v2318 = vpack.c.bf16 %v2267, %v2266
        %v2319 = vpack.c.bf16 %v2269, %v2268
        %v2320 = vpack.c.bf16 %v2271, %v2270
        %v2321 = vpack.c.bf16 %v2273, %v2272
        %v2322 = vpack.c.bf16 %v2275, %v2274
        %v2323 = vpack.c.bf16 %v2277, %v2276
        %v2324 = vpack.c.bf16 %v2279, %v2278
        %v2325 = vpack.c.bf16 %v2281, %v2280
        %v2326 = vpack.c.bf16 %v2283, %v2282
        %v2327 = vpack.c.bf16 %v2285, %v2284
        %v2328 = vpack.c.bf16 %v2287, %v2286
        %v2329 = vpack.c.bf16 %v2289, %v2288
        %v2330 = vpack.c.bf16 %v2291, %v2290
        %v2331 = vpack.c.bf16 %v2293, %v2292
        %v2332 = vpack.c.bf16 %v2295, %v2294
        %v2333 = vpack.c.bf16 %v2297, %v2296
        %v2334 = vpack.c.bf16 %v2299, %v2298
        %v2335 = vpack.c.bf16 %v2301, %v2300
        %v2336 = vpack.c.bf16 %v2303, %v2302
        %v2337 = vpack.c.bf16 %v2305, %v2304
        %v2370 = vunpack.c.l.b16 %v2306
        %v2371 = vunpack.c.h.b16 %v2306
        %v2372 = vunpack.c.l.b16 %v2307
        %v2373 = vunpack.c.h.b16 %v2307
        %v2374 = vunpack.c.l.b16 %v2308
        %v2375 = vunpack.c.h.b16 %v2308
        %v2376 = vunpack.c.l.b16 %v2309
        %v2377 = vunpack.c.h.b16 %v2309
        %v2378 = vunpack.c.l.b16 %v2310
        %v2379 = vunpack.c.h.b16 %v2310
        %v2380 = vunpack.c.l.b16 %v2311
        %v2381 = vunpack.c.h.b16 %v2311
        %v2382 = vunpack.c.l.b16 %v2312
        %v2383 = vunpack.c.h.b16 %v2312
        %v2384 = vunpack.c.l.b16 %v2313
        %v2385 = vunpack.c.h.b16 %v2313
        %v2386 = vunpack.c.l.b16 %v2314
        %v2387 = vunpack.c.h.b16 %v2314
        %v2388 = vunpack.c.l.b16 %v2315
        %v2389 = vunpack.c.h.b16 %v2315
        %v2390 = vunpack.c.l.b16 %v2316
        %v2391 = vunpack.c.h.b16 %v2316
        %v2392 = vunpack.c.l.b16 %v2317
        %v2393 = vunpack.c.h.b16 %v2317
        %v2394 = vunpack.c.l.b16 %v2318
        %v2395 = vunpack.c.h.b16 %v2318
        %v2396 = vunpack.c.l.b16 %v2319
        %v2397 = vunpack.c.h.b16 %v2319
        %v2398 = vunpack.c.l.b16 %v2320
        %v2399 = vunpack.c.h.b16 %v2320
        %v2400 = vunpack.c.l.b16 %v2321
        %v2401 = vunpack.c.h.b16 %v2321
        %v2402 = vunpack.c.l.b16 %v2322
        %v2403 = vunpack.c.h.b16 %v2322
        %v2404 = vunpack.c.l.b16 %v2323
        %v2405 = vunpack.c.h.b16 %v2323
        %v2406 = vunpack.c.l.b16 %v2324
        %v2407 = vunpack.c.h.b16 %v2324
        %v2408 = vunpack.c.l.b16 %v2325
        %v2409 = vunpack.c.h.b16 %v2325
        %v2410 = vunpack.c.l.b16 %v2326
        %v2411 = vunpack.c.h.b16 %v2326
        %v2412 = vunpack.c.l.b16 %v2327
        %v2413 = vunpack.c.h.b16 %v2327
        %v2414 = vunpack.c.l.b16 %v2328
        %v2415 = vunpack.c.h.b16 %v2328
        %v2416 = vunpack.c.l.b16 %v2329
        %v2417 = vunpack.c.h.b16 %v2329
        %v2418 = vunpack.c.l.b16 %v2330
        %v2419 = vunpack.c.h.b16 %v2330
        %v2420 = vunpack.c.l.b16 %v2331
        %v2421 = vunpack.c.h.b16 %v2331
        %v2422 = vunpack.c.l.b16 %v2332
        %v2423 = vunpack.c.h.b16 %v2332
        %v2424 = vunpack.c.l.b16 %v2333
        %v2425 = vunpack.c.h.b16 %v2333
        %v2426 = vunpack.c.l.b16 %v2334
        %v2427 = vunpack.c.h.b16 %v2334
        %v2428 = vunpack.c.l.b16 %v2335
        %v2429 = vunpack.c.h.b16 %v2335
        %v2430 = vunpack.c.l.b16 %v2336
        %v2431 = vunpack.c.h.b16 %v2336
        %v2432 = vunpack.c.l.b16 %v2337
        %v2433 = vunpack.c.h.b16 %v2337
        %v2434 = vpack.c.b16 %v2370, %v2370
        %v2435 = vpack.c.b16 %v2371, %v2371
        %v2436 = vpack.c.b16 %v2372, %v2372
        %v2437 = vpack.c.b16 %v2373, %v2373
        %v2438 = vpack.c.b16 %v2374, %v2374
        %v2439 = vpack.c.b16 %v2375, %v2375
        %v2440 = vpack.c.b16 %v2376, %v2376
        %v2441 = vpack.c.b16 %v2377, %v2377
        %v2442 = vpack.c.b16 %v2378, %v2378
        %v2443 = vpack.c.b16 %v2379, %v2379
        %v2444 = vpack.c.b16 %v2380, %v2380
        %v2445 = vpack.c.b16 %v2381, %v2381
        %v2446 = vpack.c.b16 %v2382, %v2382
        %v2447 = vpack.c.b16 %v2383, %v2383
        %v2448 = vpack.c.b16 %v2384, %v2384
        %v2449 = vpack.c.b16 %v2385, %v2385
        %v2450 = vpack.c.b16 %v2386, %v2386
        %v2451 = vpack.c.b16 %v2387, %v2387
        %v2452 = vpack.c.b16 %v2388, %v2388
        %v2453 = vpack.c.b16 %v2389, %v2389
        %v2454 = vpack.c.b16 %v2390, %v2390
        %v2455 = vpack.c.b16 %v2391, %v2391
        %v2456 = vpack.c.b16 %v2392, %v2392
        %v2457 = vpack.c.b16 %v2393, %v2393
        %v2458 = vpack.c.b16 %v2394, %v2394
        %v2459 = vpack.c.b16 %v2395, %v2395
        %v2460 = vpack.c.b16 %v2396, %v2396
        %v2461 = vpack.c.b16 %v2397, %v2397
        %v2462 = vpack.c.b16 %v2398, %v2398
        %v2463 = vpack.c.b16 %v2399, %v2399
        %v2464 = vpack.c.b16 %v2400, %v2400
        %v2465 = vpack.c.b16 %v2401, %v2401
        %v2466 = vpack.c.b16 %v2402, %v2402
        %v2467 = vpack.c.b16 %v2403, %v2403
        %v2468 = vpack.c.b16 %v2404, %v2404
        %v2469 = vpack.c.b16 %v2405, %v2405
        %v2470 = vpack.c.b16 %v2406, %v2406
        %v2471 = vpack.c.b16 %v2407, %v2407
        %v2472 = vpack.c.b16 %v2408, %v2408
        %v2473 = vpack.c.b16 %v2409, %v2409
        %v2474 = vpack.c.b16 %v2410, %v2410
        %v2475 = vpack.c.b16 %v2411, %v2411
        %v2476 = vpack.c.b16 %v2412, %v2412
        %v2477 = vpack.c.b16 %v2413, %v2413
        %v2478 = vpack.c.b16 %v2414, %v2414
        %v2479 = vpack.c.b16 %v2415, %v2415
        %v2480 = vpack.c.b16 %v2416, %v2416
        %v2481 = vpack.c.b16 %v2417, %v2417
        %v2482 = vpack.c.b16 %v2418, %v2418
        %v2483 = vpack.c.b16 %v2419, %v2419
        %v2484 = vpack.c.b16 %v2420, %v2420
        %v2485 = vpack.c.b16 %v2421, %v2421
        %v2486 = vpack.c.b16 %v2422, %v2422
        %v2487 = vpack.c.b16 %v2423, %v2423
        %v2488 = vpack.c.b16 %v2424, %v2424
        %v2489 = vpack.c.b16 %v2425, %v2425
        %v2490 = vpack.c.b16 %v2426, %v2426
        %v2491 = vpack.c.b16 %v2427, %v2427
        %v2492 = vpack.c.b16 %v2428, %v2428
        %v2493 = vpack.c.b16 %v2429, %v2429
        %v2494 = vpack.c.b16 %v2430, %v2430
        %v2495 = vpack.c.b16 %v2431, %v2431
        %v2496 = vpack.c.b16 %v2432, %v2432
        %v2497 = vpack.c.b16 %v2433, %v2433
        %vm2562 = vcmask 60416
        %2563 = vst.msk [vmem:[%s306] sm:$0xf] %vm2562, %v2434
        %2564 = vst.msk [vmem:[%s306 + $0x4] sm:$0xf] %vm2562, %v2435
        %2565 = vst.msk [vmem:[%s306 + $0x8] sm:$0xf] %vm2562, %v2436
        %2566 = vst.msk [vmem:[%s306 + $0xc] sm:$0xf] %vm2562, %v2437
        %2567 = vst.msk [vmem:[%s306 + $0x10] sm:$0xf] %vm2562, %v2438
        %2568 = vst.msk [vmem:[%s306 + $0x14] sm:$0xf] %vm2562, %v2439
        %2569 = vst.msk [vmem:[%s306 + $0x18] sm:$0xf] %vm2562, %v2440
        %2570 = vst.msk [vmem:[%s306 + $0x1c] sm:$0xf] %vm2562, %v2441
        %2571 = vst.msk [vmem:[%s306 + $0x20] sm:$0xf] %vm2562, %v2442
        %2572 = vst.msk [vmem:[%s306 + $0x24] sm:$0xf] %vm2562, %v2443
        %2573 = vst.msk [vmem:[%s306 + $0x28] sm:$0xf] %vm2562, %v2444
        %2574 = vst.msk [vmem:[%s306 + $0x2c] sm:$0xf] %vm2562, %v2445
        %2575 = vst.msk [vmem:[%s306 + $0x30] sm:$0xf] %vm2562, %v2446
        %2576 = vst.msk [vmem:[%s306 + $0x34] sm:$0xf] %vm2562, %v2447
        %2577 = vst.msk [vmem:[%s306 + $0x38] sm:$0xf] %vm2562, %v2448
        %2578 = vst.msk [vmem:[%s306 + $0x3c] sm:$0xf] %vm2562, %v2449
        %2579 = vst.msk [vmem:[%s306 + $0x40] sm:$0xf] %vm2562, %v2450
        %2580 = vst.msk [vmem:[%s306 + $0x44] sm:$0xf] %vm2562, %v2451
        %2581 = vst.msk [vmem:[%s306 + $0x48] sm:$0xf] %vm2562, %v2452
        %2582 = vst.msk [vmem:[%s306 + $0x4c] sm:$0xf] %vm2562, %v2453
        %2583 = vst.msk [vmem:[%s306 + $0x50] sm:$0xf] %vm2562, %v2454
        %2584 = vst.msk [vmem:[%s306 + $0x54] sm:$0xf] %vm2562, %v2455
        %2585 = vst.msk [vmem:[%s306 + $0x58] sm:$0xf] %vm2562, %v2456
        %2586 = vst.msk [vmem:[%s306 + $0x5c] sm:$0xf] %vm2562, %v2457
        %2587 = vst.msk [vmem:[%s306 + $0x60] sm:$0xf] %vm2562, %v2458
        %2588 = vst.msk [vmem:[%s306 + $0x64] sm:$0xf] %vm2562, %v2459
        %2589 = vst.msk [vmem:[%s306 + $0x68] sm:$0xf] %vm2562, %v2460
        %2590 = vst.msk [vmem:[%s306 + $0x6c] sm:$0xf] %vm2562, %v2461
        %2591 = vst.msk [vmem:[%s306 + $0x70] sm:$0xf] %vm2562, %v2462
        %2592 = vst.msk [vmem:[%s306 + $0x74] sm:$0xf] %vm2562, %v2463
        %2593 = vst.msk [vmem:[%s306 + $0x78] sm:$0xf] %vm2562, %v2464
        %2594 = vst.msk [vmem:[%s306 + $0x7c] sm:$0xf] %vm2562, %v2465
        %2595 = vst.msk [vmem:[%s306 + $0x80] sm:$0xf] %vm2562, %v2466
        %2596 = vst.msk [vmem:[%s306 + $0x84] sm:$0xf] %vm2562, %v2467
        %2597 = vst.msk [vmem:[%s306 + $0x88] sm:$0xf] %vm2562, %v2468
        %2598 = vst.msk [vmem:[%s306 + $0x8c] sm:$0xf] %vm2562, %v2469
        %2599 = vst.msk [vmem:[%s306 + $0x90] sm:$0xf] %vm2562, %v2470
        %2600 = vst.msk [vmem:[%s306 + $0x94] sm:$0xf] %vm2562, %v2471
        %2601 = vst.msk [vmem:[%s306 + $0x98] sm:$0xf] %vm2562, %v2472
        %2602 = vst.msk [vmem:[%s306 + $0x9c] sm:$0xf] %vm2562, %v2473
        %2603 = vst.msk [vmem:[%s306 + $0xa0] sm:$0xf] %vm2562, %v2474
        %2604 = vst.msk [vmem:[%s306 + $0xa4] sm:$0xf] %vm2562, %v2475
        %2605 = vst.msk [vmem:[%s306 + $0xa8] sm:$0xf] %vm2562, %v2476
        %2606 = vst.msk [vmem:[%s306 + $0xac] sm:$0xf] %vm2562, %v2477
        %2607 = vst.msk [vmem:[%s306 + $0xb0] sm:$0xf] %vm2562, %v2478
        %2608 = vst.msk [vmem:[%s306 + $0xb4] sm:$0xf] %vm2562, %v2479
        %2609 = vst.msk [vmem:[%s306 + $0xb8] sm:$0xf] %vm2562, %v2480
        %2610 = vst.msk [vmem:[%s306 + $0xbc] sm:$0xf] %vm2562, %v2481
        %2611 = vst.msk [vmem:[%s306 + $0xc0] sm:$0xf] %vm2562, %v2482
        %2612 = vst.msk [vmem:[%s306 + $0xc4] sm:$0xf] %vm2562, %v2483
        %2613 = vst.msk [vmem:[%s306 + $0xc8] sm:$0xf] %vm2562, %v2484
        %2614 = vst.msk [vmem:[%s306 + $0xcc] sm:$0xf] %vm2562, %v2485
        %2615 = vst.msk [vmem:[%s306 + $0xd0] sm:$0xf] %vm2562, %v2486
        %2616 = vst.msk [vmem:[%s306 + $0xd4] sm:$0xf] %vm2562, %v2487
        %2617 = vst.msk [vmem:[%s306 + $0xd8] sm:$0xf] %vm2562, %v2488
        %2618 = vst.msk [vmem:[%s306 + $0xdc] sm:$0xf] %vm2562, %v2489
        %2619 = vst.msk [vmem:[%s306 + $0xe0] sm:$0xf] %vm2562, %v2490
        %2620 = vst.msk [vmem:[%s306 + $0xe4] sm:$0xf] %vm2562, %v2491
        %2621 = vst.msk [vmem:[%s306 + $0xe8] sm:$0xf] %vm2562, %v2492
        %2622 = vst.msk [vmem:[%s306 + $0xec] sm:$0xf] %vm2562, %v2493
        %2623 = vst.msk [vmem:[%s306 + $0xf0] sm:$0xf] %vm2562, %v2494
        %2624 = vst.msk [vmem:[%s306 + $0xf4] sm:$0xf] %vm2562, %v2495
        %2625 = vst.msk [vmem:[%s306 + $0xf8] sm:$0xf] %vm2562, %v2496
        %2626 = vst.msk [vmem:[%s306 + $0xfc] sm:$0xf] %vm2562, %v2497
      $region44: #{densenet_forward.13} parent=35 // pred_fallthru
        _
      %s2627 = smul.u32 64, %s20
      %p2628 = scmp.lt.s32.totalorder %s2627, 127
      %s2629 = scalar_select %p2628, %s2627, 127
      %p2630 = scmp.lt.s32.totalorder %s21, 0
      %s2631 = scalar_select %p2630, %s21, 0
      %s2632 = sadd.s32 %s2631, %s2629
      %s2633 = smul.addr %s2632, 4
      %s2634 = scalar_lea.vmem %s4, %s2633
      // Predicated region
      $region45: #{densenet_forward.13} parent=35 // pred_check
        %p2635 = pneg %p162
      $region46: #{densenet_forward.13} parent=35 // pred_check_branch
        %2637 = sbr.rel (%p2635) target = $region48
      $region47: #{densenet_forward.13} parent=35 // pred_region
        %s2638 = smul.u32 64, %s20
      $region48: #{densenet_forward.13} parent=35 // pred_fallthru
        _
    $region36: #{densenet_forward.13} parent=5 // pred_fallthru
      _
    %p2639 = scmp.le.s32.totalorder 2, %s10
    // Predicated region
    $region49: #{densenet_forward.13} parent=5 // pred_check
      %p2640 = pneg %p2639
    $region50: #{densenet_forward.13} parent=5 // pred_check_branch
      %2642 = sbr.rel (%p2640) target = $region52
    $region51: #{densenet_forward.13} parent=5 // pred_region
      %s2643 = ssub.s32 %s10, 2
      // Predicated region
      $region53: #{densenet_forward.13} parent=51 // pred_check
        %p2644 = pneg %p168
      $region54: #{densenet_forward.13} parent=51 // pred_check_branch
        %2646 = sbr.rel (%p2644) target = $region56
      $region55: #{densenet_forward.13} parent=51 // pred_region
        %s2647 = smul.u32 64, %s23
        %p2648 = scmp.lt.s32.totalorder %s2647, 127
        %s2649 = scalar_select %p2648, %s2647, 127
        %p2650 = scmp.lt.s32.totalorder %s24, 0
        %s2651 = scalar_select %p2650, %s24, 0
        %s2652 = sadd.s32 %s2651, %s2649
        %s2653 = smul.addr %s2652, 4
        %s2654 = scalar_lea.vmem %s4, %s2653
      $region56: #{densenet_forward.13} parent=51 // pred_fallthru
        _
    $region52: #{densenet_forward.13} parent=5 // pred_fallthru
      _
  $region6: #{densenet_forward.13} parent=0 // loop_footer
    %s14 = sadd.s32 1, %s10
  $region7: #{densenet_forward.13} parent=0 // loop_footer_branch
    %9 = sbr.rel target = $region3
  $region8: #{densenet_forward.13} parent=0 // loop_exit
    _

// kernel: densenet_forward.14
$region0: #{densenet_forward.14}
  #allocation0 [shape = 'u32[]', space=smem, size = 0x4, offset = 0x4, fixed_abs, tag = 'smem constant byte address 0x4 - core index']
  #allocation1 [shape = 'u32[144,128]{1,0:T(1,128)}', space=vmem, size = 0x12000, scoped, tag = 'internal scratch']
  %s0 = inlined_call_operand.vmem [shape: bf16[32,27,32], index: 0, kind: input, shape index: {}]
  %s1 = inlined_call_operand.vmem [shape: bf16[32,32], index: 1, kind: output, shape index: {}]
  %s2 = sld [smem:[#allocation0]]
  $region14: #{densenet_forward.14} parent=0
    _
  %s4 = ssub.s32 1, %s2
  %s5 = scalar_select 0, %s4, %s2
  // Predicated region
  $region2: #{densenet_forward.14} parent=0 // pred_check
    _
  $region3: #{densenet_forward.14} parent=0 // pred_check_branch
    %7 = sbr.rel (0) target = $region5
  $region4: #{densenet_forward.14} parent=0 // pred_region
    _
  $region5: #{densenet_forward.14} parent=0 // pred_fallthru
    _
  %v9 = vld [vmem:[%s0] sm:$0xf]
  %v10 = vld [vmem:[%s0 + $0x4] sm:$0xf]
  %v11 = vld [vmem:[%s0 + $0x8] sm:$0xf]
  %v12 = vld [vmem:[%s0 + $0xc] sm:$0x3]
  %v13 = vld [vmem:[%s0 + $0x10] sm:$0xf]
  %v14 = vld [vmem:[%s0 + $0x14] sm:$0xf]
  %v15 = vld [vmem:[%s0 + $0x18] sm:$0xf]
  %v16 = vld [vmem:[%s0 + $0x1c] sm:$0x3]
  %v17 = vld [vmem:[%s0 + $0x20] sm:$0xf]
  %v18 = vld [vmem:[%s0 + $0x24] sm:$0xf]
  %v19 = vld [vmem:[%s0 + $0x28] sm:$0xf]
  %v20 = vld [vmem:[%s0 + $0x2c] sm:$0x3]
  %v21 = vld [vmem:[%s0 + $0x30] sm:$0xf]
  %v22 = vld [vmem:[%s0 + $0x34] sm:$0xf]
  %v23 = vld [vmem:[%s0 + $0x38] sm:$0xf]
  %v24 = vld [vmem:[%s0 + $0x3c] sm:$0x3]
  %v25 = vld [vmem:[%s0 + $0x40] sm:$0xf]
  %v26 = vld [vmem:[%s0 + $0x44] sm:$0xf]
  %v27 = vld [vmem:[%s0 + $0x48] sm:$0xf]
  %v28 = vld [vmem:[%s0 + $0x4c] sm:$0x3]
  %v29 = vld [vmem:[%s0 + $0x50] sm:$0xf]
  %v30 = vld [vmem:[%s0 + $0x54] sm:$0xf]
  %v31 = vld [vmem:[%s0 + $0x58] sm:$0xf]
  %v32 = vld [vmem:[%s0 + $0x5c] sm:$0x3]
  %v33 = vld [vmem:[%s0 + $0x60] sm:$0xf]
  %v34 = vld [vmem:[%s0 + $0x64] sm:$0xf]
  %v35 = vld [vmem:[%s0 + $0x68] sm:$0xf]
  %v36 = vld [vmem:[%s0 + $0x6c] sm:$0x3]
  %v37 = vld [vmem:[%s0 + $0x70] sm:$0xf]
  %v38 = vld [vmem:[%s0 + $0x74] sm:$0xf]
  %v39 = vld [vmem:[%s0 + $0x78] sm:$0xf]
  %v40 = vld [vmem:[%s0 + $0x7c] sm:$0x3]
  %v41 = vld [vmem:[%s0 + $0x80] sm:$0xf]
  %v42 = vld [vmem:[%s0 + $0x84] sm:$0xf]
  %v43 = vld [vmem:[%s0 + $0x88] sm:$0xf]
  %v44 = vld [vmem:[%s0 + $0x8c] sm:$0x3]
  %v45 = vld [vmem:[%s0 + $0x90] sm:$0xf]
  %v46 = vld [vmem:[%s0 + $0x94] sm:$0xf]
  %v47 = vld [vmem:[%s0 + $0x98] sm:$0xf]
  %v48 = vld [vmem:[%s0 + $0x9c] sm:$0x3]
  %v49 = vld [vmem:[%s0 + $0xa0] sm:$0xf]
  %v50 = vld [vmem:[%s0 + $0xa4] sm:$0xf]
  %v51 = vld [vmem:[%s0 + $0xa8] sm:$0xf]
  %v52 = vld [vmem:[%s0 + $0xac] sm:$0x3]
  %v53 = vld [vmem:[%s0 + $0xb0] sm:$0xf]
  %v54 = vld [vmem:[%s0 + $0xb4] sm:$0xf]
  %v55 = vld [vmem:[%s0 + $0xb8] sm:$0xf]
  %v56 = vld [vmem:[%s0 + $0xbc] sm:$0x3]
  %v57 = vld [vmem:[%s0 + $0xc0] sm:$0xf]
  %v58 = vld [vmem:[%s0 + $0xc4] sm:$0xf]
  %v59 = vld [vmem:[%s0 + $0xc8] sm:$0xf]
  %v60 = vld [vmem:[%s0 + $0xcc] sm:$0x3]
  %v61 = vld [vmem:[%s0 + $0xd0] sm:$0xf]
  %v62 = vld [vmem:[%s0 + $0xd4] sm:$0xf]
  %v63 = vld [vmem:[%s0 + $0xd8] sm:$0xf]
  %v64 = vld [vmem:[%s0 + $0xdc] sm:$0x3]
  %v65 = vld [vmem:[%s0 + $0xe0] sm:$0xf]
  %v66 = vld [vmem:[%s0 + $0xe4] sm:$0xf]
  %v67 = vld [vmem:[%s0 + $0xe8] sm:$0xf]
  %v68 = vld [vmem:[%s0 + $0xec] sm:$0x3]
  %v69 = vld [vmem:[%s0 + $0xf0] sm:$0xf]
  %v70 = vld [vmem:[%s0 + $0xf4] sm:$0xf]
  %v71 = vld [vmem:[%s0 + $0xf8] sm:$0xf]
  %v72 = vld [vmem:[%s0 + $0xfc] sm:$0x3]
  %v73 = vld [vmem:[%s0 + $0x100] sm:$0xf]
  %v74 = vld [vmem:[%s0 + $0x104] sm:$0xf]
  %v75 = vld [vmem:[%s0 + $0x108] sm:$0xf]
  %v76 = vld [vmem:[%s0 + $0x10c] sm:$0x3]
  %v77 = vld [vmem:[%s0 + $0x110] sm:$0xf]
  %v78 = vld [vmem:[%s0 + $0x114] sm:$0xf]
  %v79 = vld [vmem:[%s0 + $0x118] sm:$0xf]
  %v80 = vld [vmem:[%s0 + $0x11c] sm:$0x3]
  %v81 = vld [vmem:[%s0 + $0x120] sm:$0xf]
  %v82 = vld [vmem:[%s0 + $0x124] sm:$0xf]
  %v83 = vld [vmem:[%s0 + $0x128] sm:$0xf]
  %v84 = vld [vmem:[%s0 + $0x12c] sm:$0x3]
  %v85 = vld [vmem:[%s0 + $0x130] sm:$0xf]
  %v86 = vld [vmem:[%s0 + $0x134] sm:$0xf]
  %v87 = vld [vmem:[%s0 + $0x138] sm:$0xf]
  %v88 = vld [vmem:[%s0 + $0x13c] sm:$0x3]
  %v89 = vld [vmem:[%s0 + $0x140] sm:$0xf]
  %v90 = vld [vmem:[%s0 + $0x144] sm:$0xf]
  %v91 = vld [vmem:[%s0 + $0x148] sm:$0xf]
  %v92 = vld [vmem:[%s0 + $0x14c] sm:$0x3]
  %v93 = vld [vmem:[%s0 + $0x150] sm:$0xf]
  %v94 = vld [vmem:[%s0 + $0x154] sm:$0xf]
  %v95 = vld [vmem:[%s0 + $0x158] sm:$0xf]
  %v96 = vld [vmem:[%s0 + $0x15c] sm:$0x3]
  %v97 = vld [vmem:[%s0 + $0x160] sm:$0xf]
  %v98 = vld [vmem:[%s0 + $0x164] sm:$0xf]
  %v99 = vld [vmem:[%s0 + $0x168] sm:$0xf]
  %v100 = vld [vmem:[%s0 + $0x16c] sm:$0x3]
  %v101 = vld [vmem:[%s0 + $0x170] sm:$0xf]
  %v102 = vld [vmem:[%s0 + $0x174] sm:$0xf]
  %v103 = vld [vmem:[%s0 + $0x178] sm:$0xf]
  %v104 = vld [vmem:[%s0 + $0x17c] sm:$0x3]
  %v105 = vld [vmem:[%s0 + $0x180] sm:$0xf]
  %v106 = vld [vmem:[%s0 + $0x184] sm:$0xf]
  %v107 = vld [vmem:[%s0 + $0x188] sm:$0xf]
  %v108 = vld [vmem:[%s0 + $0x18c] sm:$0x3]
  %v109 = vld [vmem:[%s0 + $0x190] sm:$0xf]
  %v110 = vld [vmem:[%s0 + $0x194] sm:$0xf]
  %v111 = vld [vmem:[%s0 + $0x198] sm:$0xf]
  %v112 = vld [vmem:[%s0 + $0x19c] sm:$0x3]
  %v113 = vld [vmem:[%s0 + $0x1a0] sm:$0xf]
  %v114 = vld [vmem:[%s0 + $0x1a4] sm:$0xf]
  %v115 = vld [vmem:[%s0 + $0x1a8] sm:$0xf]
  %v116 = vld [vmem:[%s0 + $0x1ac] sm:$0x3]
  %v117 = vld [vmem:[%s0 + $0x1b0] sm:$0xf]
  %v118 = vld [vmem:[%s0 + $0x1b4] sm:$0xf]
  %v119 = vld [vmem:[%s0 + $0x1b8] sm:$0xf]
  %v120 = vld [vmem:[%s0 + $0x1bc] sm:$0x3]
  %v121 = vld [vmem:[%s0 + $0x1c0] sm:$0xf]
  %v122 = vld [vmem:[%s0 + $0x1c4] sm:$0xf]
  %v123 = vld [vmem:[%s0 + $0x1c8] sm:$0xf]
  %v124 = vld [vmem:[%s0 + $0x1cc] sm:$0x3]
  %v125 = vld [vmem:[%s0 + $0x1d0] sm:$0xf]
  %v126 = vld [vmem:[%s0 + $0x1d4] sm:$0xf]
  %v127 = vld [vmem:[%s0 + $0x1d8] sm:$0xf]
  %v128 = vld [vmem:[%s0 + $0x1dc] sm:$0x3]
  %v129 = vld [vmem:[%s0 + $0x1e0] sm:$0xf]
  %v130 = vld [vmem:[%s0 + $0x1e4] sm:$0xf]
  %v131 = vld [vmem:[%s0 + $0x1e8] sm:$0xf]
  %v132 = vld [vmem:[%s0 + $0x1ec] sm:$0x3]
  %v133 = vld [vmem:[%s0 + $0x1f0] sm:$0xf]
  %v134 = vld [vmem:[%s0 + $0x1f4] sm:$0xf]
  %v135 = vld [vmem:[%s0 + $0x1f8] sm:$0xf]
  %v136 = vld [vmem:[%s0 + $0x1fc] sm:$0x3]
  %v265 = vunpack.c.l.b16 %v9
  %v266 = vunpack.c.l.b16 %v10
  %v267 = vunpack.c.l.b16 %v11
  %v268 = vunpack.c.l.b16 %v12
  %v269 = vunpack.c.l.b16 %v13
  %v270 = vunpack.c.l.b16 %v14
  %v271 = vunpack.c.l.b16 %v15
  %v272 = vunpack.c.l.b16 %v16
  %v273 = vunpack.c.l.b16 %v17
  %v274 = vunpack.c.l.b16 %v18
  %v275 = vunpack.c.l.b16 %v19
  %v276 = vunpack.c.l.b16 %v20
  %v277 = vunpack.c.l.b16 %v21
  %v278 = vunpack.c.l.b16 %v22
  %v279 = vunpack.c.l.b16 %v23
  %v280 = vunpack.c.l.b16 %v24
  %v281 = vunpack.c.l.b16 %v25
  %v282 = vunpack.c.l.b16 %v26
  %v283 = vunpack.c.l.b16 %v27
  %v284 = vunpack.c.l.b16 %v28
  %v285 = vunpack.c.l.b16 %v29
  %v286 = vunpack.c.l.b16 %v30
  %v287 = vunpack.c.l.b16 %v31
  %v288 = vunpack.c.l.b16 %v32
  %v289 = vunpack.c.l.b16 %v33
  %v290 = vunpack.c.l.b16 %v34
  %v291 = vunpack.c.l.b16 %v35
  %v292 = vunpack.c.l.b16 %v36
  %v293 = vunpack.c.l.b16 %v37
  %v294 = vunpack.c.l.b16 %v38
  %v295 = vunpack.c.l.b16 %v39
  %v296 = vunpack.c.l.b16 %v40
  %v297 = vunpack.c.l.b16 %v41
  %v298 = vunpack.c.l.b16 %v42
  %v299 = vunpack.c.l.b16 %v43
  %v300 = vunpack.c.l.b16 %v44
  %v301 = vunpack.c.l.b16 %v45
  %v302 = vunpack.c.l.b16 %v46
  %v303 = vunpack.c.l.b16 %v47
  %v304 = vunpack.c.l.b16 %v48
  %v305 = vunpack.c.l.b16 %v49
  %v306 = vunpack.c.l.b16 %v50
  %v307 = vunpack.c.l.b16 %v51
  %v308 = vunpack.c.l.b16 %v52
  %v309 = vunpack.c.l.b16 %v53
  %v310 = vunpack.c.l.b16 %v54
  %v311 = vunpack.c.l.b16 %v55
  %v312 = vunpack.c.l.b16 %v56
  %v313 = vunpack.c.l.b16 %v57
  %v314 = vunpack.c.l.b16 %v58
  %v315 = vunpack.c.l.b16 %v59
  %v316 = vunpack.c.l.b16 %v60
  %v317 = vunpack.c.l.b16 %v61
  %v318 = vunpack.c.l.b16 %v62
  %v319 = vunpack.c.l.b16 %v63
  %v320 = vunpack.c.l.b16 %v64
  %v321 = vunpack.c.l.b16 %v65
  %v322 = vunpack.c.l.b16 %v66
  %v323 = vunpack.c.l.b16 %v67
  %v324 = vunpack.c.l.b16 %v68
  %v325 = vunpack.c.l.b16 %v69
  %v326 = vunpack.c.l.b16 %v70
  %v327 = vunpack.c.l.b16 %v71
  %v328 = vunpack.c.l.b16 %v72
  %v329 = vunpack.c.l.b16 %v73
  %v330 = vunpack.c.l.b16 %v74
  %v331 = vunpack.c.l.b16 %v75
  %v332 = vunpack.c.l.b16 %v76
  %v333 = vunpack.c.l.b16 %v77
  %v334 = vunpack.c.l.b16 %v78
  %v335 = vunpack.c.l.b16 %v79
  %v336 = vunpack.c.l.b16 %v80
  %v337 = vunpack.c.l.b16 %v81
  %v338 = vunpack.c.l.b16 %v82
  %v339 = vunpack.c.l.b16 %v83
  %v340 = vunpack.c.l.b16 %v84
  %v341 = vunpack.c.l.b16 %v85
  %v342 = vunpack.c.l.b16 %v86
  %v343 = vunpack.c.l.b16 %v87
  %v344 = vunpack.c.l.b16 %v88
  %v345 = vunpack.c.l.b16 %v89
  %v346 = vunpack.c.l.b16 %v90
  %v347 = vunpack.c.l.b16 %v91
  %v348 = vunpack.c.l.b16 %v92
  %v349 = vunpack.c.l.b16 %v93
  %v350 = vunpack.c.l.b16 %v94
  %v351 = vunpack.c.l.b16 %v95
  %v352 = vunpack.c.l.b16 %v96
  %v353 = vunpack.c.l.b16 %v97
  %v354 = vunpack.c.l.b16 %v98
  %v355 = vunpack.c.l.b16 %v99
  %v356 = vunpack.c.l.b16 %v100
  %v357 = vunpack.c.l.b16 %v101
  %v358 = vunpack.c.l.b16 %v102
  %v359 = vunpack.c.l.b16 %v103
  %v360 = vunpack.c.l.b16 %v104
  %v361 = vunpack.c.l.b16 %v105
  %v362 = vunpack.c.l.b16 %v106
  %v363 = vunpack.c.l.b16 %v107
  %v364 = vunpack.c.l.b16 %v108
  %v365 = vunpack.c.l.b16 %v109
  %v366 = vunpack.c.l.b16 %v110
  %v367 = vunpack.c.l.b16 %v111
  %v368 = vunpack.c.l.b16 %v112
  %v369 = vunpack.c.l.b16 %v113
  %v370 = vunpack.c.l.b16 %v114
  %v371 = vunpack.c.l.b16 %v115
  %v372 = vunpack.c.l.b16 %v116
  %v373 = vunpack.c.l.b16 %v117
  %v374 = vunpack.c.l.b16 %v118
  %v375 = vunpack.c.l.b16 %v119
  %v376 = vunpack.c.l.b16 %v120
  %v377 = vunpack.c.l.b16 %v121
  %v378 = vunpack.c.l.b16 %v122
  %v379 = vunpack.c.l.b16 %v123
  %v380 = vunpack.c.l.b16 %v124
  %v381 = vunpack.c.l.b16 %v125
  %v382 = vunpack.c.l.b16 %v126
  %v383 = vunpack.c.l.b16 %v127
  %v384 = vunpack.c.l.b16 %v128
  %v385 = vunpack.c.l.b16 %v129
  %v386 = vunpack.c.l.b16 %v130
  %v387 = vunpack.c.l.b16 %v131
  %v388 = vunpack.c.l.b16 %v132
  %v389 = vunpack.c.l.b16 %v133
  %v390 = vunpack.c.l.b16 %v134
  %v391 = vunpack.c.l.b16 %v135
  %v392 = vunpack.c.l.b16 %v136
  %v393 = vpack.c.b16 %v266, %v265
  %v394 = vpack.c.b16 %v268, %v267
  %v395 = vpack.c.b16 %v270, %v269
  %v396 = vpack.c.b16 %v272, %v271
  %v397 = vpack.c.b16 %v274, %v273
  %v398 = vpack.c.b16 %v276, %v275
  %v399 = vpack.c.b16 %v278, %v277
  %v400 = vpack.c.b16 %v280, %v279
  %v401 = vpack.c.b16 %v282, %v281
  %v402 = vpack.c.b16 %v284, %v283
  %v403 = vpack.c.b16 %v286, %v285
  %v404 = vpack.c.b16 %v288, %v287
  %v405 = vpack.c.b16 %v290, %v289
  %v406 = vpack.c.b16 %v292, %v291
  %v407 = vpack.c.b16 %v294, %v293
  %v408 = vpack.c.b16 %v296, %v295
  %v409 = vpack.c.b16 %v298, %v297
  %v410 = vpack.c.b16 %v300, %v299
  %v411 = vpack.c.b16 %v302, %v301
  %v412 = vpack.c.b16 %v304, %v303
  %v413 = vpack.c.b16 %v306, %v305
  %v414 = vpack.c.b16 %v308, %v307
  %v415 = vpack.c.b16 %v310, %v309
  %v416 = vpack.c.b16 %v312, %v311
  %v417 = vpack.c.b16 %v314, %v313
  %v418 = vpack.c.b16 %v316, %v315
  %v419 = vpack.c.b16 %v318, %v317
  %v420 = vpack.c.b16 %v320, %v319
  %v421 = vpack.c.b16 %v322, %v321
  %v422 = vpack.c.b16 %v324, %v323
  %v423 = vpack.c.b16 %v326, %v325
  %v424 = vpack.c.b16 %v328, %v327
  %v425 = vpack.c.b16 %v330, %v329
  %v426 = vpack.c.b16 %v332, %v331
  %v427 = vpack.c.b16 %v334, %v333
  %v428 = vpack.c.b16 %v336, %v335
  %v429 = vpack.c.b16 %v338, %v337
  %v430 = vpack.c.b16 %v340, %v339
  %v431 = vpack.c.b16 %v342, %v341
  %v432 = vpack.c.b16 %v344, %v343
  %v433 = vpack.c.b16 %v346, %v345
  %v434 = vpack.c.b16 %v348, %v347
  %v435 = vpack.c.b16 %v350, %v349
  %v436 = vpack.c.b16 %v352, %v351
  %v437 = vpack.c.b16 %v354, %v353
  %v438 = vpack.c.b16 %v356, %v355
  %v439 = vpack.c.b16 %v358, %v357
  %v440 = vpack.c.b16 %v360, %v359
  %v441 = vpack.c.b16 %v362, %v361
  %v442 = vpack.c.b16 %v364, %v363
  %v443 = vpack.c.b16 %v366, %v365
  %v444 = vpack.c.b16 %v368, %v367
  %v445 = vpack.c.b16 %v370, %v369
  %v446 = vpack.c.b16 %v372, %v371
  %v447 = vpack.c.b16 %v374, %v373
  %v448 = vpack.c.b16 %v376, %v375
  %v449 = vpack.c.b16 %v378, %v377
  %v450 = vpack.c.b16 %v380, %v379
  %v451 = vpack.c.b16 %v382, %v381
  %v452 = vpack.c.b16 %v384, %v383
  %v453 = vpack.c.b16 %v386, %v385
  %v454 = vpack.c.b16 %v388, %v387
  %v455 = vpack.c.b16 %v390, %v389
  %v456 = vpack.c.b16 %v392, %v391
  %vm489 = vcmask 261120
  %v492 = vsel %vm489, %v393, 4286644096
  %vm494 = vcmask 259072
  %vm495 = vsmask.f32 5376
  %vm496 = vmand %vm494, %vm495
  %v497 = vsel %vm496, %v394, 4286644096
  %v498 = vmax.bf16 %v492, %v497
  %v499 = vunpack.i.l.bf16 %v498
  %v500 = vunpack.i.h.bf16 %v498
  %v501 = vmax.f32 %v499, %v500
  %v502 = vrot.slane %v501, 4
  %v503 = vmax.f32 %v501, %v502
  %v504 = vrot.slane %v503, 2
  %v505 = vmax.f32 %v503, %v504
  %v506 = vrot.slane %v505, 1
  %v507 = vmax.f32 %v505, %v506
  %v508 = vpack.i.bf16 %v507, %v507
  %v510 = vsel %vm489, %v395, 4286644096
  %v512 = vsel %vm496, %v396, 4286644096
  %v513 = vmax.bf16 %v510, %v512
  %v514 = vunpack.i.l.bf16 %v513
  %v515 = vunpack.i.h.bf16 %v513
  %v516 = vmax.f32 %v514, %v515
  %v517 = vrot.slane %v516, 4
  %v518 = vmax.f32 %v516, %v517
  %v519 = vrot.slane %v518, 2
  %v520 = vmax.f32 %v518, %v519
  %v521 = vrot.slane %v520, 1
  %v522 = vmax.f32 %v520, %v521
  %v523 = vpack.i.bf16 %v522, %v522
  %v525 = vsel %vm489, %v397, 4286644096
  %v527 = vsel %vm496, %v398, 4286644096
  %v528 = vmax.bf16 %v525, %v527
  %v529 = vunpack.i.l.bf16 %v528
  %v530 = vunpack.i.h.bf16 %v528
  %v531 = vmax.f32 %v529, %v530
  %v532 = vrot.slane %v531, 4
  %v533 = vmax.f32 %v531, %v532
  %v534 = vrot.slane %v533, 2
  %v535 = vmax.f32 %v533, %v534
  %v536 = vrot.slane %v535, 1
  %v537 = vmax.f32 %v535, %v536
  %v538 = vpack.i.bf16 %v537, %v537
  %v540 = vsel %vm489, %v399, 4286644096
  %v542 = vsel %vm496, %v400, 4286644096
  %v543 = vmax.bf16 %v540, %v542
  %v544 = vunpack.i.l.bf16 %v543
  %v545 = vunpack.i.h.bf16 %v543
  %v546 = vmax.f32 %v544, %v545
  %v547 = vrot.slane %v546, 4
  %v548 = vmax.f32 %v546, %v547
  %v549 = vrot.slane %v548, 2
  %v550 = vmax.f32 %v548, %v549
  %v551 = vrot.slane %v550, 1
  %v552 = vmax.f32 %v550, %v551
  %v553 = vpack.i.bf16 %v552, %v552
  %v555 = vsel %vm489, %v401, 4286644096
  %v557 = vsel %vm496, %v402, 4286644096
  %v558 = vmax.bf16 %v555, %v557
  %v559 = vunpack.i.l.bf16 %v558
  %v560 = vunpack.i.h.bf16 %v558
  %v561 = vmax.f32 %v559, %v560
  %v562 = vrot.slane %v561, 4
  %v563 = vmax.f32 %v561, %v562
  %v564 = vrot.slane %v563, 2
  %v565 = vmax.f32 %v563, %v564
  %v566 = vrot.slane %v565, 1
  %v567 = vmax.f32 %v565, %v566
  %v568 = vpack.i.bf16 %v567, %v567
  %v570 = vsel %vm489, %v403, 4286644096
  %v572 = vsel %vm496, %v404, 4286644096
  %v573 = vmax.bf16 %v570, %v572
  %v574 = vunpack.i.l.bf16 %v573
  %v575 = vunpack.i.h.bf16 %v573
  %v576 = vmax.f32 %v574, %v575
  %v577 = vrot.slane %v576, 4
  %v578 = vmax.f32 %v576, %v577
  %v579 = vrot.slane %v578, 2
  %v580 = vmax.f32 %v578, %v579
  %v581 = vrot.slane %v580, 1
  %v582 = vmax.f32 %v580, %v581
  %v583 = vpack.i.bf16 %v582, %v582
  %v585 = vsel %vm489, %v405, 4286644096
  %v587 = vsel %vm496, %v406, 4286644096
  %v588 = vmax.bf16 %v585, %v587
  %v589 = vunpack.i.l.bf16 %v588
  %v590 = vunpack.i.h.bf16 %v588
  %v591 = vmax.f32 %v589, %v590
  %v592 = vrot.slane %v591, 4
  %v593 = vmax.f32 %v591, %v592
  %v594 = vrot.slane %v593, 2
  %v595 = vmax.f32 %v593, %v594
  %v596 = vrot.slane %v595, 1
  %v597 = vmax.f32 %v595, %v596
  %v598 = vpack.i.bf16 %v597, %v597
  %v600 = vsel %vm489, %v407, 4286644096
  %v602 = vsel %vm496, %v408, 4286644096
  %v603 = vmax.bf16 %v600, %v602
  %v604 = vunpack.i.l.bf16 %v603
  %v605 = vunpack.i.h.bf16 %v603
  %v606 = vmax.f32 %v604, %v605
  %v607 = vrot.slane %v606, 4
  %v608 = vmax.f32 %v606, %v607
  %v609 = vrot.slane %v608, 2
  %v610 = vmax.f32 %v608, %v609
  %v611 = vrot.slane %v610, 1
  %v612 = vmax.f32 %v610, %v611
  %v613 = vpack.i.bf16 %v612, %v612
  %v615 = vsel %vm489, %v409, 4286644096
  %v617 = vsel %vm496, %v410, 4286644096
  %v618 = vmax.bf16 %v615, %v617
  %v619 = vunpack.i.l.bf16 %v618
  %v620 = vunpack.i.h.bf16 %v618
  %v621 = vmax.f32 %v619, %v620
  %v622 = vrot.slane %v621, 4
  %v623 = vmax.f32 %v621, %v622
  %v624 = vrot.slane %v623, 2
  %v625 = vmax.f32 %v623, %v624
  %v626 = vrot.slane %v625, 1
  %v627 = vmax.f32 %v625, %v626
  %v628 = vpack.i.bf16 %v627, %v627
  %v630 = vsel %vm489, %v411, 4286644096
  %v632 = vsel %vm496, %v412, 4286644096
  %v633 = vmax.bf16 %v630, %v632
  %v634 = vunpack.i.l.bf16 %v633
  %v635 = vunpack.i.h.bf16 %v633
  %v636 = vmax.f32 %v634, %v635
  %v637 = vrot.slane %v636, 4
  %v638 = vmax.f32 %v636, %v637
  %v639 = vrot.slane %v638, 2
  %v640 = vmax.f32 %v638, %v639
  %v641 = vrot.slane %v640, 1
  %v642 = vmax.f32 %v640, %v641
  %v643 = vpack.i.bf16 %v642, %v642
  %v645 = vsel %vm489, %v413, 4286644096
  %v647 = vsel %vm496, %v414, 4286644096
  %v648 = vmax.bf16 %v645, %v647
  %v649 = vunpack.i.l.bf16 %v648
  %v650 = vunpack.i.h.bf16 %v648
  %v651 = vmax.f32 %v649, %v650
  %v652 = vrot.slane %v651, 4
  %v653 = vmax.f32 %v651, %v652
  %v654 = vrot.slane %v653, 2
  %v655 = vmax.f32 %v653, %v654
  %v656 = vrot.slane %v655, 1
  %v657 = vmax.f32 %v655, %v656
  %v658 = vpack.i.bf16 %v657, %v657
  %v660 = vsel %vm489, %v415, 4286644096
  %v662 = vsel %vm496, %v416, 4286644096
  %v663 = vmax.bf16 %v660, %v662
  %v664 = vunpack.i.l.bf16 %v663
  %v665 = vunpack.i.h.bf16 %v663
  %v666 = vmax.f32 %v664, %v665
  %v667 = vrot.slane %v666, 4
  %v668 = vmax.f32 %v666, %v667
  %v669 = vrot.slane %v668, 2
  %v670 = vmax.f32 %v668, %v669
  %v671 = vrot.slane %v670, 1
  %v672 = vmax.f32 %v670, %v671
  %v673 = vpack.i.bf16 %v672, %v672
  %v675 = vsel %vm489, %v417, 4286644096
  %v677 = vsel %vm496, %v418, 4286644096
  %v678 = vmax.bf16 %v675, %v677
  %v679 = vunpack.i.l.bf16 %v678
  %v680 = vunpack.i.h.bf16 %v678
  %v681 = vmax.f32 %v679, %v680
  %v682 = vrot.slane %v681, 4
  %v683 = vmax.f32 %v681, %v682
  %v684 = vrot.slane %v683, 2
  %v685 = vmax.f32 %v683, %v684
  %v686 = vrot.slane %v685, 1
  %v687 = vmax.f32 %v685, %v686
  %v688 = vpack.i.bf16 %v687, %v687
  %v690 = vsel %vm489, %v419, 4286644096
  %v692 = vsel %vm496, %v420, 4286644096
  %v693 = vmax.bf16 %v690, %v692
  %v694 = vunpack.i.l.bf16 %v693
  %v695 = vunpack.i.h.bf16 %v693
  %v696 = vmax.f32 %v694, %v695
  %v697 = vrot.slane %v696, 4
  %v698 = vmax.f32 %v696, %v697
  %v699 = vrot.slane %v698, 2
  %v700 = vmax.f32 %v698, %v699
  %v701 = vrot.slane %v700, 1
  %v702 = vmax.f32 %v700, %v701
  %v703 = vpack.i.bf16 %v702, %v702
  %v705 = vsel %vm489, %v421, 4286644096
  %v707 = vsel %vm496, %v422, 4286644096
  %v708 = vmax.bf16 %v705, %v707
  %v709 = vunpack.i.l.bf16 %v708
  %v710 = vunpack.i.h.bf16 %v708
  %v711 = vmax.f32 %v709, %v710
  %v712 = vrot.slane %v711, 4
  %v713 = vmax.f32 %v711, %v712
  %v714 = vrot.slane %v713, 2
  %v715 = vmax.f32 %v713, %v714
  %v716 = vrot.slane %v715, 1
  %v717 = vmax.f32 %v715, %v716
  %v718 = vpack.i.bf16 %v717, %v717
  %v720 = vsel %vm489, %v423, 4286644096
  %v722 = vsel %vm496, %v424, 4286644096
  %v723 = vmax.bf16 %v720, %v722
  %v724 = vunpack.i.l.bf16 %v723
  %v725 = vunpack.i.h.bf16 %v723
  %v726 = vmax.f32 %v724, %v725
  %v727 = vrot.slane %v726, 4
  %v728 = vmax.f32 %v726, %v727
  %v729 = vrot.slane %v728, 2
  %v730 = vmax.f32 %v728, %v729
  %v731 = vrot.slane %v730, 1
  %v732 = vmax.f32 %v730, %v731
  %v733 = vpack.i.bf16 %v732, %v732
  %v735 = vsel %vm489, %v425, 4286644096
  %v737 = vsel %vm496, %v426, 4286644096
  %v738 = vmax.bf16 %v735, %v737
  %v739 = vunpack.i.l.bf16 %v738
  %v740 = vunpack.i.h.bf16 %v738
  %v741 = vmax.f32 %v739, %v740
  %v742 = vrot.slane %v741, 4
  %v743 = vmax.f32 %v741, %v742
  %v744 = vrot.slane %v743, 2
  %v745 = vmax.f32 %v743, %v744
  %v746 = vrot.slane %v745, 1
  %v747 = vmax.f32 %v745, %v746
  %v748 = vpack.i.bf16 %v747, %v747
  %v750 = vsel %vm489, %v427, 4286644096
  %v752 = vsel %vm496, %v428, 4286644096
  %v753 = vmax.bf16 %v750, %v752
  %v754 = vunpack.i.l.bf16 %v753
  %v755 = vunpack.i.h.bf16 %v753
  %v756 = vmax.f32 %v754, %v755
  %v757 = vrot.slane %v756, 4
  %v758 = vmax.f32 %v756, %v757
  %v759 = vrot.slane %v758, 2
  %v760 = vmax.f32 %v758, %v759
  %v761 = vrot.slane %v760, 1
  %v762 = vmax.f32 %v760, %v761
  %v763 = vpack.i.bf16 %v762, %v762
  %v765 = vsel %vm489, %v429, 4286644096
  %v767 = vsel %vm496, %v430, 4286644096
  %v768 = vmax.bf16 %v765, %v767
  %v769 = vunpack.i.l.bf16 %v768
  %v770 = vunpack.i.h.bf16 %v768
  %v771 = vmax.f32 %v769, %v770
  %v772 = vrot.slane %v771, 4
  %v773 = vmax.f32 %v771, %v772
  %v774 = vrot.slane %v773, 2
  %v775 = vmax.f32 %v773, %v774
  %v776 = vrot.slane %v775, 1
  %v777 = vmax.f32 %v775, %v776
  %v778 = vpack.i.bf16 %v777, %v777
  %v780 = vsel %vm489, %v431, 4286644096
  %v782 = vsel %vm496, %v432, 4286644096
  %v783 = vmax.bf16 %v780, %v782
  %v784 = vunpack.i.l.bf16 %v783
  %v785 = vunpack.i.h.bf16 %v783
  %v786 = vmax.f32 %v784, %v785
  %v787 = vrot.slane %v786, 4
  %v788 = vmax.f32 %v786, %v787
  %v789 = vrot.slane %v788, 2
  %v790 = vmax.f32 %v788, %v789
  %v791 = vrot.slane %v790, 1
  %v792 = vmax.f32 %v790, %v791
  %v793 = vpack.i.bf16 %v792, %v792
  %v795 = vsel %vm489, %v433, 4286644096
  %v797 = vsel %vm496, %v434, 4286644096
  %v798 = vmax.bf16 %v795, %v797
  %v799 = vunpack.i.l.bf16 %v798
  %v800 = vunpack.i.h.bf16 %v798
  %v801 = vmax.f32 %v799, %v800
  %v802 = vrot.slane %v801, 4
  %v803 = vmax.f32 %v801, %v802
  %v804 = vrot.slane %v803, 2
  %v805 = vmax.f32 %v803, %v804
  %v806 = vrot.slane %v805, 1
  %v807 = vmax.f32 %v805, %v806
  %v808 = vpack.i.bf16 %v807, %v807
  %v810 = vsel %vm489, %v435, 4286644096
  %v812 = vsel %vm496, %v436, 4286644096
  %v813 = vmax.bf16 %v810, %v812
  %v814 = vunpack.i.l.bf16 %v813
  %v815 = vunpack.i.h.bf16 %v813
  %v816 = vmax.f32 %v814, %v815
  %v817 = vrot.slane %v816, 4
  %v818 = vmax.f32 %v816, %v817
  %v819 = vrot.slane %v818, 2
  %v820 = vmax.f32 %v818, %v819
  %v821 = vrot.slane %v820, 1
  %v822 = vmax.f32 %v820, %v821
  %v823 = vpack.i.bf16 %v822, %v822
  %v825 = vsel %vm489, %v437, 4286644096
  %v827 = vsel %vm496, %v438, 4286644096
  %v828 = vmax.bf16 %v825, %v827
  %v829 = vunpack.i.l.bf16 %v828
  %v830 = vunpack.i.h.bf16 %v828
  %v831 = vmax.f32 %v829, %v830
  %v832 = vrot.slane %v831, 4
  %v833 = vmax.f32 %v831, %v832
  %v834 = vrot.slane %v833, 2
  %v835 = vmax.f32 %v833, %v834
  %v836 = vrot.slane %v835, 1
  %v837 = vmax.f32 %v835, %v836
  %v838 = vpack.i.bf16 %v837, %v837
  %v840 = vsel %vm489, %v439, 4286644096
  %v842 = vsel %vm496, %v440, 4286644096
  %v843 = vmax.bf16 %v840, %v842
  %v844 = vunpack.i.l.bf16 %v843
  %v845 = vunpack.i.h.bf16 %v843
  %v846 = vmax.f32 %v844, %v845
  %v847 = vrot.slane %v846, 4
  %v848 = vmax.f32 %v846, %v847
  %v849 = vrot.slane %v848, 2
  %v850 = vmax.f32 %v848, %v849
  %v851 = vrot.slane %v850, 1
  %v852 = vmax.f32 %v850, %v851
  %v853 = vpack.i.bf16 %v852, %v852
  %v855 = vsel %vm489, %v441, 4286644096
  %v857 = vsel %vm496, %v442, 4286644096
  %v858 = vmax.bf16 %v855, %v857
  %v859 = vunpack.i.l.bf16 %v858
  %v860 = vunpack.i.h.bf16 %v858
  %v861 = vmax.f32 %v859, %v860
  %v862 = vrot.slane %v861, 4
  %v863 = vmax.f32 %v861, %v862
  %v864 = vrot.slane %v863, 2
  %v865 = vmax.f32 %v863, %v864
  %v866 = vrot.slane %v865, 1
  %v867 = vmax.f32 %v865, %v866
  %v868 = vpack.i.bf16 %v867, %v867
  %v870 = vsel %vm489, %v443, 4286644096
  %v872 = vsel %vm496, %v444, 4286644096
  %v873 = vmax.bf16 %v870, %v872
  %v874 = vunpack.i.l.bf16 %v873
  %v875 = vunpack.i.h.bf16 %v873
  %v876 = vmax.f32 %v874, %v875
  %v877 = vrot.slane %v876, 4
  %v878 = vmax.f32 %v876, %v877
  %v879 = vrot.slane %v878, 2
  %v880 = vmax.f32 %v878, %v879
  %v881 = vrot.slane %v880, 1
  %v882 = vmax.f32 %v880, %v881
  %v883 = vpack.i.bf16 %v882, %v882
  %v885 = vsel %vm489, %v445, 4286644096
  %v887 = vsel %vm496, %v446, 4286644096
  %v888 = vmax.bf16 %v885, %v887
  %v889 = vunpack.i.l.bf16 %v888
  %v890 = vunpack.i.h.bf16 %v888
  %v891 = vmax.f32 %v889, %v890
  %v892 = vrot.slane %v891, 4
  %v893 = vmax.f32 %v891, %v892
  %v894 = vrot.slane %v893, 2
  %v895 = vmax.f32 %v893, %v894
  %v896 = vrot.slane %v895, 1
  %v897 = vmax.f32 %v895, %v896
  %v898 = vpack.i.bf16 %v897, %v897
  %v900 = vsel %vm489, %v447, 4286644096
  %v902 = vsel %vm496, %v448, 4286644096
  %v903 = vmax.bf16 %v900, %v902
  %v904 = vunpack.i.l.bf16 %v903
  %v905 = vunpack.i.h.bf16 %v903
  %v906 = vmax.f32 %v904, %v905
  %v907 = vrot.slane %v906, 4
  %v908 = vmax.f32 %v906, %v907
  %v909 = vrot.slane %v908, 2
  %v910 = vmax.f32 %v908, %v909
  %v911 = vrot.slane %v910, 1
  %v912 = vmax.f32 %v910, %v911
  %v913 = vpack.i.bf16 %v912, %v912
  %v915 = vsel %vm489, %v449, 4286644096
  %v917 = vsel %vm496, %v450, 4286644096
  %v918 = vmax.bf16 %v915, %v917
  %v919 = vunpack.i.l.bf16 %v918
  %v920 = vunpack.i.h.bf16 %v918
  %v921 = vmax.f32 %v919, %v920
  %v922 = vrot.slane %v921, 4
  %v923 = vmax.f32 %v921, %v922
  %v924 = vrot.slane %v923, 2
  %v925 = vmax.f32 %v923, %v924
  %v926 = vrot.slane %v925, 1
  %v927 = vmax.f32 %v925, %v926
  %v928 = vpack.i.bf16 %v927, %v927
  %v930 = vsel %vm489, %v451, 4286644096
  %v932 = vsel %vm496, %v452, 4286644096
  %v933 = vmax.bf16 %v930, %v932
  %v934 = vunpack.i.l.bf16 %v933
  %v935 = vunpack.i.h.bf16 %v933
  %v936 = vmax.f32 %v934, %v935
  %v937 = vrot.slane %v936, 4
  %v938 = vmax.f32 %v936, %v937
  %v939 = vrot.slane %v938, 2
  %v940 = vmax.f32 %v938, %v939
  %v941 = vrot.slane %v940, 1
  %v942 = vmax.f32 %v940, %v941
  %v943 = vpack.i.bf16 %v942, %v942
  %v945 = vsel %vm489, %v453, 4286644096
  %v947 = vsel %vm496, %v454, 4286644096
  %v948 = vmax.bf16 %v945, %v947
  %v949 = vunpack.i.l.bf16 %v948
  %v950 = vunpack.i.h.bf16 %v948
  %v951 = vmax.f32 %v949, %v950
  %v952 = vrot.slane %v951, 4
  %v953 = vmax.f32 %v951, %v952
  %v954 = vrot.slane %v953, 2
  %v955 = vmax.f32 %v953, %v954
  %v956 = vrot.slane %v955, 1
  %v957 = vmax.f32 %v955, %v956
  %v958 = vpack.i.bf16 %v957, %v957
  %v960 = vsel %vm489, %v455, 4286644096
  %v962 = vsel %vm496, %v456, 4286644096
  %v963 = vmax.bf16 %v960, %v962
  %v964 = vunpack.i.l.bf16 %v963
  %v965 = vunpack.i.h.bf16 %v963
  %v966 = vmax.f32 %v964, %v965
  %v967 = vrot.slane %v966, 4
  %v968 = vmax.f32 %v966, %v967
  %v969 = vrot.slane %v968, 2
  %v970 = vmax.f32 %v968, %v969
  %v971 = vrot.slane %v970, 1
  %v972 = vmax.f32 %v970, %v971
  %v973 = vpack.i.bf16 %v972, %v972
  %v1006 = vunpack.c.l.b16 %v508
  %v1007 = vunpack.c.l.b16 %v523
  %v1008 = vunpack.c.l.b16 %v538
  %v1009 = vunpack.c.l.b16 %v553
  %v1010 = vunpack.c.l.b16 %v568
  %v1011 = vunpack.c.l.b16 %v583
  %v1012 = vunpack.c.l.b16 %v598
  %v1013 = vunpack.c.l.b16 %v613
  %v1014 = vunpack.c.l.b16 %v628
  %v1015 = vunpack.c.l.b16 %v643
  %v1016 = vunpack.c.l.b16 %v658
  %v1017 = vunpack.c.l.b16 %v673
  %v1018 = vunpack.c.l.b16 %v688
  %v1019 = vunpack.c.l.b16 %v703
  %v1020 = vunpack.c.l.b16 %v718
  %v1021 = vunpack.c.l.b16 %v733
  %v1022 = vunpack.c.l.b16 %v748
  %v1023 = vunpack.c.l.b16 %v763
  %v1024 = vunpack.c.l.b16 %v778
  %v1025 = vunpack.c.l.b16 %v793
  %v1026 = vunpack.c.l.b16 %v808
  %v1027 = vunpack.c.l.b16 %v823
  %v1028 = vunpack.c.l.b16 %v838
  %v1029 = vunpack.c.l.b16 %v853
  %v1030 = vunpack.c.l.b16 %v868
  %v1031 = vunpack.c.l.b16 %v883
  %v1032 = vunpack.c.l.b16 %v898
  %v1033 = vunpack.c.l.b16 %v913
  %v1034 = vunpack.c.l.b16 %v928
  %v1035 = vunpack.c.l.b16 %v943
  %v1036 = vunpack.c.l.b16 %v958
  %v1037 = vunpack.c.l.b16 %v973
  %v1038 = vpack.c.b16 %v1006, %v1006
  %v1039 = vpack.c.b16 %v1007, %v1007
  %v1040 = vpack.c.b16 %v1008, %v1008
  %v1041 = vpack.c.b16 %v1009, %v1009
  %v1042 = vpack.c.b16 %v1010, %v1010
  %v1043 = vpack.c.b16 %v1011, %v1011
  %v1044 = vpack.c.b16 %v1012, %v1012
  %v1045 = vpack.c.b16 %v1013, %v1013
  %v1046 = vpack.c.b16 %v1014, %v1014
  %v1047 = vpack.c.b16 %v1015, %v1015
  %v1048 = vpack.c.b16 %v1016, %v1016
  %v1049 = vpack.c.b16 %v1017, %v1017
  %v1050 = vpack.c.b16 %v1018, %v1018
  %v1051 = vpack.c.b16 %v1019, %v1019
  %v1052 = vpack.c.b16 %v1020, %v1020
  %v1053 = vpack.c.b16 %v1021, %v1021
  %v1054 = vpack.c.b16 %v1022, %v1022
  %v1055 = vpack.c.b16 %v1023, %v1023
  %v1056 = vpack.c.b16 %v1024, %v1024
  %v1057 = vpack.c.b16 %v1025, %v1025
  %v1058 = vpack.c.b16 %v1026, %v1026
  %v1059 = vpack.c.b16 %v1027, %v1027
  %v1060 = vpack.c.b16 %v1028, %v1028
  %v1061 = vpack.c.b16 %v1029, %v1029
  %v1062 = vpack.c.b16 %v1030, %v1030
  %v1063 = vpack.c.b16 %v1031, %v1031
  %v1064 = vpack.c.b16 %v1032, %v1032
  %v1065 = vpack.c.b16 %v1033, %v1033
  %v1066 = vpack.c.b16 %v1034, %v1034
  %v1067 = vpack.c.b16 %v1035, %v1035
  %v1068 = vpack.c.b16 %v1036, %v1036
  %v1069 = vpack.c.b16 %v1037, %v1037
  %v1070 = vunpack.c.l.b16 %v1038
  %v1071 = vunpack.c.l.b16 %v1039
  %v1072 = vunpack.c.l.b16 %v1040
  %v1073 = vunpack.c.l.b16 %v1041
  %v1074 = vunpack.c.l.b16 %v1042
  %v1075 = vunpack.c.l.b16 %v1043
  %v1076 = vunpack.c.l.b16 %v1044
  %v1077 = vunpack.c.l.b16 %v1045
  %v1078 = vunpack.c.l.b16 %v1046
  %v1079 = vunpack.c.l.b16 %v1047
  %v1080 = vunpack.c.l.b16 %v1048
  %v1081 = vunpack.c.l.b16 %v1049
  %v1082 = vunpack.c.l.b16 %v1050
  %v1083 = vunpack.c.l.b16 %v1051
  %v1084 = vunpack.c.l.b16 %v1052
  %v1085 = vunpack.c.l.b16 %v1053
  %v1086 = vunpack.c.l.b16 %v1054
  %v1087 = vunpack.c.l.b16 %v1055
  %v1088 = vunpack.c.l.b16 %v1056
  %v1089 = vunpack.c.l.b16 %v1057
  %v1090 = vunpack.c.l.b16 %v1058
  %v1091 = vunpack.c.l.b16 %v1059
  %v1092 = vunpack.c.l.b16 %v1060
  %v1093 = vunpack.c.l.b16 %v1061
  %v1094 = vunpack.c.l.b16 %v1062
  %v1095 = vunpack.c.l.b16 %v1063
  %v1096 = vunpack.c.l.b16 %v1064
  %v1097 = vunpack.c.l.b16 %v1065
  %v1098 = vunpack.c.l.b16 %v1066
  %v1099 = vunpack.c.l.b16 %v1067
  %v1100 = vunpack.c.l.b16 %v1068
  %v1101 = vunpack.c.l.b16 %v1069
  %vm1102 = vcmask 1041409
  %v1103 = vsel %vm1102, %v1071, %v1070
  %vm1104 = vcmask 1042434
  %v1105 = vsel %vm1104, %v1072, %v1103
  %vm1106 = vcmask 1043459
  %v1107 = vsel %vm1106, %v1073, %v1105
  %vm1108 = vcmask 1044484
  %v1109 = vsel %vm1108, %v1074, %v1107
  %vm1110 = vcmask 1045509
  %v1111 = vsel %vm1110, %v1075, %v1109
  %vm1112 = vcmask 1046534
  %v1113 = vsel %vm1112, %v1076, %v1111
  %vm1114 = vcmask 1047559
  %v1115 = vsel %vm1114, %v1077, %v1113
  %v1116 = vsel %vm1102, %v1079, %v1078
  %v1117 = vsel %vm1104, %v1080, %v1116
  %v1118 = vsel %vm1106, %v1081, %v1117
  %v1119 = vsel %vm1108, %v1082, %v1118
  %v1120 = vsel %vm1110, %v1083, %v1119
  %v1121 = vsel %vm1112, %v1084, %v1120
  %v1122 = vsel %vm1114, %v1085, %v1121
  %v1123 = vsel %vm1102, %v1087, %v1086
  %v1124 = vsel %vm1104, %v1088, %v1123
  %v1125 = vsel %vm1106, %v1089, %v1124
  %v1126 = vsel %vm1108, %v1090, %v1125
  %v1127 = vsel %vm1110, %v1091, %v1126
  %v1128 = vsel %vm1112, %v1092, %v1127
  %v1129 = vsel %vm1114, %v1093, %v1128
  %v1130 = vsel %vm1102, %v1095, %v1094
  %v1131 = vsel %vm1104, %v1096, %v1130
  %v1132 = vsel %vm1106, %v1097, %v1131
  %v1133 = vsel %vm1108, %v1098, %v1132
  %v1134 = vsel %vm1110, %v1099, %v1133
  %v1135 = vsel %vm1112, %v1100, %v1134
  %v1136 = vsel %vm1114, %v1101, %v1135
  %v1137 = vpack.c.b16 %v1115, %v1115
  %v1138 = vpack.c.b16 %v1122, %v1122
  %v1139 = vpack.c.b16 %v1129, %v1129
  %v1140 = vpack.c.b16 %v1136, %v1136
  %vm1145 = vcmask 257024
  %1146 = vst.msk [vmem:[%s1] sm:$0xf] %vm1145, %v1137
  %1147 = vst.msk [vmem:[%s1 + $0x4] sm:$0xf] %vm1145, %v1138
  %1148 = vst.msk [vmem:[%s1 + $0x8] sm:$0xf] %vm1145, %v1139
  %1149 = vst.msk [vmem:[%s1 + $0xc] sm:$0xf] %vm1145, %v1140
  // Predicated region
  $region6: #{densenet_forward.14} parent=0 // pred_check
    _
  $region7: #{densenet_forward.14} parent=0 // pred_check_branch
    %1151 = sbr.rel (0) target = $region9
  $region8: #{densenet_forward.14} parent=0 // pred_region
    _
  $region9: #{densenet_forward.14} parent=0 // pred_fallthru
    _
  // Predicated region
  $region10: #{densenet_forward.14} parent=0 // pred_check
    _
  $region11: #{densenet_forward.14} parent=0 // pred_check_branch
    %1153 = sbr.rel (0) target = $region13
  $region12: #{densenet_forward.14} parent=0 // pred_region
    _
  $region13: #{densenet_forward.14} parent=0 // pred_fallthru
    _

// kernel: densenet_forward.15
$region0: #{densenet_forward.15}
  #allocation0 [shape = 'u32[]', space=smem, size = 0x4, offset = 0x4, fixed_abs, tag = 'smem constant byte address 0x4 - core index']
  #allocation1 [shape = 'u32[144,128]{1,0:T(1,128)}', space=vmem, size = 0x12000, scoped, tag = 'internal scratch']
  #allocation2 [shape = 'f32[128,16]{1,0:T(8,128)}', space=vmem, size = 0x10000, scoped, tag = 'scratch operand']
  %s0 = inlined_call_operand.vmem [shape: bf16[128,8], index: 0, kind: input, shape index: {}]
  %s1 = inlined_call_operand.vmem [shape: bf16[8,16], index: 1, kind: input, shape index: {}]
  %s2 = inlined_call_operand.vmem [shape: bf16[1,8], index: 2, kind: input, shape index: {}]
  %s3 = inlined_call_operand.vmem [shape: bf16[1,8], index: 3, kind: input, shape index: {}]
  %s4 = inlined_call_operand.vmem [shape: f32[1,16], index: 4, kind: input, shape index: {}]
  %s5 = inlined_call_operand.vmem [shape: f32[1,16], index: 5, kind: input, shape index: {}]
  %s6 = inlined_call_operand.vmem [shape: bf16[128,16], index: 6, kind: output, shape index: {}]
  %s7 = sld [smem:[#allocation0]]
  $region42: #{densenet_forward.15} parent=0
    _
  %s9 = ssub.s32 1, %s7
  %s10 = scalar_select 0, %s9, %s7
  // Predicated region
  $region2: #{densenet_forward.15} parent=0 // pred_check
    _
  $region3: #{densenet_forward.15} parent=0 // pred_check_branch
    %12 = sbr.rel (0) target = $region5
  $region4: #{densenet_forward.15} parent=0 // pred_region
    _
  $region5: #{densenet_forward.15} parent=0 // pred_fallthru
    _
  // Predicated region
  $region6: #{densenet_forward.15} parent=0 // pred_check
    _
  $region7: #{densenet_forward.15} parent=0 // pred_check_branch
    %14 = sbr.rel (0) target = $region9
  $region8: #{densenet_forward.15} parent=0 // pred_region
    _
  $region9: #{densenet_forward.15} parent=0 // pred_fallthru
    _
  // Predicated region
  $region10: #{densenet_forward.15} parent=0 // pred_check
    _
  $region11: #{densenet_forward.15} parent=0 // pred_check_branch
    %16 = sbr.rel (0) target = $region13
  $region12: #{densenet_forward.15} parent=0 // pred_region
    _
  $region13: #{densenet_forward.15} parent=0 // pred_fallthru
    _
  // Predicated region
  $region14: #{densenet_forward.15} parent=0 // pred_check
    _
  $region15: #{densenet_forward.15} parent=0 // pred_check_branch
    %18 = sbr.rel (0) target = $region17
  $region16: #{densenet_forward.15} parent=0 // pred_region
    _
  $region17: #{densenet_forward.15} parent=0 // pred_fallthru
    _
  // Predicated region
  $region18: #{densenet_forward.15} parent=0 // pred_check
    _
  $region19: #{densenet_forward.15} parent=0 // pred_check_branch
    %20 = sbr.rel (0) target = $region21
  $region20: #{densenet_forward.15} parent=0 // pred_region
    _
  $region21: #{densenet_forward.15} parent=0 // pred_fallthru
    _
  // Predicated region
  $region22: #{densenet_forward.15} parent=0 // pred_check
    _
  $region23: #{densenet_forward.15} parent=0 // pred_check_branch
    %22 = sbr.rel (0) target = $region25
  $region24: #{densenet_forward.15} parent=0 // pred_region
    _
  $region25: #{densenet_forward.15} parent=0 // pred_fallthru
    _
  %p24 = scmp.eq.s32.totalorder 0, 0
  // Predicated region
  $region26: #{densenet_forward.15} parent=0 // pred_check
    %p25 = pneg %p24
  $region27: #{densenet_forward.15} parent=0 // pred_check_branch
    %27 = sbr.rel (%p25) target = $region29
  $region28: #{densenet_forward.15} parent=0 // pred_region
    %vm28 = vcmask 130048
    %29 = vst.msk [vmem:[#allocation2] sm:$0xff] %vm28, 0.0
    %30 = vst.msk [vmem:[#allocation2 + $0x8] sm:$0xff] %vm28, 0.0
    %31 = vst.msk [vmem:[#allocation2 + $0x10] sm:$0xff] %vm28, 0.0
    %32 = vst.msk [vmem:[#allocation2 + $0x18] sm:$0xff] %vm28, 0.0
    %33 = vst.msk [vmem:[#allocation2 + $0x20] sm:$0xff] %vm28, 0.0
    %34 = vst.msk [vmem:[#allocation2 + $0x28] sm:$0xff] %vm28, 0.0
    %35 = vst.msk [vmem:[#allocation2 + $0x30] sm:$0xff] %vm28, 0.0
    %36 = vst.msk [vmem:[#allocation2 + $0x38] sm:$0xff] %vm28, 0.0
    %37 = vst.msk [vmem:[#allocation2 + $0x40] sm:$0xff] %vm28, 0.0
    %38 = vst.msk [vmem:[#allocation2 + $0x48] sm:$0xff] %vm28, 0.0
    %39 = vst.msk [vmem:[#allocation2 + $0x50] sm:$0xff] %vm28, 0.0
    %40 = vst.msk [vmem:[#allocation2 + $0x58] sm:$0xff] %vm28, 0.0
    %41 = vst.msk [vmem:[#allocation2 + $0x60] sm:$0xff] %vm28, 0.0
    %42 = vst.msk [vmem:[#allocation2 + $0x68] sm:$0xff] %vm28, 0.0
    %43 = vst.msk [vmem:[#allocation2 + $0x70] sm:$0xff] %vm28, 0.0
    %44 = vst.msk [vmem:[#allocation2 + $0x78] sm:$0xff] %vm28, 0.0
  $region29: #{densenet_forward.15} parent=0 // pred_fallthru
    _
  %v45 = vld [vmem:[%s0] sm:$0xf]
  %v46 = vld [vmem:[%s0 + $0x4] sm:$0xf]
  %v47 = vld [vmem:[%s0 + $0x8] sm:$0xf]
  %v48 = vld [vmem:[%s0 + $0xc] sm:$0xf]
  %v49 = vld [vmem:[%s0 + $0x10] sm:$0xf]
  %v50 = vld [vmem:[%s0 + $0x14] sm:$0xf]
  %v51 = vld [vmem:[%s0 + $0x18] sm:$0xf]
  %v52 = vld [vmem:[%s0 + $0x1c] sm:$0xf]
  %v53 = vld [vmem:[%s0 + $0x20] sm:$0xf]
  %v54 = vld [vmem:[%s0 + $0x24] sm:$0xf]
  %v55 = vld [vmem:[%s0 + $0x28] sm:$0xf]
  %v56 = vld [vmem:[%s0 + $0x2c] sm:$0xf]
  %v57 = vld [vmem:[%s0 + $0x30] sm:$0xf]
  %v58 = vld [vmem:[%s0 + $0x34] sm:$0xf]
  %v59 = vld [vmem:[%s0 + $0x38] sm:$0xf]
  %v60 = vld [vmem:[%s0 + $0x3c] sm:$0xf]
  %v61 = vld [vmem:[%s2] sm:$0x1]
  %v63 = vpack.i.b16 %v61, %v61
  %v65 = vlaneseq
  %v66 = vshrl.u32 %v65, 7
  %v67 = vsub.s32 0, %v66
  %v68 = vrot.slane %v63, %v67
  %v70 = vunpack.c.l.b16 %v68
  %v71 = vpack.c.b16 %v70, %v70
  %v73 = vmul.bf16 %v45, %v71
  %v74 = vmul.bf16 %v46, %v71
  %v75 = vmul.bf16 %v47, %v71
  %v76 = vmul.bf16 %v48, %v71
  %v77 = vmul.bf16 %v49, %v71
  %v78 = vmul.bf16 %v50, %v71
  %v79 = vmul.bf16 %v51, %v71
  %v80 = vmul.bf16 %v52, %v71
  %v81 = vmul.bf16 %v53, %v71
  %v82 = vmul.bf16 %v54, %v71
  %v83 = vmul.bf16 %v55, %v71
  %v84 = vmul.bf16 %v56, %v71
  %v85 = vmul.bf16 %v57, %v71
  %v86 = vmul.bf16 %v58, %v71
  %v87 = vmul.bf16 %v59, %v71
  %v88 = vmul.bf16 %v60, %v71
  %v89 = vld [vmem:[%s3] sm:$0x1]
  %v91 = vpack.i.b16 %v89, %v89
  %v93 = vlaneseq
  %v94 = vshrl.u32 %v93, 7
  %v95 = vsub.s32 0, %v94
  %v96 = vrot.slane %v91, %v95
  %v98 = vunpack.c.l.b16 %v96
  %v99 = vpack.c.b16 %v98, %v98
  %v101 = vadd.bf16 %v73, %v99
  %v102 = vadd.bf16 %v74, %v99
  %v103 = vadd.bf16 %v75, %v99
  %v104 = vadd.bf16 %v76, %v99
  %v105 = vadd.bf16 %v77, %v99
  %v106 = vadd.bf16 %v78, %v99
  %v107 = vadd.bf16 %v79, %v99
  %v108 = vadd.bf16 %v80, %v99
  %v109 = vadd.bf16 %v81, %v99
  %v110 = vadd.bf16 %v82, %v99
  %v111 = vadd.bf16 %v83, %v99
  %v112 = vadd.bf16 %v84, %v99
  %v113 = vadd.bf16 %v85, %v99
  %v114 = vadd.bf16 %v86, %v99
  %v115 = vadd.bf16 %v87, %v99
  %v116 = vadd.bf16 %v88, %v99
  %v117 = vmax.bf16 %v101, 0
  %v118 = vmax.bf16 %v102, 0
  %v119 = vmax.bf16 %v103, 0
  %v120 = vmax.bf16 %v104, 0
  %v121 = vmax.bf16 %v105, 0
  %v122 = vmax.bf16 %v106, 0
  %v123 = vmax.bf16 %v107, 0
  %v124 = vmax.bf16 %v108, 0
  %v125 = vmax.bf16 %v109, 0
  %v126 = vmax.bf16 %v110, 0
  %v127 = vmax.bf16 %v111, 0
  %v128 = vmax.bf16 %v112, 0
  %v129 = vmax.bf16 %v113, 0
  %v130 = vmax.bf16 %v114, 0
  %v131 = vmax.bf16 %v115, 0
  %v132 = vmax.bf16 %v116, 0
  %v133 = vld [vmem:[#allocation2] sm:$0xff]
  %v134 = vld [vmem:[#allocation2 + $0x8] sm:$0xff]
  %v135 = vld [vmem:[#allocation2 + $0x10] sm:$0xff]
  %v136 = vld [vmem:[#allocation2 + $0x18] sm:$0xff]
  %v137 = vld [vmem:[#allocation2 + $0x20] sm:$0xff]
  %v138 = vld [vmem:[#allocation2 + $0x28] sm:$0xff]
  %v139 = vld [vmem:[#allocation2 + $0x30] sm:$0xff]
  %v140 = vld [vmem:[#allocation2 + $0x38] sm:$0xff]
  %v141 = vld [vmem:[#allocation2 + $0x40] sm:$0xff]
  %v142 = vld [vmem:[#allocation2 + $0x48] sm:$0xff]
  %v143 = vld [vmem:[#allocation2 + $0x50] sm:$0xff]
  %v144 = vld [vmem:[#allocation2 + $0x58] sm:$0xff]
  %v145 = vld [vmem:[#allocation2 + $0x60] sm:$0xff]
  %v146 = vld [vmem:[#allocation2 + $0x68] sm:$0xff]
  %v147 = vld [vmem:[#allocation2 + $0x70] sm:$0xff]
  %v148 = vld [vmem:[#allocation2 + $0x78] sm:$0xff]
  %v149 = vld [vmem:[%s1] sm:$0xf]
  %v166 = vunpack.c.l.b16 %v117
  %v167 = vunpack.c.l.b16 %v118
  %v168 = vunpack.c.l.b16 %v119
  %v169 = vunpack.c.l.b16 %v120
  %v170 = vunpack.c.l.b16 %v121
  %v171 = vunpack.c.l.b16 %v122
  %v172 = vunpack.c.l.b16 %v123
  %v173 = vunpack.c.l.b16 %v124
  %v174 = vunpack.c.l.b16 %v125
  %v175 = vunpack.c.l.b16 %v126
  %v176 = vunpack.c.l.b16 %v127
  %v177 = vunpack.c.l.b16 %v128
  %v178 = vunpack.c.l.b16 %v129
  %v179 = vunpack.c.l.b16 %v130
  %v180 = vunpack.c.l.b16 %v131
  %v181 = vunpack.c.l.b16 %v132
  %v182 = vpack.c.b16 %v167, %v166
  %v183 = vpack.c.b16 %v169, %v168
  %v184 = vpack.c.b16 %v171, %v170
  %v185 = vpack.c.b16 %v173, %v172
  %v186 = vpack.c.b16 %v175, %v174
  %v187 = vpack.c.b16 %v177, %v176
  %v188 = vpack.c.b16 %v179, %v178
  %v189 = vpack.c.b16 %v181, %v180
  %vm190 = vcmask 64512
  %v192 = vsel %vm190, %v182, 0
  %v195 = vsel %vm190, %v183, 0
  %v198 = vsel %vm190, %v184, 0
  %v201 = vsel %vm190, %v185, 0
  %v204 = vsel %vm190, %v186, 0
  %v207 = vsel %vm190, %v187, 0
  %v210 = vsel %vm190, %v188, 0
  %v213 = vsel %vm190, %v189, 0
  %vm215 = vcmask 1043456
  %v217 = vsel %vm215, %v149, 0
  %219 = vmatprep.subr.bf16.mxu0 0
  %220 = vmatpush1.bf16.msra.mxu0 0
  %221 = vmatprep.subr.bf16.mxu0 0
  %222 = vmatpush1.bf16.msra.mxu0 0
  %223 = vmatprep.subr.bf16.mxu0 0
  %224 = vmatpush1.bf16.msra.mxu0 0
  %225 = vmatprep.subr.bf16.mxu0 0
  %226 = vmatpush1.bf16.msra.mxu0 0
  %227 = vmatprep.subr.bf16.mxu0 0
  %228 = vmatpush1.bf16.msra.mxu0 0
  %229 = vmatprep.subr.bf16.mxu0 0
  %230 = vmatpush1.bf16.msra.mxu0 0
  %231 = vmatprep.subr.bf16.mxu0 0
  %232 = vmatpush1.bf16.msra.mxu0 0
  %233 = vmatprep.subr.bf16.mxu0 0
  %234 = vmatpush1.bf16.msra.mxu0 %v217
  %235 = vmatprep.subr.bf16.mxu0 0
  %236 = vmatpush2.bf16.msra.mxu0 0
  %237 = vmatprep.subr.bf16.mxu0 0
  %238 = vmatpush2.bf16.msra.mxu0 0
  %239 = vmatprep.subr.bf16.mxu0 0
  %240 = vmatpush2.bf16.msra.mxu0 0
  %241 = vmatprep.subr.bf16.mxu0 0
  %242 = vmatpush2.bf16.msra.mxu0 0
  %243 = vmatprep.subr.bf16.mxu0 0
  %244 = vmatpush2.bf16.msra.mxu0 0
  %245 = vmatprep.subr.bf16.mxu0 0
  %246 = vmatpush2.bf16.msra.mxu0 0
  %247 = vmatprep.subr.bf16.mxu0 0
  %248 = vmatpush2.bf16.msra.mxu0 0
  %249 = vmatprep.subr.bf16.mxu0 0
  %250 = vmatpush2.bf16.msra.mxu0 0
  %251 = vmatprep.mubr.bf16.mxu0 0
  %252 = vmatmul.mubr.bf16.gmra.mxu0 %v192
  %v253 = vpop.f32.mrf.mxu0
  %v254 = vadd.f32 0.0, %v253
  %v255 = vpop.f32.mrf.mxu0
  %v256 = vpop.f32.mrf.mxu0
  %v257 = vadd.f32 0.0, %v256
  %v258 = vpop.f32.mrf.mxu0
  %259 = vmatprep.mubr.bf16.mxu0 0
  %260 = vmatmul.mubr.bf16.gmra.mxu0 %v195
  %v261 = vpop.f32.mrf.mxu0
  %v262 = vadd.f32 0.0, %v261
  %v263 = vpop.f32.mrf.mxu0
  %v264 = vpop.f32.mrf.mxu0
  %v265 = vadd.f32 0.0, %v264
  %v266 = vpop.f32.mrf.mxu0
  %267 = vmatprep.mubr.bf16.mxu0 0
  %268 = vmatmul.mubr.bf16.gmra.mxu0 %v198
  %v269 = vpop.f32.mrf.mxu0
  %v270 = vadd.f32 0.0, %v269
  %v271 = vpop.f32.mrf.mxu0
  %v272 = vpop.f32.mrf.mxu0
  %v273 = vadd.f32 0.0, %v272
  %v274 = vpop.f32.mrf.mxu0
  %275 = vmatprep.mubr.bf16.mxu0 0
  %276 = vmatmul.mubr.bf16.gmra.mxu0 %v201
  %v277 = vpop.f32.mrf.mxu0
  %v278 = vadd.f32 0.0, %v277
  %v279 = vpop.f32.mrf.mxu0
  %v280 = vpop.f32.mrf.mxu0
  %v281 = vadd.f32 0.0, %v280
  %v282 = vpop.f32.mrf.mxu0
  %283 = vmatprep.mubr.bf16.mxu0 0
  %284 = vmatmul.mubr.bf16.gmra.mxu0 %v204
  %v285 = vpop.f32.mrf.mxu0
  %v286 = vadd.f32 0.0, %v285
  %v287 = vpop.f32.mrf.mxu0
  %v288 = vpop.f32.mrf.mxu0
  %v289 = vadd.f32 0.0, %v288
  %v290 = vpop.f32.mrf.mxu0
  %291 = vmatprep.mubr.bf16.mxu0 0
  %292 = vmatmul.mubr.bf16.gmra.mxu0 %v207
  %v293 = vpop.f32.mrf.mxu0
  %v294 = vadd.f32 0.0, %v293
  %v295 = vpop.f32.mrf.mxu0
  %v296 = vpop.f32.mrf.mxu0
  %v297 = vadd.f32 0.0, %v296
  %v298 = vpop.f32.mrf.mxu0
  %299 = vmatprep.mubr.bf16.mxu0 0
  %300 = vmatmul.mubr.bf16.gmra.mxu0 %v210
  %v301 = vpop.f32.mrf.mxu0
  %v302 = vadd.f32 0.0, %v301
  %v303 = vpop.f32.mrf.mxu0
  %v304 = vpop.f32.mrf.mxu0
  %v305 = vadd.f32 0.0, %v304
  %v306 = vpop.f32.mrf.mxu0
  %307 = vmatprep.mubr.bf16.mxu0 0
  %308 = vmatmul.mubr.bf16.gmra.mxu0 %v213
  %v309 = vpop.f32.mrf.mxu0
  %v310 = vadd.f32 0.0, %v309
  %v311 = vpop.f32.mrf.mxu0
  %v312 = vpop.f32.mrf.mxu0
  %v313 = vadd.f32 0.0, %v312
  %v314 = vpop.f32.mrf.mxu0
  %315 = vdwg.mxu0
  %v316 = vadd.f32 %v133, %v254
  %v317 = vadd.f32 %v134, %v257
  %v318 = vadd.f32 %v135, %v262
  %v319 = vadd.f32 %v136, %v265
  %v320 = vadd.f32 %v137, %v270
  %v321 = vadd.f32 %v138, %v273
  %v322 = vadd.f32 %v139, %v278
  %v323 = vadd.f32 %v140, %v281
  %v324 = vadd.f32 %v141, %v286
  %v325 = vadd.f32 %v142, %v289
  %v326 = vadd.f32 %v143, %v294
  %v327 = vadd.f32 %v144, %v297
  %v328 = vadd.f32 %v145, %v302
  %v329 = vadd.f32 %v146, %v305
  %v330 = vadd.f32 %v147, %v310
  %v331 = vadd.f32 %v148, %v313
  %vm332 = vcmask 130048
  %333 = vst.msk [vmem:[#allocation2] sm:$0xff] %vm332, %v316
  %334 = vst.msk [vmem:[#allocation2 + $0x8] sm:$0xff] %vm332, %v317
  %335 = vst.msk [vmem:[#allocation2 + $0x10] sm:$0xff] %vm332, %v318
  %336 = vst.msk [vmem:[#allocation2 + $0x18] sm:$0xff] %vm332, %v319
  %337 = vst.msk [vmem:[#allocation2 + $0x20] sm:$0xff] %vm332, %v320
  %338 = vst.msk [vmem:[#allocation2 + $0x28] sm:$0xff] %vm332, %v321
  %339 = vst.msk [vmem:[#allocation2 + $0x30] sm:$0xff] %vm332, %v322
  %340 = vst.msk [vmem:[#allocation2 + $0x38] sm:$0xff] %vm332, %v323
  %341 = vst.msk [vmem:[#allocation2 + $0x40] sm:$0xff] %vm332, %v324
  %342 = vst.msk [vmem:[#allocation2 + $0x48] sm:$0xff] %vm332, %v325
  %343 = vst.msk [vmem:[#allocation2 + $0x50] sm:$0xff] %vm332, %v326
  %344 = vst.msk [vmem:[#allocation2 + $0x58] sm:$0xff] %vm332, %v327
  %345 = vst.msk [vmem:[#allocation2 + $0x60] sm:$0xff] %vm332, %v328
  %346 = vst.msk [vmem:[#allocation2 + $0x68] sm:$0xff] %vm332, %v329
  %347 = vst.msk [vmem:[#allocation2 + $0x70] sm:$0xff] %vm332, %v330
  %348 = vst.msk [vmem:[#allocation2 + $0x78] sm:$0xff] %vm332, %v331
  // Predicated region
  $region30: #{densenet_forward.15} parent=0 // pred_check
    %p349 = pneg %p24
  $region31: #{densenet_forward.15} parent=0 // pred_check_branch
    %351 = sbr.rel (%p349) target = $region33
  $region32: #{densenet_forward.15} parent=0 // pred_region
    %v352 = vld [vmem:[#allocation2] sm:$0xff]
    %v353 = vld [vmem:[#allocation2 + $0x8] sm:$0xff]
    %v354 = vld [vmem:[#allocation2 + $0x10] sm:$0xff]
    %v355 = vld [vmem:[#allocation2 + $0x18] sm:$0xff]
    %v356 = vld [vmem:[#allocation2 + $0x20] sm:$0xff]
    %v357 = vld [vmem:[#allocation2 + $0x28] sm:$0xff]
    %v358 = vld [vmem:[#allocation2 + $0x30] sm:$0xff]
    %v359 = vld [vmem:[#allocation2 + $0x38] sm:$0xff]
    %v360 = vld [vmem:[#allocation2 + $0x40] sm:$0xff]
    %v361 = vld [vmem:[#allocation2 + $0x48] sm:$0xff]
    %v362 = vld [vmem:[#allocation2 + $0x50] sm:$0xff]
    %v363 = vld [vmem:[#allocation2 + $0x58] sm:$0xff]
    %v364 = vld [vmem:[#allocation2 + $0x60] sm:$0xff]
    %v365 = vld [vmem:[#allocation2 + $0x68] sm:$0xff]
    %v366 = vld [vmem:[#allocation2 + $0x70] sm:$0xff]
    %v367 = vld [vmem:[#allocation2 + $0x78] sm:$0xff]
    %v368 = vld [vmem:[%s4] sm:$0x1]
    %v370 = vlaneseq
    %v371 = vshrl.u32 %v370, 7
    %v372 = vsub.s32 0, %v371
    %v373 = vrot.slane %v368, %v372
    %v375 = vmul.f32 %v352, %v373
    %v376 = vmul.f32 %v353, %v373
    %v377 = vmul.f32 %v354, %v373
    %v378 = vmul.f32 %v355, %v373
    %v379 = vmul.f32 %v356, %v373
    %v380 = vmul.f32 %v357, %v373
    %v381 = vmul.f32 %v358, %v373
    %v382 = vmul.f32 %v359, %v373
    %v383 = vmul.f32 %v360, %v373
    %v384 = vmul.f32 %v361, %v373
    %v385 = vmul.f32 %v362, %v373
    %v386 = vmul.f32 %v363, %v373
    %v387 = vmul.f32 %v364, %v373
    %v388 = vmul.f32 %v365, %v373
    %v389 = vmul.f32 %v366, %v373
    %v390 = vmul.f32 %v367, %v373
    %v391 = vld [vmem:[%s5] sm:$0x1]
    %v393 = vlaneseq
    %v394 = vshrl.u32 %v393, 7
    %v395 = vsub.s32 0, %v394
    %v396 = vrot.slane %v391, %v395
    %v398 = vadd.f32 %v375, %v396
    %v399 = vadd.f32 %v376, %v396
    %v400 = vadd.f32 %v377, %v396
    %v401 = vadd.f32 %v378, %v396
    %v402 = vadd.f32 %v379, %v396
    %v403 = vadd.f32 %v380, %v396
    %v404 = vadd.f32 %v381, %v396
    %v405 = vadd.f32 %v382, %v396
    %v406 = vadd.f32 %v383, %v396
    %v407 = vadd.f32 %v384, %v396
    %v408 = vadd.f32 %v385, %v396
    %v409 = vadd.f32 %v386, %v396
    %v410 = vadd.f32 %v387, %v396
    %v411 = vadd.f32 %v388, %v396
    %v412 = vadd.f32 %v389, %v396
    %v413 = vadd.f32 %v390, %v396
    %v414 = vmax.f32 %v398, 0.0
    %v415 = vmax.f32 %v399, 0.0
    %v416 = vmax.f32 %v400, 0.0
    %v417 = vmax.f32 %v401, 0.0
    %v418 = vmax.f32 %v402, 0.0
    %v419 = vmax.f32 %v403, 0.0
    %v420 = vmax.f32 %v404, 0.0
    %v421 = vmax.f32 %v405, 0.0
    %v422 = vmax.f32 %v406, 0.0
    %v423 = vmax.f32 %v407, 0.0
    %v424 = vmax.f32 %v408, 0.0
    %v425 = vmax.f32 %v409, 0.0
    %v426 = vmax.f32 %v410, 0.0
    %v427 = vmax.f32 %v411, 0.0
    %v428 = vmax.f32 %v412, 0.0
    %v429 = vmax.f32 %v413, 0.0
    %v430 = vpack.c.bf16 %v415, %v414
    %v431 = vpack.c.bf16 %v417, %v416
    %v432 = vpack.c.bf16 %v419, %v418
    %v433 = vpack.c.bf16 %v421, %v420
    %v434 = vpack.c.bf16 %v423, %v422
    %v435 = vpack.c.bf16 %v425, %v424
    %v436 = vpack.c.bf16 %v427, %v426
    %v437 = vpack.c.bf16 %v429, %v428
    %v446 = vunpack.c.l.b16 %v430
    %v447 = vunpack.c.h.b16 %v430
    %v448 = vunpack.c.l.b16 %v431
    %v449 = vunpack.c.h.b16 %v431
    %v450 = vunpack.c.l.b16 %v432
    %v451 = vunpack.c.h.b16 %v432
    %v452 = vunpack.c.l.b16 %v433
    %v453 = vunpack.c.h.b16 %v433
    %v454 = vunpack.c.l.b16 %v434
    %v455 = vunpack.c.h.b16 %v434
    %v456 = vunpack.c.l.b16 %v435
    %v457 = vunpack.c.h.b16 %v435
    %v458 = vunpack.c.l.b16 %v436
    %v459 = vunpack.c.h.b16 %v436
    %v460 = vunpack.c.l.b16 %v437
    %v461 = vunpack.c.h.b16 %v437
    %v462 = vpack.c.b16 %v446, %v446
    %v463 = vpack.c.b16 %v447, %v447
    %v464 = vpack.c.b16 %v448, %v448
    %v465 = vpack.c.b16 %v449, %v449
    %v466 = vpack.c.b16 %v450, %v450
    %v467 = vpack.c.b16 %v451, %v451
    %v468 = vpack.c.b16 %v452, %v452
    %v469 = vpack.c.b16 %v453, %v453
    %v470 = vpack.c.b16 %v454, %v454
    %v471 = vpack.c.b16 %v455, %v455
    %v472 = vpack.c.b16 %v456, %v456
    %v473 = vpack.c.b16 %v457, %v457
    %v474 = vpack.c.b16 %v458, %v458
    %v475 = vpack.c.b16 %v459, %v459
    %v476 = vpack.c.b16 %v460, %v460
    %v477 = vpack.c.b16 %v461, %v461
    %vm494 = vcmask 125952
    %495 = vst.msk [vmem:[%s6] sm:$0xf] %vm494, %v462
    %496 = vst.msk [vmem:[%s6 + $0x4] sm:$0xf] %vm494, %v463
    %497 = vst.msk [vmem:[%s6 + $0x8] sm:$0xf] %vm494, %v464
    %498 = vst.msk [vmem:[%s6 + $0xc] sm:$0xf] %vm494, %v465
    %499 = vst.msk [vmem:[%s6 + $0x10] sm:$0xf] %vm494, %v466
    %500 = vst.msk [vmem:[%s6 + $0x14] sm:$0xf] %vm494, %v467
    %501 = vst.msk [vmem:[%s6 + $0x18] sm:$0xf] %vm494, %v468
    %502 = vst.msk [vmem:[%s6 + $0x1c] sm:$0xf] %vm494, %v469
    %503 = vst.msk [vmem:[%s6 + $0x20] sm:$0xf] %vm494, %v470
    %504 = vst.msk [vmem:[%s6 + $0x24] sm:$0xf] %vm494, %v471
    %505 = vst.msk [vmem:[%s6 + $0x28] sm:$0xf] %vm494, %v472
    %506 = vst.msk [vmem:[%s6 + $0x2c] sm:$0xf] %vm494, %v473
    %507 = vst.msk [vmem:[%s6 + $0x30] sm:$0xf] %vm494, %v474
    %508 = vst.msk [vmem:[%s6 + $0x34] sm:$0xf] %vm494, %v475
    %509 = vst.msk [vmem:[%s6 + $0x38] sm:$0xf] %vm494, %v476
    %510 = vst.msk [vmem:[%s6 + $0x3c] sm:$0xf] %vm494, %v477
  $region33: #{densenet_forward.15} parent=0 // pred_fallthru
    _
  // Predicated region
  $region34: #{densenet_forward.15} parent=0 // pred_check
    _
  $region35: #{densenet_forward.15} parent=0 // pred_check_branch
    %512 = sbr.rel (0) target = $region37
  $region36: #{densenet_forward.15} parent=0 // pred_region
    _
  $region37: #{densenet_forward.15} parent=0 // pred_fallthru
    _
  // Predicated region
  $region38: #{densenet_forward.15} parent=0 // pred_check
    _
  $region39: #{densenet_forward.15} parent=0 // pred_check_branch
    %514 = sbr.rel (0) target = $region41
  $region40: #{densenet_forward.15} parent=0 // pred_region
    _
  $region41: #{densenet_forward.15} parent=0 // pred_fallthru
    _

// kernel: densenet_forward.16
$region0: #{densenet_forward.16}
  #allocation0 [shape = 'u32[]', space=smem, size = 0x4, offset = 0x4, fixed_abs, tag = 'smem constant byte address 0x4 - core index']
  #allocation1 [shape = 'u32[144,128]{1,0:T(1,128)}', space=vmem, size = 0x12000, scoped, tag = 'internal scratch']
  #allocation2 [shape = 'f32[24,8]{1,0:T(8,128)}', space=vmem, size = 0x3000, scoped, tag = 'scratch operand']
  %s0 = inlined_call_operand.vmem [shape: bf16[2,6,38,16], index: 0, kind: input, shape index: {}]
  %s1 = inlined_call_operand.vmem [shape: bf16[3,144,8], index: 1, kind: input, shape index: {}]
  %s2 = inlined_call_operand.vmem [shape: bf16[2,4,24,8], index: 2, kind: output, shape index: {}]
  %s3 = sld [smem:[#allocation0]]
  $region49: #{densenet_forward.16} parent=0
    _
  %s5 = ssub.s32 1, %s3
  %s6 = scalar_select 0, %s5, %s3
  loop: start=0, step=1, limit=26
  $region2: #{densenet_forward.16} parent=0 // loop_pre_header
    _
  $region3: #{densenet_forward.16} parent=0 // loop_header
    %s8 = sphi 0, %s12
    %p9 = scmp.ge.s32.totalorder %s8, 26
    %s15 = sphi 0, %s34
    %s16 = sphi 0, %s30
    %s17 = sphi 0, %s26
    %s18 = sphi 0, %s15
    %s19 = sphi 0, %s16
    %s20 = sphi 0, %s17
    %s21 = sphi 0, %s18
    %s22 = sphi 0, %s19
    %s23 = sphi 0, %s20
    %s41 = sphi 0, %s43
    %s44 = sphi 0, %s41
    %s45 = sphi 0, %s44
    %s61 = sphi 0, %s45
    %s67 = sphi 0, %s69
    %s70 = sphi 0, %s67
    %s71 = sphi 0, %s70
    %s87 = sphi 0, %s71
    %s95 = sphi 0, %s97
    %s98 = sphi 0, %s95
    %s99 = sphi 0, %s98
    %s115 = sphi 0, %s99
  $region4: #{densenet_forward.16} parent=0 // loop_header_branch
    %11 = sbr.rel (%p9) target = $region8
  $region5: #{densenet_forward.16} parent=0 // loop_body
    %s13 = ssub.s32 %s8, 1
    %s14 = ssub.s32 %s8, 2
    %s24 = sadd.s32 1, %s17
    %p25 = scmp.ge.s32.totalorder %s24, 3
    %s26 = scalar_select %p25, 0, %s24
    %s27 = sadd.s32 1, %s16
    %s28 = scalar_select %p25, %s27, %s16
    %p29 = scmp.ge.s32.totalorder %s28, 4
    %s30 = scalar_select %p29, 0, %s28
    %s31 = sadd.s32 1, %s15
    %s32 = scalar_select %p29, %s31, %s15
    %p33 = scmp.ge.s32.totalorder %s32, 2
    %s34 = scalar_select %p33, 0, %s32
    %s35 = sadd.s32 %s16, %s17
    %s36 = sadd.s32 %s30, %s26
    %s37 = ssub.s32 %s15, %s34
    %s38 = ssub.s32 %s35, %s36
    %s39 = sor.u32 %s37, %s38
    %p40 = scmp.eq.s32.totalorder %s39, 0
    %s42 = sadd.s32 %s41, 1
    %s43 = scalar_select %p40, %s41, %s42
    %p46 = pneg %p40
    %p47 = scmp.eq.s32.totalorder %s8, 23
    %p48 = por %p46, %p47
    %p49 = scmp.ne.s32.totalorder %s41, %s44
    %p50 = scmp.eq.s32.totalorder %s8, 0
    %p51 = por %p49, %p50
    %p52 = scmp.ne.s32.totalorder %s41, %s44
    %p53 = scmp.eq.s32.totalorder %s13, 23
    %p54 = por %p52, %p53
    %p55 = scmp.ne.s32.totalorder %s44, %s45
    %p56 = scmp.eq.s32.totalorder %s13, 0
    %p57 = por %p55, %p56
    %p58 = scmp.ne.s32.totalorder %s44, %s45
    %p59 = scmp.eq.s32.totalorder %s14, 23
    %p60 = por %p58, %p59
    %p62 = scmp.ne.s32.totalorder %s45, %s61
    %p63 = scmp.eq.s32.totalorder %s14, 0
    %p64 = por %p62, %p63
    %s65 = ssub.s32 %s17, %s26
    %p66 = scmp.eq.s32.totalorder %s65, 0
    %s68 = sadd.s32 %s67, 1
    %s69 = scalar_select %p66, %s67, %s68
    %p72 = pneg %p66
    %p73 = scmp.eq.s32.totalorder %s8, 23
    %p74 = por %p72, %p73
    %p75 = scmp.ne.s32.totalorder %s67, %s70
    %p76 = scmp.eq.s32.totalorder %s8, 0
    %p77 = por %p75, %p76
    %p78 = scmp.ne.s32.totalorder %s67, %s70
    %p79 = scmp.eq.s32.totalorder %s13, 23
    %p80 = por %p78, %p79
    %p81 = scmp.ne.s32.totalorder %s70, %s71
    %p82 = scmp.eq.s32.totalorder %s13, 0
    %p83 = por %p81, %p82
    %p84 = scmp.ne.s32.totalorder %s70, %s71
    %p85 = scmp.eq.s32.totalorder %s14, 23
    %p86 = por %p84, %p85
    %p88 = scmp.ne.s32.totalorder %s71, %s87
    %p89 = scmp.eq.s32.totalorder %s14, 0
    %p90 = por %p88, %p89
    %s91 = ssub.s32 %s15, %s34
    %s92 = ssub.s32 %s16, %s30
    %s93 = sor.u32 %s91, %s92
    %p94 = scmp.eq.s32.totalorder %s93, 0
    %s96 = sadd.s32 %s95, 1
    %s97 = scalar_select %p94, %s95, %s96
    %p100 = pneg %p94
    %p101 = scmp.eq.s32.totalorder %s8, 23
    %p102 = por %p100, %p101
    %p103 = scmp.ne.s32.totalorder %s95, %s98
    %p104 = scmp.eq.s32.totalorder %s8, 0
    %p105 = por %p103, %p104
    %p106 = scmp.ne.s32.totalorder %s95, %s98
    %p107 = scmp.eq.s32.totalorder %s13, 23
    %p108 = por %p106, %p107
    %p109 = scmp.ne.s32.totalorder %s98, %s99
    %p110 = scmp.eq.s32.totalorder %s13, 0
    %p111 = por %p109, %p110
    %p112 = scmp.ne.s32.totalorder %s98, %s99
    %p113 = scmp.eq.s32.totalorder %s14, 23
    %p114 = por %p112, %p113
    %p116 = scmp.ne.s32.totalorder %s99, %s115
    %p117 = scmp.eq.s32.totalorder %s14, 0
    %p118 = por %p116, %p117
    %p119 = scmp.le.s32.totalorder 1, %s8
    %p120 = scmp.lt.s32.totalorder %s8, 25
    %p121 = pnand %p119, %p120
    %p122 = pneg %p121
    // Predicated region
    $region9: #{densenet_forward.16} parent=5 // pred_check
      _
    $region10: #{densenet_forward.16} parent=5 // pred_check_branch
      %124 = sbr.rel (%p121) target = $region12
    $region11: #{densenet_forward.16} parent=5 // pred_region
      %s125 = ssub.s32 %s8, 1
    $region12: #{densenet_forward.16} parent=5 // pred_fallthru
      _
    %p126 = scmp.lt.s32.totalorder %s8, 24
    // Predicated region
    $region13: #{densenet_forward.16} parent=5 // pred_check
      %p127 = pneg %p126
    $region14: #{densenet_forward.16} parent=5 // pred_check_branch
      %129 = sbr.rel (%p127) target = $region16
    $region15: #{densenet_forward.16} parent=5 // pred_region
      // Predicated region
      $region17: #{densenet_forward.16} parent=15 // pred_check
        %p130 = pneg %p51
      $region18: #{densenet_forward.16} parent=15 // pred_check_branch
        %132 = sbr.rel (%p130) target = $region20
      $region19: #{densenet_forward.16} parent=15 // pred_region
        %s133 = sadd.s32 %s16, %s17
        %p134 = scmp.lt.s32.totalorder %s15, 1
        %s135 = scalar_select %p134, %s15, 1
        %p136 = scmp.lt.s32.totalorder %s133, 5
        %s137 = scalar_select %p136, %s133, 5
        %s138 = smul.addr %s137, 5
        %s139 = smul.addr %s135, 30
        %s140 = sadd.s32 %s138, %s139
        %s141 = smul.addr %s140, 4
        %s142 = scalar_lea.vmem %s0, %s141
        %s143 = sadd.s32 %s16, %s17
      $region20: #{densenet_forward.16} parent=15 // pred_fallthru
        _
      // Predicated region
      $region21: #{densenet_forward.16} parent=15 // pred_check
        %p144 = pneg %p77
      $region22: #{densenet_forward.16} parent=15 // pred_check_branch
        %146 = sbr.rel (%p144) target = $region24
      $region23: #{densenet_forward.16} parent=15 // pred_region
        %p147 = scmp.lt.s32.totalorder %s17, 2
        %s148 = scalar_select %p147, %s17, 2
        %s149 = smul.addr %s148, 18
        %s150 = smul.addr %s149, 4
        %s151 = scalar_lea.vmem %s1, %s150
      $region24: #{densenet_forward.16} parent=15 // pred_fallthru
        _
    $region16: #{densenet_forward.16} parent=5 // pred_fallthru
      _
    %p152 = scmp.le.s32.totalorder 1, %s8
    %p153 = scmp.lt.s32.totalorder %s8, 25
    %p154 = pnand %p152, %p153
    %p155 = pneg %p154
    // Predicated region
    $region25: #{densenet_forward.16} parent=5 // pred_check
      _
    $region26: #{densenet_forward.16} parent=5 // pred_check_branch
      %157 = sbr.rel (%p154) target = $region28
    $region27: #{densenet_forward.16} parent=5 // pred_region
      %s158 = ssub.s32 %s8, 1
      %s159 = sadd.s32 %s19, %s20
      %p160 = scmp.lt.s32.totalorder %s18, 1
      %s161 = scalar_select %p160, %s18, 1
      %p162 = scmp.lt.s32.totalorder %s159, 5
      %s163 = scalar_select %p162, %s159, 5
      %s164 = smul.addr %s163, 5
      %s165 = smul.addr %s161, 30
      %s166 = sadd.s32 %s164, %s165
      %s167 = smul.addr %s166, 4
      %s168 = scalar_lea.vmem %s0, %s167
      %p169 = pneg %p57
      %p170 = pneg %p54
      %p171 = scmp.lt.s32.totalorder %s20, 2
      %s172 = scalar_select %p171, %s20, 2
      %s173 = smul.addr %s172, 18
      %s174 = smul.addr %s173, 4
      %s175 = scalar_lea.vmem %s1, %s174
      %p176 = pneg %p83
      %p177 = pneg %p80
      %p178 = pneg %p111
      %p179 = pneg %p108
      %p180 = scmp.lt.s32.totalorder %s18, 1
      %s181 = scalar_select %p180, %s18, 1
      %p182 = scmp.lt.s32.totalorder %s19, 3
      %s183 = scalar_select %p182, %s19, 3
      %s184 = smul.addr %s183, 3
      %s185 = smul.addr %s181, 12
      %s186 = sadd.s32 %s184, %s185
      %s187 = smul.addr %s186, 4
      %s188 = scalar_lea.vmem %s2, %s187
      %s189 = sadd.s32 %s19, %s20
      %p190 = scmp.lt.s32.totalorder %s18, 1
      %s191 = scalar_select %p190, %s18, 1
      %p192 = scmp.lt.s32.totalorder %s189, 5
      %s193 = scalar_select %p192, %s189, 5
      %s194 = smul.addr %s193, 5
      %s195 = smul.addr %s191, 30
      %s196 = sadd.s32 %s194, %s195
      %s197 = smul.addr %s196, 4
      %s198 = scalar_lea.vmem %s0, %s197
      %s199 = sadd.s32 %s19, %s20
      %p200 = scmp.lt.s32.totalorder %s20, 2
      %s201 = scalar_select %p200, %s20, 2
      %s202 = smul.addr %s201, 18
      %s203 = smul.addr %s202, 4
      %s204 = scalar_lea.vmem %s1, %s203
      %p205 = scmp.lt.s32.totalorder %s18, 1
      %s206 = scalar_select %p205, %s18, 1
      %p207 = scmp.lt.s32.totalorder %s19, 3
      %s208 = scalar_select %p207, %s19, 3
      %s209 = smul.addr %s208, 3
      %s210 = smul.addr %s206, 12
      %s211 = sadd.s32 %s209, %s210
      %s212 = smul.addr %s211, 4
      %s213 = scalar_lea.vmem %s2, %s212
      %p215 = scmp.eq.s32.totalorder %s20, 0
      // Predicated region
      $region29: #{densenet_forward.16} parent=27 // pred_check
        %p216 = pneg %p215
      $region30: #{densenet_forward.16} parent=27 // pred_check_branch
        %218 = sbr.rel (%p216) target = $region32
      $region31: #{densenet_forward.16} parent=27 // pred_region
        %vm219 = vcmask 64512
        %220 = vst.msk [vmem:[#allocation2] sm:$0xff] %vm219, 0.0
        %221 = vst.msk [vmem:[#allocation2 + $0x8] sm:$0xff] %vm219, 0.0
        %222 = vst.msk [vmem:[#allocation2 + $0x10] sm:$0xff] %vm219, 0.0
      $region32: #{densenet_forward.16} parent=27 // pred_fallthru
        _
      %v223 = vld [vmem:[%s198] sm:$0xf]
      %v224 = vld [vmem:[%s198 + $0x4] sm:$0xf]
      %v225 = vld [vmem:[%s198 + $0x8] sm:$0xf]
      %v226 = vld [vmem:[%s198 + $0xc] sm:$0xf]
      %v227 = vld [vmem:[%s198 + $0x10] sm:$0x7]
      %v231 = vunpack.c.l.b16 %v223
      %v232 = vunpack.c.l.b16 %v224
      %v233 = vunpack.c.l.b16 %v225
      %v234 = vpack.c.b16 %v232, %v231
      %v235 = vpack.c.b16 %v233, %v233
      %v237 = vunpack.c.l.b16 %v226
      %v238 = vpack.c.b16 %v237, %v233
      %vm239 = vsmask.f32 7424
      %v241 = vshrl.u32 %v234, 16
      %v243 = vshll.u32 %v234, 16
      %v245 = vrot.slane %v243, 1
      %v246 = vor.u32 %v241, %v245
      %v248 = vshll.u32 %v238, 16
      %v250 = vrot.slane %v248, 1
      %v251 = vsel %vm239, %v246, %v250
      %v252 = vshrl.u32 %v238, 16
      %v254 = vor.u32 %v252, %v250
      %255 = vrot.lane.b32.xlu0 %v251, 16
      %v256 = vpop.permute.xlu0 %255
      %257 = vrot.lane.b32.xlu0 %v254, 16
      %v258 = vpop.permute.xlu0 %257
      %vm259 = vcmask 1046528
      %v260 = vrot.slane %v234, 1
      %v261 = vrot.slane %v238, 1
      %v262 = vsel %vm259, %v260, %v261
      %263 = vrot.lane.b32.xlu0 %v262, 32
      %v264 = vpop.permute.xlu0 %263
      %265 = vrot.lane.b32.xlu0 %v261, 32
      %v266 = vpop.permute.xlu0 %265
      %vm267 = vcmask 1044480
      %v268 = vrot.slane %v234, 3
      %v269 = vrot.slane %v238, 3
      %v270 = vsel %vm267, %v268, %v269
      %271 = vrot.lane.b32.xlu0 %v270, 48
      %v272 = vpop.permute.xlu0 %271
      %273 = vrot.lane.b32.xlu0 %v269, 48
      %v274 = vpop.permute.xlu0 %273
      %vm275 = vsmask.f32 4352
      %v276 = vrot.slane %v241, 3
      %v277 = vrot.slane %v243, 4
      %v278 = vor.u32 %v276, %v277
      %v279 = vrot.slane %v252, 3
      %v280 = vrot.slane %v248, 4
      %v281 = vor.u32 %v279, %v280
      %v282 = vsel %vm275, %v278, %v281
      %283 = vrot.lane.b32.xlu0 %v282, 64
      %v284 = vpop.permute.xlu0 %283
      %285 = vrot.lane.b32.xlu0 %v281, 64
      %v286 = vpop.permute.xlu0 %285
      %v287 = vpack.c.b16 %v233, %v232
      %v288 = vpack.c.b16 %v237, %v237
      %289 = vrot.lane.b32.xlu0 %v287, 80
      %v290 = vpop.permute.xlu0 %289
      %291 = vrot.lane.b32.xlu0 %v288, 80
      %v292 = vpop.permute.xlu0 %291
      %v294 = vunpack.c.l.b16 %v227
      %v295 = vpack.c.b16 %v294, %v237
      %vm296 = vcmask 1045504
      %v297 = vrot.slane %v287, 2
      %v298 = vrot.slane %v295, 2
      %v299 = vsel %vm296, %v297, %v298
      %300 = vrot.lane.b32.xlu0 %v299, 96
      %v301 = vpop.permute.xlu0 %300
      %302 = vrot.lane.b32.xlu0 %v298, 96
      %v303 = vpop.permute.xlu0 %302
      %vm304 = vsmask.f32 5376
      %v306 = vshrl.u32 %v287, 16
      %v308 = vrot.slane %v306, 2
      %v309 = vshll.u32 %v287, 16
      %v311 = vrot.slane %v309, 3
      %v312 = vor.u32 %v308, %v311
      %v314 = vshrl.u32 %v295, 16
      %v316 = vrot.slane %v314, 2
      %v317 = vshll.u32 %v295, 16
      %v319 = vrot.slane %v317, 3
      %v320 = vor.u32 %v316, %v319
      %v321 = vsel %vm304, %v312, %v320
      %322 = vrot.lane.b32.xlu0 %v321, 112
      %v323 = vpop.permute.xlu0 %322
      %324 = vrot.lane.b32.xlu0 %v320, 112
      %v325 = vpop.permute.xlu0 %324
      %v326 = vrot.slane %v287, 3
      %v327 = vrot.slane %v295, 3
      %v328 = vsel %vm267, %v326, %v327
      %vm329 = vcmask 130048
      %v331 = vsel %vm329, %v234, %v256
      %v334 = vsel %vm329, %v235, %v258
      %vm335 = vcmask 261120
      %v337 = vsel %vm335, %v331, %v264
      %v339 = vsel %vm335, %v334, %v266
      %vm340 = vcmask 392192
      %v342 = vsel %vm340, %v337, %v272
      %v344 = vsel %vm340, %v339, %v274
      %vm345 = vcmask 523264
      %v347 = vsel %vm345, %v342, %v284
      %v349 = vsel %vm345, %v344, %v286
      %vm350 = vcmask 654336
      %v352 = vsel %vm350, %v347, %v290
      %v354 = vsel %vm350, %v349, %v292
      %vm355 = vcmask 785408
      %v357 = vsel %vm355, %v352, %v301
      %v359 = vsel %vm355, %v354, %v303
      %vm360 = vcmask 916480
      %v362 = vsel %vm360, %v357, %v323
      %v365 = vsel %vm360, %v359, %v325
      %v367 = vld [vmem:[#allocation2] sm:$0xff]
      %v368 = vld [vmem:[#allocation2 + $0x8] sm:$0xff]
      %v369 = vld [vmem:[#allocation2 + $0x10] sm:$0xff]
      %v370 = vld [vmem:[%s204] sm:$0xf]
      %v371 = vld [vmem:[%s204 + $0x4] sm:$0xf]
      %v372 = vld [vmem:[%s204 + $0x8] sm:$0xf]
      %v373 = vld [vmem:[%s204 + $0xc] sm:$0xf]
      %v374 = vld [vmem:[%s204 + $0x10] sm:$0xf]
      %v375 = vld [vmem:[%s204 + $0x14] sm:$0xf]
      %v376 = vld [vmem:[%s204 + $0x18] sm:$0xf]
      %v377 = vld [vmem:[%s204 + $0x1c] sm:$0xf]
      %v378 = vld [vmem:[%s204 + $0x20] sm:$0xf]
      %v379 = vld [vmem:[%s204 + $0x24] sm:$0xf]
      %v380 = vld [vmem:[%s204 + $0x28] sm:$0xf]
      %v381 = vld [vmem:[%s204 + $0x2c] sm:$0xf]
      %v382 = vld [vmem:[%s204 + $0x30] sm:$0xf]
      %v383 = vld [vmem:[%s204 + $0x34] sm:$0xf]
      %v384 = vld [vmem:[%s204 + $0x38] sm:$0xf]
      %v385 = vld [vmem:[%s204 + $0x3c] sm:$0xf]
      %v386 = vld [vmem:[%s204 + $0x40] sm:$0xf]
      %v387 = vld [vmem:[%s204 + $0x44] sm:$0xf]
      %v406 = vunpack.c.l.b16 %v370
      %v407 = vunpack.c.l.b16 %v371
      %v408 = vunpack.c.l.b16 %v372
      %v409 = vunpack.c.l.b16 %v373
      %v410 = vunpack.c.l.b16 %v374
      %v411 = vunpack.c.l.b16 %v375
      %v412 = vunpack.c.l.b16 %v376
      %v413 = vunpack.c.l.b16 %v377
      %v414 = vunpack.c.l.b16 %v378
      %v415 = vunpack.c.l.b16 %v379
      %v416 = vunpack.c.l.b16 %v380
      %v417 = vunpack.c.l.b16 %v381
      %v418 = vunpack.c.l.b16 %v382
      %v419 = vunpack.c.l.b16 %v383
      %v420 = vunpack.c.l.b16 %v384
      %v421 = vunpack.c.l.b16 %v385
      %v422 = vunpack.c.l.b16 %v386
      %v423 = vunpack.c.l.b16 %v387
      %v424 = vpack.c.b16 %v407, %v406
      %v425 = vpack.c.b16 %v409, %v408
      %v426 = vpack.c.b16 %v411, %v410
      %v427 = vpack.c.b16 %v413, %v412
      %v428 = vpack.c.b16 %v415, %v414
      %v429 = vpack.c.b16 %v417, %v416
      %v430 = vpack.c.b16 %v419, %v418
      %v431 = vpack.c.b16 %v421, %v420
      %v432 = vpack.c.b16 %v423, %v422
      %v443 = vsel %vm329, %v328, 0
      %v446 = vsel %vm329, %v327, 0
      %448 = vmatprep.subr.bf16.mxu0 0
      %449 = vmatpush1.bf16.msra.mxu0 %v431
      %450 = vmatprep.subr.bf16.mxu0 0
      %451 = vmatpush1.bf16.msra.mxu0 %v430
      %452 = vmatprep.subr.bf16.mxu0 0
      %453 = vmatpush1.bf16.msra.mxu0 %v429
      %454 = vmatprep.subr.bf16.mxu0 0
      %455 = vmatpush1.bf16.msra.mxu0 %v428
      %456 = vmatprep.subr.bf16.mxu0 0
      %457 = vmatpush1.bf16.msra.mxu0 %v427
      %458 = vmatprep.subr.bf16.mxu0 0
      %459 = vmatpush1.bf16.msra.mxu0 %v426
      %460 = vmatprep.subr.bf16.mxu0 0
      %461 = vmatpush1.bf16.msra.mxu0 %v425
      %462 = vmatprep.subr.bf16.mxu0 0
      %463 = vmatpush1.bf16.msra.mxu0 %v424
      %464 = vmatprep.subr.bf16.mxu0 0
      %465 = vmatpush2.bf16.msra.mxu0 0
      %466 = vmatprep.subr.bf16.mxu0 0
      %467 = vmatpush2.bf16.msra.mxu0 0
      %468 = vmatprep.subr.bf16.mxu0 0
      %469 = vmatpush2.bf16.msra.mxu0 0
      %470 = vmatprep.subr.bf16.mxu0 0
      %471 = vmatpush2.bf16.msra.mxu0 0
      %472 = vmatprep.subr.bf16.mxu0 0
      %473 = vmatpush2.bf16.msra.mxu0 0
      %474 = vmatprep.subr.bf16.mxu0 0
      %475 = vmatpush2.bf16.msra.mxu0 0
      %476 = vmatprep.subr.bf16.mxu0 0
      %477 = vmatpush2.bf16.msra.mxu0 0
      %478 = vmatprep.subr.bf16.mxu0 0
      %479 = vmatpush2.bf16.msra.mxu0 %v432
      %480 = vmatprep.mubr.bf16.mxu0 %v443
      %481 = vmatmul.mubr.bf16.gmra.mxu0 %v362
      %v482 = vpop.f32.mrf.mxu0
      %v483 = vadd.f32 0.0, %v482
      %v484 = vpop.f32.mrf.mxu0
      %v485 = vpop.f32.mrf.mxu0
      %v486 = vadd.f32 0.0, %v485
      %v487 = vpop.f32.mrf.mxu0
      %488 = vmatprep.mubr.bf16.mxu0 %v446
      %489 = vmatmul.mubr.bf16.gmra.mxu0 %v365
      %v490 = vpop.f32.mrf.mxu0
      %v491 = vadd.f32 0.0, %v490
      %v492 = vpop.f32.mrf.mxu0
      %v493 = vpop.f32.mrf.mxu0
      %v494 = vpop.f32.mrf.mxu0
      %495 = vdwg.mxu0
      %v496 = vadd.f32 %v367, %v483
      %v497 = vadd.f32 %v368, %v486
      %v498 = vadd.f32 %v369, %v491
      %vm499 = vcmask 64512
      %500 = vst.msk [vmem:[#allocation2] sm:$0xff] %vm499, %v496
      %501 = vst.msk [vmem:[#allocation2 + $0x8] sm:$0xff] %vm499, %v497
      %502 = vst.msk [vmem:[#allocation2 + $0x10] sm:$0xff] %vm499, %v498
      %p503 = scmp.eq.s32.totalorder %s20, 2
      // Predicated region
      $region33: #{densenet_forward.16} parent=27 // pred_check
        %p504 = pneg %p503
      $region34: #{densenet_forward.16} parent=27 // pred_check_branch
        %506 = sbr.rel (%p504) target = $region36
      $region35: #{densenet_forward.16} parent=27 // pred_region
        %v507 = vld [vmem:[#allocation2] sm:$0xff]
        %v508 = vld [vmem:[#allocation2 + $0x8] sm:$0xff]
        %v509 = vld [vmem:[#allocation2 + $0x10] sm:$0xff]
        %v510 = vpack.c.bf16 %v508, %v507
        %v511 = vpack.c.bf16 %v509, %v509
        %v514 = vunpack.c.l.b16 %v510
        %v515 = vunpack.c.h.b16 %v510
        %v516 = vunpack.c.l.b16 %v511
        %v517 = vpack.c.b16 %v514, %v514
        %v518 = vpack.c.b16 %v515, %v515
        %v519 = vpack.c.b16 %v516, %v516
        %vm523 = vcmask 60416
        %524 = vst.msk [vmem:[%s213] sm:$0xf] %vm523, %v517
        %525 = vst.msk [vmem:[%s213 + $0x4] sm:$0xf] %vm523, %v518
        %526 = vst.msk [vmem:[%s213 + $0x8] sm:$0xf] %vm523, %v519
      $region36: #{densenet_forward.16} parent=27 // pred_fallthru
        _
      %p527 = scmp.lt.s32.totalorder %s18, 1
      %s528 = scalar_select %p527, %s18, 1
      %p529 = scmp.lt.s32.totalorder %s19, 3
      %s530 = scalar_select %p529, %s19, 3
      %s531 = smul.addr %s530, 3
      %s532 = smul.addr %s528, 12
      %s533 = sadd.s32 %s531, %s532
      %s534 = smul.addr %s533, 4
      %s535 = scalar_lea.vmem %s2, %s534
      // Predicated region
      $region37: #{densenet_forward.16} parent=27 // pred_check
        %p536 = pneg %p108
      $region38: #{densenet_forward.16} parent=27 // pred_check_branch
        %538 = sbr.rel (%p536) target = $region40
      $region39: #{densenet_forward.16} parent=27 // pred_region
        _
      $region40: #{densenet_forward.16} parent=27 // pred_fallthru
        _
    $region28: #{densenet_forward.16} parent=5 // pred_fallthru
      _
    %p539 = scmp.le.s32.totalorder 2, %s8
    // Predicated region
    $region41: #{densenet_forward.16} parent=5 // pred_check
      %p540 = pneg %p539
    $region42: #{densenet_forward.16} parent=5 // pred_check_branch
      %542 = sbr.rel (%p540) target = $region44
    $region43: #{densenet_forward.16} parent=5 // pred_region
      %s543 = ssub.s32 %s8, 2
      // Predicated region
      $region45: #{densenet_forward.16} parent=43 // pred_check
        %p544 = pneg %p114
      $region46: #{densenet_forward.16} parent=43 // pred_check_branch
        %546 = sbr.rel (%p544) target = $region48
      $region47: #{densenet_forward.16} parent=43 // pred_region
        %p547 = scmp.lt.s32.totalorder %s21, 1
        %s548 = scalar_select %p547, %s21, 1
        %p549 = scmp.lt.s32.totalorder %s22, 3
        %s550 = scalar_select %p549, %s22, 3
        %s551 = smul.addr %s550, 3
        %s552 = smul.addr %s548, 12
        %s553 = sadd.s32 %s551, %s552
        %s554 = smul.addr %s553, 4
        %s555 = scalar_lea.vmem %s2, %s554
      $region48: #{densenet_forward.16} parent=43 // pred_fallthru
        _
    $region44: #{densenet_forward.16} parent=5 // pred_fallthru
      _
  $region6: #{densenet_forward.16} parent=0 // loop_footer
    %s12 = sadd.s32 1, %s8
  $region7: #{densenet_forward.16} parent=0 // loop_footer_branch
    %7 = sbr.rel target = $region3
  $region8: #{densenet_forward.16} parent=0 // loop_exit
    _

// kernel: densenet_forward.17
$region0: #{densenet_forward.17}
  #allocation0 [shape = 'u32[]', space=smem, size = 0x4, offset = 0x4, fixed_abs, tag = 'smem constant byte address 0x4 - core index']
  #allocation1 [shape = 'u32[144,128]{1,0:T(1,128)}', space=vmem, size = 0x12000, scoped, tag = 'internal scratch']
  #allocation2 [shape = 'f32[128,16]{1,0:T(8,128)}', space=vmem, size = 0x10000, scoped, tag = 'scratch operand']
  %s0 = inlined_call_operand.vmem [shape: bf16[128,16], index: 0, kind: input, shape index: {}]
  %s1 = inlined_call_operand.vmem [shape: bf16[16,16], index: 1, kind: input, shape index: {}]
  %s2 = inlined_call_operand.vmem [shape: bf16[1,16], index: 2, kind: input, shape index: {}]
  %s3 = inlined_call_operand.vmem [shape: bf16[1,16], index: 3, kind: input, shape index: {}]
  %s4 = inlined_call_operand.vmem [shape: f32[1,16], index: 4, kind: input, shape index: {}]
  %s5 = inlined_call_operand.vmem [shape: f32[1,16], index: 5, kind: input, shape index: {}]
  %s6 = inlined_call_operand.vmem [shape: bf16[128,16], index: 6, kind: output, shape index: {}]
  %s7 = sld [smem:[#allocation0]]
  $region42: #{densenet_forward.17} parent=0
    _
  %s9 = ssub.s32 1, %s7
  %s10 = scalar_select 0, %s9, %s7
  // Predicated region
  $region2: #{densenet_forward.17} parent=0 // pred_check
    _
  $region3: #{densenet_forward.17} parent=0 // pred_check_branch
    %12 = sbr.rel (0) target = $region5
  $region4: #{densenet_forward.17} parent=0 // pred_region
    _
  $region5: #{densenet_forward.17} parent=0 // pred_fallthru
    _
  // Predicated region
  $region6: #{densenet_forward.17} parent=0 // pred_check
    _
  $region7: #{densenet_forward.17} parent=0 // pred_check_branch
    %14 = sbr.rel (0) target = $region9
  $region8: #{densenet_forward.17} parent=0 // pred_region
    _
  $region9: #{densenet_forward.17} parent=0 // pred_fallthru
    _
  // Predicated region
  $region10: #{densenet_forward.17} parent=0 // pred_check
    _
  $region11: #{densenet_forward.17} parent=0 // pred_check_branch
    %16 = sbr.rel (0) target = $region13
  $region12: #{densenet_forward.17} parent=0 // pred_region
    _
  $region13: #{densenet_forward.17} parent=0 // pred_fallthru
    _
  // Predicated region
  $region14: #{densenet_forward.17} parent=0 // pred_check
    _
  $region15: #{densenet_forward.17} parent=0 // pred_check_branch
    %18 = sbr.rel (0) target = $region17
  $region16: #{densenet_forward.17} parent=0 // pred_region
    _
  $region17: #{densenet_forward.17} parent=0 // pred_fallthru
    _
  // Predicated region
  $region18: #{densenet_forward.17} parent=0 // pred_check
    _
  $region19: #{densenet_forward.17} parent=0 // pred_check_branch
    %20 = sbr.rel (0) target = $region21
  $region20: #{densenet_forward.17} parent=0 // pred_region
    _
  $region21: #{densenet_forward.17} parent=0 // pred_fallthru
    _
  // Predicated region
  $region22: #{densenet_forward.17} parent=0 // pred_check
    _
  $region23: #{densenet_forward.17} parent=0 // pred_check_branch
    %22 = sbr.rel (0) target = $region25
  $region24: #{densenet_forward.17} parent=0 // pred_region
    _
  $region25: #{densenet_forward.17} parent=0 // pred_fallthru
    _
  %p24 = scmp.eq.s32.totalorder 0, 0
  // Predicated region
  $region26: #{densenet_forward.17} parent=0 // pred_check
    %p25 = pneg %p24
  $region27: #{densenet_forward.17} parent=0 // pred_check_branch
    %27 = sbr.rel (%p25) target = $region29
  $region28: #{densenet_forward.17} parent=0 // pred_region
    %vm28 = vcmask 130048
    %29 = vst.msk [vmem:[#allocation2] sm:$0xff] %vm28, 0.0
    %30 = vst.msk [vmem:[#allocation2 + $0x8] sm:$0xff] %vm28, 0.0
    %31 = vst.msk [vmem:[#allocation2 + $0x10] sm:$0xff] %vm28, 0.0
    %32 = vst.msk [vmem:[#allocation2 + $0x18] sm:$0xff] %vm28, 0.0
    %33 = vst.msk [vmem:[#allocation2 + $0x20] sm:$0xff] %vm28, 0.0
    %34 = vst.msk [vmem:[#allocation2 + $0x28] sm:$0xff] %vm28, 0.0
    %35 = vst.msk [vmem:[#allocation2 + $0x30] sm:$0xff] %vm28, 0.0
    %36 = vst.msk [vmem:[#allocation2 + $0x38] sm:$0xff] %vm28, 0.0
    %37 = vst.msk [vmem:[#allocation2 + $0x40] sm:$0xff] %vm28, 0.0
    %38 = vst.msk [vmem:[#allocation2 + $0x48] sm:$0xff] %vm28, 0.0
    %39 = vst.msk [vmem:[#allocation2 + $0x50] sm:$0xff] %vm28, 0.0
    %40 = vst.msk [vmem:[#allocation2 + $0x58] sm:$0xff] %vm28, 0.0
    %41 = vst.msk [vmem:[#allocation2 + $0x60] sm:$0xff] %vm28, 0.0
    %42 = vst.msk [vmem:[#allocation2 + $0x68] sm:$0xff] %vm28, 0.0
    %43 = vst.msk [vmem:[#allocation2 + $0x70] sm:$0xff] %vm28, 0.0
    %44 = vst.msk [vmem:[#allocation2 + $0x78] sm:$0xff] %vm28, 0.0
  $region29: #{densenet_forward.17} parent=0 // pred_fallthru
    _
  %v45 = vld [vmem:[%s0] sm:$0xf]
  %v46 = vld [vmem:[%s0 + $0x4] sm:$0xf]
  %v47 = vld [vmem:[%s0 + $0x8] sm:$0xf]
  %v48 = vld [vmem:[%s0 + $0xc] sm:$0xf]
  %v49 = vld [vmem:[%s0 + $0x10] sm:$0xf]
  %v50 = vld [vmem:[%s0 + $0x14] sm:$0xf]
  %v51 = vld [vmem:[%s0 + $0x18] sm:$0xf]
  %v52 = vld [vmem:[%s0 + $0x1c] sm:$0xf]
  %v53 = vld [vmem:[%s0 + $0x20] sm:$0xf]
  %v54 = vld [vmem:[%s0 + $0x24] sm:$0xf]
  %v55 = vld [vmem:[%s0 + $0x28] sm:$0xf]
  %v56 = vld [vmem:[%s0 + $0x2c] sm:$0xf]
  %v57 = vld [vmem:[%s0 + $0x30] sm:$0xf]
  %v58 = vld [vmem:[%s0 + $0x34] sm:$0xf]
  %v59 = vld [vmem:[%s0 + $0x38] sm:$0xf]
  %v60 = vld [vmem:[%s0 + $0x3c] sm:$0xf]
  %v61 = vld [vmem:[%s2] sm:$0x1]
  %v63 = vpack.i.b16 %v61, %v61
  %v65 = vlaneseq
  %v66 = vshrl.u32 %v65, 7
  %v67 = vsub.s32 0, %v66
  %v68 = vrot.slane %v63, %v67
  %v70 = vunpack.c.l.b16 %v68
  %v71 = vpack.c.b16 %v70, %v70
  %v73 = vmul.bf16 %v45, %v71
  %v74 = vmul.bf16 %v46, %v71
  %v75 = vmul.bf16 %v47, %v71
  %v76 = vmul.bf16 %v48, %v71
  %v77 = vmul.bf16 %v49, %v71
  %v78 = vmul.bf16 %v50, %v71
  %v79 = vmul.bf16 %v51, %v71
  %v80 = vmul.bf16 %v52, %v71
  %v81 = vmul.bf16 %v53, %v71
  %v82 = vmul.bf16 %v54, %v71
  %v83 = vmul.bf16 %v55, %v71
  %v84 = vmul.bf16 %v56, %v71
  %v85 = vmul.bf16 %v57, %v71
  %v86 = vmul.bf16 %v58, %v71
  %v87 = vmul.bf16 %v59, %v71
  %v88 = vmul.bf16 %v60, %v71
  %v89 = vld [vmem:[%s3] sm:$0x1]
  %v91 = vpack.i.b16 %v89, %v89
  %v93 = vlaneseq
  %v94 = vshrl.u32 %v93, 7
  %v95 = vsub.s32 0, %v94
  %v96 = vrot.slane %v91, %v95
  %v98 = vunpack.c.l.b16 %v96
  %v99 = vpack.c.b16 %v98, %v98
  %v101 = vadd.bf16 %v73, %v99
  %v102 = vadd.bf16 %v74, %v99
  %v103 = vadd.bf16 %v75, %v99
  %v104 = vadd.bf16 %v76, %v99
  %v105 = vadd.bf16 %v77, %v99
  %v106 = vadd.bf16 %v78, %v99
  %v107 = vadd.bf16 %v79, %v99
  %v108 = vadd.bf16 %v80, %v99
  %v109 = vadd.bf16 %v81, %v99
  %v110 = vadd.bf16 %v82, %v99
  %v111 = vadd.bf16 %v83, %v99
  %v112 = vadd.bf16 %v84, %v99
  %v113 = vadd.bf16 %v85, %v99
  %v114 = vadd.bf16 %v86, %v99
  %v115 = vadd.bf16 %v87, %v99
  %v116 = vadd.bf16 %v88, %v99
  %v117 = vmax.bf16 %v101, 0
  %v118 = vmax.bf16 %v102, 0
  %v119 = vmax.bf16 %v103, 0
  %v120 = vmax.bf16 %v104, 0
  %v121 = vmax.bf16 %v105, 0
  %v122 = vmax.bf16 %v106, 0
  %v123 = vmax.bf16 %v107, 0
  %v124 = vmax.bf16 %v108, 0
  %v125 = vmax.bf16 %v109, 0
  %v126 = vmax.bf16 %v110, 0
  %v127 = vmax.bf16 %v111, 0
  %v128 = vmax.bf16 %v112, 0
  %v129 = vmax.bf16 %v113, 0
  %v130 = vmax.bf16 %v114, 0
  %v131 = vmax.bf16 %v115, 0
  %v132 = vmax.bf16 %v116, 0
  %v133 = vld [vmem:[#allocation2] sm:$0xff]
  %v134 = vld [vmem:[#allocation2 + $0x8] sm:$0xff]
  %v135 = vld [vmem:[#allocation2 + $0x10] sm:$0xff]
  %v136 = vld [vmem:[#allocation2 + $0x18] sm:$0xff]
  %v137 = vld [vmem:[#allocation2 + $0x20] sm:$0xff]
  %v138 = vld [vmem:[#allocation2 + $0x28] sm:$0xff]
  %v139 = vld [vmem:[#allocation2 + $0x30] sm:$0xff]
  %v140 = vld [vmem:[#allocation2 + $0x38] sm:$0xff]
  %v141 = vld [vmem:[#allocation2 + $0x40] sm:$0xff]
  %v142 = vld [vmem:[#allocation2 + $0x48] sm:$0xff]
  %v143 = vld [vmem:[#allocation2 + $0x50] sm:$0xff]
  %v144 = vld [vmem:[#allocation2 + $0x58] sm:$0xff]
  %v145 = vld [vmem:[#allocation2 + $0x60] sm:$0xff]
  %v146 = vld [vmem:[#allocation2 + $0x68] sm:$0xff]
  %v147 = vld [vmem:[#allocation2 + $0x70] sm:$0xff]
  %v148 = vld [vmem:[#allocation2 + $0x78] sm:$0xff]
  %v149 = vld [vmem:[%s1] sm:$0xf]
  %v150 = vld [vmem:[%s1 + $0x4] sm:$0xf]
  %v167 = vunpack.c.l.b16 %v117
  %v168 = vunpack.c.l.b16 %v118
  %v169 = vunpack.c.l.b16 %v119
  %v170 = vunpack.c.l.b16 %v120
  %v171 = vunpack.c.l.b16 %v121
  %v172 = vunpack.c.l.b16 %v122
  %v173 = vunpack.c.l.b16 %v123
  %v174 = vunpack.c.l.b16 %v124
  %v175 = vunpack.c.l.b16 %v125
  %v176 = vunpack.c.l.b16 %v126
  %v177 = vunpack.c.l.b16 %v127
  %v178 = vunpack.c.l.b16 %v128
  %v179 = vunpack.c.l.b16 %v129
  %v180 = vunpack.c.l.b16 %v130
  %v181 = vunpack.c.l.b16 %v131
  %v182 = vunpack.c.l.b16 %v132
  %v183 = vpack.c.b16 %v168, %v167
  %v184 = vpack.c.b16 %v170, %v169
  %v185 = vpack.c.b16 %v172, %v171
  %v186 = vpack.c.b16 %v174, %v173
  %v187 = vpack.c.b16 %v176, %v175
  %v188 = vpack.c.b16 %v178, %v177
  %v189 = vpack.c.b16 %v180, %v179
  %v190 = vpack.c.b16 %v182, %v181
  %v193 = vunpack.c.l.b16 %v149
  %v194 = vunpack.c.l.b16 %v150
  %v195 = vpack.c.b16 %v194, %v193
  %vm197 = vcmask 130048
  %v199 = vsel %vm197, %v183, 0
  %v202 = vsel %vm197, %v184, 0
  %v205 = vsel %vm197, %v185, 0
  %v208 = vsel %vm197, %v186, 0
  %v211 = vsel %vm197, %v187, 0
  %v214 = vsel %vm197, %v188, 0
  %v217 = vsel %vm197, %v189, 0
  %v220 = vsel %vm197, %v190, 0
  %222 = vmatprep.subr.bf16.mxu0 0
  %223 = vmatpush1.bf16.msra.mxu0 0
  %224 = vmatprep.subr.bf16.mxu0 0
  %225 = vmatpush1.bf16.msra.mxu0 0
  %226 = vmatprep.subr.bf16.mxu0 0
  %227 = vmatpush1.bf16.msra.mxu0 0
  %228 = vmatprep.subr.bf16.mxu0 0
  %229 = vmatpush1.bf16.msra.mxu0 0
  %230 = vmatprep.subr.bf16.mxu0 0
  %231 = vmatpush1.bf16.msra.mxu0 0
  %232 = vmatprep.subr.bf16.mxu0 0
  %233 = vmatpush1.bf16.msra.mxu0 0
  %234 = vmatprep.subr.bf16.mxu0 0
  %235 = vmatpush1.bf16.msra.mxu0 0
  %236 = vmatprep.subr.bf16.mxu0 0
  %237 = vmatpush1.bf16.msra.mxu0 %v195
  %238 = vmatprep.subr.bf16.mxu0 0
  %239 = vmatpush2.bf16.msra.mxu0 0
  %240 = vmatprep.subr.bf16.mxu0 0
  %241 = vmatpush2.bf16.msra.mxu0 0
  %242 = vmatprep.subr.bf16.mxu0 0
  %243 = vmatpush2.bf16.msra.mxu0 0
  %244 = vmatprep.subr.bf16.mxu0 0
  %245 = vmatpush2.bf16.msra.mxu0 0
  %246 = vmatprep.subr.bf16.mxu0 0
  %247 = vmatpush2.bf16.msra.mxu0 0
  %248 = vmatprep.subr.bf16.mxu0 0
  %249 = vmatpush2.bf16.msra.mxu0 0
  %250 = vmatprep.subr.bf16.mxu0 0
  %251 = vmatpush2.bf16.msra.mxu0 0
  %252 = vmatprep.subr.bf16.mxu0 0
  %253 = vmatpush2.bf16.msra.mxu0 0
  %254 = vmatprep.mubr.bf16.mxu0 0
  %255 = vmatmul.mubr.bf16.gmra.mxu0 %v199
  %v256 = vpop.f32.mrf.mxu0
  %v257 = vadd.f32 0.0, %v256
  %v258 = vpop.f32.mrf.mxu0
  %v259 = vpop.f32.mrf.mxu0
  %v260 = vadd.f32 0.0, %v259
  %v261 = vpop.f32.mrf.mxu0
  %262 = vmatprep.mubr.bf16.mxu0 0
  %263 = vmatmul.mubr.bf16.gmra.mxu0 %v202
  %v264 = vpop.f32.mrf.mxu0
  %v265 = vadd.f32 0.0, %v264
  %v266 = vpop.f32.mrf.mxu0
  %v267 = vpop.f32.mrf.mxu0
  %v268 = vadd.f32 0.0, %v267
  %v269 = vpop.f32.mrf.mxu0
  %270 = vmatprep.mubr.bf16.mxu0 0
  %271 = vmatmul.mubr.bf16.gmra.mxu0 %v205
  %v272 = vpop.f32.mrf.mxu0
  %v273 = vadd.f32 0.0, %v272
  %v274 = vpop.f32.mrf.mxu0
  %v275 = vpop.f32.mrf.mxu0
  %v276 = vadd.f32 0.0, %v275
  %v277 = vpop.f32.mrf.mxu0
  %278 = vmatprep.mubr.bf16.mxu0 0
  %279 = vmatmul.mubr.bf16.gmra.mxu0 %v208
  %v280 = vpop.f32.mrf.mxu0
  %v281 = vadd.f32 0.0, %v280
  %v282 = vpop.f32.mrf.mxu0
  %v283 = vpop.f32.mrf.mxu0
  %v284 = vadd.f32 0.0, %v283
  %v285 = vpop.f32.mrf.mxu0
  %286 = vmatprep.mubr.bf16.mxu0 0
  %287 = vmatmul.mubr.bf16.gmra.mxu0 %v211
  %v288 = vpop.f32.mrf.mxu0
  %v289 = vadd.f32 0.0, %v288
  %v290 = vpop.f32.mrf.mxu0
  %v291 = vpop.f32.mrf.mxu0
  %v292 = vadd.f32 0.0, %v291
  %v293 = vpop.f32.mrf.mxu0
  %294 = vmatprep.mubr.bf16.mxu0 0
  %295 = vmatmul.mubr.bf16.gmra.mxu0 %v214
  %v296 = vpop.f32.mrf.mxu0
  %v297 = vadd.f32 0.0, %v296
  %v298 = vpop.f32.mrf.mxu0
  %v299 = vpop.f32.mrf.mxu0
  %v300 = vadd.f32 0.0, %v299
  %v301 = vpop.f32.mrf.mxu0
  %302 = vmatprep.mubr.bf16.mxu0 0
  %303 = vmatmul.mubr.bf16.gmra.mxu0 %v217
  %v304 = vpop.f32.mrf.mxu0
  %v305 = vadd.f32 0.0, %v304
  %v306 = vpop.f32.mrf.mxu0
  %v307 = vpop.f32.mrf.mxu0
  %v308 = vadd.f32 0.0, %v307
  %v309 = vpop.f32.mrf.mxu0
  %310 = vmatprep.mubr.bf16.mxu0 0
  %311 = vmatmul.mubr.bf16.gmra.mxu0 %v220
  %v312 = vpop.f32.mrf.mxu0
  %v313 = vadd.f32 0.0, %v312
  %v314 = vpop.f32.mrf.mxu0
  %v315 = vpop.f32.mrf.mxu0
  %v316 = vadd.f32 0.0, %v315
  %v317 = vpop.f32.mrf.mxu0
  %318 = vdwg.mxu0
  %v319 = vadd.f32 %v133, %v257
  %v320 = vadd.f32 %v134, %v260
  %v321 = vadd.f32 %v135, %v265
  %v322 = vadd.f32 %v136, %v268
  %v323 = vadd.f32 %v137, %v273
  %v324 = vadd.f32 %v138, %v276
  %v325 = vadd.f32 %v139, %v281
  %v326 = vadd.f32 %v140, %v284
  %v327 = vadd.f32 %v141, %v289
  %v328 = vadd.f32 %v142, %v292
  %v329 = vadd.f32 %v143, %v297
  %v330 = vadd.f32 %v144, %v300
  %v331 = vadd.f32 %v145, %v305
  %v332 = vadd.f32 %v146, %v308
  %v333 = vadd.f32 %v147, %v313
  %v334 = vadd.f32 %v148, %v316
  %335 = vst.msk [vmem:[#allocation2] sm:$0xff] %vm197, %v319
  %336 = vst.msk [vmem:[#allocation2 + $0x8] sm:$0xff] %vm197, %v320
  %337 = vst.msk [vmem:[#allocation2 + $0x10] sm:$0xff] %vm197, %v321
  %338 = vst.msk [vmem:[#allocation2 + $0x18] sm:$0xff] %vm197, %v322
  %339 = vst.msk [vmem:[#allocation2 + $0x20] sm:$0xff] %vm197, %v323
  %340 = vst.msk [vmem:[#allocation2 + $0x28] sm:$0xff] %vm197, %v324
  %341 = vst.msk [vmem:[#allocation2 + $0x30] sm:$0xff] %vm197, %v325
  %342 = vst.msk [vmem:[#allocation2 + $0x38] sm:$0xff] %vm197, %v326
  %343 = vst.msk [vmem:[#allocation2 + $0x40] sm:$0xff] %vm197, %v327
  %344 = vst.msk [vmem:[#allocation2 + $0x48] sm:$0xff] %vm197, %v328
  %345 = vst.msk [vmem:[#allocation2 + $0x50] sm:$0xff] %vm197, %v329
  %346 = vst.msk [vmem:[#allocation2 + $0x58] sm:$0xff] %vm197, %v330
  %347 = vst.msk [vmem:[#allocation2 + $0x60] sm:$0xff] %vm197, %v331
  %348 = vst.msk [vmem:[#allocation2 + $0x68] sm:$0xff] %vm197, %v332
  %349 = vst.msk [vmem:[#allocation2 + $0x70] sm:$0xff] %vm197, %v333
  %350 = vst.msk [vmem:[#allocation2 + $0x78] sm:$0xff] %vm197, %v334
  // Predicated region
  $region30: #{densenet_forward.17} parent=0 // pred_check
    %p351 = pneg %p24
  $region31: #{densenet_forward.17} parent=0 // pred_check_branch
    %353 = sbr.rel (%p351) target = $region33
  $region32: #{densenet_forward.17} parent=0 // pred_region
    %v354 = vld [vmem:[#allocation2] sm:$0xff]
    %v355 = vld [vmem:[#allocation2 + $0x8] sm:$0xff]
    %v356 = vld [vmem:[#allocation2 + $0x10] sm:$0xff]
    %v357 = vld [vmem:[#allocation2 + $0x18] sm:$0xff]
    %v358 = vld [vmem:[#allocation2 + $0x20] sm:$0xff]
    %v359 = vld [vmem:[#allocation2 + $0x28] sm:$0xff]
    %v360 = vld [vmem:[#allocation2 + $0x30] sm:$0xff]
    %v361 = vld [vmem:[#allocation2 + $0x38] sm:$0xff]
    %v362 = vld [vmem:[#allocation2 + $0x40] sm:$0xff]
    %v363 = vld [vmem:[#allocation2 + $0x48] sm:$0xff]
    %v364 = vld [vmem:[#allocation2 + $0x50] sm:$0xff]
    %v365 = vld [vmem:[#allocation2 + $0x58] sm:$0xff]
    %v366 = vld [vmem:[#allocation2 + $0x60] sm:$0xff]
    %v367 = vld [vmem:[#allocation2 + $0x68] sm:$0xff]
    %v368 = vld [vmem:[#allocation2 + $0x70] sm:$0xff]
    %v369 = vld [vmem:[#allocation2 + $0x78] sm:$0xff]
    %v370 = vld [vmem:[%s4] sm:$0x1]
    %v372 = vlaneseq
    %v373 = vshrl.u32 %v372, 7
    %v374 = vsub.s32 0, %v373
    %v375 = vrot.slane %v370, %v374
    %v377 = vmul.f32 %v354, %v375
    %v378 = vmul.f32 %v355, %v375
    %v379 = vmul.f32 %v356, %v375
    %v380 = vmul.f32 %v357, %v375
    %v381 = vmul.f32 %v358, %v375
    %v382 = vmul.f32 %v359, %v375
    %v383 = vmul.f32 %v360, %v375
    %v384 = vmul.f32 %v361, %v375
    %v385 = vmul.f32 %v362, %v375
    %v386 = vmul.f32 %v363, %v375
    %v387 = vmul.f32 %v364, %v375
    %v388 = vmul.f32 %v365, %v375
    %v389 = vmul.f32 %v366, %v375
    %v390 = vmul.f32 %v367, %v375
    %v391 = vmul.f32 %v368, %v375
    %v392 = vmul.f32 %v369, %v375
    %v393 = vld [vmem:[%s5] sm:$0x1]
    %v395 = vlaneseq
    %v396 = vshrl.u32 %v395, 7
    %v397 = vsub.s32 0, %v396
    %v398 = vrot.slane %v393, %v397
    %v400 = vadd.f32 %v377, %v398
    %v401 = vadd.f32 %v378, %v398
    %v402 = vadd.f32 %v379, %v398
    %v403 = vadd.f32 %v380, %v398
    %v404 = vadd.f32 %v381, %v398
    %v405 = vadd.f32 %v382, %v398
    %v406 = vadd.f32 %v383, %v398
    %v407 = vadd.f32 %v384, %v398
    %v408 = vadd.f32 %v385, %v398
    %v409 = vadd.f32 %v386, %v398
    %v410 = vadd.f32 %v387, %v398
    %v411 = vadd.f32 %v388, %v398
    %v412 = vadd.f32 %v389, %v398
    %v413 = vadd.f32 %v390, %v398
    %v414 = vadd.f32 %v391, %v398
    %v415 = vadd.f32 %v392, %v398
    %v416 = vmax.f32 %v400, 0.0
    %v417 = vmax.f32 %v401, 0.0
    %v418 = vmax.f32 %v402, 0.0
    %v419 = vmax.f32 %v403, 0.0
    %v420 = vmax.f32 %v404, 0.0
    %v421 = vmax.f32 %v405, 0.0
    %v422 = vmax.f32 %v406, 0.0
    %v423 = vmax.f32 %v407, 0.0
    %v424 = vmax.f32 %v408, 0.0
    %v425 = vmax.f32 %v409, 0.0
    %v426 = vmax.f32 %v410, 0.0
    %v427 = vmax.f32 %v411, 0.0
    %v428 = vmax.f32 %v412, 0.0
    %v429 = vmax.f32 %v413, 0.0
    %v430 = vmax.f32 %v414, 0.0
    %v431 = vmax.f32 %v415, 0.0
    %v432 = vpack.c.bf16 %v417, %v416
    %v433 = vpack.c.bf16 %v419, %v418
    %v434 = vpack.c.bf16 %v421, %v420
    %v435 = vpack.c.bf16 %v423, %v422
    %v436 = vpack.c.bf16 %v425, %v424
    %v437 = vpack.c.bf16 %v427, %v426
    %v438 = vpack.c.bf16 %v429, %v428
    %v439 = vpack.c.bf16 %v431, %v430
    %v448 = vunpack.c.l.b16 %v432
    %v449 = vunpack.c.h.b16 %v432
    %v450 = vunpack.c.l.b16 %v433
    %v451 = vunpack.c.h.b16 %v433
    %v452 = vunpack.c.l.b16 %v434
    %v453 = vunpack.c.h.b16 %v434
    %v454 = vunpack.c.l.b16 %v435
    %v455 = vunpack.c.h.b16 %v435
    %v456 = vunpack.c.l.b16 %v436
    %v457 = vunpack.c.h.b16 %v436
    %v458 = vunpack.c.l.b16 %v437
    %v459 = vunpack.c.h.b16 %v437
    %v460 = vunpack.c.l.b16 %v438
    %v461 = vunpack.c.h.b16 %v438
    %v462 = vunpack.c.l.b16 %v439
    %v463 = vunpack.c.h.b16 %v439
    %v464 = vpack.c.b16 %v448, %v448
    %v465 = vpack.c.b16 %v449, %v449
    %v466 = vpack.c.b16 %v450, %v450
    %v467 = vpack.c.b16 %v451, %v451
    %v468 = vpack.c.b16 %v452, %v452
    %v469 = vpack.c.b16 %v453, %v453
    %v470 = vpack.c.b16 %v454, %v454
    %v471 = vpack.c.b16 %v455, %v455
    %v472 = vpack.c.b16 %v456, %v456
    %v473 = vpack.c.b16 %v457, %v457
    %v474 = vpack.c.b16 %v458, %v458
    %v475 = vpack.c.b16 %v459, %v459
    %v476 = vpack.c.b16 %v460, %v460
    %v477 = vpack.c.b16 %v461, %v461
    %v478 = vpack.c.b16 %v462, %v462
    %v479 = vpack.c.b16 %v463, %v463
    %vm496 = vcmask 125952
    %497 = vst.msk [vmem:[%s6] sm:$0xf] %vm496, %v464
    %498 = vst.msk [vmem:[%s6 + $0x4] sm:$0xf] %vm496, %v465
    %499 = vst.msk [vmem:[%s6 + $0x8] sm:$0xf] %vm496, %v466
    %500 = vst.msk [vmem:[%s6 + $0xc] sm:$0xf] %vm496, %v467
    %501 = vst.msk [vmem:[%s6 + $0x10] sm:$0xf] %vm496, %v468
    %502 = vst.msk [vmem:[%s6 + $0x14] sm:$0xf] %vm496, %v469
    %503 = vst.msk [vmem:[%s6 + $0x18] sm:$0xf] %vm496, %v470
    %504 = vst.msk [vmem:[%s6 + $0x1c] sm:$0xf] %vm496, %v471
    %505 = vst.msk [vmem:[%s6 + $0x20] sm:$0xf] %vm496, %v472
    %506 = vst.msk [vmem:[%s6 + $0x24] sm:$0xf] %vm496, %v473
    %507 = vst.msk [vmem:[%s6 + $0x28] sm:$0xf] %vm496, %v474
    %508 = vst.msk [vmem:[%s6 + $0x2c] sm:$0xf] %vm496, %v475
    %509 = vst.msk [vmem:[%s6 + $0x30] sm:$0xf] %vm496, %v476
    %510 = vst.msk [vmem:[%s6 + $0x34] sm:$0xf] %vm496, %v477
    %511 = vst.msk [vmem:[%s6 + $0x38] sm:$0xf] %vm496, %v478
    %512 = vst.msk [vmem:[%s6 + $0x3c] sm:$0xf] %vm496, %v479
  $region33: #{densenet_forward.17} parent=0 // pred_fallthru
    _
  // Predicated region
  $region34: #{densenet_forward.17} parent=0 // pred_check
    _
  $region35: #{densenet_forward.17} parent=0 // pred_check_branch
    %514 = sbr.rel (0) target = $region37
  $region36: #{densenet_forward.17} parent=0 // pred_region
    _
  $region37: #{densenet_forward.17} parent=0 // pred_fallthru
    _
  // Predicated region
  $region38: #{densenet_forward.17} parent=0 // pred_check
    _
  $region39: #{densenet_forward.17} parent=0 // pred_check_branch
    %516 = sbr.rel (0) target = $region41
  $region40: #{densenet_forward.17} parent=0 // pred_region
    _
  $region41: #{densenet_forward.17} parent=0 // pred_fallthru
    _

// kernel: densenet_forward.19
$region0: #{densenet_forward.19}
  #allocation0 [shape = 'u32[]', space=smem, size = 0x4, offset = 0x4, fixed_abs, tag = 'smem constant byte address 0x4 - core index']
  #allocation1 [shape = 'u32[144,128]{1,0:T(1,128)}', space=vmem, size = 0x12000, scoped, tag = 'internal scratch']
  #allocation2 [shape = 'f32[128,12]{1,0:T(8,128)}', space=vmem, size = 0x10000, scoped, tag = 'scratch operand']
  %s0 = inlined_call_operand.vmem [shape: bf16[128,24], index: 0, kind: input, shape index: {}]
  %s1 = inlined_call_operand.vmem [shape: bf16[24,12], index: 1, kind: input, shape index: {}]
  %s2 = inlined_call_operand.vmem [shape: bf16[1,24], index: 2, kind: input, shape index: {}]
  %s3 = inlined_call_operand.vmem [shape: bf16[1,24], index: 3, kind: input, shape index: {}]
  %s4 = inlined_call_operand.vmem [shape: bf16[128,12], index: 4, kind: output, shape index: {}]
  %s5 = sld [smem:[#allocation0]]
  $region34: #{densenet_forward.19} parent=0
    _
  %s7 = ssub.s32 1, %s5
  %s8 = scalar_select 0, %s7, %s5
  // Predicated region
  $region2: #{densenet_forward.19} parent=0 // pred_check
    _
  $region3: #{densenet_forward.19} parent=0 // pred_check_branch
    %10 = sbr.rel (0) target = $region5
  $region4: #{densenet_forward.19} parent=0 // pred_region
    _
  $region5: #{densenet_forward.19} parent=0 // pred_fallthru
    _
  // Predicated region
  $region6: #{densenet_forward.19} parent=0 // pred_check
    _
  $region7: #{densenet_forward.19} parent=0 // pred_check_branch
    %12 = sbr.rel (0) target = $region9
  $region8: #{densenet_forward.19} parent=0 // pred_region
    _
  $region9: #{densenet_forward.19} parent=0 // pred_fallthru
    _
  // Predicated region
  $region10: #{densenet_forward.19} parent=0 // pred_check
    _
  $region11: #{densenet_forward.19} parent=0 // pred_check_branch
    %14 = sbr.rel (0) target = $region13
  $region12: #{densenet_forward.19} parent=0 // pred_region
    _
  $region13: #{densenet_forward.19} parent=0 // pred_fallthru
    _
  // Predicated region
  $region14: #{densenet_forward.19} parent=0 // pred_check
    _
  $region15: #{densenet_forward.19} parent=0 // pred_check_branch
    %16 = sbr.rel (0) target = $region17
  $region16: #{densenet_forward.19} parent=0 // pred_region
    _
  $region17: #{densenet_forward.19} parent=0 // pred_fallthru
    _
  %p18 = scmp.eq.s32.totalorder 0, 0
  // Predicated region
  $region18: #{densenet_forward.19} parent=0 // pred_check
    %p19 = pneg %p18
  $region19: #{densenet_forward.19} parent=0 // pred_check_branch
    %21 = sbr.rel (%p19) target = $region21
  $region20: #{densenet_forward.19} parent=0 // pred_region
    %vm22 = vcmask 97280
    %23 = vst.msk [vmem:[#allocation2] sm:$0xff] %vm22, 0.0
    %24 = vst.msk [vmem:[#allocation2 + $0x8] sm:$0xff] %vm22, 0.0
    %25 = vst.msk [vmem:[#allocation2 + $0x10] sm:$0xff] %vm22, 0.0
    %26 = vst.msk [vmem:[#allocation2 + $0x18] sm:$0xff] %vm22, 0.0
    %27 = vst.msk [vmem:[#allocation2 + $0x20] sm:$0xff] %vm22, 0.0
    %28 = vst.msk [vmem:[#allocation2 + $0x28] sm:$0xff] %vm22, 0.0
    %29 = vst.msk [vmem:[#allocation2 + $0x30] sm:$0xff] %vm22, 0.0
    %30 = vst.msk [vmem:[#allocation2 + $0x38] sm:$0xff] %vm22, 0.0
    %31 = vst.msk [vmem:[#allocation2 + $0x40] sm:$0xff] %vm22, 0.0
    %32 = vst.msk [vmem:[#allocation2 + $0x48] sm:$0xff] %vm22, 0.0
    %33 = vst.msk [vmem:[#allocation2 + $0x50] sm:$0xff] %vm22, 0.0
    %34 = vst.msk [vmem:[#allocation2 + $0x58] sm:$0xff] %vm22, 0.0
    %35 = vst.msk [vmem:[#allocation2 + $0x60] sm:$0xff] %vm22, 0.0
    %36 = vst.msk [vmem:[#allocation2 + $0x68] sm:$0xff] %vm22, 0.0
    %37 = vst.msk [vmem:[#allocation2 + $0x70] sm:$0xff] %vm22, 0.0
    %38 = vst.msk [vmem:[#allocation2 + $0x78] sm:$0xff] %vm22, 0.0
  $region21: #{densenet_forward.19} parent=0 // pred_fallthru
    _
  %v39 = vld [vmem:[%s0] sm:$0xf]
  %v40 = vld [vmem:[%s0 + $0x4] sm:$0xf]
  %v41 = vld [vmem:[%s0 + $0x8] sm:$0xf]
  %v42 = vld [vmem:[%s0 + $0xc] sm:$0xf]
  %v43 = vld [vmem:[%s0 + $0x10] sm:$0xf]
  %v44 = vld [vmem:[%s0 + $0x14] sm:$0xf]
  %v45 = vld [vmem:[%s0 + $0x18] sm:$0xf]
  %v46 = vld [vmem:[%s0 + $0x1c] sm:$0xf]
  %v47 = vld [vmem:[%s0 + $0x20] sm:$0xf]
  %v48 = vld [vmem:[%s0 + $0x24] sm:$0xf]
  %v49 = vld [vmem:[%s0 + $0x28] sm:$0xf]
  %v50 = vld [vmem:[%s0 + $0x2c] sm:$0xf]
  %v51 = vld [vmem:[%s0 + $0x30] sm:$0xf]
  %v52 = vld [vmem:[%s0 + $0x34] sm:$0xf]
  %v53 = vld [vmem:[%s0 + $0x38] sm:$0xf]
  %v54 = vld [vmem:[%s0 + $0x3c] sm:$0xf]
  %v55 = vld [vmem:[%s2] sm:$0x1]
  %v57 = vpack.i.b16 %v55, %v55
  %v59 = vlaneseq
  %v60 = vshrl.u32 %v59, 7
  %v61 = vsub.s32 0, %v60
  %v62 = vrot.slane %v57, %v61
  %v64 = vunpack.c.l.b16 %v62
  %v65 = vpack.c.b16 %v64, %v64
  %v67 = vmul.bf16 %v39, %v65
  %v68 = vmul.bf16 %v40, %v65
  %v69 = vmul.bf16 %v41, %v65
  %v70 = vmul.bf16 %v42, %v65
  %v71 = vmul.bf16 %v43, %v65
  %v72 = vmul.bf16 %v44, %v65
  %v73 = vmul.bf16 %v45, %v65
  %v74 = vmul.bf16 %v46, %v65
  %v75 = vmul.bf16 %v47, %v65
  %v76 = vmul.bf16 %v48, %v65
  %v77 = vmul.bf16 %v49, %v65
  %v78 = vmul.bf16 %v50, %v65
  %v79 = vmul.bf16 %v51, %v65
  %v80 = vmul.bf16 %v52, %v65
  %v81 = vmul.bf16 %v53, %v65
  %v82 = vmul.bf16 %v54, %v65
  %v83 = vld [vmem:[%s3] sm:$0x1]
  %v85 = vpack.i.b16 %v83, %v83
  %v87 = vlaneseq
  %v88 = vshrl.u32 %v87, 7
  %v89 = vsub.s32 0, %v88
  %v90 = vrot.slane %v85, %v89
  %v92 = vunpack.c.l.b16 %v90
  %v93 = vpack.c.b16 %v92, %v92
  %v95 = vadd.bf16 %v67, %v93
  %v96 = vadd.bf16 %v68, %v93
  %v97 = vadd.bf16 %v69, %v93
  %v98 = vadd.bf16 %v70, %v93
  %v99 = vadd.bf16 %v71, %v93
  %v100 = vadd.bf16 %v72, %v93
  %v101 = vadd.bf16 %v73, %v93
  %v102 = vadd.bf16 %v74, %v93
  %v103 = vadd.bf16 %v75, %v93
  %v104 = vadd.bf16 %v76, %v93
  %v105 = vadd.bf16 %v77, %v93
  %v106 = vadd.bf16 %v78, %v93
  %v107 = vadd.bf16 %v79, %v93
  %v108 = vadd.bf16 %v80, %v93
  %v109 = vadd.bf16 %v81, %v93
  %v110 = vadd.bf16 %v82, %v93
  %v111 = vmax.bf16 %v95, 0
  %v112 = vmax.bf16 %v96, 0
  %v113 = vmax.bf16 %v97, 0
  %v114 = vmax.bf16 %v98, 0
  %v115 = vmax.bf16 %v99, 0
  %v116 = vmax.bf16 %v100, 0
  %v117 = vmax.bf16 %v101, 0
  %v118 = vmax.bf16 %v102, 0
  %v119 = vmax.bf16 %v103, 0
  %v120 = vmax.bf16 %v104, 0
  %v121 = vmax.bf16 %v105, 0
  %v122 = vmax.bf16 %v106, 0
  %v123 = vmax.bf16 %v107, 0
  %v124 = vmax.bf16 %v108, 0
  %v125 = vmax.bf16 %v109, 0
  %v126 = vmax.bf16 %v110, 0
  %v127 = vld [vmem:[#allocation2] sm:$0xff]
  %v128 = vld [vmem:[#allocation2 + $0x8] sm:$0xff]
  %v129 = vld [vmem:[#allocation2 + $0x10] sm:$0xff]
  %v130 = vld [vmem:[#allocation2 + $0x18] sm:$0xff]
  %v131 = vld [vmem:[#allocation2 + $0x20] sm:$0xff]
  %v132 = vld [vmem:[#allocation2 + $0x28] sm:$0xff]
  %v133 = vld [vmem:[#allocation2 + $0x30] sm:$0xff]
  %v134 = vld [vmem:[#allocation2 + $0x38] sm:$0xff]
  %v135 = vld [vmem:[#allocation2 + $0x40] sm:$0xff]
  %v136 = vld [vmem:[#allocation2 + $0x48] sm:$0xff]
  %v137 = vld [vmem:[#allocation2 + $0x50] sm:$0xff]
  %v138 = vld [vmem:[#allocation2 + $0x58] sm:$0xff]
  %v139 = vld [vmem:[#allocation2 + $0x60] sm:$0xff]
  %v140 = vld [vmem:[#allocation2 + $0x68] sm:$0xff]
  %v141 = vld [vmem:[#allocation2 + $0x70] sm:$0xff]
  %v142 = vld [vmem:[#allocation2 + $0x78] sm:$0xff]
  %v143 = vld [vmem:[%s1] sm:$0xf]
  %v144 = vld [vmem:[%s1 + $0x4] sm:$0xf]
  %v145 = vld [vmem:[%s1 + $0x8] sm:$0xf]
  %v162 = vunpack.c.l.b16 %v111
  %v163 = vunpack.c.l.b16 %v112
  %v164 = vunpack.c.l.b16 %v113
  %v165 = vunpack.c.l.b16 %v114
  %v166 = vunpack.c.l.b16 %v115
  %v167 = vunpack.c.l.b16 %v116
  %v168 = vunpack.c.l.b16 %v117
  %v169 = vunpack.c.l.b16 %v118
  %v170 = vunpack.c.l.b16 %v119
  %v171 = vunpack.c.l.b16 %v120
  %v172 = vunpack.c.l.b16 %v121
  %v173 = vunpack.c.l.b16 %v122
  %v174 = vunpack.c.l.b16 %v123
  %v175 = vunpack.c.l.b16 %v124
  %v176 = vunpack.c.l.b16 %v125
  %v177 = vunpack.c.l.b16 %v126
  %v178 = vpack.c.b16 %v163, %v162
  %v179 = vpack.c.b16 %v165, %v164
  %v180 = vpack.c.b16 %v167, %v166
  %v181 = vpack.c.b16 %v169, %v168
  %v182 = vpack.c.b16 %v171, %v170
  %v183 = vpack.c.b16 %v173, %v172
  %v184 = vpack.c.b16 %v175, %v174
  %v185 = vpack.c.b16 %v177, %v176
  %v189 = vunpack.c.l.b16 %v143
  %v190 = vunpack.c.l.b16 %v144
  %v191 = vunpack.c.l.b16 %v145
  %v192 = vpack.c.b16 %v190, %v189
  %v193 = vpack.c.b16 %v191, %v191
  %vm195 = vcmask 195584
  %v197 = vsel %vm195, %v178, 0
  %v200 = vsel %vm195, %v179, 0
  %v203 = vsel %vm195, %v180, 0
  %v206 = vsel %vm195, %v181, 0
  %v209 = vsel %vm195, %v182, 0
  %v212 = vsel %vm195, %v183, 0
  %v215 = vsel %vm195, %v184, 0
  %v218 = vsel %vm195, %v185, 0
  %vm220 = vcmask 1043456
  %v222 = vsel %vm220, %v193, 0
  %224 = vmatprep.subr.bf16.mxu0 0
  %225 = vmatpush1.bf16.msra.mxu0 0
  %226 = vmatprep.subr.bf16.mxu0 0
  %227 = vmatpush1.bf16.msra.mxu0 0
  %228 = vmatprep.subr.bf16.mxu0 0
  %229 = vmatpush1.bf16.msra.mxu0 0
  %230 = vmatprep.subr.bf16.mxu0 0
  %231 = vmatpush1.bf16.msra.mxu0 0
  %232 = vmatprep.subr.bf16.mxu0 0
  %233 = vmatpush1.bf16.msra.mxu0 0
  %234 = vmatprep.subr.bf16.mxu0 0
  %235 = vmatpush1.bf16.msra.mxu0 0
  %236 = vmatprep.subr.bf16.mxu0 0
  %237 = vmatpush1.bf16.msra.mxu0 %v222
  %238 = vmatprep.subr.bf16.mxu0 0
  %239 = vmatpush1.bf16.msra.mxu0 %v192
  %240 = vmatprep.subr.bf16.mxu0 0
  %241 = vmatpush2.bf16.msra.mxu0 0
  %242 = vmatprep.subr.bf16.mxu0 0
  %243 = vmatpush2.bf16.msra.mxu0 0
  %244 = vmatprep.subr.bf16.mxu0 0
  %245 = vmatpush2.bf16.msra.mxu0 0
  %246 = vmatprep.subr.bf16.mxu0 0
  %247 = vmatpush2.bf16.msra.mxu0 0
  %248 = vmatprep.subr.bf16.mxu0 0
  %249 = vmatpush2.bf16.msra.mxu0 0
  %250 = vmatprep.subr.bf16.mxu0 0
  %251 = vmatpush2.bf16.msra.mxu0 0
  %252 = vmatprep.subr.bf16.mxu0 0
  %253 = vmatpush2.bf16.msra.mxu0 0
  %254 = vmatprep.subr.bf16.mxu0 0
  %255 = vmatpush2.bf16.msra.mxu0 0
  %256 = vmatprep.mubr.bf16.mxu0 0
  %257 = vmatmul.mubr.bf16.gmra.mxu0 %v197
  %v258 = vpop.f32.mrf.mxu0
  %v259 = vadd.f32 0.0, %v258
  %v260 = vpop.f32.mrf.mxu0
  %v261 = vpop.f32.mrf.mxu0
  %v262 = vadd.f32 0.0, %v261
  %v263 = vpop.f32.mrf.mxu0
  %264 = vmatprep.mubr.bf16.mxu0 0
  %265 = vmatmul.mubr.bf16.gmra.mxu0 %v200
  %v266 = vpop.f32.mrf.mxu0
  %v267 = vadd.f32 0.0, %v266
  %v268 = vpop.f32.mrf.mxu0
  %v269 = vpop.f32.mrf.mxu0
  %v270 = vadd.f32 0.0, %v269
  %v271 = vpop.f32.mrf.mxu0
  %272 = vmatprep.mubr.bf16.mxu0 0
  %273 = vmatmul.mubr.bf16.gmra.mxu0 %v203
  %v274 = vpop.f32.mrf.mxu0
  %v275 = vadd.f32 0.0, %v274
  %v276 = vpop.f32.mrf.mxu0
  %v277 = vpop.f32.mrf.mxu0
  %v278 = vadd.f32 0.0, %v277
  %v279 = vpop.f32.mrf.mxu0
  %280 = vmatprep.mubr.bf16.mxu0 0
  %281 = vmatmul.mubr.bf16.gmra.mxu0 %v206
  %v282 = vpop.f32.mrf.mxu0
  %v283 = vadd.f32 0.0, %v282
  %v284 = vpop.f32.mrf.mxu0
  %v285 = vpop.f32.mrf.mxu0
  %v286 = vadd.f32 0.0, %v285
  %v287 = vpop.f32.mrf.mxu0
  %288 = vmatprep.mubr.bf16.mxu0 0
  %289 = vmatmul.mubr.bf16.gmra.mxu0 %v209
  %v290 = vpop.f32.mrf.mxu0
  %v291 = vadd.f32 0.0, %v290
  %v292 = vpop.f32.mrf.mxu0
  %v293 = vpop.f32.mrf.mxu0
  %v294 = vadd.f32 0.0, %v293
  %v295 = vpop.f32.mrf.mxu0
  %296 = vmatprep.mubr.bf16.mxu0 0
  %297 = vmatmul.mubr.bf16.gmra.mxu0 %v212
  %v298 = vpop.f32.mrf.mxu0
  %v299 = vadd.f32 0.0, %v298
  %v300 = vpop.f32.mrf.mxu0
  %v301 = vpop.f32.mrf.mxu0
  %v302 = vadd.f32 0.0, %v301
  %v303 = vpop.f32.mrf.mxu0
  %304 = vmatprep.mubr.bf16.mxu0 0
  %305 = vmatmul.mubr.bf16.gmra.mxu0 %v215
  %v306 = vpop.f32.mrf.mxu0
  %v307 = vadd.f32 0.0, %v306
  %v308 = vpop.f32.mrf.mxu0
  %v309 = vpop.f32.mrf.mxu0
  %v310 = vadd.f32 0.0, %v309
  %v311 = vpop.f32.mrf.mxu0
  %312 = vmatprep.mubr.bf16.mxu0 0
  %313 = vmatmul.mubr.bf16.gmra.mxu0 %v218
  %v314 = vpop.f32.mrf.mxu0
  %v315 = vadd.f32 0.0, %v314
  %v316 = vpop.f32.mrf.mxu0
  %v317 = vpop.f32.mrf.mxu0
  %v318 = vadd.f32 0.0, %v317
  %v319 = vpop.f32.mrf.mxu0
  %320 = vdwg.mxu0
  %v321 = vadd.f32 %v127, %v259
  %v322 = vadd.f32 %v128, %v262
  %v323 = vadd.f32 %v129, %v267
  %v324 = vadd.f32 %v130, %v270
  %v325 = vadd.f32 %v131, %v275
  %v326 = vadd.f32 %v132, %v278
  %v327 = vadd.f32 %v133, %v283
  %v328 = vadd.f32 %v134, %v286
  %v329 = vadd.f32 %v135, %v291
  %v330 = vadd.f32 %v136, %v294
  %v331 = vadd.f32 %v137, %v299
  %v332 = vadd.f32 %v138, %v302
  %v333 = vadd.f32 %v139, %v307
  %v334 = vadd.f32 %v140, %v310
  %v335 = vadd.f32 %v141, %v315
  %v336 = vadd.f32 %v142, %v318
  %vm337 = vcmask 97280
  %338 = vst.msk [vmem:[#allocation2] sm:$0xff] %vm337, %v321
  %339 = vst.msk [vmem:[#allocation2 + $0x8] sm:$0xff] %vm337, %v322
  %340 = vst.msk [vmem:[#allocation2 + $0x10] sm:$0xff] %vm337, %v323
  %341 = vst.msk [vmem:[#allocation2 + $0x18] sm:$0xff] %vm337, %v324
  %342 = vst.msk [vmem:[#allocation2 + $0x20] sm:$0xff] %vm337, %v325
  %343 = vst.msk [vmem:[#allocation2 + $0x28] sm:$0xff] %vm337, %v326
  %344 = vst.msk [vmem:[#allocation2 + $0x30] sm:$0xff] %vm337, %v327
  %345 = vst.msk [vmem:[#allocation2 + $0x38] sm:$0xff] %vm337, %v328
  %346 = vst.msk [vmem:[#allocation2 + $0x40] sm:$0xff] %vm337, %v329
  %347 = vst.msk [vmem:[#allocation2 + $0x48] sm:$0xff] %vm337, %v330
  %348 = vst.msk [vmem:[#allocation2 + $0x50] sm:$0xff] %vm337, %v331
  %349 = vst.msk [vmem:[#allocation2 + $0x58] sm:$0xff] %vm337, %v332
  %350 = vst.msk [vmem:[#allocation2 + $0x60] sm:$0xff] %vm337, %v333
  %351 = vst.msk [vmem:[#allocation2 + $0x68] sm:$0xff] %vm337, %v334
  %352 = vst.msk [vmem:[#allocation2 + $0x70] sm:$0xff] %vm337, %v335
  %353 = vst.msk [vmem:[#allocation2 + $0x78] sm:$0xff] %vm337, %v336
  // Predicated region
  $region22: #{densenet_forward.19} parent=0 // pred_check
    %p354 = pneg %p18
  $region23: #{densenet_forward.19} parent=0 // pred_check_branch
    %356 = sbr.rel (%p354) target = $region25
  $region24: #{densenet_forward.19} parent=0 // pred_region
    %v357 = vld [vmem:[#allocation2] sm:$0xff]
    %v358 = vld [vmem:[#allocation2 + $0x8] sm:$0xff]
    %v359 = vld [vmem:[#allocation2 + $0x10] sm:$0xff]
    %v360 = vld [vmem:[#allocation2 + $0x18] sm:$0xff]
    %v361 = vld [vmem:[#allocation2 + $0x20] sm:$0xff]
    %v362 = vld [vmem:[#allocation2 + $0x28] sm:$0xff]
    %v363 = vld [vmem:[#allocation2 + $0x30] sm:$0xff]
    %v364 = vld [vmem:[#allocation2 + $0x38] sm:$0xff]
    %v365 = vld [vmem:[#allocation2 + $0x40] sm:$0xff]
    %v366 = vld [vmem:[#allocation2 + $0x48] sm:$0xff]
    %v367 = vld [vmem:[#allocation2 + $0x50] sm:$0xff]
    %v368 = vld [vmem:[#allocation2 + $0x58] sm:$0xff]
    %v369 = vld [vmem:[#allocation2 + $0x60] sm:$0xff]
    %v370 = vld [vmem:[#allocation2 + $0x68] sm:$0xff]
    %v371 = vld [vmem:[#allocation2 + $0x70] sm:$0xff]
    %v372 = vld [vmem:[#allocation2 + $0x78] sm:$0xff]
    %v373 = vpack.c.bf16 %v358, %v357
    %v374 = vpack.c.bf16 %v360, %v359
    %v375 = vpack.c.bf16 %v362, %v361
    %v376 = vpack.c.bf16 %v364, %v363
    %v377 = vpack.c.bf16 %v366, %v365
    %v378 = vpack.c.bf16 %v368, %v367
    %v379 = vpack.c.bf16 %v370, %v369
    %v380 = vpack.c.bf16 %v372, %v371
    %v389 = vunpack.c.l.b16 %v373
    %v390 = vunpack.c.h.b16 %v373
    %v391 = vunpack.c.l.b16 %v374
    %v392 = vunpack.c.h.b16 %v374
    %v393 = vunpack.c.l.b16 %v375
    %v394 = vunpack.c.h.b16 %v375
    %v395 = vunpack.c.l.b16 %v376
    %v396 = vunpack.c.h.b16 %v376
    %v397 = vunpack.c.l.b16 %v377
    %v398 = vunpack.c.h.b16 %v377
    %v399 = vunpack.c.l.b16 %v378
    %v400 = vunpack.c.h.b16 %v378
    %v401 = vunpack.c.l.b16 %v379
    %v402 = vunpack.c.h.b16 %v379
    %v403 = vunpack.c.l.b16 %v380
    %v404 = vunpack.c.h.b16 %v380
    %v405 = vpack.c.b16 %v389, %v389
    %v406 = vpack.c.b16 %v390, %v390
    %v407 = vpack.c.b16 %v391, %v391
    %v408 = vpack.c.b16 %v392, %v392
    %v409 = vpack.c.b16 %v393, %v393
    %v410 = vpack.c.b16 %v394, %v394
    %v411 = vpack.c.b16 %v395, %v395
    %v412 = vpack.c.b16 %v396, %v396
    %v413 = vpack.c.b16 %v397, %v397
    %v414 = vpack.c.b16 %v398, %v398
    %v415 = vpack.c.b16 %v399, %v399
    %v416 = vpack.c.b16 %v400, %v400
    %v417 = vpack.c.b16 %v401, %v401
    %v418 = vpack.c.b16 %v402, %v402
    %v419 = vpack.c.b16 %v403, %v403
    %v420 = vpack.c.b16 %v404, %v404
    %vm437 = vcmask 93184
    %438 = vst.msk [vmem:[%s4] sm:$0xf] %vm437, %v405
    %439 = vst.msk [vmem:[%s4 + $0x4] sm:$0xf] %vm437, %v406
    %440 = vst.msk [vmem:[%s4 + $0x8] sm:$0xf] %vm437, %v407
    %441 = vst.msk [vmem:[%s4 + $0xc] sm:$0xf] %vm437, %v408
    %442 = vst.msk [vmem:[%s4 + $0x10] sm:$0xf] %vm437, %v409
    %443 = vst.msk [vmem:[%s4 + $0x14] sm:$0xf] %vm437, %v410
    %444 = vst.msk [vmem:[%s4 + $0x18] sm:$0xf] %vm437, %v411
    %445 = vst.msk [vmem:[%s4 + $0x1c] sm:$0xf] %vm437, %v412
    %446 = vst.msk [vmem:[%s4 + $0x20] sm:$0xf] %vm437, %v413
    %447 = vst.msk [vmem:[%s4 + $0x24] sm:$0xf] %vm437, %v414
    %448 = vst.msk [vmem:[%s4 + $0x28] sm:$0xf] %vm437, %v415
    %449 = vst.msk [vmem:[%s4 + $0x2c] sm:$0xf] %vm437, %v416
    %450 = vst.msk [vmem:[%s4 + $0x30] sm:$0xf] %vm437, %v417
    %451 = vst.msk [vmem:[%s4 + $0x34] sm:$0xf] %vm437, %v418
    %452 = vst.msk [vmem:[%s4 + $0x38] sm:$0xf] %vm437, %v419
    %453 = vst.msk [vmem:[%s4 + $0x3c] sm:$0xf] %vm437, %v420
  $region25: #{densenet_forward.19} parent=0 // pred_fallthru
    _
  // Predicated region
  $region26: #{densenet_forward.19} parent=0 // pred_check
    _
  $region27: #{densenet_forward.19} parent=0 // pred_check_branch
    %455 = sbr.rel (0) target = $region29
  $region28: #{densenet_forward.19} parent=0 // pred_region
    _
  $region29: #{densenet_forward.19} parent=0 // pred_fallthru
    _
  // Predicated region
  $region30: #{densenet_forward.19} parent=0 // pred_check
    _
  $region31: #{densenet_forward.19} parent=0 // pred_check_branch
    %457 = sbr.rel (0) target = $region33
  $region32: #{densenet_forward.19} parent=0 // pred_region
    _
  $region33: #{densenet_forward.19} parent=0 // pred_fallthru
    _

// kernel: densenet_forward.20
$region0: #{densenet_forward.20}
  #allocation0 [shape = 'u32[]', space=smem, size = 0x4, offset = 0x4, fixed_abs, tag = 'smem constant byte address 0x4 - core index']
  #allocation1 [shape = 'u32[144,128]{1,0:T(1,128)}', space=vmem, size = 0x12000, scoped, tag = 'internal scratch']
  %s0 = inlined_call_operand.vmem [shape: bf16[8,8,24], index: 0, kind: input, shape index: {}]
  %s1 = inlined_call_operand.vmem [shape: bf16[8,24], index: 1, kind: output, shape index: {}]
  %s2 = sld [smem:[#allocation0]]
  $region14: #{densenet_forward.20} parent=0
    _
  %s4 = ssub.s32 1, %s2
  %s5 = scalar_select 0, %s4, %s2
  // Predicated region
  $region2: #{densenet_forward.20} parent=0 // pred_check
    _
  $region3: #{densenet_forward.20} parent=0 // pred_check_branch
    %7 = sbr.rel (0) target = $region5
  $region4: #{densenet_forward.20} parent=0 // pred_region
    _
  $region5: #{densenet_forward.20} parent=0 // pred_fallthru
    _
  %v8 = vld [vmem:[%s0] sm:$0xf]
  %v9 = vld [vmem:[%s0 + $0x4] sm:$0xf]
  %v10 = vld [vmem:[%s0 + $0x8] sm:$0xf]
  %v11 = vld [vmem:[%s0 + $0xc] sm:$0xf]
  %v12 = vld [vmem:[%s0 + $0x10] sm:$0xf]
  %v13 = vld [vmem:[%s0 + $0x14] sm:$0xf]
  %v14 = vld [vmem:[%s0 + $0x18] sm:$0xf]
  %v15 = vld [vmem:[%s0 + $0x1c] sm:$0xf]
  %v16 = vunpack.c.l.bf16 %v8
  %v17 = vunpack.c.l.bf16 %v9
  %v18 = vunpack.c.l.bf16 %v10
  %v19 = vunpack.c.l.bf16 %v11
  %v20 = vunpack.c.l.bf16 %v12
  %v21 = vunpack.c.l.bf16 %v13
  %v22 = vunpack.c.l.bf16 %v14
  %v23 = vunpack.c.l.bf16 %v15
  %vm24 = vcmask 195584
  %v25 = vsel %vm24, %v16, 0.0
  %v26 = vrot.slane %v25, 4
  %v27 = vadd.f32 %v25, %v26
  %v28 = vrot.slane %v27, 2
  %v29 = vadd.f32 %v27, %v28
  %v30 = vrot.slane %v29, 1
  %v31 = vadd.f32 %v29, %v30
  %v32 = vsel %vm24, %v17, 0.0
  %v33 = vrot.slane %v32, 4
  %v34 = vadd.f32 %v32, %v33
  %v35 = vrot.slane %v34, 2
  %v36 = vadd.f32 %v34, %v35
  %v37 = vrot.slane %v36, 1
  %v38 = vadd.f32 %v36, %v37
  %v39 = vsel %vm24, %v18, 0.0
  %v40 = vrot.slane %v39, 4
  %v41 = vadd.f32 %v39, %v40
  %v42 = vrot.slane %v41, 2
  %v43 = vadd.f32 %v41, %v42
  %v44 = vrot.slane %v43, 1
  %v45 = vadd.f32 %v43, %v44
  %v46 = vsel %vm24, %v19, 0.0
  %v47 = vrot.slane %v46, 4
  %v48 = vadd.f32 %v46, %v47
  %v49 = vrot.slane %v48, 2
  %v50 = vadd.f32 %v48, %v49
  %v51 = vrot.slane %v50, 1
  %v52 = vadd.f32 %v50, %v51
  %v53 = vsel %vm24, %v20, 0.0
  %v54 = vrot.slane %v53, 4
  %v55 = vadd.f32 %v53, %v54
  %v56 = vrot.slane %v55, 2
  %v57 = vadd.f32 %v55, %v56
  %v58 = vrot.slane %v57, 1
  %v59 = vadd.f32 %v57, %v58
  %v60 = vsel %vm24, %v21, 0.0
  %v61 = vrot.slane %v60, 4
  %v62 = vadd.f32 %v60, %v61
  %v63 = vrot.slane %v62, 2
  %v64 = vadd.f32 %v62, %v63
  %v65 = vrot.slane %v64, 1
  %v66 = vadd.f32 %v64, %v65
  %v67 = vsel %vm24, %v22, 0.0
  %v68 = vrot.slane %v67, 4
  %v69 = vadd.f32 %v67, %v68
  %v70 = vrot.slane %v69, 2
  %v71 = vadd.f32 %v69, %v70
  %v72 = vrot.slane %v71, 1
  %v73 = vadd.f32 %v71, %v72
  %v74 = vsel %vm24, %v23, 0.0
  %v75 = vrot.slane %v74, 4
  %v76 = vadd.f32 %v74, %v75
  %v77 = vrot.slane %v76, 2
  %v78 = vadd.f32 %v76, %v77
  %v79 = vrot.slane %v78, 1
  %v80 = vadd.f32 %v78, %v79
  %v81 = vmul.f32 %v31, 0.125
  %v82 = vmul.f32 %v38, 0.125
  %v83 = vmul.f32 %v45, 0.125
  %v84 = vmul.f32 %v52, 0.125
  %v85 = vmul.f32 %v59, 0.125
  %v86 = vmul.f32 %v66, 0.125
  %v87 = vmul.f32 %v73, 0.125
  %v88 = vmul.f32 %v80, 0.125
  %v89 = vpack.c.bf16 %v81, %v81
  %v90 = vpack.c.bf16 %v82, %v82
  %v91 = vpack.c.bf16 %v83, %v83
  %v92 = vpack.c.bf16 %v84, %v84
  %v93 = vpack.c.bf16 %v85, %v85
  %v94 = vpack.c.bf16 %v86, %v86
  %v95 = vpack.c.bf16 %v87, %v87
  %v96 = vpack.c.bf16 %v88, %v88
  %v105 = vunpack.c.l.b16 %v89
  %v106 = vunpack.c.l.b16 %v90
  %v107 = vunpack.c.l.b16 %v91
  %v108 = vunpack.c.l.b16 %v92
  %v109 = vunpack.c.l.b16 %v93
  %v110 = vunpack.c.l.b16 %v94
  %v111 = vunpack.c.l.b16 %v95
  %v112 = vunpack.c.l.b16 %v96
  %v113 = vpack.c.b16 %v105, %v105
  %v114 = vpack.c.b16 %v106, %v106
  %v115 = vpack.c.b16 %v107, %v107
  %v116 = vpack.c.b16 %v108, %v108
  %v117 = vpack.c.b16 %v109, %v109
  %v118 = vpack.c.b16 %v110, %v110
  %v119 = vpack.c.b16 %v111, %v111
  %v120 = vpack.c.b16 %v112, %v112
  %v121 = vunpack.c.l.b16 %v113
  %v122 = vunpack.c.l.b16 %v114
  %v123 = vunpack.c.l.b16 %v115
  %v124 = vunpack.c.l.b16 %v116
  %v125 = vunpack.c.l.b16 %v117
  %v126 = vunpack.c.l.b16 %v118
  %v127 = vunpack.c.l.b16 %v119
  %v128 = vunpack.c.l.b16 %v120
  %vm129 = vcmask 1041409
  %v130 = vsel %vm129, %v122, %v121
  %vm131 = vcmask 1042434
  %v132 = vsel %vm131, %v123, %v130
  %vm133 = vcmask 1043459
  %v134 = vsel %vm133, %v124, %v132
  %vm135 = vcmask 1044484
  %v136 = vsel %vm135, %v125, %v134
  %vm137 = vcmask 1045509
  %v138 = vsel %vm137, %v126, %v136
  %vm139 = vcmask 1046534
  %v140 = vsel %vm139, %v127, %v138
  %vm141 = vcmask 1047559
  %v142 = vsel %vm141, %v128, %v140
  %v143 = vpack.c.b16 %v142, %v142
  %vm145 = vcmask 191488
  %146 = vst.msk [vmem:[%s1] sm:$0xf] %vm145, %v143
  // Predicated region
  $region6: #{densenet_forward.20} parent=0 // pred_check
    _
  $region7: #{densenet_forward.20} parent=0 // pred_check_branch
    %148 = sbr.rel (0) target = $region9
  $region8: #{densenet_forward.20} parent=0 // pred_region
    _
  $region9: #{densenet_forward.20} parent=0 // pred_fallthru
    _
  // Predicated region
  $region10: #{densenet_forward.20} parent=0 // pred_check
    _
  $region11: #{densenet_forward.20} parent=0 // pred_check_branch
    %150 = sbr.rel (0) target = $region13
  $region12: #{densenet_forward.20} parent=0 // pred_region
    _
  $region13: #{densenet_forward.20} parent=0 // pred_fallthru
    _

// kernel: densenet_forward.21
$region0: #{densenet_forward.21}
  #allocation0 [shape = 'u32[]', space=smem, size = 0x4, offset = 0x4, fixed_abs, tag = 'smem constant byte address 0x4 - core index']
  #allocation1 [shape = 'u32[144,128]{1,0:T(1,128)}', space=vmem, size = 0x12000, scoped, tag = 'internal scratch']
  #allocation2 [shape = 'f32[16,16]{1,0:T(8,128)}', space=vmem, size = 0x2000, scoped, tag = 'scratch operand']
  %s0 = inlined_call_operand.vmem [shape: bf16[16,12], index: 0, kind: input, shape index: {}]
  %s1 = inlined_call_operand.vmem [shape: bf16[12,16], index: 1, kind: input, shape index: {}]
  %s2 = inlined_call_operand.vmem [shape: bf16[1,12], index: 2, kind: input, shape index: {}]
  %s3 = inlined_call_operand.vmem [shape: bf16[1,12], index: 3, kind: input, shape index: {}]
  %s4 = inlined_call_operand.vmem [shape: f32[1,16], index: 4, kind: input, shape index: {}]
  %s5 = inlined_call_operand.vmem [shape: f32[1,16], index: 5, kind: input, shape index: {}]
  %s6 = inlined_call_operand.vmem [shape: bf16[16,16], index: 6, kind: output, shape index: {}]
  %s7 = sld [smem:[#allocation0]]
  $region42: #{densenet_forward.21} parent=0
    _
  %s9 = ssub.s32 1, %s7
  %s10 = scalar_select 0, %s9, %s7
  // Predicated region
  $region2: #{densenet_forward.21} parent=0 // pred_check
    _
  $region3: #{densenet_forward.21} parent=0 // pred_check_branch
    %12 = sbr.rel (0) target = $region5
  $region4: #{densenet_forward.21} parent=0 // pred_region
    _
  $region5: #{densenet_forward.21} parent=0 // pred_fallthru
    _
  // Predicated region
  $region6: #{densenet_forward.21} parent=0 // pred_check
    _
  $region7: #{densenet_forward.21} parent=0 // pred_check_branch
    %14 = sbr.rel (0) target = $region9
  $region8: #{densenet_forward.21} parent=0 // pred_region
    _
  $region9: #{densenet_forward.21} parent=0 // pred_fallthru
    _
  // Predicated region
  $region10: #{densenet_forward.21} parent=0 // pred_check
    _
  $region11: #{densenet_forward.21} parent=0 // pred_check_branch
    %16 = sbr.rel (0) target = $region13
  $region12: #{densenet_forward.21} parent=0 // pred_region
    _
  $region13: #{densenet_forward.21} parent=0 // pred_fallthru
    _
  // Predicated region
  $region14: #{densenet_forward.21} parent=0 // pred_check
    _
  $region15: #{densenet_forward.21} parent=0 // pred_check_branch
    %18 = sbr.rel (0) target = $region17
  $region16: #{densenet_forward.21} parent=0 // pred_region
    _
  $region17: #{densenet_forward.21} parent=0 // pred_fallthru
    _
  // Predicated region
  $region18: #{densenet_forward.21} parent=0 // pred_check
    _
  $region19: #{densenet_forward.21} parent=0 // pred_check_branch
    %20 = sbr.rel (0) target = $region21
  $region20: #{densenet_forward.21} parent=0 // pred_region
    _
  $region21: #{densenet_forward.21} parent=0 // pred_fallthru
    _
  // Predicated region
  $region22: #{densenet_forward.21} parent=0 // pred_check
    _
  $region23: #{densenet_forward.21} parent=0 // pred_check_branch
    %22 = sbr.rel (0) target = $region25
  $region24: #{densenet_forward.21} parent=0 // pred_region
    _
  $region25: #{densenet_forward.21} parent=0 // pred_fallthru
    _
  %p24 = scmp.eq.s32.totalorder 0, 0
  // Predicated region
  $region26: #{densenet_forward.21} parent=0 // pred_check
    %p25 = pneg %p24
  $region27: #{densenet_forward.21} parent=0 // pred_check_branch
    %27 = sbr.rel (%p25) target = $region29
  $region28: #{densenet_forward.21} parent=0 // pred_region
    %vm28 = vcmask 130048
    %29 = vst.msk [vmem:[#allocation2] sm:$0xff] %vm28, 0.0
    %30 = vst.msk [vmem:[#allocation2 + $0x8] sm:$0xff] %vm28, 0.0
  $region29: #{densenet_forward.21} parent=0 // pred_fallthru
    _
  %v31 = vld [vmem:[%s0] sm:$0xf]
  %v32 = vld [vmem:[%s0 + $0x4] sm:$0xf]
  %v33 = vld [vmem:[%s2] sm:$0x1]
  %v35 = vpack.i.b16 %v33, %v33
  %v37 = vlaneseq
  %v38 = vshrl.u32 %v37, 7
  %v39 = vsub.s32 0, %v38
  %v40 = vrot.slane %v35, %v39
  %v42 = vunpack.c.l.b16 %v40
  %v43 = vpack.c.b16 %v42, %v42
  %v45 = vmul.bf16 %v31, %v43
  %v46 = vmul.bf16 %v32, %v43
  %v47 = vld [vmem:[%s3] sm:$0x1]
  %v49 = vpack.i.b16 %v47, %v47
  %v51 = vlaneseq
  %v52 = vshrl.u32 %v51, 7
  %v53 = vsub.s32 0, %v52
  %v54 = vrot.slane %v49, %v53
  %v56 = vunpack.c.l.b16 %v54
  %v57 = vpack.c.b16 %v56, %v56
  %v59 = vadd.bf16 %v45, %v57
  %v60 = vadd.bf16 %v46, %v57
  %v61 = vmax.bf16 %v59, 0
  %v62 = vmax.bf16 %v60, 0
  %v63 = vld [vmem:[#allocation2] sm:$0xff]
  %v64 = vld [vmem:[#allocation2 + $0x8] sm:$0xff]
  %v65 = vld [vmem:[%s1] sm:$0xf]
  %v66 = vld [vmem:[%s1 + $0x4] sm:$0x3]
  %v69 = vunpack.c.l.b16 %v61
  %v70 = vunpack.c.l.b16 %v62
  %v71 = vpack.c.b16 %v70, %v69
  %v74 = vunpack.c.l.b16 %v65
  %v75 = vunpack.c.l.b16 %v66
  %v76 = vpack.c.b16 %v75, %v74
  %vm77 = vcmask 97280
  %v79 = vsel %vm77, %v71, 0
  %vm81 = vcmask 1045504
  %v83 = vsel %vm81, %v76, 0
  %85 = vmatprep.subr.bf16.mxu0 0
  %86 = vmatpush1.bf16.msra.mxu0 0
  %87 = vmatprep.subr.bf16.mxu0 0
  %88 = vmatpush1.bf16.msra.mxu0 0
  %89 = vmatprep.subr.bf16.mxu0 0
  %90 = vmatpush1.bf16.msra.mxu0 0
  %91 = vmatprep.subr.bf16.mxu0 0
  %92 = vmatpush1.bf16.msra.mxu0 0
  %93 = vmatprep.subr.bf16.mxu0 0
  %94 = vmatpush1.bf16.msra.mxu0 0
  %95 = vmatprep.subr.bf16.mxu0 0
  %96 = vmatpush1.bf16.msra.mxu0 0
  %97 = vmatprep.subr.bf16.mxu0 0
  %98 = vmatpush1.bf16.msra.mxu0 0
  %99 = vmatprep.subr.bf16.mxu0 0
  %100 = vmatpush1.bf16.msra.mxu0 %v83
  %101 = vmatprep.subr.bf16.mxu0 0
  %102 = vmatpush2.bf16.msra.mxu0 0
  %103 = vmatprep.subr.bf16.mxu0 0
  %104 = vmatpush2.bf16.msra.mxu0 0
  %105 = vmatprep.subr.bf16.mxu0 0
  %106 = vmatpush2.bf16.msra.mxu0 0
  %107 = vmatprep.subr.bf16.mxu0 0
  %108 = vmatpush2.bf16.msra.mxu0 0
  %109 = vmatprep.subr.bf16.mxu0 0
  %110 = vmatpush2.bf16.msra.mxu0 0
  %111 = vmatprep.subr.bf16.mxu0 0
  %112 = vmatpush2.bf16.msra.mxu0 0
  %113 = vmatprep.subr.bf16.mxu0 0
  %114 = vmatpush2.bf16.msra.mxu0 0
  %115 = vmatprep.subr.bf16.mxu0 0
  %116 = vmatpush2.bf16.msra.mxu0 0
  %117 = vmatprep.mubr.bf16.mxu0 0
  %118 = vmatmul.mubr.bf16.gmra.mxu0 %v79
  %v119 = vpop.f32.mrf.mxu0
  %v120 = vadd.f32 0.0, %v119
  %v121 = vpop.f32.mrf.mxu0
  %v122 = vpop.f32.mrf.mxu0
  %v123 = vadd.f32 0.0, %v122
  %v124 = vpop.f32.mrf.mxu0
  %125 = vdwg.mxu0
  %v126 = vadd.f32 %v63, %v120
  %v127 = vadd.f32 %v64, %v123
  %vm128 = vcmask 130048
  %129 = vst.msk [vmem:[#allocation2] sm:$0xff] %vm128, %v126
  %130 = vst.msk [vmem:[#allocation2 + $0x8] sm:$0xff] %vm128, %v127
  // Predicated region
  $region30: #{densenet_forward.21} parent=0 // pred_check
    %p131 = pneg %p24
  $region31: #{densenet_forward.21} parent=0 // pred_check_branch
    %133 = sbr.rel (%p131) target = $region33
  $region32: #{densenet_forward.21} parent=0 // pred_region
    %v134 = vld [vmem:[#allocation2] sm:$0xff]
    %v135 = vld [vmem:[#allocation2 + $0x8] sm:$0xff]
    %v136 = vld [vmem:[%s4] sm:$0x1]
    %v138 = vlaneseq
    %v139 = vshrl.u32 %v138, 7
    %v140 = vsub.s32 0, %v139
    %v141 = vrot.slane %v136, %v140
    %v143 = vmul.f32 %v134, %v141
    %v144 = vmul.f32 %v135, %v141
    %v145 = vld [vmem:[%s5] sm:$0x1]
    %v147 = vlaneseq
    %v148 = vshrl.u32 %v147, 7
    %v149 = vsub.s32 0, %v148
    %v150 = vrot.slane %v145, %v149
    %v152 = vadd.f32 %v143, %v150
    %v153 = vadd.f32 %v144, %v150
    %v154 = vmax.f32 %v152, 0.0
    %v155 = vmax.f32 %v153, 0.0
    %v156 = vpack.c.bf16 %v155, %v154
    %v158 = vunpack.c.l.b16 %v156
    %v159 = vunpack.c.h.b16 %v156
    %v160 = vpack.c.b16 %v158, %v158
    %v161 = vpack.c.b16 %v159, %v159
    %vm164 = vcmask 125952
    %165 = vst.msk [vmem:[%s6] sm:$0xf] %vm164, %v160
    %166 = vst.msk [vmem:[%s6 + $0x4] sm:$0xf] %vm164, %v161
  $region33: #{densenet_forward.21} parent=0 // pred_fallthru
    _
  // Predicated region
  $region34: #{densenet_forward.21} parent=0 // pred_check
    _
  $region35: #{densenet_forward.21} parent=0 // pred_check_branch
    %168 = sbr.rel (0) target = $region37
  $region36: #{densenet_forward.21} parent=0 // pred_region
    _
  $region37: #{densenet_forward.21} parent=0 // pred_fallthru
    _
  // Predicated region
  $region38: #{densenet_forward.21} parent=0 // pred_check
    _
  $region39: #{densenet_forward.21} parent=0 // pred_check_branch
    %170 = sbr.rel (0) target = $region41
  $region40: #{densenet_forward.21} parent=0 // pred_region
    _
  $region41: #{densenet_forward.21} parent=0 // pred_fallthru
    _

// kernel: densenet_forward.22
$region0: #{densenet_forward.22}
  #allocation0 [shape = 'u32[]', space=smem, size = 0x4, offset = 0x4, fixed_abs, tag = 'smem constant byte address 0x4 - core index']
  #allocation1 [shape = 'u32[144,128]{1,0:T(1,128)}', space=vmem, size = 0x12000, scoped, tag = 'internal scratch']
  #allocation2 [shape = 'f32[8,8]{1,0:T(8,128)}', space=vmem, size = 0x1000, scoped, tag = 'scratch operand']
  %s0 = inlined_call_operand.vmem [shape: bf16[2,4,18,16], index: 0, kind: input, shape index: {}]
  %s1 = inlined_call_operand.vmem [shape: bf16[3,144,8], index: 1, kind: input, shape index: {}]
  %s2 = inlined_call_operand.vmem [shape: bf16[2,2,8,8], index: 2, kind: output, shape index: {}]
  %s3 = sld [smem:[#allocation0]]
  $region49: #{densenet_forward.22} parent=0
    _
  %s5 = ssub.s32 1, %s3
  %s6 = scalar_select 0, %s5, %s3
  loop: start=0, step=1, limit=14
  $region2: #{densenet_forward.22} parent=0 // loop_pre_header
    _
  $region3: #{densenet_forward.22} parent=0 // loop_header
    %s8 = sphi 0, %s12
    %p9 = scmp.ge.s32.totalorder %s8, 14
    %s15 = sphi 0, %s34
    %s16 = sphi 0, %s30
    %s17 = sphi 0, %s26
    %s18 = sphi 0, %s15
    %s19 = sphi 0, %s16
    %s20 = sphi 0, %s17
    %s21 = sphi 0, %s18
    %s22 = sphi 0, %s19
    %s23 = sphi 0, %s20
    %s41 = sphi 0, %s43
    %s44 = sphi 0, %s41
    %s45 = sphi 0, %s44
    %s61 = sphi 0, %s45
    %s67 = sphi 0, %s69
    %s70 = sphi 0, %s67
    %s71 = sphi 0, %s70
    %s87 = sphi 0, %s71
    %s95 = sphi 0, %s97
    %s98 = sphi 0, %s95
    %s99 = sphi 0, %s98
    %s115 = sphi 0, %s99
  $region4: #{densenet_forward.22} parent=0 // loop_header_branch
    %11 = sbr.rel (%p9) target = $region8
  $region5: #{densenet_forward.22} parent=0 // loop_body
    %s13 = ssub.s32 %s8, 1
    %s14 = ssub.s32 %s8, 2
    %s24 = sadd.s32 1, %s17
    %p25 = scmp.ge.s32.totalorder %s24, 3
    %s26 = scalar_select %p25, 0, %s24
    %s27 = sadd.s32 1, %s16
    %s28 = scalar_select %p25, %s27, %s16
    %p29 = scmp.ge.s32.totalorder %s28, 2
    %s30 = scalar_select %p29, 0, %s28
    %s31 = sadd.s32 1, %s15
    %s32 = scalar_select %p29, %s31, %s15
    %p33 = scmp.ge.s32.totalorder %s32, 2
    %s34 = scalar_select %p33, 0, %s32
    %s35 = sadd.s32 %s16, %s17
    %s36 = sadd.s32 %s30, %s26
    %s37 = ssub.s32 %s15, %s34
    %s38 = ssub.s32 %s35, %s36
    %s39 = sor.u32 %s37, %s38
    %p40 = scmp.eq.s32.totalorder %s39, 0
    %s42 = sadd.s32 %s41, 1
    %s43 = scalar_select %p40, %s41, %s42
    %p46 = pneg %p40
    %p47 = scmp.eq.s32.totalorder %s8, 11
    %p48 = por %p46, %p47
    %p49 = scmp.ne.s32.totalorder %s41, %s44
    %p50 = scmp.eq.s32.totalorder %s8, 0
    %p51 = por %p49, %p50
    %p52 = scmp.ne.s32.totalorder %s41, %s44
    %p53 = scmp.eq.s32.totalorder %s13, 11
    %p54 = por %p52, %p53
    %p55 = scmp.ne.s32.totalorder %s44, %s45
    %p56 = scmp.eq.s32.totalorder %s13, 0
    %p57 = por %p55, %p56
    %p58 = scmp.ne.s32.totalorder %s44, %s45
    %p59 = scmp.eq.s32.totalorder %s14, 11
    %p60 = por %p58, %p59
    %p62 = scmp.ne.s32.totalorder %s45, %s61
    %p63 = scmp.eq.s32.totalorder %s14, 0
    %p64 = por %p62, %p63
    %s65 = ssub.s32 %s17, %s26
    %p66 = scmp.eq.s32.totalorder %s65, 0
    %s68 = sadd.s32 %s67, 1
    %s69 = scalar_select %p66, %s67, %s68
    %p72 = pneg %p66
    %p73 = scmp.eq.s32.totalorder %s8, 11
    %p74 = por %p72, %p73
    %p75 = scmp.ne.s32.totalorder %s67, %s70
    %p76 = scmp.eq.s32.totalorder %s8, 0
    %p77 = por %p75, %p76
    %p78 = scmp.ne.s32.totalorder %s67, %s70
    %p79 = scmp.eq.s32.totalorder %s13, 11
    %p80 = por %p78, %p79
    %p81 = scmp.ne.s32.totalorder %s70, %s71
    %p82 = scmp.eq.s32.totalorder %s13, 0
    %p83 = por %p81, %p82
    %p84 = scmp.ne.s32.totalorder %s70, %s71
    %p85 = scmp.eq.s32.totalorder %s14, 11
    %p86 = por %p84, %p85
    %p88 = scmp.ne.s32.totalorder %s71, %s87
    %p89 = scmp.eq.s32.totalorder %s14, 0
    %p90 = por %p88, %p89
    %s91 = ssub.s32 %s15, %s34
    %s92 = ssub.s32 %s16, %s30
    %s93 = sor.u32 %s91, %s92
    %p94 = scmp.eq.s32.totalorder %s93, 0
    %s96 = sadd.s32 %s95, 1
    %s97 = scalar_select %p94, %s95, %s96
    %p100 = pneg %p94
    %p101 = scmp.eq.s32.totalorder %s8, 11
    %p102 = por %p100, %p101
    %p103 = scmp.ne.s32.totalorder %s95, %s98
    %p104 = scmp.eq.s32.totalorder %s8, 0
    %p105 = por %p103, %p104
    %p106 = scmp.ne.s32.totalorder %s95, %s98
    %p107 = scmp.eq.s32.totalorder %s13, 11
    %p108 = por %p106, %p107
    %p109 = scmp.ne.s32.totalorder %s98, %s99
    %p110 = scmp.eq.s32.totalorder %s13, 0
    %p111 = por %p109, %p110
    %p112 = scmp.ne.s32.totalorder %s98, %s99
    %p113 = scmp.eq.s32.totalorder %s14, 11
    %p114 = por %p112, %p113
    %p116 = scmp.ne.s32.totalorder %s99, %s115
    %p117 = scmp.eq.s32.totalorder %s14, 0
    %p118 = por %p116, %p117
    %p119 = scmp.le.s32.totalorder 1, %s8
    %p120 = scmp.lt.s32.totalorder %s8, 13
    %p121 = pnand %p119, %p120
    %p122 = pneg %p121
    // Predicated region
    $region9: #{densenet_forward.22} parent=5 // pred_check
      _
    $region10: #{densenet_forward.22} parent=5 // pred_check_branch
      %124 = sbr.rel (%p121) target = $region12
    $region11: #{densenet_forward.22} parent=5 // pred_region
      %s125 = ssub.s32 %s8, 1
    $region12: #{densenet_forward.22} parent=5 // pred_fallthru
      _
    %p126 = scmp.lt.s32.totalorder %s8, 12
    // Predicated region
    $region13: #{densenet_forward.22} parent=5 // pred_check
      %p127 = pneg %p126
    $region14: #{densenet_forward.22} parent=5 // pred_check_branch
      %129 = sbr.rel (%p127) target = $region16
    $region15: #{densenet_forward.22} parent=5 // pred_region
      // Predicated region
      $region17: #{densenet_forward.22} parent=15 // pred_check
        %p130 = pneg %p51
      $region18: #{densenet_forward.22} parent=15 // pred_check_branch
        %132 = sbr.rel (%p130) target = $region20
      $region19: #{densenet_forward.22} parent=15 // pred_region
        %s133 = sadd.s32 %s16, %s17
        %p134 = scmp.lt.s32.totalorder %s15, 1
        %s135 = scalar_select %p134, %s15, 1
        %p136 = scmp.lt.s32.totalorder %s133, 3
        %s137 = scalar_select %p136, %s133, 3
        %s138 = smul.addr %s137, 3
        %s139 = smul.addr %s135, 12
        %s140 = sadd.s32 %s138, %s139
        %s141 = smul.addr %s140, 4
        %s142 = scalar_lea.vmem %s0, %s141
        %s143 = sadd.s32 %s16, %s17
      $region20: #{densenet_forward.22} parent=15 // pred_fallthru
        _
      // Predicated region
      $region21: #{densenet_forward.22} parent=15 // pred_check
        %p144 = pneg %p77
      $region22: #{densenet_forward.22} parent=15 // pred_check_branch
        %146 = sbr.rel (%p144) target = $region24
      $region23: #{densenet_forward.22} parent=15 // pred_region
        %p147 = scmp.lt.s32.totalorder %s17, 2
        %s148 = scalar_select %p147, %s17, 2
        %s149 = smul.addr %s148, 18
        %s150 = smul.addr %s149, 4
        %s151 = scalar_lea.vmem %s1, %s150
      $region24: #{densenet_forward.22} parent=15 // pred_fallthru
        _
    $region16: #{densenet_forward.22} parent=5 // pred_fallthru
      _
    %p152 = scmp.le.s32.totalorder 1, %s8
    %p153 = scmp.lt.s32.totalorder %s8, 13
    %p154 = pnand %p152, %p153
    %p155 = pneg %p154
    // Predicated region
    $region25: #{densenet_forward.22} parent=5 // pred_check
      _
    $region26: #{densenet_forward.22} parent=5 // pred_check_branch
      %157 = sbr.rel (%p154) target = $region28
    $region27: #{densenet_forward.22} parent=5 // pred_region
      %s158 = ssub.s32 %s8, 1
      %s159 = sadd.s32 %s19, %s20
      %p160 = scmp.lt.s32.totalorder %s18, 1
      %s161 = scalar_select %p160, %s18, 1
      %p162 = scmp.lt.s32.totalorder %s159, 3
      %s163 = scalar_select %p162, %s159, 3
      %s164 = smul.addr %s163, 3
      %s165 = smul.addr %s161, 12
      %s166 = sadd.s32 %s164, %s165
      %s167 = smul.addr %s166, 4
      %s168 = scalar_lea.vmem %s0, %s167
      %p169 = pneg %p57
      %p170 = pneg %p54
      %p171 = scmp.lt.s32.totalorder %s20, 2
      %s172 = scalar_select %p171, %s20, 2
      %s173 = smul.addr %s172, 18
      %s174 = smul.addr %s173, 4
      %s175 = scalar_lea.vmem %s1, %s174
      %p176 = pneg %p83
      %p177 = pneg %p80
      %p178 = pneg %p111
      %p179 = pneg %p108
      %p180 = scmp.lt.s32.totalorder %s18, 1
      %s181 = scalar_select %p180, %s18, 1
      %p182 = scmp.lt.s32.totalorder %s19, 1
      %s183 = scalar_select %p182, %s19, 1
      %s184 = smul.addr %s181, 2
      %s185 = sadd.s32 %s183, %s184
      %s186 = smul.addr %s185, 4
      %s187 = scalar_lea.vmem %s2, %s186
      %s188 = sadd.s32 %s19, %s20
      %p189 = scmp.lt.s32.totalorder %s18, 1
      %s190 = scalar_select %p189, %s18, 1
      %p191 = scmp.lt.s32.totalorder %s188, 3
      %s192 = scalar_select %p191, %s188, 3
      %s193 = smul.addr %s192, 3
      %s194 = smul.addr %s190, 12
      %s195 = sadd.s32 %s193, %s194
      %s196 = smul.addr %s195, 4
      %s197 = scalar_lea.vmem %s0, %s196
      %s198 = sadd.s32 %s19, %s20
      %p199 = scmp.lt.s32.totalorder %s20, 2
      %s200 = scalar_select %p199, %s20, 2
      %s201 = smul.addr %s200, 18
      %s202 = smul.addr %s201, 4
      %s203 = scalar_lea.vmem %s1, %s202
      %p204 = scmp.lt.s32.totalorder %s18, 1
      %s205 = scalar_select %p204, %s18, 1
      %p206 = scmp.lt.s32.totalorder %s19, 1
      %s207 = scalar_select %p206, %s19, 1
      %s208 = smul.addr %s205, 2
      %s209 = sadd.s32 %s207, %s208
      %s210 = smul.addr %s209, 4
      %s211 = scalar_lea.vmem %s2, %s210
      %p213 = scmp.eq.s32.totalorder %s20, 0
      // Predicated region
      $region29: #{densenet_forward.22} parent=27 // pred_check
        %p214 = pneg %p213
      $region30: #{densenet_forward.22} parent=27 // pred_check_branch
        %216 = sbr.rel (%p214) target = $region32
      $region31: #{densenet_forward.22} parent=27 // pred_region
        %vm217 = vcmask 64512
        %218 = vst.msk [vmem:[#allocation2] sm:$0xff] %vm217, 0.0
      $region32: #{densenet_forward.22} parent=27 // pred_fallthru
        _
      %v219 = vld [vmem:[%s197] sm:$0xf]
      %v220 = vld [vmem:[%s197 + $0x4] sm:$0xf]
      %v221 = vld [vmem:[%s197 + $0x8] sm:$0x1]
      %v224 = vunpack.c.l.b16 %v219
      %v225 = vunpack.c.l.b16 %v220
      %v226 = vpack.c.b16 %v225, %v224
      %v228 = vshrl.u32 %v226, 16
      %v230 = vshll.u32 %v226, 16
      %v232 = vrot.slane %v230, 1
      %v233 = vor.u32 %v228, %v232
      %234 = vrot.lane.b32.xlu0 %v233, 16
      %v235 = vpop.permute.xlu0 %234
      %v236 = vrot.slane %v226, 1
      %237 = vrot.lane.b32.xlu0 %v236, 32
      %v238 = vpop.permute.xlu0 %237
      %v239 = vrot.slane %v226, 2
      %240 = vrot.lane.b32.xlu0 %v239, 48
      %v241 = vpop.permute.xlu0 %240
      %v242 = vrot.slane %v228, 2
      %v243 = vrot.slane %v230, 3
      %v244 = vor.u32 %v242, %v243
      %245 = vrot.lane.b32.xlu0 %v244, 64
      %v246 = vpop.permute.xlu0 %245
      %v247 = vrot.slane %v226, 3
      %248 = vrot.lane.b32.xlu0 %v247, 80
      %v249 = vpop.permute.xlu0 %248
      %v250 = vpack.c.b16 %v225, %v225
      %251 = vrot.lane.b32.xlu0 %v250, 96
      %v252 = vpop.permute.xlu0 %251
      %v254 = vunpack.c.l.b16 %v221
      %v255 = vpack.c.b16 %v254, %v225
      %v257 = vshrl.u32 %v255, 16
      %v259 = vshll.u32 %v255, 16
      %v261 = vrot.slane %v259, 1
      %v262 = vor.u32 %v257, %v261
      %263 = vrot.lane.b32.xlu0 %v262, 112
      %v264 = vpop.permute.xlu0 %263
      %v265 = vrot.slane %v255, 1
      %vm266 = vcmask 130048
      %v269 = vsel %vm266, %v219, %v235
      %vm270 = vcmask 261120
      %v272 = vsel %vm270, %v269, %v238
      %vm273 = vcmask 392192
      %v275 = vsel %vm273, %v272, %v241
      %vm276 = vcmask 523264
      %v278 = vsel %vm276, %v275, %v246
      %vm279 = vcmask 654336
      %v281 = vsel %vm279, %v278, %v249
      %vm282 = vcmask 785408
      %v284 = vsel %vm282, %v281, %v252
      %vm285 = vcmask 916480
      %v287 = vsel %vm285, %v284, %v264
      %v289 = vld [vmem:[#allocation2] sm:$0xff]
      %v290 = vld [vmem:[%s203] sm:$0xf]
      %v291 = vld [vmem:[%s203 + $0x4] sm:$0xf]
      %v292 = vld [vmem:[%s203 + $0x8] sm:$0xf]
      %v293 = vld [vmem:[%s203 + $0xc] sm:$0xf]
      %v294 = vld [vmem:[%s203 + $0x10] sm:$0xf]
      %v295 = vld [vmem:[%s203 + $0x14] sm:$0xf]
      %v296 = vld [vmem:[%s203 + $0x18] sm:$0xf]
      %v297 = vld [vmem:[%s203 + $0x1c] sm:$0xf]
      %v298 = vld [vmem:[%s203 + $0x20] sm:$0xf]
      %v299 = vld [vmem:[%s203 + $0x24] sm:$0xf]
      %v300 = vld [vmem:[%s203 + $0x28] sm:$0xf]
      %v301 = vld [vmem:[%s203 + $0x2c] sm:$0xf]
      %v302 = vld [vmem:[%s203 + $0x30] sm:$0xf]
      %v303 = vld [vmem:[%s203 + $0x34] sm:$0xf]
      %v304 = vld [vmem:[%s203 + $0x38] sm:$0xf]
      %v305 = vld [vmem:[%s203 + $0x3c] sm:$0xf]
      %v306 = vld [vmem:[%s203 + $0x40] sm:$0xf]
      %v307 = vld [vmem:[%s203 + $0x44] sm:$0xf]
      %v326 = vunpack.c.l.b16 %v290
      %v327 = vunpack.c.l.b16 %v291
      %v328 = vunpack.c.l.b16 %v292
      %v329 = vunpack.c.l.b16 %v293
      %v330 = vunpack.c.l.b16 %v294
      %v331 = vunpack.c.l.b16 %v295
      %v332 = vunpack.c.l.b16 %v296
      %v333 = vunpack.c.l.b16 %v297
      %v334 = vunpack.c.l.b16 %v298
      %v335 = vunpack.c.l.b16 %v299
      %v336 = vunpack.c.l.b16 %v300
      %v337 = vunpack.c.l.b16 %v301
      %v338 = vunpack.c.l.b16 %v302
      %v339 = vunpack.c.l.b16 %v303
      %v340 = vunpack.c.l.b16 %v304
      %v341 = vunpack.c.l.b16 %v305
      %v342 = vunpack.c.l.b16 %v306
      %v343 = vunpack.c.l.b16 %v307
      %v344 = vpack.c.b16 %v327, %v326
      %v345 = vpack.c.b16 %v329, %v328
      %v346 = vpack.c.b16 %v331, %v330
      %v347 = vpack.c.b16 %v333, %v332
      %v348 = vpack.c.b16 %v335, %v334
      %v349 = vpack.c.b16 %v337, %v336
      %v350 = vpack.c.b16 %v339, %v338
      %v351 = vpack.c.b16 %v341, %v340
      %v352 = vpack.c.b16 %v343, %v342
      %v363 = vsel %vm266, %v265, 0
      %365 = vmatprep.subr.bf16.mxu0 0
      %366 = vmatpush1.bf16.msra.mxu0 %v351
      %367 = vmatprep.subr.bf16.mxu0 0
      %368 = vmatpush1.bf16.msra.mxu0 %v350
      %369 = vmatprep.subr.bf16.mxu0 0
      %370 = vmatpush1.bf16.msra.mxu0 %v349
      %371 = vmatprep.subr.bf16.mxu0 0
      %372 = vmatpush1.bf16.msra.mxu0 %v348
      %373 = vmatprep.subr.bf16.mxu0 0
      %374 = vmatpush1.bf16.msra.mxu0 %v347
      %375 = vmatprep.subr.bf16.mxu0 0
      %376 = vmatpush1.bf16.msra.mxu0 %v346
      %377 = vmatprep.subr.bf16.mxu0 0
      %378 = vmatpush1.bf16.msra.mxu0 %v345
      %379 = vmatprep.subr.bf16.mxu0 0
      %380 = vmatpush1.bf16.msra.mxu0 %v344
      %381 = vmatprep.subr.bf16.mxu0 0
      %382 = vmatpush2.bf16.msra.mxu0 0
      %383 = vmatprep.subr.bf16.mxu0 0
      %384 = vmatpush2.bf16.msra.mxu0 0
      %385 = vmatprep.subr.bf16.mxu0 0
      %386 = vmatpush2.bf16.msra.mxu0 0
      %387 = vmatprep.subr.bf16.mxu0 0
      %388 = vmatpush2.bf16.msra.mxu0 0
      %389 = vmatprep.subr.bf16.mxu0 0
      %390 = vmatpush2.bf16.msra.mxu0 0
      %391 = vmatprep.subr.bf16.mxu0 0
      %392 = vmatpush2.bf16.msra.mxu0 0
      %393 = vmatprep.subr.bf16.mxu0 0
      %394 = vmatpush2.bf16.msra.mxu0 0
      %395 = vmatprep.subr.bf16.mxu0 0
      %396 = vmatpush2.bf16.msra.mxu0 %v352
      %397 = vmatprep.mubr.bf16.mxu0 %v363
      %398 = vmatmul.mubr.bf16.gmra.mxu0 %v287
      %v399 = vpop.f32.mrf.mxu0
      %v400 = vadd.f32 0.0, %v399
      %v401 = vpop.f32.mrf.mxu0
      %v402 = vpop.f32.mrf.mxu0
      %v403 = vpop.f32.mrf.mxu0
      %404 = vdwg.mxu0
      %v405 = vadd.f32 %v289, %v400
      %vm406 = vcmask 64512
      %407 = vst.msk [vmem:[#allocation2] sm:$0xff] %vm406, %v405
      %p408 = scmp.eq.s32.totalorder %s20, 2
      // Predicated region
      $region33: #{densenet_forward.22} parent=27 // pred_check
        %p409 = pneg %p408
      $region34: #{densenet_forward.22} parent=27 // pred_check_branch
        %411 = sbr.rel (%p409) target = $region36
      $region35: #{densenet_forward.22} parent=27 // pred_region
        %v412 = vld [vmem:[#allocation2] sm:$0xff]
        %v413 = vpack.c.bf16 %v412, %v412
        %vm414 = vcmask 60416
        %415 = vst.msk [vmem:[%s211] sm:$0xf] %vm414, %v413
      $region36: #{densenet_forward.22} parent=27 // pred_fallthru
        _
      %p416 = scmp.lt.s32.totalorder %s18, 1
      %s417 = scalar_select %p416, %s18, 1
      %p418 = scmp.lt.s32.totalorder %s19, 1
      %s419 = scalar_select %p418, %s19, 1
      %s420 = smul.addr %s417, 2
      %s421 = sadd.s32 %s419, %s420
      %s422 = smul.addr %s421, 4
      %s423 = scalar_lea.vmem %s2, %s422
      // Predicated region
      $region37: #{densenet_forward.22} parent=27 // pred_check
        %p424 = pneg %p108
      $region38: #{densenet_forward.22} parent=27 // pred_check_branch
        %426 = sbr.rel (%p424) target = $region40
      $region39: #{densenet_forward.22} parent=27 // pred_region
        _
      $region40: #{densenet_forward.22} parent=27 // pred_fallthru
        _
    $region28: #{densenet_forward.22} parent=5 // pred_fallthru
      _
    %p427 = scmp.le.s32.totalorder 2, %s8
    // Predicated region
    $region41: #{densenet_forward.22} parent=5 // pred_check
      %p428 = pneg %p427
    $region42: #{densenet_forward.22} parent=5 // pred_check_branch
      %430 = sbr.rel (%p428) target = $region44
    $region43: #{densenet_forward.22} parent=5 // pred_region
      %s431 = ssub.s32 %s8, 2
      // Predicated region
      $region45: #{densenet_forward.22} parent=43 // pred_check
        %p432 = pneg %p114
      $region46: #{densenet_forward.22} parent=43 // pred_check_branch
        %434 = sbr.rel (%p432) target = $region48
      $region47: #{densenet_forward.22} parent=43 // pred_region
        %p435 = scmp.lt.s32.totalorder %s21, 1
        %s436 = scalar_select %p435, %s21, 1
        %p437 = scmp.lt.s32.totalorder %s22, 1
        %s438 = scalar_select %p437, %s22, 1
        %s439 = smul.addr %s436, 2
        %s440 = sadd.s32 %s438, %s439
        %s441 = smul.addr %s440, 4
        %s442 = scalar_lea.vmem %s2, %s441
      $region48: #{densenet_forward.22} parent=43 // pred_fallthru
        _
    $region44: #{densenet_forward.22} parent=5 // pred_fallthru
      _
  $region6: #{densenet_forward.22} parent=0 // loop_footer
    %s12 = sadd.s32 1, %s8
  $region7: #{densenet_forward.22} parent=0 // loop_footer_branch
    %7 = sbr.rel target = $region3
  $region8: #{densenet_forward.22} parent=0 // loop_exit
    _

// kernel: densenet_forward.23
$region0: #{densenet_forward.23}
  #allocation0 [shape = 'u32[]', space=smem, size = 0x4, offset = 0x4, fixed_abs, tag = 'smem constant byte address 0x4 - core index']
  #allocation1 [shape = 'u32[144,128]{1,0:T(1,128)}', space=vmem, size = 0x12000, scoped, tag = 'internal scratch']
  #allocation2 [shape = 'f32[16,16]{1,0:T(8,128)}', space=vmem, size = 0x2000, scoped, tag = 'scratch operand']
  %s0 = inlined_call_operand.vmem [shape: bf16[16,20], index: 0, kind: input, shape index: {}]
  %s1 = inlined_call_operand.vmem [shape: bf16[20,16], index: 1, kind: input, shape index: {}]
  %s2 = inlined_call_operand.vmem [shape: bf16[1,20], index: 2, kind: input, shape index: {}]
  %s3 = inlined_call_operand.vmem [shape: bf16[1,20], index: 3, kind: input, shape index: {}]
  %s4 = inlined_call_operand.vmem [shape: f32[1,16], index: 4, kind: input, shape index: {}]
  %s5 = inlined_call_operand.vmem [shape: f32[1,16], index: 5, kind: input, shape index: {}]
  %s6 = inlined_call_operand.vmem [shape: bf16[16,16], index: 6, kind: output, shape index: {}]
  %s7 = sld [smem:[#allocation0]]
  $region42: #{densenet_forward.23} parent=0
    _
  %s9 = ssub.s32 1, %s7
  %s10 = scalar_select 0, %s9, %s7
  // Predicated region
  $region2: #{densenet_forward.23} parent=0 // pred_check
    _
  $region3: #{densenet_forward.23} parent=0 // pred_check_branch
    %12 = sbr.rel (0) target = $region5
  $region4: #{densenet_forward.23} parent=0 // pred_region
    _
  $region5: #{densenet_forward.23} parent=0 // pred_fallthru
    _
  // Predicated region
  $region6: #{densenet_forward.23} parent=0 // pred_check
    _
  $region7: #{densenet_forward.23} parent=0 // pred_check_branch
    %14 = sbr.rel (0) target = $region9
  $region8: #{densenet_forward.23} parent=0 // pred_region
    _
  $region9: #{densenet_forward.23} parent=0 // pred_fallthru
    _
  // Predicated region
  $region10: #{densenet_forward.23} parent=0 // pred_check
    _
  $region11: #{densenet_forward.23} parent=0 // pred_check_branch
    %16 = sbr.rel (0) target = $region13
  $region12: #{densenet_forward.23} parent=0 // pred_region
    _
  $region13: #{densenet_forward.23} parent=0 // pred_fallthru
    _
  // Predicated region
  $region14: #{densenet_forward.23} parent=0 // pred_check
    _
  $region15: #{densenet_forward.23} parent=0 // pred_check_branch
    %18 = sbr.rel (0) target = $region17
  $region16: #{densenet_forward.23} parent=0 // pred_region
    _
  $region17: #{densenet_forward.23} parent=0 // pred_fallthru
    _
  // Predicated region
  $region18: #{densenet_forward.23} parent=0 // pred_check
    _
  $region19: #{densenet_forward.23} parent=0 // pred_check_branch
    %20 = sbr.rel (0) target = $region21
  $region20: #{densenet_forward.23} parent=0 // pred_region
    _
  $region21: #{densenet_forward.23} parent=0 // pred_fallthru
    _
  // Predicated region
  $region22: #{densenet_forward.23} parent=0 // pred_check
    _
  $region23: #{densenet_forward.23} parent=0 // pred_check_branch
    %22 = sbr.rel (0) target = $region25
  $region24: #{densenet_forward.23} parent=0 // pred_region
    _
  $region25: #{densenet_forward.23} parent=0 // pred_fallthru
    _
  %p24 = scmp.eq.s32.totalorder 0, 0
  // Predicated region
  $region26: #{densenet_forward.23} parent=0 // pred_check
    %p25 = pneg %p24
  $region27: #{densenet_forward.23} parent=0 // pred_check_branch
    %27 = sbr.rel (%p25) target = $region29
  $region28: #{densenet_forward.23} parent=0 // pred_region
    %vm28 = vcmask 130048
    %29 = vst.msk [vmem:[#allocation2] sm:$0xff] %vm28, 0.0
    %30 = vst.msk [vmem:[#allocation2 + $0x8] sm:$0xff] %vm28, 0.0
  $region29: #{densenet_forward.23} parent=0 // pred_fallthru
    _
  %v31 = vld [vmem:[%s0] sm:$0xf]
  %v32 = vld [vmem:[%s0 + $0x4] sm:$0xf]
  %v33 = vld [vmem:[%s2] sm:$0x1]
  %v35 = vpack.i.b16 %v33, %v33
  %v37 = vlaneseq
  %v38 = vshrl.u32 %v37, 7
  %v39 = vsub.s32 0, %v38
  %v40 = vrot.slane %v35, %v39
  %v42 = vunpack.c.l.b16 %v40
  %v43 = vpack.c.b16 %v42, %v42
  %v45 = vmul.bf16 %v31, %v43
  %v46 = vmul.bf16 %v32, %v43
  %v47 = vld [vmem:[%s3] sm:$0x1]
  %v49 = vpack.i.b16 %v47, %v47
  %v51 = vlaneseq
  %v52 = vshrl.u32 %v51, 7
  %v53 = vsub.s32 0, %v52
  %v54 = vrot.slane %v49, %v53
  %v56 = vunpack.c.l.b16 %v54
  %v57 = vpack.c.b16 %v56, %v56
  %v59 = vadd.bf16 %v45, %v57
  %v60 = vadd.bf16 %v46, %v57
  %v61 = vmax.bf16 %v59, 0
  %v62 = vmax.bf16 %v60, 0
  %v63 = vld [vmem:[#allocation2] sm:$0xff]
  %v64 = vld [vmem:[#allocation2 + $0x8] sm:$0xff]
  %v65 = vld [vmem:[%s1] sm:$0xf]
  %v66 = vld [vmem:[%s1 + $0x4] sm:$0xf]
  %v67 = vld [vmem:[%s1 + $0x8] sm:$0x3]
  %v70 = vunpack.c.l.b16 %v61
  %v71 = vunpack.c.l.b16 %v62
  %v72 = vpack.c.b16 %v71, %v70
  %v76 = vunpack.c.l.b16 %v65
  %v77 = vunpack.c.l.b16 %v66
  %v78 = vunpack.c.l.b16 %v67
  %v79 = vpack.c.b16 %v77, %v76
  %v80 = vpack.c.b16 %v78, %v78
  %vm82 = vcmask 162816
  %v84 = vsel %vm82, %v72, 0
  %vm86 = vcmask 1041408
  %v88 = vsel %vm86, %v80, 0
  %90 = vmatprep.subr.bf16.mxu0 0
  %91 = vmatpush1.bf16.msra.mxu0 0
  %92 = vmatprep.subr.bf16.mxu0 0
  %93 = vmatpush1.bf16.msra.mxu0 0
  %94 = vmatprep.subr.bf16.mxu0 0
  %95 = vmatpush1.bf16.msra.mxu0 0
  %96 = vmatprep.subr.bf16.mxu0 0
  %97 = vmatpush1.bf16.msra.mxu0 0
  %98 = vmatprep.subr.bf16.mxu0 0
  %99 = vmatpush1.bf16.msra.mxu0 0
  %100 = vmatprep.subr.bf16.mxu0 0
  %101 = vmatpush1.bf16.msra.mxu0 0
  %102 = vmatprep.subr.bf16.mxu0 0
  %103 = vmatpush1.bf16.msra.mxu0 %v88
  %104 = vmatprep.subr.bf16.mxu0 0
  %105 = vmatpush1.bf16.msra.mxu0 %v79
  %106 = vmatprep.subr.bf16.mxu0 0
  %107 = vmatpush2.bf16.msra.mxu0 0
  %108 = vmatprep.subr.bf16.mxu0 0
  %109 = vmatpush2.bf16.msra.mxu0 0
  %110 = vmatprep.subr.bf16.mxu0 0
  %111 = vmatpush2.bf16.msra.mxu0 0
  %112 = vmatprep.subr.bf16.mxu0 0
  %113 = vmatpush2.bf16.msra.mxu0 0
  %114 = vmatprep.subr.bf16.mxu0 0
  %115 = vmatpush2.bf16.msra.mxu0 0
  %116 = vmatprep.subr.bf16.mxu0 0
  %117 = vmatpush2.bf16.msra.mxu0 0
  %118 = vmatprep.subr.bf16.mxu0 0
  %119 = vmatpush2.bf16.msra.mxu0 0
  %120 = vmatprep.subr.bf16.mxu0 0
  %121 = vmatpush2.bf16.msra.mxu0 0
  %122 = vmatprep.mubr.bf16.mxu0 0
  %123 = vmatmul.mubr.bf16.gmra.mxu0 %v84
  %v124 = vpop.f32.mrf.mxu0
  %v125 = vadd.f32 0.0, %v124
  %v126 = vpop.f32.mrf.mxu0
  %v127 = vpop.f32.mrf.mxu0
  %v128 = vadd.f32 0.0, %v127
  %v129 = vpop.f32.mrf.mxu0
  %130 = vdwg.mxu0
  %v131 = vadd.f32 %v63, %v125
  %v132 = vadd.f32 %v64, %v128
  %vm133 = vcmask 130048
  %134 = vst.msk [vmem:[#allocation2] sm:$0xff] %vm133, %v131
  %135 = vst.msk [vmem:[#allocation2 + $0x8] sm:$0xff] %vm133, %v132
  // Predicated region
  $region30: #{densenet_forward.23} parent=0 // pred_check
    %p136 = pneg %p24
  $region31: #{densenet_forward.23} parent=0 // pred_check_branch
    %138 = sbr.rel (%p136) target = $region33
  $region32: #{densenet_forward.23} parent=0 // pred_region
    %v139 = vld [vmem:[#allocation2] sm:$0xff]
    %v140 = vld [vmem:[#allocation2 + $0x8] sm:$0xff]
    %v141 = vld [vmem:[%s4] sm:$0x1]
    %v143 = vlaneseq
    %v144 = vshrl.u32 %v143, 7
    %v145 = vsub.s32 0, %v144
    %v146 = vrot.slane %v141, %v145
    %v148 = vmul.f32 %v139, %v146
    %v149 = vmul.f32 %v140, %v146
    %v150 = vld [vmem:[%s5] sm:$0x1]
    %v152 = vlaneseq
    %v153 = vshrl.u32 %v152, 7
    %v154 = vsub.s32 0, %v153
    %v155 = vrot.slane %v150, %v154
    %v157 = vadd.f32 %v148, %v155
    %v158 = vadd.f32 %v149, %v155
    %v159 = vmax.f32 %v157, 0.0
    %v160 = vmax.f32 %v158, 0.0
    %v161 = vpack.c.bf16 %v160, %v159
    %v163 = vunpack.c.l.b16 %v161
    %v164 = vunpack.c.h.b16 %v161
    %v165 = vpack.c.b16 %v163, %v163
    %v166 = vpack.c.b16 %v164, %v164
    %vm169 = vcmask 125952
    %170 = vst.msk [vmem:[%s6] sm:$0xf] %vm169, %v165
    %171 = vst.msk [vmem:[%s6 + $0x4] sm:$0xf] %vm169, %v166
  $region33: #{densenet_forward.23} parent=0 // pred_fallthru
    _
  // Predicated region
  $region34: #{densenet_forward.23} parent=0 // pred_check
    _
  $region35: #{densenet_forward.23} parent=0 // pred_check_branch
    %173 = sbr.rel (0) target = $region37
  $region36: #{densenet_forward.23} parent=0 // pred_region
    _
  $region37: #{densenet_forward.23} parent=0 // pred_fallthru
    _
  // Predicated region
  $region38: #{densenet_forward.23} parent=0 // pred_check
    _
  $region39: #{densenet_forward.23} parent=0 // pred_check_branch
    %175 = sbr.rel (0) target = $region41
  $region40: #{densenet_forward.23} parent=0 // pred_region
    _
  $region41: #{densenet_forward.23} parent=0 // pred_fallthru
    _

// kernel: densenet_forward.25
$region0: #{densenet_forward.25}
  #allocation0 [shape = 'u32[]', space=smem, size = 0x4, offset = 0x4, fixed_abs, tag = 'smem constant byte address 0x4 - core index']
  #allocation1 [shape = 'u32[144,128]{1,0:T(1,128)}', space=vmem, size = 0x12000, scoped, tag = 'internal scratch']
  %s0 = inlined_call_operand.vmem [shape: bf16[8,8,28], index: 0, kind: input, shape index: {}]
  %s1 = inlined_call_operand.vmem [shape: f32[8,28], index: 1, kind: output, shape index: {}]
  %s2 = sld [smem:[#allocation0]]
  $region14: #{densenet_forward.25} parent=0
    _
  %s4 = ssub.s32 1, %s2
  %s5 = scalar_select 0, %s4, %s2
  // Predicated region
  $region2: #{densenet_forward.25} parent=0 // pred_check
    _
  $region3: #{densenet_forward.25} parent=0 // pred_check_branch
    %7 = sbr.rel (0) target = $region5
  $region4: #{densenet_forward.25} parent=0 // pred_region
    _
  $region5: #{densenet_forward.25} parent=0 // pred_fallthru
    _
  %v8 = vld [vmem:[%s0] sm:$0xf]
  %v9 = vld [vmem:[%s0 + $0x4] sm:$0xf]
  %v10 = vld [vmem:[%s0 + $0x8] sm:$0xf]
  %v11 = vld [vmem:[%s0 + $0xc] sm:$0xf]
  %v12 = vld [vmem:[%s0 + $0x10] sm:$0xf]
  %v13 = vld [vmem:[%s0 + $0x14] sm:$0xf]
  %v14 = vld [vmem:[%s0 + $0x18] sm:$0xf]
  %v15 = vld [vmem:[%s0 + $0x1c] sm:$0xf]
  %v16 = vunpack.c.l.bf16 %v8
  %v17 = vunpack.c.l.bf16 %v9
  %v18 = vunpack.c.l.bf16 %v10
  %v19 = vunpack.c.l.bf16 %v11
  %v20 = vunpack.c.l.bf16 %v12
  %v21 = vunpack.c.l.bf16 %v13
  %v22 = vunpack.c.l.bf16 %v14
  %v23 = vunpack.c.l.bf16 %v15
  %vm24 = vcmask 228352
  %v25 = vsel %vm24, %v16, 0.0
  %v26 = vrot.slane %v25, 4
  %v27 = vadd.f32 %v25, %v26
  %v28 = vrot.slane %v27, 2
  %v29 = vadd.f32 %v27, %v28
  %v30 = vrot.slane %v29, 1
  %v31 = vadd.f32 %v29, %v30
  %v32 = vsel %vm24, %v17, 0.0
  %v33 = vrot.slane %v32, 4
  %v34 = vadd.f32 %v32, %v33
  %v35 = vrot.slane %v34, 2
  %v36 = vadd.f32 %v34, %v35
  %v37 = vrot.slane %v36, 1
  %v38 = vadd.f32 %v36, %v37
  %v39 = vsel %vm24, %v18, 0.0
  %v40 = vrot.slane %v39, 4
  %v41 = vadd.f32 %v39, %v40
  %v42 = vrot.slane %v41, 2
  %v43 = vadd.f32 %v41, %v42
  %v44 = vrot.slane %v43, 1
  %v45 = vadd.f32 %v43, %v44
  %v46 = vsel %vm24, %v19, 0.0
  %v47 = vrot.slane %v46, 4
  %v48 = vadd.f32 %v46, %v47
  %v49 = vrot.slane %v48, 2
  %v50 = vadd.f32 %v48, %v49
  %v51 = vrot.slane %v50, 1
  %v52 = vadd.f32 %v50, %v51
  %v53 = vsel %vm24, %v20, 0.0
  %v54 = vrot.slane %v53, 4
  %v55 = vadd.f32 %v53, %v54
  %v56 = vrot.slane %v55, 2
  %v57 = vadd.f32 %v55, %v56
  %v58 = vrot.slane %v57, 1
  %v59 = vadd.f32 %v57, %v58
  %v60 = vsel %vm24, %v21, 0.0
  %v61 = vrot.slane %v60, 4
  %v62 = vadd.f32 %v60, %v61
  %v63 = vrot.slane %v62, 2
  %v64 = vadd.f32 %v62, %v63
  %v65 = vrot.slane %v64, 1
  %v66 = vadd.f32 %v64, %v65
  %v67 = vsel %vm24, %v22, 0.0
  %v68 = vrot.slane %v67, 4
  %v69 = vadd.f32 %v67, %v68
  %v70 = vrot.slane %v69, 2
  %v71 = vadd.f32 %v69, %v70
  %v72 = vrot.slane %v71, 1
  %v73 = vadd.f32 %v71, %v72
  %v74 = vsel %vm24, %v23, 0.0
  %v75 = vrot.slane %v74, 4
  %v76 = vadd.f32 %v74, %v75
  %v77 = vrot.slane %v76, 2
  %v78 = vadd.f32 %v76, %v77
  %v79 = vrot.slane %v78, 1
  %v80 = vadd.f32 %v78, %v79
  %v81 = vmul.f32 %v31, 0.125
  %v82 = vmul.f32 %v38, 0.125
  %v83 = vmul.f32 %v45, 0.125
  %v84 = vmul.f32 %v52, 0.125
  %v85 = vmul.f32 %v59, 0.125
  %v86 = vmul.f32 %v66, 0.125
  %v87 = vmul.f32 %v73, 0.125
  %v88 = vmul.f32 %v80, 0.125
  %vm97 = vcmask 1041409
  %v98 = vsel %vm97, %v82, %v81
  %vm99 = vcmask 1042434
  %v100 = vsel %vm99, %v83, %v98
  %vm101 = vcmask 1043459
  %v102 = vsel %vm101, %v84, %v100
  %vm103 = vcmask 1044484
  %v104 = vsel %vm103, %v85, %v102
  %vm105 = vcmask 1045509
  %v106 = vsel %vm105, %v86, %v104
  %vm107 = vcmask 1046534
  %v108 = vsel %vm107, %v87, %v106
  %vm109 = vcmask 1047559
  %v110 = vsel %vm109, %v88, %v108
  %112 = vst.msk [vmem:[%s1] sm:$0xff] %vm24, %v110
  // Predicated region
  $region6: #{densenet_forward.25} parent=0 // pred_check
    _
  $region7: #{densenet_forward.25} parent=0 // pred_check_branch
    %114 = sbr.rel (0) target = $region9
  $region8: #{densenet_forward.25} parent=0 // pred_region
    _
  $region9: #{densenet_forward.25} parent=0 // pred_fallthru
    _
  // Predicated region
  $region10: #{densenet_forward.25} parent=0 // pred_check
    _
  $region11: #{densenet_forward.25} parent=0 // pred_check_branch
    %116 = sbr.rel (0) target = $region13
  $region12: #{densenet_forward.25} parent=0 // pred_region
    _
  $region13: #{densenet_forward.25} parent=0 // pred_fallthru
    _

</llo_original>
